<compile_context>
chip_gen: v7x
topology: tpu7x:2x2x1
jax: 0.10.0
libtpu: 0.0.40
codegen_flags: <defaults>
</compile_context>

<pallas_src>
import functools

import jax
import jax.numpy as jnp
from jax.experimental import pallas as pl
from jax.experimental.pallas import tpu as pltpu


# ------------------------------------------------------------------
# Small padding helpers (host-side, exact: zero padding does not change the math)
# ------------------------------------------------------------------
def _round_up(x, m):
    return ((x + m - 1) // m) * m


def _pad_gate_cols(w, H, Hp):
    """Last axis is 3 concatenated gate blocks [r|z|n] of width H; pad each to Hp."""
    if Hp == H:
        return w
    pad_cfg = [(0, 0)] * (w.ndim - 1) + [(0, Hp - H)]
    blocks = [jnp.pad(w[..., g * H:(g + 1) * H], pad_cfg) for g in range(3)]
    return jnp.concatenate(blocks, axis=-1)


def _pad_row_blocks(w, H, Hp, n_blocks):
    """First axis is n_blocks consecutive blocks of height H; pad each block to Hp."""
    if Hp == H:
        return w
    pad_cfg = [(0, Hp - H)] + [(0, 0)] * (w.ndim - 1)
    blocks = [jnp.pad(w[b * H:(b + 1) * H], pad_cfg) for b in range(n_blocks)]
    return jnp.concatenate(blocks, axis=0)


# ------------------------------------------------------------------
# Fused encoder kernel (single invocation, everything VMEM resident)
# ------------------------------------------------------------------
def _make_encoder_kernel(n_layers, T, Bp, Ep, Hp):
    H3 = 3 * Hp

    def kernel(*refs):
        # ---- unpack: inputs..., outputs..., scratch... ----
        x_ref = refs[0]
        pos = 1
        layer_refs = []
        for _ in range(n_layers):
            # (w_ih_cat, b_gi_cat, w_hh_f, b_hn_f, w_hh_b, b_hn_b)
            layer_refs.append(refs[pos:pos + 6])
            pos += 6
        fc_w_ref, fc_b_ref = refs[pos], refs[pos + 1]
        pos += 2
        out_f_ref, out_b_ref, hid_ref = refs[pos], refs[pos + 1], refs[pos + 2]
        pos += 3
        gi_f, gi_b, seq_f, seq_b = refs[pos], refs[pos + 1], refs[pos + 2], refs[pos + 3]

        def input_projection(layer, w_ih_ref, b_gi_ref):
            # Hoisted input projection: one batched matmul over all T*Bp rows covering
            # BOTH directions (6Hp output lanes), instead of per-step / per-direction
            # matmuls.  Result is split lane-aligned into the fwd / bwd gate buffers.
            if layer == 0:
                x2 = x_ref[...].reshape(T * Bp, Ep)
                gi = jnp.dot(x2, w_ih_ref[...], preferred_element_type=jnp.float32)
            else:
                # previous layer output is kept as separate fwd/bwd buffers; the
                # "concat" is expressed as two matmuls against row-blocks of W_ih.
                xf = seq_f[...].reshape(T * Bp, Hp)
                xb = seq_b[...].reshape(T * Bp, Hp)
                gi = (jnp.dot(xf, w_ih_ref[0:Hp, :],
                              preferred_element_type=jnp.float32)
                      + jnp.dot(xb, w_ih_ref[Hp:2 * Hp, :],
                                preferred_element_type=jnp.float32))
            gi = gi + b_gi_ref[...]
            gi_f[...] = gi[:, :H3].reshape(T, Bp, H3)
            gi_b[...] = gi[:, H3:].reshape(T, Bp, H3)

        def gru_update(gi_t, gh, b_hn, h):
            r = jax.nn.sigmoid(gi_t[:, :Hp] + gh[:, :Hp])
            z = jax.nn.sigmoid(gi_t[:, Hp:2 * Hp] + gh[:, Hp:2 * Hp])
            n = jnp.tanh(gi_t[:, 2 * Hp:] + r * (gh[:, 2 * Hp:] + b_hn))
            return (1.0 - z) * n + z * h

        def run_recurrence(whf_ref, bnf_ref, whb_ref, bnb_ref, dst_f, dst_b):
            # loop-invariant weight loads
            wh_f = whf_ref[...]           # (Hp, 3Hp)
            wh_b = whb_ref[...]
            bn_f = bnf_ref[...]           # (1, Hp)
            bn_b = bnb_ref[...]

            def step(i, carry):
                h_f, h_b = carry
                t_f = i
                t_b = T - 1 - i
                gh_f = jnp.dot(h_f, wh_f, preferred_element_type=jnp.float32)
                gh_b = jnp.dot(h_b, wh_b, preferred_element_type=jnp.float32)
                h_f_new = gru_update(gi_f[t_f], gh_f, bn_f, h_f)
                h_b_new = gru_update(gi_b[t_b], gh_b, bn_b, h_b)
                dst_f[t_f] = h_f_new      # outputs land at their original time index
                dst_b[t_b] = h_b_new
                return (h_f_new, h_b_new)

            h0 = jnp.zeros((Bp, Hp), jnp.float32)
            return jax.lax.fori_loop(0, T, step, (h0, h0), unroll=True)

        h_fwd = h_bwd = None
        for layer in range(n_layers):
            wi_ref, bg_ref, whf_ref, bnf_ref, whb_ref, bnb_ref = layer_refs[layer]
            # projection reads seq_* of the previous layer before the recurrence
            # overwrites them.
            input_projection(layer, wi_ref, bg_ref)
            last = layer == n_layers - 1
            dst_f = out_f_ref if last else seq_f
            dst_b = out_b_ref if last else seq_b
            h_fwd, h_bwd = run_recurrence(whf_ref, bnf_ref, whb_ref, bnb_ref,
                                          dst_f, dst_b)

        # fc + tanh epilogue, fused (uses the last layer's final fwd/bwd hidden states).
        hcat = jnp.concatenate([h_fwd, h_bwd], axis=-1)            # (Bp, 2Hp)
        hid_ref[...] = jnp.tanh(
            jnp.dot(hcat, fc_w_ref[...], preferred_element_type=jnp.float32)
            + fc_b_ref[...])

    return kernel


# ------------------------------------------------------------------
# Full forward (Pallas path)
# ------------------------------------------------------------------
def encoder_forward(params, source):
    # source: (T, B) int32 token ids
    T, B = source.shape
    emb = params["embedding"]
    E = emb.shape[1]
    H = params["gru"][0]["fwd"]["w_hh"].shape[0]
    dec = params["fc_w"].shape[1]
    n_layers = len(params["gru"])

    Bp = _round_up(B, 8)        # full sublanes
    Hp = _round_up(H, 128)      # lane-dense hidden
    Ep = _round_up(E, 128)      # lane-dense embedding
    Np = _round_up(dec, 128)    # lane-dense decoder hidden

    # Embedding gather (+ identity dropout) as plain-JAX glue, then pad to vreg shape.
    embedded = jnp.take(emb, source, axis=0)                       # (T, B, E)
    x = jnp.pad(embedded, ((0, 0), (0, Bp - B), (0, Ep - E)))      # (T, Bp, Ep)

    # Build padded / bias-folded kernel parameters; both directions' input-projection
    # weights are fused along the gate axis -> one matmul per layer in-kernel.
    # TODO(synk): for large H on v6e, weights could be cast to bf16 for the MXU inputs.
    flat_inputs = [x]
    for l, layer_p in enumerate(params["gru"]):
        wi_cat, bg_cat, extra = [], [], []
        for dname in ("fwd", "bwd"):
            p = layer_p[dname]
            w_ih, w_hh, b_ih, b_hh = p["w_ih"], p["w_hh"], p["b_ih"], p["b_hh"]
            # fold b_hh's r/z parts into the hoisted input-projection bias
            b_gi = jnp.concatenate(
                [b_ih[:, :2 * H] + b_hh[:, :2 * H], b_ih[:, 2 * H:]], axis=-1)
            b_hn = b_hh[:, 2 * H:]

            w_ih_p = _pad_gate_cols(w_ih, H, Hp)
            w_hh_p = _pad_gate_cols(w_hh, H, Hp)
            b_gi_p = _pad_gate_cols(b_gi, H, Hp)
            b_hn_p = jnp.pad(b_hn, ((0, 0), (0, Hp - H)))

            if l == 0:
                w_ih_p = jnp.pad(w_ih_p, ((0, Ep - E), (0, 0)))      # (Ep, 3Hp)
            else:
                w_ih_p = _pad_row_blocks(w_ih_p, H, Hp, 2)           # (2Hp, 3Hp)
            w_hh_p = _pad_row_blocks(w_hh_p, H, Hp, 1)               # (Hp, 3Hp)

            wi_cat.append(w_ih_p)
            bg_cat.append(b_gi_p)
            extra += [w_hh_p, b_hn_p]

        flat_inputs += [jnp.concatenate(wi_cat, axis=-1),            # (Din_p, 6Hp)
                        jnp.concatenate(bg_cat, axis=-1)] + extra    # (1, 6Hp), ...

    fc_w_p = _pad_row_blocks(params["fc_w"], H, Hp, 2)               # (2Hp, dec)
    fc_w_p = jnp.pad(fc_w_p, ((0, 0), (0, Np - dec)))                # (2Hp, Np)
    fc_b_p = jnp.pad(params["fc_b"], ((0, 0), (0, Np - dec)))        # (1, Np)
    flat_inputs += [fc_w_p, fc_b_p]

    kernel = _make_encoder_kernel(n_layers, T, Bp, Ep, Hp)
    vmem_spec = pl.BlockSpec(memory_space=pltpu.MemorySpace.VMEM)

    out_f, out_b, hid = pl.pallas_call(
        kernel,
        out_shape=(jax.ShapeDtypeStruct((T, Bp, Hp), jnp.float32),   # last-layer fwd seq
                   jax.ShapeDtypeStruct((T, Bp, Hp), jnp.float32),   # last-layer bwd seq
                   jax.ShapeDtypeStruct((Bp, Np), jnp.float32)),     # fc+tanh hidden
        in_specs=[vmem_spec] * len(flat_inputs),
        out_specs=(vmem_spec, vmem_spec, vmem_spec),
        scratch_shapes=[
            pltpu.VMEM((T, Bp, 3 * Hp), jnp.float32),   # hoisted gates, fwd
            pltpu.VMEM((T, Bp, 3 * Hp), jnp.float32),   # hoisted gates, bwd
            pltpu.VMEM((T, Bp, Hp), jnp.float32),       # inter-layer seq, fwd
            pltpu.VMEM((T, Bp, Hp), jnp.float32),       # inter-layer seq, bwd
        ],
    )(*flat_inputs)

    # strip the padding; concat(fwd, bwd) matches PyTorch bidirectional output layout
    outputs = jnp.concatenate([out_f[:, :B, :H], out_b[:, :B, :H]], axis=-1)
    hidden = hid[:B, :dec]
    return outputs, hidden


# ------------------------------------------------------------------
# Parameter construction (deterministic, PyTorch-shaped, pre-transposed)
# ------------------------------------------------------------------
def init_params(key, input_dim, embedding_dim, enc_hidden_dim, dec_hidden_dim, n_layers):
    params = {}
    k = key

    def nxt():
        nonlocal k
        k, sub = jax.random.split(k)
        return sub

    scale = 0.1
    params["embedding"] = scale * jax.random.normal(
        nxt(), (input_dim, embedding_dim), jnp.float32)

    H = enc_hidden_dim
    params["gru"] = []
    for layer in range(n_layers):
        d_in = embedding_dim if layer == 0 else 2 * H
        layer_p = {}
        for direction in ("fwd", "bwd"):
            # PyTorch stores (3H, d_in) / (3H, H); we store transposed for x @ W.
            layer_p[direction] = dict(
                w_ih=scale * jax.random.normal(nxt(), (d_in, 3 * H), jnp.float32),
                w_hh=scale * jax.random.normal(nxt(), (H, 3 * H), jnp.float32),
                b_ih=scale * jax.random.normal(nxt(), (1, 3 * H), jnp.float32),
                b_hh=scale * jax.random.normal(nxt(), (1, 3 * H), jnp.float32),
            )
        params["gru"].append(layer_p)

    params["fc_w"] = scale * jax.random.normal(
        nxt(), (2 * H, dec_hidden_dim), jnp.float32)
    params["fc_b"] = scale * jax.random.normal(nxt(), (1, dec_hidden_dim), jnp.float32)
    return params


# ------------------------------------------------------------------
# Pure-JAX reference (for silent correctness check)
# ------------------------------------------------------------------
def _gru_cell_ref(x_t, h, p):
    H = h.shape[-1]
    gi = x_t @ p["w_ih"] + p["b_ih"]
    gh = h @ p["w_hh"] + p["b_hh"]
    r = jax.nn.sigmoid(gi[:, :H] + gh[:, :H])
    z = jax.nn.sigmoid(gi[:, H:2 * H] + gh[:, H:2 * H])
    n = jnp.tanh(gi[:, 2 * H:] + r * gh[:, 2 * H:])
    return (1.0 - z) * n + z * h


def _gru_dir_ref(x, p, reverse):
    T, B, _ = x.shape
    H = p["w_hh"].shape[0]
    seq = x[::-1] if reverse else x

    def step(h, x_t):
        h = _gru_cell_ref(x_t, h, p)
        return h, h

    h_n, ys = jax.lax.scan(step, jnp.zeros((B, H), jnp.float32), seq)
    if reverse:
        ys = ys[::-1]
    return ys, h_n


def encoder_forward_ref(params, source):
    embedded = jnp.take(params["embedding"], source, axis=0)
    layer_in = embedded
    h_finals = []
    for layer_p in params["gru"]:
        of, hf = _gru_dir_ref(layer_in, layer_p["fwd"], reverse=False)
        ob, hb = _gru_dir_ref(layer_in, layer_p["bwd"], reverse=True)
        layer_in = jnp.concatenate([of, ob], axis=-1)
        h_finals.extend([hf, hb])
    hidden_cat = jnp.concatenate([h_finals[-2], h_finals[-1]], axis=-1)
    hidden = jnp.tanh(hidden_cat @ params["fc_w"] + params["fc_b"])
    return layer_in, hidden


# ------------------------------------------------------------------
if __name__ == "__main__":
    INPUT_DIM = 50        # vocab size
    EMBEDDING_DIM = 32
    ENC_HIDDEN_DIM = 32
    DEC_HIDDEN_DIM = 32
    N_LAYERS = 2
    SEQ_LEN = 8
    BATCH = 2

    key = jax.random.PRNGKey(0)
    pkey, skey = jax.random.split(key)
    params = init_params(pkey, INPUT_DIM, EMBEDDING_DIM, ENC_HIDDEN_DIM,
                         DEC_HIDDEN_DIM, N_LAYERS)
    source = jax.random.randint(skey, (SEQ_LEN, BATCH), 0, INPUT_DIM, dtype=jnp.int32)

    fwd = jax.jit(functools.partial(encoder_forward, params))
    outputs, hidden = fwd(source)
    jax.block_until_ready((outputs, hidden))

    # silent correctness check vs pure-JAX reference
    out_ref, hid_ref = encoder_forward_ref(params, source)
    assert outputs.shape == (SEQ_LEN, BATCH, 2 * ENC_HIDDEN_DIM)
    assert hidden.shape == (BATCH, DEC_HIDDEN_DIM)
    assert jnp.allclose(outputs, out_ref, atol=2e-3, rtol=2e-3)
    assert jnp.allclose(hidden, hid_ref, atol=2e-3, rtol=2e-3)

    print("KERNEL_OK")
</pallas_src>

<mosaic_0001>
module attributes {stable_mosaic.version = 11 : i64} {
  func.func @kernel(%arg0: memref<8x8x128xf32, #tpu.memory_space<vmem>>, %arg1: memref<128x768xf32, #tpu.memory_space<vmem>>, %arg2: memref<1x768xf32, #tpu.memory_space<vmem>>, %arg3: memref<128x384xf32, #tpu.memory_space<vmem>>, %arg4: memref<1x128xf32, #tpu.memory_space<vmem>>, %arg5: memref<128x384xf32, #tpu.memory_space<vmem>>, %arg6: memref<1x128xf32, #tpu.memory_space<vmem>>, %arg7: memref<256x768xf32, #tpu.memory_space<vmem>>, %arg8: memref<1x768xf32, #tpu.memory_space<vmem>>, %arg9: memref<128x384xf32, #tpu.memory_space<vmem>>, %arg10: memref<1x128xf32, #tpu.memory_space<vmem>>, %arg11: memref<128x384xf32, #tpu.memory_space<vmem>>, %arg12: memref<1x128xf32, #tpu.memory_space<vmem>>, %arg13: memref<256x128xf32, #tpu.memory_space<vmem>>, %arg14: memref<1x128xf32, #tpu.memory_space<vmem>>, %arg15: memref<8x8x128xf32, #tpu.memory_space<vmem>>, %arg16: memref<8x8x128xf32, #tpu.memory_space<vmem>>, %arg17: memref<8x128xf32, #tpu.memory_space<vmem>>, %arg18: memref<8x8x384xf32, #tpu.memory_space<vmem>>, %arg19: memref<8x8x384xf32, #tpu.memory_space<vmem>>, %arg20: memref<8x8x128xf32, #tpu.memory_space<vmem>>, %arg21: memref<8x8x128xf32, #tpu.memory_space<vmem>>) attributes {dimension_semantics = [], scalar_prefetch = 0 : i64, scratch_operands = 4 : i64, tpu.core_type = #tpu.core_type<tc>} {
    %c0 = arith.constant 0 : index
    %c0_0 = arith.constant 0 : index
    %c0_1 = arith.constant 0 : index
    %0 = vector.load %arg0[%c0, %c0_0, %c0_1] : memref<8x8x128xf32, #tpu.memory_space<vmem>>, vector<8x8x128xf32>
    %1 = vector.shape_cast %0 : vector<8x8x128xf32> to vector<64x128xf32>
    %c0_2 = arith.constant 0 : index
    %c0_3 = arith.constant 0 : index
    %2 = vector.load %arg1[%c0_2, %c0_3] : memref<128x768xf32, #tpu.memory_space<vmem>>, vector<128x768xf32>
    %cst = arith.constant dense<0.000000e+00> : vector<64x768xf32>
    %3 = tpu.matmul %1, %2, %cst {dimension_numbers = #tpu.dot_dimension_numbers<[1], [0], [0], [1], [0, 0, 1, 1], [], []>} : vector<64x128xf32>, vector<128x768xf32>, vector<64x768xf32> -> vector<64x768xf32>
    %c0_4 = arith.constant 0 : index
    %c0_5 = arith.constant 0 : index
    %4 = vector.load %arg2[%c0_4, %c0_5] : memref<1x768xf32, #tpu.memory_space<vmem>>, vector<1x768xf32>
    %5 = vector.broadcast %4 : vector<1x768xf32> to vector<64x768xf32>
    %6 = arith.addf %3, %5 : vector<64x768xf32>
    %7 = vector.extract_strided_slice %6 {offsets = [0, 0], sizes = [64, 384], strides = [1, 1]} : vector<64x768xf32> to vector<64x384xf32>
    %8 = vector.shape_cast %7 : vector<64x384xf32> to vector<8x8x384xf32>
    %c0_6 = arith.constant 0 : index
    %c0_7 = arith.constant 0 : index
    %c0_8 = arith.constant 0 : index
    %9 = vector.load %arg18[%c0_6, %c0_7, %c0_8] : memref<8x8x384xf32, #tpu.memory_space<vmem>>, vector<8x8x384xf32>
    tpu.vector_store %arg18[%c0_6, %c0_7, %c0_8], %8 {strides = array<i32>} : memref<8x8x384xf32, #tpu.memory_space<vmem>>, vector<8x8x384xf32>,
    %10 = vector.extract_strided_slice %6 {offsets = [0, 384], sizes = [64, 384], strides = [1, 1]} : vector<64x768xf32> to vector<64x384xf32>
    %11 = vector.shape_cast %10 : vector<64x384xf32> to vector<8x8x384xf32>
    %c0_9 = arith.constant 0 : index
    %c0_10 = arith.constant 0 : index
    %c0_11 = arith.constant 0 : index
    %12 = vector.load %arg19[%c0_9, %c0_10, %c0_11] : memref<8x8x384xf32, #tpu.memory_space<vmem>>, vector<8x8x384xf32>
    tpu.vector_store %arg19[%c0_9, %c0_10, %c0_11], %11 {strides = array<i32>} : memref<8x8x384xf32, #tpu.memory_space<vmem>>, vector<8x8x384xf32>,
    %c0_12 = arith.constant 0 : index
    %c0_13 = arith.constant 0 : index
    %13 = vector.load %arg3[%c0_12, %c0_13] : memref<128x384xf32, #tpu.memory_space<vmem>>, vector<128x384xf32>
    %c0_14 = arith.constant 0 : index
    %c0_15 = arith.constant 0 : index
    %14 = vector.load %arg5[%c0_14, %c0_15] : memref<128x384xf32, #tpu.memory_space<vmem>>, vector<128x384xf32>
    %c0_16 = arith.constant 0 : index
    %c0_17 = arith.constant 0 : index
    %15 = vector.load %arg4[%c0_16, %c0_17] : memref<1x128xf32, #tpu.memory_space<vmem>>, vector<1x128xf32>
    %c0_18 = arith.constant 0 : index
    %c0_19 = arith.constant 0 : index
    %16 = vector.load %arg6[%c0_18, %c0_19] : memref<1x128xf32, #tpu.memory_space<vmem>>, vector<1x128xf32>
    %cst_20 = arith.constant 0.000000e+00 : f32
    %17 = vector.broadcast %cst_20 : f32 to vector<8x128xf32>
    %c0_i32 = arith.constant 0 : i32
    %c7_i32 = arith.constant 7 : i32
    %18 = arith.subi %c7_i32, %c0_i32 : i32
    %cst_21 = arith.constant dense<0.000000e+00> : vector<8x384xf32>
    %19 = tpu.matmul %17, %13, %cst_21 {dimension_numbers = #tpu.dot_dimension_numbers<[1], [0], [0], [1], [0, 0, 1, 1], [], []>} : vector<8x128xf32>, vector<128x384xf32>, vector<8x384xf32> -> vector<8x384xf32>
    %cst_22 = arith.constant dense<0.000000e+00> : vector<8x384xf32>
    %20 = tpu.matmul %17, %14, %cst_22 {dimension_numbers = #tpu.dot_dimension_numbers<[1], [0], [0], [1], [0, 0, 1, 1], [], []>} : vector<8x128xf32>, vector<128x384xf32>, vector<8x384xf32> -> vector<8x384xf32>
    %21 = arith.index_cast %c0_i32 : i32 to index
    %c0_23 = arith.constant 0 : index
    %c0_24 = arith.constant 0 : index
    %22 = vector.load %arg18[%21, %c0_23, %c0_24] : memref<8x8x384xf32, #tpu.memory_space<vmem>>, vector<1x8x384xf32>
    %23 = vector.shape_cast %22 : vector<1x8x384xf32> to vector<8x384xf32>
    %24 = vector.extract_strided_slice %23 {offsets = [0, 0], sizes = [8, 128], strides = [1, 1]} : vector<8x384xf32> to vector<8x128xf32>
    %25 = vector.extract_strided_slice %19 {offsets = [0, 0], sizes = [8, 128], strides = [1, 1]} : vector<8x384xf32> to vector<8x128xf32>
    %26 = arith.addf %24, %25 : vector<8x128xf32>
    %27 = arith.negf %26 : vector<8x128xf32>
    %28 = math.exp %27 : vector<8x128xf32>
    %cst_25 = arith.constant 1.000000e+00 : f32
    %29 = vector.broadcast %cst_25 : f32 to vector<8x128xf32>
    %30 = arith.addf %29, %28 : vector<8x128xf32>
    %31 = arith.divf %29, %30 : vector<8x128xf32>
    %32 = vector.extract_strided_slice %23 {offsets = [0, 128], sizes = [8, 128], strides = [1, 1]} : vector<8x384xf32> to vector<8x128xf32>
    %33 = vector.extract_strided_slice %19 {offsets = [0, 128], sizes = [8, 128], strides = [1, 1]} : vector<8x384xf32> to vector<8x128xf32>
    %34 = arith.addf %32, %33 : vector<8x128xf32>
    %35 = arith.negf %34 : vector<8x128xf32>
    %36 = math.exp %35 : vector<8x128xf32>
    %cst_26 = arith.constant 1.000000e+00 : f32
    %37 = vector.broadcast %cst_26 : f32 to vector<8x128xf32>
    %38 = arith.addf %37, %36 : vector<8x128xf32>
    %39 = arith.divf %37, %38 : vector<8x128xf32>
    %40 = vector.extract_strided_slice %23 {offsets = [0, 256], sizes = [8, 128], strides = [1, 1]} : vector<8x384xf32> to vector<8x128xf32>
    %41 = vector.extract_strided_slice %19 {offsets = [0, 256], sizes = [8, 128], strides = [1, 1]} : vector<8x384xf32> to vector<8x128xf32>
    %42 = vector.broadcast %15 : vector<1x128xf32> to vector<8x128xf32>
    %43 = arith.addf %41, %42 : vector<8x128xf32>
    %44 = arith.mulf %31, %43 : vector<8x128xf32>
    %45 = arith.addf %40, %44 : vector<8x128xf32>
    %46 = math.tanh %45 : vector<8x128xf32>
    %cst_27 = arith.constant 1.000000e+00 : f32
    %47 = vector.broadcast %cst_27 : f32 to vector<8x128xf32>
    %48 = arith.subf %47, %39 : vector<8x128xf32>
    %49 = arith.mulf %48, %46 : vector<8x128xf32>
    %50 = arith.mulf %39, %17 : vector<8x128xf32>
    %51 = arith.addf %49, %50 : vector<8x128xf32>
    %52 = arith.index_cast %18 : i32 to index
    %c0_28 = arith.constant 0 : index
    %c0_29 = arith.constant 0 : index
    %53 = vector.load %arg19[%52, %c0_28, %c0_29] : memref<8x8x384xf32, #tpu.memory_space<vmem>>, vector<1x8x384xf32>
    %54 = vector.shape_cast %53 : vector<1x8x384xf32> to vector<8x384xf32>
    %55 = vector.extract_strided_slice %54 {offsets = [0, 0], sizes = [8, 128], strides = [1, 1]} : vector<8x384xf32> to vector<8x128xf32>
    %56 = vector.extract_strided_slice %20 {offsets = [0, 0], sizes = [8, 128], strides = [1, 1]} : vector<8x384xf32> to vector<8x128xf32>
    %57 = arith.addf %55, %56 : vector<8x128xf32>
    %58 = arith.negf %57 : vector<8x128xf32>
    %59 = math.exp %58 : vector<8x128xf32>
    %cst_30 = arith.constant 1.000000e+00 : f32
    %60 = vector.broadcast %cst_30 : f32 to vector<8x128xf32>
    %61 = arith.addf %60, %59 : vector<8x128xf32>
    %62 = arith.divf %60, %61 : vector<8x128xf32>
    %63 = vector.extract_strided_slice %54 {offsets = [0, 128], sizes = [8, 128], strides = [1, 1]} : vector<8x384xf32> to vector<8x128xf32>
    %64 = vector.extract_strided_slice %20 {offsets = [0, 128], sizes = [8, 128], strides = [1, 1]} : vector<8x384xf32> to vector<8x128xf32>
    %65 = arith.addf %63, %64 : vector<8x128xf32>
    %66 = arith.negf %65 : vector<8x128xf32>
    %67 = math.exp %66 : vector<8x128xf32>
    %cst_31 = arith.constant 1.000000e+00 : f32
    %68 = vector.broadcast %cst_31 : f32 to vector<8x128xf32>
    %69 = arith.addf %68, %67 : vector<8x128xf32>
    %70 = arith.divf %68, %69 : vector<8x128xf32>
    %71 = vector.extract_strided_slice %54 {offsets = [0, 256], sizes = [8, 128], strides = [1, 1]} : vector<8x384xf32> to vector<8x128xf32>
    %72 = vector.extract_strided_slice %20 {offsets = [0, 256], sizes = [8, 128], strides = [1, 1]} : vector<8x384xf32> to vector<8x128xf32>
    %73 = vector.broadcast %16 : vector<1x128xf32> to vector<8x128xf32>
    %74 = arith.addf %72, %73 : vector<8x128xf32>
    %75 = arith.mulf %62, %74 : vector<8x128xf32>
    %76 = arith.addf %71, %75 : vector<8x128xf32>
    %77 = math.tanh %76 : vector<8x128xf32>
    %cst_32 = arith.constant 1.000000e+00 : f32
    %78 = vector.broadcast %cst_32 : f32 to vector<8x128xf32>
    %79 = arith.subf %78, %70 : vector<8x128xf32>
    %80 = arith.mulf %79, %77 : vector<8x128xf32>
    %81 = arith.mulf %70, %17 : vector<8x128xf32>
    %82 = arith.addf %80, %81 : vector<8x128xf32>
    %83 = arith.index_cast %c0_i32 : i32 to index
    %c0_33 = arith.constant 0 : index
    %c0_34 = arith.constant 0 : index
    %84 = vector.load %arg20[%83, %c0_33, %c0_34] : memref<8x8x128xf32, #tpu.memory_space<vmem>>, vector<1x8x128xf32>
    %85 = vector.shape_cast %84 : vector<1x8x128xf32> to vector<8x128xf32>
    %86 = vector.shape_cast %51 : vector<8x128xf32> to vector<1x8x128xf32>
    tpu.vector_store %arg20[%83, %c0_33, %c0_34], %86 {strides = array<i32>} : memref<8x8x128xf32, #tpu.memory_space<vmem>>, vector<1x8x128xf32>,
    %87 = arith.index_cast %18 : i32 to index
    %c0_35 = arith.constant 0 : index
    %c0_36 = arith.constant 0 : index
    %88 = vector.load %arg21[%87, %c0_35, %c0_36] : memref<8x8x128xf32, #tpu.memory_space<vmem>>, vector<1x8x128xf32>
    %89 = vector.shape_cast %88 : vector<1x8x128xf32> to vector<8x128xf32>
    %90 = vector.shape_cast %82 : vector<8x128xf32> to vector<1x8x128xf32>
    tpu.vector_store %arg21[%87, %c0_35, %c0_36], %90 {strides = array<i32>} : memref<8x8x128xf32, #tpu.memory_space<vmem>>, vector<1x8x128xf32>,
    %c1_i32 = arith.constant 1 : i32
    %c7_i32_37 = arith.constant 7 : i32
    %91 = arith.subi %c7_i32_37, %c1_i32 : i32
    %cst_38 = arith.constant dense<0.000000e+00> : vector<8x384xf32>
    %92 = tpu.matmul %51, %13, %cst_38 {dimension_numbers = #tpu.dot_dimension_numbers<[1], [0], [0], [1], [0, 0, 1, 1], [], []>} : vector<8x128xf32>, vector<128x384xf32>, vector<8x384xf32> -> vector<8x384xf32>
    %cst_39 = arith.constant dense<0.000000e+00> : vector<8x384xf32>
    %93 = tpu.matmul %82, %14, %cst_39 {dimension_numbers = #tpu.dot_dimension_numbers<[1], [0], [0], [1], [0, 0, 1, 1], [], []>} : vector<8x128xf32>, vector<128x384xf32>, vector<8x384xf32> -> vector<8x384xf32>
    %94 = arith.index_cast %c1_i32 : i32 to index
    %c0_40 = arith.constant 0 : index
    %c0_41 = arith.constant 0 : index
    %95 = vector.load %arg18[%94, %c0_40, %c0_41] : memref<8x8x384xf32, #tpu.memory_space<vmem>>, vector<1x8x384xf32>
    %96 = vector.shape_cast %95 : vector<1x8x384xf32> to vector<8x384xf32>
    %97 = vector.extract_strided_slice %96 {offsets = [0, 0], sizes = [8, 128], strides = [1, 1]} : vector<8x384xf32> to vector<8x128xf32>
    %98 = vector.extract_strided_slice %92 {offsets = [0, 0], sizes = [8, 128], strides = [1, 1]} : vector<8x384xf32> to vector<8x128xf32>
    %99 = arith.addf %97, %98 : vector<8x128xf32>
    %100 = arith.negf %99 : vector<8x128xf32>
    %101 = math.exp %100 : vector<8x128xf32>
    %cst_42 = arith.constant 1.000000e+00 : f32
    %102 = vector.broadcast %cst_42 : f32 to vector<8x128xf32>
    %103 = arith.addf %102, %101 : vector<8x128xf32>
    %104 = arith.divf %102, %103 : vector<8x128xf32>
    %105 = vector.extract_strided_slice %96 {offsets = [0, 128], sizes = [8, 128], strides = [1, 1]} : vector<8x384xf32> to vector<8x128xf32>
    %106 = vector.extract_strided_slice %92 {offsets = [0, 128], sizes = [8, 128], strides = [1, 1]} : vector<8x384xf32> to vector<8x128xf32>
    %107 = arith.addf %105, %106 : vector<8x128xf32>
    %108 = arith.negf %107 : vector<8x128xf32>
    %109 = math.exp %108 : vector<8x128xf32>
    %cst_43 = arith.constant 1.000000e+00 : f32
    %110 = vector.broadcast %cst_43 : f32 to vector<8x128xf32>
    %111 = arith.addf %110, %109 : vector<8x128xf32>
    %112 = arith.divf %110, %111 : vector<8x128xf32>
    %113 = vector.extract_strided_slice %96 {offsets = [0, 256], sizes = [8, 128], strides = [1, 1]} : vector<8x384xf32> to vector<8x128xf32>
    %114 = vector.extract_strided_slice %92 {offsets = [0, 256], sizes = [8, 128], strides = [1, 1]} : vector<8x384xf32> to vector<8x128xf32>
    %115 = vector.broadcast %15 : vector<1x128xf32> to vector<8x128xf32>
    %116 = arith.addf %114, %115 : vector<8x128xf32>
    %117 = arith.mulf %104, %116 : vector<8x128xf32>
    %118 = arith.addf %113, %117 : vector<8x128xf32>
    %119 = math.tanh %118 : vector<8x128xf32>
    %cst_44 = arith.constant 1.000000e+00 : f32
    %120 = vector.broadcast %cst_44 : f32 to vector<8x128xf32>
    %121 = arith.subf %120, %112 : vector<8x128xf32>
    %122 = arith.mulf %121, %119 : vector<8x128xf32>
    %123 = arith.mulf %112, %51 : vector<8x128xf32>
    %124 = arith.addf %122, %123 : vector<8x128xf32>
    %125 = arith.index_cast %91 : i32 to index
    %c0_45 = arith.constant 0 : index
    %c0_46 = arith.constant 0 : index
    %126 = vector.load %arg19[%125, %c0_45, %c0_46] : memref<8x8x384xf32, #tpu.memory_space<vmem>>, vector<1x8x384xf32>
    %127 = vector.shape_cast %126 : vector<1x8x384xf32> to vector<8x384xf32>
    %128 = vector.extract_strided_slice %127 {offsets = [0, 0], sizes = [8, 128], strides = [1, 1]} : vector<8x384xf32> to vector<8x128xf32>
    %129 = vector.extract_strided_slice %93 {offsets = [0, 0], sizes = [8, 128], strides = [1, 1]} : vector<8x384xf32> to vector<8x128xf32>
    %130 = arith.addf %128, %129 : vector<8x128xf32>
    %131 = arith.negf %130 : vector<8x128xf32>
    %132 = math.exp %131 : vector<8x128xf32>
    %cst_47 = arith.constant 1.000000e+00 : f32
    %133 = vector.broadcast %cst_47 : f32 to vector<8x128xf32>
    %134 = arith.addf %133, %132 : vector<8x128xf32>
    %135 = arith.divf %133, %134 : vector<8x128xf32>
    %136 = vector.extract_strided_slice %127 {offsets = [0, 128], sizes = [8, 128], strides = [1, 1]} : vector<8x384xf32> to vector<8x128xf32>
    %137 = vector.extract_strided_slice %93 {offsets = [0, 128], sizes = [8, 128], strides = [1, 1]} : vector<8x384xf32> to vector<8x128xf32>
    %138 = arith.addf %136, %137 : vector<8x128xf32>
    %139 = arith.negf %138 : vector<8x128xf32>
    %140 = math.exp %139 : vector<8x128xf32>
    %cst_48 = arith.constant 1.000000e+00 : f32
    %141 = vector.broadcast %cst_48 : f32 to vector<8x128xf32>
    %142 = arith.addf %141, %140 : vector<8x128xf32>
    %143 = arith.divf %141, %142 : vector<8x128xf32>
    %144 = vector.extract_strided_slice %127 {offsets = [0, 256], sizes = [8, 128], strides = [1, 1]} : vector<8x384xf32> to vector<8x128xf32>
    %145 = vector.extract_strided_slice %93 {offsets = [0, 256], sizes = [8, 128], strides = [1, 1]} : vector<8x384xf32> to vector<8x128xf32>
    %146 = vector.broadcast %16 : vector<1x128xf32> to vector<8x128xf32>
    %147 = arith.addf %145, %146 : vector<8x128xf32>
    %148 = arith.mulf %135, %147 : vector<8x128xf32>
    %149 = arith.addf %144, %148 : vector<8x128xf32>
    %150 = math.tanh %149 : vector<8x128xf32>
    %cst_49 = arith.constant 1.000000e+00 : f32
    %151 = vector.broadcast %cst_49 : f32 to vector<8x128xf32>
    %152 = arith.subf %151, %143 : vector<8x128xf32>
    %153 = arith.mulf %152, %150 : vector<8x128xf32>
    %154 = arith.mulf %143, %82 : vector<8x128xf32>
    %155 = arith.addf %153, %154 : vector<8x128xf32>
    %156 = arith.index_cast %c1_i32 : i32 to index
    %c0_50 = arith.constant 0 : index
    %c0_51 = arith.constant 0 : index
    %157 = vector.load %arg20[%156, %c0_50, %c0_51] : memref<8x8x128xf32, #tpu.memory_space<vmem>>, vector<1x8x128xf32>
    %158 = vector.shape_cast %157 : vector<1x8x128xf32> to vector<8x128xf32>
    %159 = vector.shape_cast %124 : vector<8x128xf32> to vector<1x8x128xf32>
    tpu.vector_store %arg20[%156, %c0_50, %c0_51], %159 {strides = array<i32>} : memref<8x8x128xf32, #tpu.memory_space<vmem>>, vector<1x8x128xf32>,
    %160 = arith.index_cast %91 : i32 to index
    %c0_52 = arith.constant 0 : index
    %c0_53 = arith.constant 0 : index
    %161 = vector.load %arg21[%160, %c0_52, %c0_53] : memref<8x8x128xf32, #tpu.memory_space<vmem>>, vector<1x8x128xf32>
    %162 = vector.shape_cast %161 : vector<1x8x128xf32> to vector<8x128xf32>
    %163 = vector.shape_cast %155 : vector<8x128xf32> to vector<1x8x128xf32>
    tpu.vector_store %arg21[%160, %c0_52, %c0_53], %163 {strides = array<i32>} : memref<8x8x128xf32, #tpu.memory_space<vmem>>, vector<1x8x128xf32>,
    %c2_i32 = arith.constant 2 : i32
    %c7_i32_54 = arith.constant 7 : i32
    %164 = arith.subi %c7_i32_54, %c2_i32 : i32
    %cst_55 = arith.constant dense<0.000000e+00> : vector<8x384xf32>
    %165 = tpu.matmul %124, %13, %cst_55 {dimension_numbers = #tpu.dot_dimension_numbers<[1], [0], [0], [1], [0, 0, 1, 1], [], []>} : vector<8x128xf32>, vector<128x384xf32>, vector<8x384xf32> -> vector<8x384xf32>
    %cst_56 = arith.constant dense<0.000000e+00> : vector<8x384xf32>
    %166 = tpu.matmul %155, %14, %cst_56 {dimension_numbers = #tpu.dot_dimension_numbers<[1], [0], [0], [1], [0, 0, 1, 1], [], []>} : vector<8x128xf32>, vector<128x384xf32>, vector<8x384xf32> -> vector<8x384xf32>
    %167 = arith.index_cast %c2_i32 : i32 to index
    %c0_57 = arith.constant 0 : index
    %c0_58 = arith.constant 0 : index
    %168 = vector.load %arg18[%167, %c0_57, %c0_58] : memref<8x8x384xf32, #tpu.memory_space<vmem>>, vector<1x8x384xf32>
    %169 = vector.shape_cast %168 : vector<1x8x384xf32> to vector<8x384xf32>
    %170 = vector.extract_strided_slice %169 {offsets = [0, 0], sizes = [8, 128], strides = [1, 1]} : vector<8x384xf32> to vector<8x128xf32>
    %171 = vector.extract_strided_slice %165 {offsets = [0, 0], sizes = [8, 128], strides = [1, 1]} : vector<8x384xf32> to vector<8x128xf32>
    %172 = arith.addf %170, %171 : vector<8x128xf32>
    %173 = arith.negf %172 : vector<8x128xf32>
    %174 = math.exp %173 : vector<8x128xf32>
    %cst_59 = arith.constant 1.000000e+00 : f32
    %175 = vector.broadcast %cst_59 : f32 to vector<8x128xf32>
    %176 = arith.addf %175, %174 : vector<8x128xf32>
    %177 = arith.divf %175, %176 : vector<8x128xf32>
    %178 = vector.extract_strided_slice %169 {offsets = [0, 128], sizes = [8, 128], strides = [1, 1]} : vector<8x384xf32> to vector<8x128xf32>
    %179 = vector.extract_strided_slice %165 {offsets = [0, 128], sizes = [8, 128], strides = [1, 1]} : vector<8x384xf32> to vector<8x128xf32>
    %180 = arith.addf %178, %179 : vector<8x128xf32>
    %181 = arith.negf %180 : vector<8x128xf32>
    %182 = math.exp %181 : vector<8x128xf32>
    %cst_60 = arith.constant 1.000000e+00 : f32
    %183 = vector.broadcast %cst_60 : f32 to vector<8x128xf32>
    %184 = arith.addf %183, %182 : vector<8x128xf32>
    %185 = arith.divf %183, %184 : vector<8x128xf32>
    %186 = vector.extract_strided_slice %169 {offsets = [0, 256], sizes = [8, 128], strides = [1, 1]} : vector<8x384xf32> to vector<8x128xf32>
    %187 = vector.extract_strided_slice %165 {offsets = [0, 256], sizes = [8, 128], strides = [1, 1]} : vector<8x384xf32> to vector<8x128xf32>
    %188 = vector.broadcast %15 : vector<1x128xf32> to vector<8x128xf32>
    %189 = arith.addf %187, %188 : vector<8x128xf32>
    %190 = arith.mulf %177, %189 : vector<8x128xf32>
    %191 = arith.addf %186, %190 : vector<8x128xf32>
    %192 = math.tanh %191 : vector<8x128xf32>
    %cst_61 = arith.constant 1.000000e+00 : f32
    %193 = vector.broadcast %cst_61 : f32 to vector<8x128xf32>
    %194 = arith.subf %193, %185 : vector<8x128xf32>
    %195 = arith.mulf %194, %192 : vector<8x128xf32>
    %196 = arith.mulf %185, %124 : vector<8x128xf32>
    %197 = arith.addf %195, %196 : vector<8x128xf32>
    %198 = arith.index_cast %164 : i32 to index
    %c0_62 = arith.constant 0 : index
    %c0_63 = arith.constant 0 : index
    %199 = vector.load %arg19[%198, %c0_62, %c0_63] : memref<8x8x384xf32, #tpu.memory_space<vmem>>, vector<1x8x384xf32>
    %200 = vector.shape_cast %199 : vector<1x8x384xf32> to vector<8x384xf32>
    %201 = vector.extract_strided_slice %200 {offsets = [0, 0], sizes = [8, 128], strides = [1, 1]} : vector<8x384xf32> to vector<8x128xf32>
    %202 = vector.extract_strided_slice %166 {offsets = [0, 0], sizes = [8, 128], strides = [1, 1]} : vector<8x384xf32> to vector<8x128xf32>
    %203 = arith.addf %201, %202 : vector<8x128xf32>
    %204 = arith.negf %203 : vector<8x128xf32>
    %205 = math.exp %204 : vector<8x128xf32>
    %cst_64 = arith.constant 1.000000e+00 : f32
    %206 = vector.broadcast %cst_64 : f32 to vector<8x128xf32>
    %207 = arith.addf %206, %205 : vector<8x128xf32>
    %208 = arith.divf %206, %207 : vector<8x128xf32>
    %209 = vector.extract_strided_slice %200 {offsets = [0, 128], sizes = [8, 128], strides = [1, 1]} : vector<8x384xf32> to vector<8x128xf32>
    %210 = vector.extract_strided_slice %166 {offsets = [0, 128], sizes = [8, 128], strides = [1, 1]} : vector<8x384xf32> to vector<8x128xf32>
    %211 = arith.addf %209, %210 : vector<8x128xf32>
    %212 = arith.negf %211 : vector<8x128xf32>
    %213 = math.exp %212 : vector<8x128xf32>
    %cst_65 = arith.constant 1.000000e+00 : f32
    %214 = vector.broadcast %cst_65 : f32 to vector<8x128xf32>
    %215 = arith.addf %214, %213 : vector<8x128xf32>
    %216 = arith.divf %214, %215 : vector<8x128xf32>
    %217 = vector.extract_strided_slice %200 {offsets = [0, 256], sizes = [8, 128], strides = [1, 1]} : vector<8x384xf32> to vector<8x128xf32>
    %218 = vector.extract_strided_slice %166 {offsets = [0, 256], sizes = [8, 128], strides = [1, 1]} : vector<8x384xf32> to vector<8x128xf32>
    %219 = vector.broadcast %16 : vector<1x128xf32> to vector<8x128xf32>
    %220 = arith.addf %218, %219 : vector<8x128xf32>
    %221 = arith.mulf %208, %220 : vector<8x128xf32>
    %222 = arith.addf %217, %221 : vector<8x128xf32>
    %223 = math.tanh %222 : vector<8x128xf32>
    %cst_66 = arith.constant 1.000000e+00 : f32
    %224 = vector.broadcast %cst_66 : f32 to vector<8x128xf32>
    %225 = arith.subf %224, %216 : vector<8x128xf32>
    %226 = arith.mulf %225, %223 : vector<8x128xf32>
    %227 = arith.mulf %216, %155 : vector<8x128xf32>
    %228 = arith.addf %226, %227 : vector<8x128xf32>
    %229 = arith.index_cast %c2_i32 : i32 to index
    %c0_67 = arith.constant 0 : index
    %c0_68 = arith.constant 0 : index
    %230 = vector.load %arg20[%229, %c0_67, %c0_68] : memref<8x8x128xf32, #tpu.memory_space<vmem>>, vector<1x8x128xf32>
    %231 = vector.shape_cast %230 : vector<1x8x128xf32> to vector<8x128xf32>
    %232 = vector.shape_cast %197 : vector<8x128xf32> to vector<1x8x128xf32>
    tpu.vector_store %arg20[%229, %c0_67, %c0_68], %232 {strides = array<i32>} : memref<8x8x128xf32, #tpu.memory_space<vmem>>, vector<1x8x128xf32>,
    %233 = arith.index_cast %164 : i32 to index
    %c0_69 = arith.constant 0 : index
    %c0_70 = arith.constant 0 : index
    %234 = vector.load %arg21[%233, %c0_69, %c0_70] : memref<8x8x128xf32, #tpu.memory_space<vmem>>, vector<1x8x128xf32>
    %235 = vector.shape_cast %234 : vector<1x8x128xf32> to vector<8x128xf32>
    %236 = vector.shape_cast %228 : vector<8x128xf32> to vector<1x8x128xf32>
    tpu.vector_store %arg21[%233, %c0_69, %c0_70], %236 {strides = array<i32>} : memref<8x8x128xf32, #tpu.memory_space<vmem>>, vector<1x8x128xf32>,
    %c3_i32 = arith.constant 3 : i32
    %c7_i32_71 = arith.constant 7 : i32
    %237 = arith.subi %c7_i32_71, %c3_i32 : i32
    %cst_72 = arith.constant dense<0.000000e+00> : vector<8x384xf32>
    %238 = tpu.matmul %197, %13, %cst_72 {dimension_numbers = #tpu.dot_dimension_numbers<[1], [0], [0], [1], [0, 0, 1, 1], [], []>} : vector<8x128xf32>, vector<128x384xf32>, vector<8x384xf32> -> vector<8x384xf32>
    %cst_73 = arith.constant dense<0.000000e+00> : vector<8x384xf32>
    %239 = tpu.matmul %228, %14, %cst_73 {dimension_numbers = #tpu.dot_dimension_numbers<[1], [0], [0], [1], [0, 0, 1, 1], [], []>} : vector<8x128xf32>, vector<128x384xf32>, vector<8x384xf32> -> vector<8x384xf32>
    %240 = arith.index_cast %c3_i32 : i32 to index
    %c0_74 = arith.constant 0 : index
    %c0_75 = arith.constant 0 : index
    %241 = vector.load %arg18[%240, %c0_74, %c0_75] : memref<8x8x384xf32, #tpu.memory_space<vmem>>, vector<1x8x384xf32>
    %242 = vector.shape_cast %241 : vector<1x8x384xf32> to vector<8x384xf32>
    %243 = vector.extract_strided_slice %242 {offsets = [0, 0], sizes = [8, 128], strides = [1, 1]} : vector<8x384xf32> to vector<8x128xf32>
    %244 = vector.extract_strided_slice %238 {offsets = [0, 0], sizes = [8, 128], strides = [1, 1]} : vector<8x384xf32> to vector<8x128xf32>
    %245 = arith.addf %243, %244 : vector<8x128xf32>
    %246 = arith.negf %245 : vector<8x128xf32>
    %247 = math.exp %246 : vector<8x128xf32>
    %cst_76 = arith.constant 1.000000e+00 : f32
    %248 = vector.broadcast %cst_76 : f32 to vector<8x128xf32>
    %249 = arith.addf %248, %247 : vector<8x128xf32>
    %250 = arith.divf %248, %249 : vector<8x128xf32>
    %251 = vector.extract_strided_slice %242 {offsets = [0, 128], sizes = [8, 128], strides = [1, 1]} : vector<8x384xf32> to vector<8x128xf32>
    %252 = vector.extract_strided_slice %238 {offsets = [0, 128], sizes = [8, 128], strides = [1, 1]} : vector<8x384xf32> to vector<8x128xf32>
    %253 = arith.addf %251, %252 : vector<8x128xf32>
    %254 = arith.negf %253 : vector<8x128xf32>
    %255 = math.exp %254 : vector<8x128xf32>
    %cst_77 = arith.constant 1.000000e+00 : f32
    %256 = vector.broadcast %cst_77 : f32 to vector<8x128xf32>
    %257 = arith.addf %256, %255 : vector<8x128xf32>
    %258 = arith.divf %256, %257 : vector<8x128xf32>
    %259 = vector.extract_strided_slice %242 {offsets = [0, 256], sizes = [8, 128], strides = [1, 1]} : vector<8x384xf32> to vector<8x128xf32>
    %260 = vector.extract_strided_slice %238 {offsets = [0, 256], sizes = [8, 128], strides = [1, 1]} : vector<8x384xf32> to vector<8x128xf32>
    %261 = vector.broadcast %15 : vector<1x128xf32> to vector<8x128xf32>
    %262 = arith.addf %260, %261 : vector<8x128xf32>
    %263 = arith.mulf %250, %262 : vector<8x128xf32>
    %264 = arith.addf %259, %263 : vector<8x128xf32>
    %265 = math.tanh %264 : vector<8x128xf32>
    %cst_78 = arith.constant 1.000000e+00 : f32
    %266 = vector.broadcast %cst_78 : f32 to vector<8x128xf32>
    %267 = arith.subf %266, %258 : vector<8x128xf32>
    %268 = arith.mulf %267, %265 : vector<8x128xf32>
    %269 = arith.mulf %258, %197 : vector<8x128xf32>
    %270 = arith.addf %268, %269 : vector<8x128xf32>
    %271 = arith.index_cast %237 : i32 to index
    %c0_79 = arith.constant 0 : index
    %c0_80 = arith.constant 0 : index
    %272 = vector.load %arg19[%271, %c0_79, %c0_80] : memref<8x8x384xf32, #tpu.memory_space<vmem>>, vector<1x8x384xf32>
    %273 = vector.shape_cast %272 : vector<1x8x384xf32> to vector<8x384xf32>
    %274 = vector.extract_strided_slice %273 {offsets = [0, 0], sizes = [8, 128], strides = [1, 1]} : vector<8x384xf32> to vector<8x128xf32>
    %275 = vector.extract_strided_slice %239 {offsets = [0, 0], sizes = [8, 128], strides = [1, 1]} : vector<8x384xf32> to vector<8x128xf32>
    %276 = arith.addf %274, %275 : vector<8x128xf32>
    %277 = arith.negf %276 : vector<8x128xf32>
    %278 = math.exp %277 : vector<8x128xf32>
    %cst_81 = arith.constant 1.000000e+00 : f32
    %279 = vector.broadcast %cst_81 : f32 to vector<8x128xf32>
    %280 = arith.addf %279, %278 : vector<8x128xf32>
    %281 = arith.divf %279, %280 : vector<8x128xf32>
    %282 = vector.extract_strided_slice %273 {offsets = [0, 128], sizes = [8, 128], strides = [1, 1]} : vector<8x384xf32> to vector<8x128xf32>
    %283 = vector.extract_strided_slice %239 {offsets = [0, 128], sizes = [8, 128], strides = [1, 1]} : vector<8x384xf32> to vector<8x128xf32>
    %284 = arith.addf %282, %283 : vector<8x128xf32>
    %285 = arith.negf %284 : vector<8x128xf32>
    %286 = math.exp %285 : vector<8x128xf32>
    %cst_82 = arith.constant 1.000000e+00 : f32
    %287 = vector.broadcast %cst_82 : f32 to vector<8x128xf32>
    %288 = arith.addf %287, %286 : vector<8x128xf32>
    %289 = arith.divf %287, %288 : vector<8x128xf32>
    %290 = vector.extract_strided_slice %273 {offsets = [0, 256], sizes = [8, 128], strides = [1, 1]} : vector<8x384xf32> to vector<8x128xf32>
    %291 = vector.extract_strided_slice %239 {offsets = [0, 256], sizes = [8, 128], strides = [1, 1]} : vector<8x384xf32> to vector<8x128xf32>
    %292 = vector.broadcast %16 : vector<1x128xf32> to vector<8x128xf32>
    %293 = arith.addf %291, %292 : vector<8x128xf32>
    %294 = arith.mulf %281, %293 : vector<8x128xf32>
    %295 = arith.addf %290, %294 : vector<8x128xf32>
    %296 = math.tanh %295 : vector<8x128xf32>
    %cst_83 = arith.constant 1.000000e+00 : f32
    %297 = vector.broadcast %cst_83 : f32 to vector<8x128xf32>
    %298 = arith.subf %297, %289 : vector<8x128xf32>
    %299 = arith.mulf %298, %296 : vector<8x128xf32>
    %300 = arith.mulf %289, %228 : vector<8x128xf32>
    %301 = arith.addf %299, %300 : vector<8x128xf32>
    %302 = arith.index_cast %c3_i32 : i32 to index
    %c0_84 = arith.constant 0 : index
    %c0_85 = arith.constant 0 : index
    %303 = vector.load %arg20[%302, %c0_84, %c0_85] : memref<8x8x128xf32, #tpu.memory_space<vmem>>, vector<1x8x128xf32>
    %304 = vector.shape_cast %303 : vector<1x8x128xf32> to vector<8x128xf32>
    %305 = vector.shape_cast %270 : vector<8x128xf32> to vector<1x8x128xf32>
    tpu.vector_store %arg20[%302, %c0_84, %c0_85], %305 {strides = array<i32>} : memref<8x8x128xf32, #tpu.memory_space<vmem>>, vector<1x8x128xf32>,
    %306 = arith.index_cast %237 : i32 to index
    %c0_86 = arith.constant 0 : index
    %c0_87 = arith.constant 0 : index
    %307 = vector.load %arg21[%306, %c0_86, %c0_87] : memref<8x8x128xf32, #tpu.memory_space<vmem>>, vector<1x8x128xf32>
    %308 = vector.shape_cast %307 : vector<1x8x128xf32> to vector<8x128xf32>
    %309 = vector.shape_cast %301 : vector<8x128xf32> to vector<1x8x128xf32>
    tpu.vector_store %arg21[%306, %c0_86, %c0_87], %309 {strides = array<i32>} : memref<8x8x128xf32, #tpu.memory_space<vmem>>, vector<1x8x128xf32>,
    %c4_i32 = arith.constant 4 : i32
    %c7_i32_88 = arith.constant 7 : i32
    %310 = arith.subi %c7_i32_88, %c4_i32 : i32
    %cst_89 = arith.constant dense<0.000000e+00> : vector<8x384xf32>
    %311 = tpu.matmul %270, %13, %cst_89 {dimension_numbers = #tpu.dot_dimension_numbers<[1], [0], [0], [1], [0, 0, 1, 1], [], []>} : vector<8x128xf32>, vector<128x384xf32>, vector<8x384xf32> -> vector<8x384xf32>
    %cst_90 = arith.constant dense<0.000000e+00> : vector<8x384xf32>
    %312 = tpu.matmul %301, %14, %cst_90 {dimension_numbers = #tpu.dot_dimension_numbers<[1], [0], [0], [1], [0, 0, 1, 1], [], []>} : vector<8x128xf32>, vector<128x384xf32>, vector<8x384xf32> -> vector<8x384xf32>
    %313 = arith.index_cast %c4_i32 : i32 to index
    %c0_91 = arith.constant 0 : index
    %c0_92 = arith.constant 0 : index
    %314 = vector.load %arg18[%313, %c0_91, %c0_92] : memref<8x8x384xf32, #tpu.memory_space<vmem>>, vector<1x8x384xf32>
    %315 = vector.shape_cast %314 : vector<1x8x384xf32> to vector<8x384xf32>
    %316 = vector.extract_strided_slice %315 {offsets = [0, 0], sizes = [8, 128], strides = [1, 1]} : vector<8x384xf32> to vector<8x128xf32>
    %317 = vector.extract_strided_slice %311 {offsets = [0, 0], sizes = [8, 128], strides = [1, 1]} : vector<8x384xf32> to vector<8x128xf32>
    %318 = arith.addf %316, %317 : vector<8x128xf32>
    %319 = arith.negf %318 : vector<8x128xf32>
    %320 = math.exp %319 : vector<8x128xf32>
    %cst_93 = arith.constant 1.000000e+00 : f32
    %321 = vector.broadcast %cst_93 : f32 to vector<8x128xf32>
    %322 = arith.addf %321, %320 : vector<8x128xf32>
    %323 = arith.divf %321, %322 : vector<8x128xf32>
    %324 = vector.extract_strided_slice %315 {offsets = [0, 128], sizes = [8, 128], strides = [1, 1]} : vector<8x384xf32> to vector<8x128xf32>
    %325 = vector.extract_strided_slice %311 {offsets = [0, 128], sizes = [8, 128], strides = [1, 1]} : vector<8x384xf32> to vector<8x128xf32>
    %326 = arith.addf %324, %325 : vector<8x128xf32>
    %327 = arith.negf %326 : vector<8x128xf32>
    %328 = math.exp %327 : vector<8x128xf32>
    %cst_94 = arith.constant 1.000000e+00 : f32
    %329 = vector.broadcast %cst_94 : f32 to vector<8x128xf32>
    %330 = arith.addf %329, %328 : vector<8x128xf32>
    %331 = arith.divf %329, %330 : vector<8x128xf32>
    %332 = vector.extract_strided_slice %315 {offsets = [0, 256], sizes = [8, 128], strides = [1, 1]} : vector<8x384xf32> to vector<8x128xf32>
    %333 = vector.extract_strided_slice %311 {offsets = [0, 256], sizes = [8, 128], strides = [1, 1]} : vector<8x384xf32> to vector<8x128xf32>
    %334 = vector.broadcast %15 : vector<1x128xf32> to vector<8x128xf32>
    %335 = arith.addf %333, %334 : vector<8x128xf32>
    %336 = arith.mulf %323, %335 : vector<8x128xf32>
    %337 = arith.addf %332, %336 : vector<8x128xf32>
    %338 = math.tanh %337 : vector<8x128xf32>
    %cst_95 = arith.constant 1.000000e+00 : f32
    %339 = vector.broadcast %cst_95 : f32 to vector<8x128xf32>
    %340 = arith.subf %339, %331 : vector<8x128xf32>
    %341 = arith.mulf %340, %338 : vector<8x128xf32>
    %342 = arith.mulf %331, %270 : vector<8x128xf32>
    %343 = arith.addf %341, %342 : vector<8x128xf32>
    %344 = arith.index_cast %310 : i32 to index
    %c0_96 = arith.constant 0 : index
    %c0_97 = arith.constant 0 : index
    %345 = vector.load %arg19[%344, %c0_96, %c0_97] : memref<8x8x384xf32, #tpu.memory_space<vmem>>, vector<1x8x384xf32>
    %346 = vector.shape_cast %345 : vector<1x8x384xf32> to vector<8x384xf32>
    %347 = vector.extract_strided_slice %346 {offsets = [0, 0], sizes = [8, 128], strides = [1, 1]} : vector<8x384xf32> to vector<8x128xf32>
    %348 = vector.extract_strided_slice %312 {offsets = [0, 0], sizes = [8, 128], strides = [1, 1]} : vector<8x384xf32> to vector<8x128xf32>
    %349 = arith.addf %347, %348 : vector<8x128xf32>
    %350 = arith.negf %349 : vector<8x128xf32>
    %351 = math.exp %350 : vector<8x128xf32>
    %cst_98 = arith.constant 1.000000e+00 : f32
    %352 = vector.broadcast %cst_98 : f32 to vector<8x128xf32>
    %353 = arith.addf %352, %351 : vector<8x128xf32>
    %354 = arith.divf %352, %353 : vector<8x128xf32>
    %355 = vector.extract_strided_slice %346 {offsets = [0, 128], sizes = [8, 128], strides = [1, 1]} : vector<8x384xf32> to vector<8x128xf32>
    %356 = vector.extract_strided_slice %312 {offsets = [0, 128], sizes = [8, 128], strides = [1, 1]} : vector<8x384xf32> to vector<8x128xf32>
    %357 = arith.addf %355, %356 : vector<8x128xf32>
    %358 = arith.negf %357 : vector<8x128xf32>
    %359 = math.exp %358 : vector<8x128xf32>
    %cst_99 = arith.constant 1.000000e+00 : f32
    %360 = vector.broadcast %cst_99 : f32 to vector<8x128xf32>
    %361 = arith.addf %360, %359 : vector<8x128xf32>
    %362 = arith.divf %360, %361 : vector<8x128xf32>
    %363 = vector.extract_strided_slice %346 {offsets = [0, 256], sizes = [8, 128], strides = [1, 1]} : vector<8x384xf32> to vector<8x128xf32>
    %364 = vector.extract_strided_slice %312 {offsets = [0, 256], sizes = [8, 128], strides = [1, 1]} : vector<8x384xf32> to vector<8x128xf32>
    %365 = vector.broadcast %16 : vector<1x128xf32> to vector<8x128xf32>
    %366 = arith.addf %364, %365 : vector<8x128xf32>
    %367 = arith.mulf %354, %366 : vector<8x128xf32>
    %368 = arith.addf %363, %367 : vector<8x128xf32>
    %369 = math.tanh %368 : vector<8x128xf32>
    %cst_100 = arith.constant 1.000000e+00 : f32
    %370 = vector.broadcast %cst_100 : f32 to vector<8x128xf32>
    %371 = arith.subf %370, %362 : vector<8x128xf32>
    %372 = arith.mulf %371, %369 : vector<8x128xf32>
    %373 = arith.mulf %362, %301 : vector<8x128xf32>
    %374 = arith.addf %372, %373 : vector<8x128xf32>
    %375 = arith.index_cast %c4_i32 : i32 to index
    %c0_101 = arith.constant 0 : index
    %c0_102 = arith.constant 0 : index
    %376 = vector.load %arg20[%375, %c0_101, %c0_102] : memref<8x8x128xf32, #tpu.memory_space<vmem>>, vector<1x8x128xf32>
    %377 = vector.shape_cast %376 : vector<1x8x128xf32> to vector<8x128xf32>
    %378 = vector.shape_cast %343 : vector<8x128xf32> to vector<1x8x128xf32>
    tpu.vector_store %arg20[%375, %c0_101, %c0_102], %378 {strides = array<i32>} : memref<8x8x128xf32, #tpu.memory_space<vmem>>, vector<1x8x128xf32>,
    %379 = arith.index_cast %310 : i32 to index
    %c0_103 = arith.constant 0 : index
    %c0_104 = arith.constant 0 : index
    %380 = vector.load %arg21[%379, %c0_103, %c0_104] : memref<8x8x128xf32, #tpu.memory_space<vmem>>, vector<1x8x128xf32>
    %381 = vector.shape_cast %380 : vector<1x8x128xf32> to vector<8x128xf32>
    %382 = vector.shape_cast %374 : vector<8x128xf32> to vector<1x8x128xf32>
    tpu.vector_store %arg21[%379, %c0_103, %c0_104], %382 {strides = array<i32>} : memref<8x8x128xf32, #tpu.memory_space<vmem>>, vector<1x8x128xf32>,
    %c5_i32 = arith.constant 5 : i32
    %c7_i32_105 = arith.constant 7 : i32
    %383 = arith.subi %c7_i32_105, %c5_i32 : i32
    %cst_106 = arith.constant dense<0.000000e+00> : vector<8x384xf32>
    %384 = tpu.matmul %343, %13, %cst_106 {dimension_numbers = #tpu.dot_dimension_numbers<[1], [0], [0], [1], [0, 0, 1, 1], [], []>} : vector<8x128xf32>, vector<128x384xf32>, vector<8x384xf32> -> vector<8x384xf32>
    %cst_107 = arith.constant dense<0.000000e+00> : vector<8x384xf32>
    %385 = tpu.matmul %374, %14, %cst_107 {dimension_numbers = #tpu.dot_dimension_numbers<[1], [0], [0], [1], [0, 0, 1, 1], [], []>} : vector<8x128xf32>, vector<128x384xf32>, vector<8x384xf32> -> vector<8x384xf32>
    %386 = arith.index_cast %c5_i32 : i32 to index
    %c0_108 = arith.constant 0 : index
    %c0_109 = arith.constant 0 : index
    %387 = vector.load %arg18[%386, %c0_108, %c0_109] : memref<8x8x384xf32, #tpu.memory_space<vmem>>, vector<1x8x384xf32>
    %388 = vector.shape_cast %387 : vector<1x8x384xf32> to vector<8x384xf32>
    %389 = vector.extract_strided_slice %388 {offsets = [0, 0], sizes = [8, 128], strides = [1, 1]} : vector<8x384xf32> to vector<8x128xf32>
    %390 = vector.extract_strided_slice %384 {offsets = [0, 0], sizes = [8, 128], strides = [1, 1]} : vector<8x384xf32> to vector<8x128xf32>
    %391 = arith.addf %389, %390 : vector<8x128xf32>
    %392 = arith.negf %391 : vector<8x128xf32>
    %393 = math.exp %392 : vector<8x128xf32>
    %cst_110 = arith.constant 1.000000e+00 : f32
    %394 = vector.broadcast %cst_110 : f32 to vector<8x128xf32>
    %395 = arith.addf %394, %393 : vector<8x128xf32>
    %396 = arith.divf %394, %395 : vector<8x128xf32>
    %397 = vector.extract_strided_slice %388 {offsets = [0, 128], sizes = [8, 128], strides = [1, 1]} : vector<8x384xf32> to vector<8x128xf32>
    %398 = vector.extract_strided_slice %384 {offsets = [0, 128], sizes = [8, 128], strides = [1, 1]} : vector<8x384xf32> to vector<8x128xf32>
    %399 = arith.addf %397, %398 : vector<8x128xf32>
    %400 = arith.negf %399 : vector<8x128xf32>
    %401 = math.exp %400 : vector<8x128xf32>
    %cst_111 = arith.constant 1.000000e+00 : f32
    %402 = vector.broadcast %cst_111 : f32 to vector<8x128xf32>
    %403 = arith.addf %402, %401 : vector<8x128xf32>
    %404 = arith.divf %402, %403 : vector<8x128xf32>
    %405 = vector.extract_strided_slice %388 {offsets = [0, 256], sizes = [8, 128], strides = [1, 1]} : vector<8x384xf32> to vector<8x128xf32>
    %406 = vector.extract_strided_slice %384 {offsets = [0, 256], sizes = [8, 128], strides = [1, 1]} : vector<8x384xf32> to vector<8x128xf32>
    %407 = vector.broadcast %15 : vector<1x128xf32> to vector<8x128xf32>
    %408 = arith.addf %406, %407 : vector<8x128xf32>
    %409 = arith.mulf %396, %408 : vector<8x128xf32>
    %410 = arith.addf %405, %409 : vector<8x128xf32>
    %411 = math.tanh %410 : vector<8x128xf32>
    %cst_112 = arith.constant 1.000000e+00 : f32
    %412 = vector.broadcast %cst_112 : f32 to vector<8x128xf32>
    %413 = arith.subf %412, %404 : vector<8x128xf32>
    %414 = arith.mulf %413, %411 : vector<8x128xf32>
    %415 = arith.mulf %404, %343 : vector<8x128xf32>
    %416 = arith.addf %414, %415 : vector<8x128xf32>
    %417 = arith.index_cast %383 : i32 to index
    %c0_113 = arith.constant 0 : index
    %c0_114 = arith.constant 0 : index
    %418 = vector.load %arg19[%417, %c0_113, %c0_114] : memref<8x8x384xf32, #tpu.memory_space<vmem>>, vector<1x8x384xf32>
    %419 = vector.shape_cast %418 : vector<1x8x384xf32> to vector<8x384xf32>
    %420 = vector.extract_strided_slice %419 {offsets = [0, 0], sizes = [8, 128], strides = [1, 1]} : vector<8x384xf32> to vector<8x128xf32>
    %421 = vector.extract_strided_slice %385 {offsets = [0, 0], sizes = [8, 128], strides = [1, 1]} : vector<8x384xf32> to vector<8x128xf32>
    %422 = arith.addf %420, %421 : vector<8x128xf32>
    %423 = arith.negf %422 : vector<8x128xf32>
    %424 = math.exp %423 : vector<8x128xf32>
    %cst_115 = arith.constant 1.000000e+00 : f32
    %425 = vector.broadcast %cst_115 : f32 to vector<8x128xf32>
    %426 = arith.addf %425, %424 : vector<8x128xf32>
    %427 = arith.divf %425, %426 : vector<8x128xf32>
    %428 = vector.extract_strided_slice %419 {offsets = [0, 128], sizes = [8, 128], strides = [1, 1]} : vector<8x384xf32> to vector<8x128xf32>
    %429 = vector.extract_strided_slice %385 {offsets = [0, 128], sizes = [8, 128], strides = [1, 1]} : vector<8x384xf32> to vector<8x128xf32>
    %430 = arith.addf %428, %429 : vector<8x128xf32>
    %431 = arith.negf %430 : vector<8x128xf32>
    %432 = math.exp %431 : vector<8x128xf32>
    %cst_116 = arith.constant 1.000000e+00 : f32
    %433 = vector.broadcast %cst_116 : f32 to vector<8x128xf32>
    %434 = arith.addf %433, %432 : vector<8x128xf32>
    %435 = arith.divf %433, %434 : vector<8x128xf32>
    %436 = vector.extract_strided_slice %419 {offsets = [0, 256], sizes = [8, 128], strides = [1, 1]} : vector<8x384xf32> to vector<8x128xf32>
    %437 = vector.extract_strided_slice %385 {offsets = [0, 256], sizes = [8, 128], strides = [1, 1]} : vector<8x384xf32> to vector<8x128xf32>
    %438 = vector.broadcast %16 : vector<1x128xf32> to vector<8x128xf32>
    %439 = arith.addf %437, %438 : vector<8x128xf32>
    %440 = arith.mulf %427, %439 : vector<8x128xf32>
    %441 = arith.addf %436, %440 : vector<8x128xf32>
    %442 = math.tanh %441 : vector<8x128xf32>
    %cst_117 = arith.constant 1.000000e+00 : f32
    %443 = vector.broadcast %cst_117 : f32 to vector<8x128xf32>
    %444 = arith.subf %443, %435 : vector<8x128xf32>
    %445 = arith.mulf %444, %442 : vector<8x128xf32>
    %446 = arith.mulf %435, %374 : vector<8x128xf32>
    %447 = arith.addf %445, %446 : vector<8x128xf32>
    %448 = arith.index_cast %c5_i32 : i32 to index
    %c0_118 = arith.constant 0 : index
    %c0_119 = arith.constant 0 : index
    %449 = vector.load %arg20[%448, %c0_118, %c0_119] : memref<8x8x128xf32, #tpu.memory_space<vmem>>, vector<1x8x128xf32>
    %450 = vector.shape_cast %449 : vector<1x8x128xf32> to vector<8x128xf32>
    %451 = vector.shape_cast %416 : vector<8x128xf32> to vector<1x8x128xf32>
    tpu.vector_store %arg20[%448, %c0_118, %c0_119], %451 {strides = array<i32>} : memref<8x8x128xf32, #tpu.memory_space<vmem>>, vector<1x8x128xf32>,
    %452 = arith.index_cast %383 : i32 to index
    %c0_120 = arith.constant 0 : index
    %c0_121 = arith.constant 0 : index
    %453 = vector.load %arg21[%452, %c0_120, %c0_121] : memref<8x8x128xf32, #tpu.memory_space<vmem>>, vector<1x8x128xf32>
    %454 = vector.shape_cast %453 : vector<1x8x128xf32> to vector<8x128xf32>
    %455 = vector.shape_cast %447 : vector<8x128xf32> to vector<1x8x128xf32>
    tpu.vector_store %arg21[%452, %c0_120, %c0_121], %455 {strides = array<i32>} : memref<8x8x128xf32, #tpu.memory_space<vmem>>, vector<1x8x128xf32>,
    %c6_i32 = arith.constant 6 : i32
    %c7_i32_122 = arith.constant 7 : i32
    %456 = arith.subi %c7_i32_122, %c6_i32 : i32
    %cst_123 = arith.constant dense<0.000000e+00> : vector<8x384xf32>
    %457 = tpu.matmul %416, %13, %cst_123 {dimension_numbers = #tpu.dot_dimension_numbers<[1], [0], [0], [1], [0, 0, 1, 1], [], []>} : vector<8x128xf32>, vector<128x384xf32>, vector<8x384xf32> -> vector<8x384xf32>
    %cst_124 = arith.constant dense<0.000000e+00> : vector<8x384xf32>
    %458 = tpu.matmul %447, %14, %cst_124 {dimension_numbers = #tpu.dot_dimension_numbers<[1], [0], [0], [1], [0, 0, 1, 1], [], []>} : vector<8x128xf32>, vector<128x384xf32>, vector<8x384xf32> -> vector<8x384xf32>
    %459 = arith.index_cast %c6_i32 : i32 to index
    %c0_125 = arith.constant 0 : index
    %c0_126 = arith.constant 0 : index
    %460 = vector.load %arg18[%459, %c0_125, %c0_126] : memref<8x8x384xf32, #tpu.memory_space<vmem>>, vector<1x8x384xf32>
    %461 = vector.shape_cast %460 : vector<1x8x384xf32> to vector<8x384xf32>
    %462 = vector.extract_strided_slice %461 {offsets = [0, 0], sizes = [8, 128], strides = [1, 1]} : vector<8x384xf32> to vector<8x128xf32>
    %463 = vector.extract_strided_slice %457 {offsets = [0, 0], sizes = [8, 128], strides = [1, 1]} : vector<8x384xf32> to vector<8x128xf32>
    %464 = arith.addf %462, %463 : vector<8x128xf32>
    %465 = arith.negf %464 : vector<8x128xf32>
    %466 = math.exp %465 : vector<8x128xf32>
    %cst_127 = arith.constant 1.000000e+00 : f32
    %467 = vector.broadcast %cst_127 : f32 to vector<8x128xf32>
    %468 = arith.addf %467, %466 : vector<8x128xf32>
    %469 = arith.divf %467, %468 : vector<8x128xf32>
    %470 = vector.extract_strided_slice %461 {offsets = [0, 128], sizes = [8, 128], strides = [1, 1]} : vector<8x384xf32> to vector<8x128xf32>
    %471 = vector.extract_strided_slice %457 {offsets = [0, 128], sizes = [8, 128], strides = [1, 1]} : vector<8x384xf32> to vector<8x128xf32>
    %472 = arith.addf %470, %471 : vector<8x128xf32>
    %473 = arith.negf %472 : vector<8x128xf32>
    %474 = math.exp %473 : vector<8x128xf32>
    %cst_128 = arith.constant 1.000000e+00 : f32
    %475 = vector.broadcast %cst_128 : f32 to vector<8x128xf32>
    %476 = arith.addf %475, %474 : vector<8x128xf32>
    %477 = arith.divf %475, %476 : vector<8x128xf32>
    %478 = vector.extract_strided_slice %461 {offsets = [0, 256], sizes = [8, 128], strides = [1, 1]} : vector<8x384xf32> to vector<8x128xf32>
    %479 = vector.extract_strided_slice %457 {offsets = [0, 256], sizes = [8, 128], strides = [1, 1]} : vector<8x384xf32> to vector<8x128xf32>
    %480 = vector.broadcast %15 : vector<1x128xf32> to vector<8x128xf32>
    %481 = arith.addf %479, %480 : vector<8x128xf32>
    %482 = arith.mulf %469, %481 : vector<8x128xf32>
    %483 = arith.addf %478, %482 : vector<8x128xf32>
    %484 = math.tanh %483 : vector<8x128xf32>
    %cst_129 = arith.constant 1.000000e+00 : f32
    %485 = vector.broadcast %cst_129 : f32 to vector<8x128xf32>
    %486 = arith.subf %485, %477 : vector<8x128xf32>
    %487 = arith.mulf %486, %484 : vector<8x128xf32>
    %488 = arith.mulf %477, %416 : vector<8x128xf32>
    %489 = arith.addf %487, %488 : vector<8x128xf32>
    %490 = arith.index_cast %456 : i32 to index
    %c0_130 = arith.constant 0 : index
    %c0_131 = arith.constant 0 : index
    %491 = vector.load %arg19[%490, %c0_130, %c0_131] : memref<8x8x384xf32, #tpu.memory_space<vmem>>, vector<1x8x384xf32>
    %492 = vector.shape_cast %491 : vector<1x8x384xf32> to vector<8x384xf32>
    %493 = vector.extract_strided_slice %492 {offsets = [0, 0], sizes = [8, 128], strides = [1, 1]} : vector<8x384xf32> to vector<8x128xf32>
    %494 = vector.extract_strided_slice %458 {offsets = [0, 0], sizes = [8, 128], strides = [1, 1]} : vector<8x384xf32> to vector<8x128xf32>
    %495 = arith.addf %493, %494 : vector<8x128xf32>
    %496 = arith.negf %495 : vector<8x128xf32>
    %497 = math.exp %496 : vector<8x128xf32>
    %cst_132 = arith.constant 1.000000e+00 : f32
    %498 = vector.broadcast %cst_132 : f32 to vector<8x128xf32>
    %499 = arith.addf %498, %497 : vector<8x128xf32>
    %500 = arith.divf %498, %499 : vector<8x128xf32>
    %501 = vector.extract_strided_slice %492 {offsets = [0, 128], sizes = [8, 128], strides = [1, 1]} : vector<8x384xf32> to vector<8x128xf32>
    %502 = vector.extract_strided_slice %458 {offsets = [0, 128], sizes = [8, 128], strides = [1, 1]} : vector<8x384xf32> to vector<8x128xf32>
    %503 = arith.addf %501, %502 : vector<8x128xf32>
    %504 = arith.negf %503 : vector<8x128xf32>
    %505 = math.exp %504 : vector<8x128xf32>
    %cst_133 = arith.constant 1.000000e+00 : f32
    %506 = vector.broadcast %cst_133 : f32 to vector<8x128xf32>
    %507 = arith.addf %506, %505 : vector<8x128xf32>
    %508 = arith.divf %506, %507 : vector<8x128xf32>
    %509 = vector.extract_strided_slice %492 {offsets = [0, 256], sizes = [8, 128], strides = [1, 1]} : vector<8x384xf32> to vector<8x128xf32>
    %510 = vector.extract_strided_slice %458 {offsets = [0, 256], sizes = [8, 128], strides = [1, 1]} : vector<8x384xf32> to vector<8x128xf32>
    %511 = vector.broadcast %16 : vector<1x128xf32> to vector<8x128xf32>
    %512 = arith.addf %510, %511 : vector<8x128xf32>
    %513 = arith.mulf %500, %512 : vector<8x128xf32>
    %514 = arith.addf %509, %513 : vector<8x128xf32>
    %515 = math.tanh %514 : vector<8x128xf32>
    %cst_134 = arith.constant 1.000000e+00 : f32
    %516 = vector.broadcast %cst_134 : f32 to vector<8x128xf32>
    %517 = arith.subf %516, %508 : vector<8x128xf32>
    %518 = arith.mulf %517, %515 : vector<8x128xf32>
    %519 = arith.mulf %508, %447 : vector<8x128xf32>
    %520 = arith.addf %518, %519 : vector<8x128xf32>
    %521 = arith.index_cast %c6_i32 : i32 to index
    %c0_135 = arith.constant 0 : index
    %c0_136 = arith.constant 0 : index
    %522 = vector.load %arg20[%521, %c0_135, %c0_136] : memref<8x8x128xf32, #tpu.memory_space<vmem>>, vector<1x8x128xf32>
    %523 = vector.shape_cast %522 : vector<1x8x128xf32> to vector<8x128xf32>
    %524 = vector.shape_cast %489 : vector<8x128xf32> to vector<1x8x128xf32>
    tpu.vector_store %arg20[%521, %c0_135, %c0_136], %524 {strides = array<i32>} : memref<8x8x128xf32, #tpu.memory_space<vmem>>, vector<1x8x128xf32>,
    %525 = arith.index_cast %456 : i32 to index
    %c0_137 = arith.constant 0 : index
    %c0_138 = arith.constant 0 : index
    %526 = vector.load %arg21[%525, %c0_137, %c0_138] : memref<8x8x128xf32, #tpu.memory_space<vmem>>, vector<1x8x128xf32>
    %527 = vector.shape_cast %526 : vector<1x8x128xf32> to vector<8x128xf32>
    %528 = vector.shape_cast %520 : vector<8x128xf32> to vector<1x8x128xf32>
    tpu.vector_store %arg21[%525, %c0_137, %c0_138], %528 {strides = array<i32>} : memref<8x8x128xf32, #tpu.memory_space<vmem>>, vector<1x8x128xf32>,
    %c7_i32_139 = arith.constant 7 : i32
    %c7_i32_140 = arith.constant 7 : i32
    %529 = arith.subi %c7_i32_140, %c7_i32_139 : i32
    %cst_141 = arith.constant dense<0.000000e+00> : vector<8x384xf32>
    %530 = tpu.matmul %489, %13, %cst_141 {dimension_numbers = #tpu.dot_dimension_numbers<[1], [0], [0], [1], [0, 0, 1, 1], [], []>} : vector<8x128xf32>, vector<128x384xf32>, vector<8x384xf32> -> vector<8x384xf32>
    %cst_142 = arith.constant dense<0.000000e+00> : vector<8x384xf32>
    %531 = tpu.matmul %520, %14, %cst_142 {dimension_numbers = #tpu.dot_dimension_numbers<[1], [0], [0], [1], [0, 0, 1, 1], [], []>} : vector<8x128xf32>, vector<128x384xf32>, vector<8x384xf32> -> vector<8x384xf32>
    %532 = arith.index_cast %c7_i32_139 : i32 to index
    %c0_143 = arith.constant 0 : index
    %c0_144 = arith.constant 0 : index
    %533 = vector.load %arg18[%532, %c0_143, %c0_144] : memref<8x8x384xf32, #tpu.memory_space<vmem>>, vector<1x8x384xf32>
    %534 = vector.shape_cast %533 : vector<1x8x384xf32> to vector<8x384xf32>
    %535 = vector.extract_strided_slice %534 {offsets = [0, 0], sizes = [8, 128], strides = [1, 1]} : vector<8x384xf32> to vector<8x128xf32>
    %536 = vector.extract_strided_slice %530 {offsets = [0, 0], sizes = [8, 128], strides = [1, 1]} : vector<8x384xf32> to vector<8x128xf32>
    %537 = arith.addf %535, %536 : vector<8x128xf32>
    %538 = arith.negf %537 : vector<8x128xf32>
    %539 = math.exp %538 : vector<8x128xf32>
    %cst_145 = arith.constant 1.000000e+00 : f32
    %540 = vector.broadcast %cst_145 : f32 to vector<8x128xf32>
    %541 = arith.addf %540, %539 : vector<8x128xf32>
    %542 = arith.divf %540, %541 : vector<8x128xf32>
    %543 = vector.extract_strided_slice %534 {offsets = [0, 128], sizes = [8, 128], strides = [1, 1]} : vector<8x384xf32> to vector<8x128xf32>
    %544 = vector.extract_strided_slice %530 {offsets = [0, 128], sizes = [8, 128], strides = [1, 1]} : vector<8x384xf32> to vector<8x128xf32>
    %545 = arith.addf %543, %544 : vector<8x128xf32>
    %546 = arith.negf %545 : vector<8x128xf32>
    %547 = math.exp %546 : vector<8x128xf32>
    %cst_146 = arith.constant 1.000000e+00 : f32
    %548 = vector.broadcast %cst_146 : f32 to vector<8x128xf32>
    %549 = arith.addf %548, %547 : vector<8x128xf32>
    %550 = arith.divf %548, %549 : vector<8x128xf32>
    %551 = vector.extract_strided_slice %534 {offsets = [0, 256], sizes = [8, 128], strides = [1, 1]} : vector<8x384xf32> to vector<8x128xf32>
    %552 = vector.extract_strided_slice %530 {offsets = [0, 256], sizes = [8, 128], strides = [1, 1]} : vector<8x384xf32> to vector<8x128xf32>
    %553 = vector.broadcast %15 : vector<1x128xf32> to vector<8x128xf32>
    %554 = arith.addf %552, %553 : vector<8x128xf32>
    %555 = arith.mulf %542, %554 : vector<8x128xf32>
    %556 = arith.addf %551, %555 : vector<8x128xf32>
    %557 = math.tanh %556 : vector<8x128xf32>
    %cst_147 = arith.constant 1.000000e+00 : f32
    %558 = vector.broadcast %cst_147 : f32 to vector<8x128xf32>
    %559 = arith.subf %558, %550 : vector<8x128xf32>
    %560 = arith.mulf %559, %557 : vector<8x128xf32>
    %561 = arith.mulf %550, %489 : vector<8x128xf32>
    %562 = arith.addf %560, %561 : vector<8x128xf32>
    %563 = arith.index_cast %529 : i32 to index
    %c0_148 = arith.constant 0 : index
    %c0_149 = arith.constant 0 : index
    %564 = vector.load %arg19[%563, %c0_148, %c0_149] : memref<8x8x384xf32, #tpu.memory_space<vmem>>, vector<1x8x384xf32>
    %565 = vector.shape_cast %564 : vector<1x8x384xf32> to vector<8x384xf32>
    %566 = vector.extract_strided_slice %565 {offsets = [0, 0], sizes = [8, 128], strides = [1, 1]} : vector<8x384xf32> to vector<8x128xf32>
    %567 = vector.extract_strided_slice %531 {offsets = [0, 0], sizes = [8, 128], strides = [1, 1]} : vector<8x384xf32> to vector<8x128xf32>
    %568 = arith.addf %566, %567 : vector<8x128xf32>
    %569 = arith.negf %568 : vector<8x128xf32>
    %570 = math.exp %569 : vector<8x128xf32>
    %cst_150 = arith.constant 1.000000e+00 : f32
    %571 = vector.broadcast %cst_150 : f32 to vector<8x128xf32>
    %572 = arith.addf %571, %570 : vector<8x128xf32>
    %573 = arith.divf %571, %572 : vector<8x128xf32>
    %574 = vector.extract_strided_slice %565 {offsets = [0, 128], sizes = [8, 128], strides = [1, 1]} : vector<8x384xf32> to vector<8x128xf32>
    %575 = vector.extract_strided_slice %531 {offsets = [0, 128], sizes = [8, 128], strides = [1, 1]} : vector<8x384xf32> to vector<8x128xf32>
    %576 = arith.addf %574, %575 : vector<8x128xf32>
    %577 = arith.negf %576 : vector<8x128xf32>
    %578 = math.exp %577 : vector<8x128xf32>
    %cst_151 = arith.constant 1.000000e+00 : f32
    %579 = vector.broadcast %cst_151 : f32 to vector<8x128xf32>
    %580 = arith.addf %579, %578 : vector<8x128xf32>
    %581 = arith.divf %579, %580 : vector<8x128xf32>
    %582 = vector.extract_strided_slice %565 {offsets = [0, 256], sizes = [8, 128], strides = [1, 1]} : vector<8x384xf32> to vector<8x128xf32>
    %583 = vector.extract_strided_slice %531 {offsets = [0, 256], sizes = [8, 128], strides = [1, 1]} : vector<8x384xf32> to vector<8x128xf32>
    %584 = vector.broadcast %16 : vector<1x128xf32> to vector<8x128xf32>
    %585 = arith.addf %583, %584 : vector<8x128xf32>
    %586 = arith.mulf %573, %585 : vector<8x128xf32>
    %587 = arith.addf %582, %586 : vector<8x128xf32>
    %588 = math.tanh %587 : vector<8x128xf32>
    %cst_152 = arith.constant 1.000000e+00 : f32
    %589 = vector.broadcast %cst_152 : f32 to vector<8x128xf32>
    %590 = arith.subf %589, %581 : vector<8x128xf32>
    %591 = arith.mulf %590, %588 : vector<8x128xf32>
    %592 = arith.mulf %581, %520 : vector<8x128xf32>
    %593 = arith.addf %591, %592 : vector<8x128xf32>
    %594 = arith.index_cast %c7_i32_139 : i32 to index
    %c0_153 = arith.constant 0 : index
    %c0_154 = arith.constant 0 : index
    %595 = vector.load %arg20[%594, %c0_153, %c0_154] : memref<8x8x128xf32, #tpu.memory_space<vmem>>, vector<1x8x128xf32>
    %596 = vector.shape_cast %595 : vector<1x8x128xf32> to vector<8x128xf32>
    %597 = vector.shape_cast %562 : vector<8x128xf32> to vector<1x8x128xf32>
    tpu.vector_store %arg20[%594, %c0_153, %c0_154], %597 {strides = array<i32>} : memref<8x8x128xf32, #tpu.memory_space<vmem>>, vector<1x8x128xf32>,
    %598 = arith.index_cast %529 : i32 to index
    %c0_155 = arith.constant 0 : index
    %c0_156 = arith.constant 0 : index
    %599 = vector.load %arg21[%598, %c0_155, %c0_156] : memref<8x8x128xf32, #tpu.memory_space<vmem>>, vector<1x8x128xf32>
    %600 = vector.shape_cast %599 : vector<1x8x128xf32> to vector<8x128xf32>
    %601 = vector.shape_cast %593 : vector<8x128xf32> to vector<1x8x128xf32>
    tpu.vector_store %arg21[%598, %c0_155, %c0_156], %601 {strides = array<i32>} : memref<8x8x128xf32, #tpu.memory_space<vmem>>, vector<1x8x128xf32>,
    %c8_i32 = arith.constant 8 : i32
    %c0_157 = arith.constant 0 : index
    %c0_158 = arith.constant 0 : index
    %c0_159 = arith.constant 0 : index
    %602 = vector.load %arg20[%c0_157, %c0_158, %c0_159] : memref<8x8x128xf32, #tpu.memory_space<vmem>>, vector<8x8x128xf32>
    %603 = vector.shape_cast %602 : vector<8x8x128xf32> to vector<64x128xf32>
    %c0_160 = arith.constant 0 : index
    %c0_161 = arith.constant 0 : index
    %c0_162 = arith.constant 0 : index
    %604 = vector.load %arg21[%c0_160, %c0_161, %c0_162] : memref<8x8x128xf32, #tpu.memory_space<vmem>>, vector<8x8x128xf32>
    %605 = vector.shape_cast %604 : vector<8x8x128xf32> to vector<64x128xf32>
    %c0_163 = arith.constant 0 : index
    %c0_164 = arith.constant 0 : index
    %606 = vector.load %arg7[%c0_163, %c0_164] : memref<256x768xf32, #tpu.memory_space<vmem>>, vector<128x768xf32>
    %cst_165 = arith.constant dense<0.000000e+00> : vector<64x768xf32>
    %607 = tpu.matmul %603, %606, %cst_165 {dimension_numbers = #tpu.dot_dimension_numbers<[1], [0], [0], [1], [0, 0, 1, 1], [], []>} : vector<64x128xf32>, vector<128x768xf32>, vector<64x768xf32> -> vector<64x768xf32>
    %c128 = arith.constant 128 : index
    %c0_166 = arith.constant 0 : index
    %608 = vector.load %arg7[%c128, %c0_166] : memref<256x768xf32, #tpu.memory_space<vmem>>, vector<128x768xf32>
    %cst_167 = arith.constant dense<0.000000e+00> : vector<64x768xf32>
    %609 = tpu.matmul %605, %608, %cst_167 {dimension_numbers = #tpu.dot_dimension_numbers<[1], [0], [0], [1], [0, 0, 1, 1], [], []>} : vector<64x128xf32>, vector<128x768xf32>, vector<64x768xf32> -> vector<64x768xf32>
    %610 = arith.addf %607, %609 : vector<64x768xf32>
    %c0_168 = arith.constant 0 : index
    %c0_169 = arith.constant 0 : index
    %611 = vector.load %arg8[%c0_168, %c0_169] : memref<1x768xf32, #tpu.memory_space<vmem>>, vector<1x768xf32>
    %612 = vector.broadcast %611 : vector<1x768xf32> to vector<64x768xf32>
    %613 = arith.addf %610, %612 : vector<64x768xf32>
    %614 = vector.extract_strided_slice %613 {offsets = [0, 0], sizes = [64, 384], strides = [1, 1]} : vector<64x768xf32> to vector<64x384xf32>
    %615 = vector.shape_cast %614 : vector<64x384xf32> to vector<8x8x384xf32>
    %c0_170 = arith.constant 0 : index
    %c0_171 = arith.constant 0 : index
    %c0_172 = arith.constant 0 : index
    %616 = vector.load %arg18[%c0_170, %c0_171, %c0_172] : memref<8x8x384xf32, #tpu.memory_space<vmem>>, vector<8x8x384xf32>
    tpu.vector_store %arg18[%c0_170, %c0_171, %c0_172], %615 {strides = array<i32>} : memref<8x8x384xf32, #tpu.memory_space<vmem>>, vector<8x8x384xf32>,
    %617 = vector.extract_strided_slice %613 {offsets = [0, 384], sizes = [64, 384], strides = [1, 1]} : vector<64x768xf32> to vector<64x384xf32>
    %618 = vector.shape_cast %617 : vector<64x384xf32> to vector<8x8x384xf32>
    %c0_173 = arith.constant 0 : index
    %c0_174 = arith.constant 0 : index
    %c0_175 = arith.constant 0 : index
    %619 = vector.load %arg19[%c0_173, %c0_174, %c0_175] : memref<8x8x384xf32, #tpu.memory_space<vmem>>, vector<8x8x384xf32>
    tpu.vector_store %arg19[%c0_173, %c0_174, %c0_175], %618 {strides = array<i32>} : memref<8x8x384xf32, #tpu.memory_space<vmem>>, vector<8x8x384xf32>,
    %c0_176 = arith.constant 0 : index
    %c0_177 = arith.constant 0 : index
    %620 = vector.load %arg9[%c0_176, %c0_177] : memref<128x384xf32, #tpu.memory_space<vmem>>, vector<128x384xf32>
    %c0_178 = arith.constant 0 : index
    %c0_179 = arith.constant 0 : index
    %621 = vector.load %arg11[%c0_178, %c0_179] : memref<128x384xf32, #tpu.memory_space<vmem>>, vector<128x384xf32>
    %c0_180 = arith.constant 0 : index
    %c0_181 = arith.constant 0 : index
    %622 = vector.load %arg10[%c0_180, %c0_181] : memref<1x128xf32, #tpu.memory_space<vmem>>, vector<1x128xf32>
    %c0_182 = arith.constant 0 : index
    %c0_183 = arith.constant 0 : index
    %623 = vector.load %arg12[%c0_182, %c0_183] : memref<1x128xf32, #tpu.memory_space<vmem>>, vector<1x128xf32>
    %cst_184 = arith.constant 0.000000e+00 : f32
    %624 = vector.broadcast %cst_184 : f32 to vector<8x128xf32>
    %c0_i32_185 = arith.constant 0 : i32
    %c7_i32_186 = arith.constant 7 : i32
    %625 = arith.subi %c7_i32_186, %c0_i32_185 : i32
    %cst_187 = arith.constant dense<0.000000e+00> : vector<8x384xf32>
    %626 = tpu.matmul %624, %620, %cst_187 {dimension_numbers = #tpu.dot_dimension_numbers<[1], [0], [0], [1], [0, 0, 1, 1], [], []>} : vector<8x128xf32>, vector<128x384xf32>, vector<8x384xf32> -> vector<8x384xf32>
    %cst_188 = arith.constant dense<0.000000e+00> : vector<8x384xf32>
    %627 = tpu.matmul %624, %621, %cst_188 {dimension_numbers = #tpu.dot_dimension_numbers<[1], [0], [0], [1], [0, 0, 1, 1], [], []>} : vector<8x128xf32>, vector<128x384xf32>, vector<8x384xf32> -> vector<8x384xf32>
    %628 = arith.index_cast %c0_i32_185 : i32 to index
    %c0_189 = arith.constant 0 : index
    %c0_190 = arith.constant 0 : index
    %629 = vector.load %arg18[%628, %c0_189, %c0_190] : memref<8x8x384xf32, #tpu.memory_space<vmem>>, vector<1x8x384xf32>
    %630 = vector.shape_cast %629 : vector<1x8x384xf32> to vector<8x384xf32>
    %631 = vector.extract_strided_slice %630 {offsets = [0, 0], sizes = [8, 128], strides = [1, 1]} : vector<8x384xf32> to vector<8x128xf32>
    %632 = vector.extract_strided_slice %626 {offsets = [0, 0], sizes = [8, 128], strides = [1, 1]} : vector<8x384xf32> to vector<8x128xf32>
    %633 = arith.addf %631, %632 : vector<8x128xf32>
    %634 = arith.negf %633 : vector<8x128xf32>
    %635 = math.exp %634 : vector<8x128xf32>
    %cst_191 = arith.constant 1.000000e+00 : f32
    %636 = vector.broadcast %cst_191 : f32 to vector<8x128xf32>
    %637 = arith.addf %636, %635 : vector<8x128xf32>
    %638 = arith.divf %636, %637 : vector<8x128xf32>
    %639 = vector.extract_strided_slice %630 {offsets = [0, 128], sizes = [8, 128], strides = [1, 1]} : vector<8x384xf32> to vector<8x128xf32>
    %640 = vector.extract_strided_slice %626 {offsets = [0, 128], sizes = [8, 128], strides = [1, 1]} : vector<8x384xf32> to vector<8x128xf32>
    %641 = arith.addf %639, %640 : vector<8x128xf32>
    %642 = arith.negf %641 : vector<8x128xf32>
    %643 = math.exp %642 : vector<8x128xf32>
    %cst_192 = arith.constant 1.000000e+00 : f32
    %644 = vector.broadcast %cst_192 : f32 to vector<8x128xf32>
    %645 = arith.addf %644, %643 : vector<8x128xf32>
    %646 = arith.divf %644, %645 : vector<8x128xf32>
    %647 = vector.extract_strided_slice %630 {offsets = [0, 256], sizes = [8, 128], strides = [1, 1]} : vector<8x384xf32> to vector<8x128xf32>
    %648 = vector.extract_strided_slice %626 {offsets = [0, 256], sizes = [8, 128], strides = [1, 1]} : vector<8x384xf32> to vector<8x128xf32>
    %649 = vector.broadcast %622 : vector<1x128xf32> to vector<8x128xf32>
    %650 = arith.addf %648, %649 : vector<8x128xf32>
    %651 = arith.mulf %638, %650 : vector<8x128xf32>
    %652 = arith.addf %647, %651 : vector<8x128xf32>
    %653 = math.tanh %652 : vector<8x128xf32>
    %cst_193 = arith.constant 1.000000e+00 : f32
    %654 = vector.broadcast %cst_193 : f32 to vector<8x128xf32>
    %655 = arith.subf %654, %646 : vector<8x128xf32>
    %656 = arith.mulf %655, %653 : vector<8x128xf32>
    %657 = arith.mulf %646, %624 : vector<8x128xf32>
    %658 = arith.addf %656, %657 : vector<8x128xf32>
    %659 = arith.index_cast %625 : i32 to index
    %c0_194 = arith.constant 0 : index
    %c0_195 = arith.constant 0 : index
    %660 = vector.load %arg19[%659, %c0_194, %c0_195] : memref<8x8x384xf32, #tpu.memory_space<vmem>>, vector<1x8x384xf32>
    %661 = vector.shape_cast %660 : vector<1x8x384xf32> to vector<8x384xf32>
    %662 = vector.extract_strided_slice %661 {offsets = [0, 0], sizes = [8, 128], strides = [1, 1]} : vector<8x384xf32> to vector<8x128xf32>
    %663 = vector.extract_strided_slice %627 {offsets = [0, 0], sizes = [8, 128], strides = [1, 1]} : vector<8x384xf32> to vector<8x128xf32>
    %664 = arith.addf %662, %663 : vector<8x128xf32>
    %665 = arith.negf %664 : vector<8x128xf32>
    %666 = math.exp %665 : vector<8x128xf32>
    %cst_196 = arith.constant 1.000000e+00 : f32
    %667 = vector.broadcast %cst_196 : f32 to vector<8x128xf32>
    %668 = arith.addf %667, %666 : vector<8x128xf32>
    %669 = arith.divf %667, %668 : vector<8x128xf32>
    %670 = vector.extract_strided_slice %661 {offsets = [0, 128], sizes = [8, 128], strides = [1, 1]} : vector<8x384xf32> to vector<8x128xf32>
    %671 = vector.extract_strided_slice %627 {offsets = [0, 128], sizes = [8, 128], strides = [1, 1]} : vector<8x384xf32> to vector<8x128xf32>
    %672 = arith.addf %670, %671 : vector<8x128xf32>
    %673 = arith.negf %672 : vector<8x128xf32>
    %674 = math.exp %673 : vector<8x128xf32>
    %cst_197 = arith.constant 1.000000e+00 : f32
    %675 = vector.broadcast %cst_197 : f32 to vector<8x128xf32>
    %676 = arith.addf %675, %674 : vector<8x128xf32>
    %677 = arith.divf %675, %676 : vector<8x128xf32>
    %678 = vector.extract_strided_slice %661 {offsets = [0, 256], sizes = [8, 128], strides = [1, 1]} : vector<8x384xf32> to vector<8x128xf32>
    %679 = vector.extract_strided_slice %627 {offsets = [0, 256], sizes = [8, 128], strides = [1, 1]} : vector<8x384xf32> to vector<8x128xf32>
    %680 = vector.broadcast %623 : vector<1x128xf32> to vector<8x128xf32>
    %681 = arith.addf %679, %680 : vector<8x128xf32>
    %682 = arith.mulf %669, %681 : vector<8x128xf32>
    %683 = arith.addf %678, %682 : vector<8x128xf32>
    %684 = math.tanh %683 : vector<8x128xf32>
    %cst_198 = arith.constant 1.000000e+00 : f32
    %685 = vector.broadcast %cst_198 : f32 to vector<8x128xf32>
    %686 = arith.subf %685, %677 : vector<8x128xf32>
    %687 = arith.mulf %686, %684 : vector<8x128xf32>
    %688 = arith.mulf %677, %624 : vector<8x128xf32>
    %689 = arith.addf %687, %688 : vector<8x128xf32>
    %690 = arith.index_cast %c0_i32_185 : i32 to index
    %c0_199 = arith.constant 0 : index
    %c0_200 = arith.constant 0 : index
    %691 = vector.load %arg15[%690, %c0_199, %c0_200] : memref<8x8x128xf32, #tpu.memory_space<vmem>>, vector<1x8x128xf32>
    %692 = vector.shape_cast %691 : vector<1x8x128xf32> to vector<8x128xf32>
    %693 = vector.shape_cast %658 : vector<8x128xf32> to vector<1x8x128xf32>
    tpu.vector_store %arg15[%690, %c0_199, %c0_200], %693 {strides = array<i32>} : memref<8x8x128xf32, #tpu.memory_space<vmem>>, vector<1x8x128xf32>,
    %694 = arith.index_cast %625 : i32 to index
    %c0_201 = arith.constant 0 : index
    %c0_202 = arith.constant 0 : index
    %695 = vector.load %arg16[%694, %c0_201, %c0_202] : memref<8x8x128xf32, #tpu.memory_space<vmem>>, vector<1x8x128xf32>
    %696 = vector.shape_cast %695 : vector<1x8x128xf32> to vector<8x128xf32>
    %697 = vector.shape_cast %689 : vector<8x128xf32> to vector<1x8x128xf32>
    tpu.vector_store %arg16[%694, %c0_201, %c0_202], %697 {strides = array<i32>} : memref<8x8x128xf32, #tpu.memory_space<vmem>>, vector<1x8x128xf32>,
    %c1_i32_203 = arith.constant 1 : i32
    %c7_i32_204 = arith.constant 7 : i32
    %698 = arith.subi %c7_i32_204, %c1_i32_203 : i32
    %cst_205 = arith.constant dense<0.000000e+00> : vector<8x384xf32>
    %699 = tpu.matmul %658, %620, %cst_205 {dimension_numbers = #tpu.dot_dimension_numbers<[1], [0], [0], [1], [0, 0, 1, 1], [], []>} : vector<8x128xf32>, vector<128x384xf32>, vector<8x384xf32> -> vector<8x384xf32>
    %cst_206 = arith.constant dense<0.000000e+00> : vector<8x384xf32>
    %700 = tpu.matmul %689, %621, %cst_206 {dimension_numbers = #tpu.dot_dimension_numbers<[1], [0], [0], [1], [0, 0, 1, 1], [], []>} : vector<8x128xf32>, vector<128x384xf32>, vector<8x384xf32> -> vector<8x384xf32>
    %701 = arith.index_cast %c1_i32_203 : i32 to index
    %c0_207 = arith.constant 0 : index
    %c0_208 = arith.constant 0 : index
    %702 = vector.load %arg18[%701, %c0_207, %c0_208] : memref<8x8x384xf32, #tpu.memory_space<vmem>>, vector<1x8x384xf32>
    %703 = vector.shape_cast %702 : vector<1x8x384xf32> to vector<8x384xf32>
    %704 = vector.extract_strided_slice %703 {offsets = [0, 0], sizes = [8, 128], strides = [1, 1]} : vector<8x384xf32> to vector<8x128xf32>
    %705 = vector.extract_strided_slice %699 {offsets = [0, 0], sizes = [8, 128], strides = [1, 1]} : vector<8x384xf32> to vector<8x128xf32>
    %706 = arith.addf %704, %705 : vector<8x128xf32>
    %707 = arith.negf %706 : vector<8x128xf32>
    %708 = math.exp %707 : vector<8x128xf32>
    %cst_209 = arith.constant 1.000000e+00 : f32
    %709 = vector.broadcast %cst_209 : f32 to vector<8x128xf32>
    %710 = arith.addf %709, %708 : vector<8x128xf32>
    %711 = arith.divf %709, %710 : vector<8x128xf32>
    %712 = vector.extract_strided_slice %703 {offsets = [0, 128], sizes = [8, 128], strides = [1, 1]} : vector<8x384xf32> to vector<8x128xf32>
    %713 = vector.extract_strided_slice %699 {offsets = [0, 128], sizes = [8, 128], strides = [1, 1]} : vector<8x384xf32> to vector<8x128xf32>
    %714 = arith.addf %712, %713 : vector<8x128xf32>
    %715 = arith.negf %714 : vector<8x128xf32>
    %716 = math.exp %715 : vector<8x128xf32>
    %cst_210 = arith.constant 1.000000e+00 : f32
    %717 = vector.broadcast %cst_210 : f32 to vector<8x128xf32>
    %718 = arith.addf %717, %716 : vector<8x128xf32>
    %719 = arith.divf %717, %718 : vector<8x128xf32>
    %720 = vector.extract_strided_slice %703 {offsets = [0, 256], sizes = [8, 128], strides = [1, 1]} : vector<8x384xf32> to vector<8x128xf32>
    %721 = vector.extract_strided_slice %699 {offsets = [0, 256], sizes = [8, 128], strides = [1, 1]} : vector<8x384xf32> to vector<8x128xf32>
    %722 = vector.broadcast %622 : vector<1x128xf32> to vector<8x128xf32>
    %723 = arith.addf %721, %722 : vector<8x128xf32>
    %724 = arith.mulf %711, %723 : vector<8x128xf32>
    %725 = arith.addf %720, %724 : vector<8x128xf32>
    %726 = math.tanh %725 : vector<8x128xf32>
    %cst_211 = arith.constant 1.000000e+00 : f32
    %727 = vector.broadcast %cst_211 : f32 to vector<8x128xf32>
    %728 = arith.subf %727, %719 : vector<8x128xf32>
    %729 = arith.mulf %728, %726 : vector<8x128xf32>
    %730 = arith.mulf %719, %658 : vector<8x128xf32>
    %731 = arith.addf %729, %730 : vector<8x128xf32>
    %732 = arith.index_cast %698 : i32 to index
    %c0_212 = arith.constant 0 : index
    %c0_213 = arith.constant 0 : index
    %733 = vector.load %arg19[%732, %c0_212, %c0_213] : memref<8x8x384xf32, #tpu.memory_space<vmem>>, vector<1x8x384xf32>
    %734 = vector.shape_cast %733 : vector<1x8x384xf32> to vector<8x384xf32>
    %735 = vector.extract_strided_slice %734 {offsets = [0, 0], sizes = [8, 128], strides = [1, 1]} : vector<8x384xf32> to vector<8x128xf32>
    %736 = vector.extract_strided_slice %700 {offsets = [0, 0], sizes = [8, 128], strides = [1, 1]} : vector<8x384xf32> to vector<8x128xf32>
    %737 = arith.addf %735, %736 : vector<8x128xf32>
    %738 = arith.negf %737 : vector<8x128xf32>
    %739 = math.exp %738 : vector<8x128xf32>
    %cst_214 = arith.constant 1.000000e+00 : f32
    %740 = vector.broadcast %cst_214 : f32 to vector<8x128xf32>
    %741 = arith.addf %740, %739 : vector<8x128xf32>
    %742 = arith.divf %740, %741 : vector<8x128xf32>
    %743 = vector.extract_strided_slice %734 {offsets = [0, 128], sizes = [8, 128], strides = [1, 1]} : vector<8x384xf32> to vector<8x128xf32>
    %744 = vector.extract_strided_slice %700 {offsets = [0, 128], sizes = [8, 128], strides = [1, 1]} : vector<8x384xf32> to vector<8x128xf32>
    %745 = arith.addf %743, %744 : vector<8x128xf32>
    %746 = arith.negf %745 : vector<8x128xf32>
    %747 = math.exp %746 : vector<8x128xf32>
    %cst_215 = arith.constant 1.000000e+00 : f32
    %748 = vector.broadcast %cst_215 : f32 to vector<8x128xf32>
    %749 = arith.addf %748, %747 : vector<8x128xf32>
    %750 = arith.divf %748, %749 : vector<8x128xf32>
    %751 = vector.extract_strided_slice %734 {offsets = [0, 256], sizes = [8, 128], strides = [1, 1]} : vector<8x384xf32> to vector<8x128xf32>
    %752 = vector.extract_strided_slice %700 {offsets = [0, 256], sizes = [8, 128], strides = [1, 1]} : vector<8x384xf32> to vector<8x128xf32>
    %753 = vector.broadcast %623 : vector<1x128xf32> to vector<8x128xf32>
    %754 = arith.addf %752, %753 : vector<8x128xf32>
    %755 = arith.mulf %742, %754 : vector<8x128xf32>
    %756 = arith.addf %751, %755 : vector<8x128xf32>
    %757 = math.tanh %756 : vector<8x128xf32>
    %cst_216 = arith.constant 1.000000e+00 : f32
    %758 = vector.broadcast %cst_216 : f32 to vector<8x128xf32>
    %759 = arith.subf %758, %750 : vector<8x128xf32>
    %760 = arith.mulf %759, %757 : vector<8x128xf32>
    %761 = arith.mulf %750, %689 : vector<8x128xf32>
    %762 = arith.addf %760, %761 : vector<8x128xf32>
    %763 = arith.index_cast %c1_i32_203 : i32 to index
    %c0_217 = arith.constant 0 : index
    %c0_218 = arith.constant 0 : index
    %764 = vector.load %arg15[%763, %c0_217, %c0_218] : memref<8x8x128xf32, #tpu.memory_space<vmem>>, vector<1x8x128xf32>
    %765 = vector.shape_cast %764 : vector<1x8x128xf32> to vector<8x128xf32>
    %766 = vector.shape_cast %731 : vector<8x128xf32> to vector<1x8x128xf32>
    tpu.vector_store %arg15[%763, %c0_217, %c0_218], %766 {strides = array<i32>} : memref<8x8x128xf32, #tpu.memory_space<vmem>>, vector<1x8x128xf32>,
    %767 = arith.index_cast %698 : i32 to index
    %c0_219 = arith.constant 0 : index
    %c0_220 = arith.constant 0 : index
    %768 = vector.load %arg16[%767, %c0_219, %c0_220] : memref<8x8x128xf32, #tpu.memory_space<vmem>>, vector<1x8x128xf32>
    %769 = vector.shape_cast %768 : vector<1x8x128xf32> to vector<8x128xf32>
    %770 = vector.shape_cast %762 : vector<8x128xf32> to vector<1x8x128xf32>
    tpu.vector_store %arg16[%767, %c0_219, %c0_220], %770 {strides = array<i32>} : memref<8x8x128xf32, #tpu.memory_space<vmem>>, vector<1x8x128xf32>,
    %c2_i32_221 = arith.constant 2 : i32
    %c7_i32_222 = arith.constant 7 : i32
    %771 = arith.subi %c7_i32_222, %c2_i32_221 : i32
    %cst_223 = arith.constant dense<0.000000e+00> : vector<8x384xf32>
    %772 = tpu.matmul %731, %620, %cst_223 {dimension_numbers = #tpu.dot_dimension_numbers<[1], [0], [0], [1], [0, 0, 1, 1], [], []>} : vector<8x128xf32>, vector<128x384xf32>, vector<8x384xf32> -> vector<8x384xf32>
    %cst_224 = arith.constant dense<0.000000e+00> : vector<8x384xf32>
    %773 = tpu.matmul %762, %621, %cst_224 {dimension_numbers = #tpu.dot_dimension_numbers<[1], [0], [0], [1], [0, 0, 1, 1], [], []>} : vector<8x128xf32>, vector<128x384xf32>, vector<8x384xf32> -> vector<8x384xf32>
    %774 = arith.index_cast %c2_i32_221 : i32 to index
    %c0_225 = arith.constant 0 : index
    %c0_226 = arith.constant 0 : index
    %775 = vector.load %arg18[%774, %c0_225, %c0_226] : memref<8x8x384xf32, #tpu.memory_space<vmem>>, vector<1x8x384xf32>
    %776 = vector.shape_cast %775 : vector<1x8x384xf32> to vector<8x384xf32>
    %777 = vector.extract_strided_slice %776 {offsets = [0, 0], sizes = [8, 128], strides = [1, 1]} : vector<8x384xf32> to vector<8x128xf32>
    %778 = vector.extract_strided_slice %772 {offsets = [0, 0], sizes = [8, 128], strides = [1, 1]} : vector<8x384xf32> to vector<8x128xf32>
    %779 = arith.addf %777, %778 : vector<8x128xf32>
    %780 = arith.negf %779 : vector<8x128xf32>
    %781 = math.exp %780 : vector<8x128xf32>
    %cst_227 = arith.constant 1.000000e+00 : f32
    %782 = vector.broadcast %cst_227 : f32 to vector<8x128xf32>
    %783 = arith.addf %782, %781 : vector<8x128xf32>
    %784 = arith.divf %782, %783 : vector<8x128xf32>
    %785 = vector.extract_strided_slice %776 {offsets = [0, 128], sizes = [8, 128], strides = [1, 1]} : vector<8x384xf32> to vector<8x128xf32>
    %786 = vector.extract_strided_slice %772 {offsets = [0, 128], sizes = [8, 128], strides = [1, 1]} : vector<8x384xf32> to vector<8x128xf32>
    %787 = arith.addf %785, %786 : vector<8x128xf32>
    %788 = arith.negf %787 : vector<8x128xf32>
    %789 = math.exp %788 : vector<8x128xf32>
    %cst_228 = arith.constant 1.000000e+00 : f32
    %790 = vector.broadcast %cst_228 : f32 to vector<8x128xf32>
    %791 = arith.addf %790, %789 : vector<8x128xf32>
    %792 = arith.divf %790, %791 : vector<8x128xf32>
    %793 = vector.extract_strided_slice %776 {offsets = [0, 256], sizes = [8, 128], strides = [1, 1]} : vector<8x384xf32> to vector<8x128xf32>
    %794 = vector.extract_strided_slice %772 {offsets = [0, 256], sizes = [8, 128], strides = [1, 1]} : vector<8x384xf32> to vector<8x128xf32>
    %795 = vector.broadcast %622 : vector<1x128xf32> to vector<8x128xf32>
    %796 = arith.addf %794, %795 : vector<8x128xf32>
    %797 = arith.mulf %784, %796 : vector<8x128xf32>
    %798 = arith.addf %793, %797 : vector<8x128xf32>
    %799 = math.tanh %798 : vector<8x128xf32>
    %cst_229 = arith.constant 1.000000e+00 : f32
    %800 = vector.broadcast %cst_229 : f32 to vector<8x128xf32>
    %801 = arith.subf %800, %792 : vector<8x128xf32>
    %802 = arith.mulf %801, %799 : vector<8x128xf32>
    %803 = arith.mulf %792, %731 : vector<8x128xf32>
    %804 = arith.addf %802, %803 : vector<8x128xf32>
    %805 = arith.index_cast %771 : i32 to index
    %c0_230 = arith.constant 0 : index
    %c0_231 = arith.constant 0 : index
    %806 = vector.load %arg19[%805, %c0_230, %c0_231] : memref<8x8x384xf32, #tpu.memory_space<vmem>>, vector<1x8x384xf32>
    %807 = vector.shape_cast %806 : vector<1x8x384xf32> to vector<8x384xf32>
    %808 = vector.extract_strided_slice %807 {offsets = [0, 0], sizes = [8, 128], strides = [1, 1]} : vector<8x384xf32> to vector<8x128xf32>
    %809 = vector.extract_strided_slice %773 {offsets = [0, 0], sizes = [8, 128], strides = [1, 1]} : vector<8x384xf32> to vector<8x128xf32>
    %810 = arith.addf %808, %809 : vector<8x128xf32>
    %811 = arith.negf %810 : vector<8x128xf32>
    %812 = math.exp %811 : vector<8x128xf32>
    %cst_232 = arith.constant 1.000000e+00 : f32
    %813 = vector.broadcast %cst_232 : f32 to vector<8x128xf32>
    %814 = arith.addf %813, %812 : vector<8x128xf32>
    %815 = arith.divf %813, %814 : vector<8x128xf32>
    %816 = vector.extract_strided_slice %807 {offsets = [0, 128], sizes = [8, 128], strides = [1, 1]} : vector<8x384xf32> to vector<8x128xf32>
    %817 = vector.extract_strided_slice %773 {offsets = [0, 128], sizes = [8, 128], strides = [1, 1]} : vector<8x384xf32> to vector<8x128xf32>
    %818 = arith.addf %816, %817 : vector<8x128xf32>
    %819 = arith.negf %818 : vector<8x128xf32>
    %820 = math.exp %819 : vector<8x128xf32>
    %cst_233 = arith.constant 1.000000e+00 : f32
    %821 = vector.broadcast %cst_233 : f32 to vector<8x128xf32>
    %822 = arith.addf %821, %820 : vector<8x128xf32>
    %823 = arith.divf %821, %822 : vector<8x128xf32>
    %824 = vector.extract_strided_slice %807 {offsets = [0, 256], sizes = [8, 128], strides = [1, 1]} : vector<8x384xf32> to vector<8x128xf32>
    %825 = vector.extract_strided_slice %773 {offsets = [0, 256], sizes = [8, 128], strides = [1, 1]} : vector<8x384xf32> to vector<8x128xf32>
    %826 = vector.broadcast %623 : vector<1x128xf32> to vector<8x128xf32>
    %827 = arith.addf %825, %826 : vector<8x128xf32>
    %828 = arith.mulf %815, %827 : vector<8x128xf32>
    %829 = arith.addf %824, %828 : vector<8x128xf32>
    %830 = math.tanh %829 : vector<8x128xf32>
    %cst_234 = arith.constant 1.000000e+00 : f32
    %831 = vector.broadcast %cst_234 : f32 to vector<8x128xf32>
    %832 = arith.subf %831, %823 : vector<8x128xf32>
    %833 = arith.mulf %832, %830 : vector<8x128xf32>
    %834 = arith.mulf %823, %762 : vector<8x128xf32>
    %835 = arith.addf %833, %834 : vector<8x128xf32>
    %836 = arith.index_cast %c2_i32_221 : i32 to index
    %c0_235 = arith.constant 0 : index
    %c0_236 = arith.constant 0 : index
    %837 = vector.load %arg15[%836, %c0_235, %c0_236] : memref<8x8x128xf32, #tpu.memory_space<vmem>>, vector<1x8x128xf32>
    %838 = vector.shape_cast %837 : vector<1x8x128xf32> to vector<8x128xf32>
    %839 = vector.shape_cast %804 : vector<8x128xf32> to vector<1x8x128xf32>
    tpu.vector_store %arg15[%836, %c0_235, %c0_236], %839 {strides = array<i32>} : memref<8x8x128xf32, #tpu.memory_space<vmem>>, vector<1x8x128xf32>,
    %840 = arith.index_cast %771 : i32 to index
    %c0_237 = arith.constant 0 : index
    %c0_238 = arith.constant 0 : index
    %841 = vector.load %arg16[%840, %c0_237, %c0_238] : memref<8x8x128xf32, #tpu.memory_space<vmem>>, vector<1x8x128xf32>
    %842 = vector.shape_cast %841 : vector<1x8x128xf32> to vector<8x128xf32>
    %843 = vector.shape_cast %835 : vector<8x128xf32> to vector<1x8x128xf32>
    tpu.vector_store %arg16[%840, %c0_237, %c0_238], %843 {strides = array<i32>} : memref<8x8x128xf32, #tpu.memory_space<vmem>>, vector<1x8x128xf32>,
    %c3_i32_239 = arith.constant 3 : i32
    %c7_i32_240 = arith.constant 7 : i32
    %844 = arith.subi %c7_i32_240, %c3_i32_239 : i32
    %cst_241 = arith.constant dense<0.000000e+00> : vector<8x384xf32>
    %845 = tpu.matmul %804, %620, %cst_241 {dimension_numbers = #tpu.dot_dimension_numbers<[1], [0], [0], [1], [0, 0, 1, 1], [], []>} : vector<8x128xf32>, vector<128x384xf32>, vector<8x384xf32> -> vector<8x384xf32>
    %cst_242 = arith.constant dense<0.000000e+00> : vector<8x384xf32>
    %846 = tpu.matmul %835, %621, %cst_242 {dimension_numbers = #tpu.dot_dimension_numbers<[1], [0], [0], [1], [0, 0, 1, 1], [], []>} : vector<8x128xf32>, vector<128x384xf32>, vector<8x384xf32> -> vector<8x384xf32>
    %847 = arith.index_cast %c3_i32_239 : i32 to index
    %c0_243 = arith.constant 0 : index
    %c0_244 = arith.constant 0 : index
    %848 = vector.load %arg18[%847, %c0_243, %c0_244] : memref<8x8x384xf32, #tpu.memory_space<vmem>>, vector<1x8x384xf32>
    %849 = vector.shape_cast %848 : vector<1x8x384xf32> to vector<8x384xf32>
    %850 = vector.extract_strided_slice %849 {offsets = [0, 0], sizes = [8, 128], strides = [1, 1]} : vector<8x384xf32> to vector<8x128xf32>
    %851 = vector.extract_strided_slice %845 {offsets = [0, 0], sizes = [8, 128], strides = [1, 1]} : vector<8x384xf32> to vector<8x128xf32>
    %852 = arith.addf %850, %851 : vector<8x128xf32>
    %853 = arith.negf %852 : vector<8x128xf32>
    %854 = math.exp %853 : vector<8x128xf32>
    %cst_245 = arith.constant 1.000000e+00 : f32
    %855 = vector.broadcast %cst_245 : f32 to vector<8x128xf32>
    %856 = arith.addf %855, %854 : vector<8x128xf32>
    %857 = arith.divf %855, %856 : vector<8x128xf32>
    %858 = vector.extract_strided_slice %849 {offsets = [0, 128], sizes = [8, 128], strides = [1, 1]} : vector<8x384xf32> to vector<8x128xf32>
    %859 = vector.extract_strided_slice %845 {offsets = [0, 128], sizes = [8, 128], strides = [1, 1]} : vector<8x384xf32> to vector<8x128xf32>
    %860 = arith.addf %858, %859 : vector<8x128xf32>
    %861 = arith.negf %860 : vector<8x128xf32>
    %862 = math.exp %861 : vector<8x128xf32>
    %cst_246 = arith.constant 1.000000e+00 : f32
    %863 = vector.broadcast %cst_246 : f32 to vector<8x128xf32>
    %864 = arith.addf %863, %862 : vector<8x128xf32>
    %865 = arith.divf %863, %864 : vector<8x128xf32>
    %866 = vector.extract_strided_slice %849 {offsets = [0, 256], sizes = [8, 128], strides = [1, 1]} : vector<8x384xf32> to vector<8x128xf32>
    %867 = vector.extract_strided_slice %845 {offsets = [0, 256], sizes = [8, 128], strides = [1, 1]} : vector<8x384xf32> to vector<8x128xf32>
    %868 = vector.broadcast %622 : vector<1x128xf32> to vector<8x128xf32>
    %869 = arith.addf %867, %868 : vector<8x128xf32>
    %870 = arith.mulf %857, %869 : vector<8x128xf32>
    %871 = arith.addf %866, %870 : vector<8x128xf32>
    %872 = math.tanh %871 : vector<8x128xf32>
    %cst_247 = arith.constant 1.000000e+00 : f32
    %873 = vector.broadcast %cst_247 : f32 to vector<8x128xf32>
    %874 = arith.subf %873, %865 : vector<8x128xf32>
    %875 = arith.mulf %874, %872 : vector<8x128xf32>
    %876 = arith.mulf %865, %804 : vector<8x128xf32>
    %877 = arith.addf %875, %876 : vector<8x128xf32>
    %878 = arith.index_cast %844 : i32 to index
    %c0_248 = arith.constant 0 : index
    %c0_249 = arith.constant 0 : index
    %879 = vector.load %arg19[%878, %c0_248, %c0_249] : memref<8x8x384xf32, #tpu.memory_space<vmem>>, vector<1x8x384xf32>
    %880 = vector.shape_cast %879 : vector<1x8x384xf32> to vector<8x384xf32>
    %881 = vector.extract_strided_slice %880 {offsets = [0, 0], sizes = [8, 128], strides = [1, 1]} : vector<8x384xf32> to vector<8x128xf32>
    %882 = vector.extract_strided_slice %846 {offsets = [0, 0], sizes = [8, 128], strides = [1, 1]} : vector<8x384xf32> to vector<8x128xf32>
    %883 = arith.addf %881, %882 : vector<8x128xf32>
    %884 = arith.negf %883 : vector<8x128xf32>
    %885 = math.exp %884 : vector<8x128xf32>
    %cst_250 = arith.constant 1.000000e+00 : f32
    %886 = vector.broadcast %cst_250 : f32 to vector<8x128xf32>
    %887 = arith.addf %886, %885 : vector<8x128xf32>
    %888 = arith.divf %886, %887 : vector<8x128xf32>
    %889 = vector.extract_strided_slice %880 {offsets = [0, 128], sizes = [8, 128], strides = [1, 1]} : vector<8x384xf32> to vector<8x128xf32>
    %890 = vector.extract_strided_slice %846 {offsets = [0, 128], sizes = [8, 128], strides = [1, 1]} : vector<8x384xf32> to vector<8x128xf32>
    %891 = arith.addf %889, %890 : vector<8x128xf32>
    %892 = arith.negf %891 : vector<8x128xf32>
    %893 = math.exp %892 : vector<8x128xf32>
    %cst_251 = arith.constant 1.000000e+00 : f32
    %894 = vector.broadcast %cst_251 : f32 to vector<8x128xf32>
    %895 = arith.addf %894, %893 : vector<8x128xf32>
    %896 = arith.divf %894, %895 : vector<8x128xf32>
    %897 = vector.extract_strided_slice %880 {offsets = [0, 256], sizes = [8, 128], strides = [1, 1]} : vector<8x384xf32> to vector<8x128xf32>
    %898 = vector.extract_strided_slice %846 {offsets = [0, 256], sizes = [8, 128], strides = [1, 1]} : vector<8x384xf32> to vector<8x128xf32>
    %899 = vector.broadcast %623 : vector<1x128xf32> to vector<8x128xf32>
    %900 = arith.addf %898, %899 : vector<8x128xf32>
    %901 = arith.mulf %888, %900 : vector<8x128xf32>
    %902 = arith.addf %897, %901 : vector<8x128xf32>
    %903 = math.tanh %902 : vector<8x128xf32>
    %cst_252 = arith.constant 1.000000e+00 : f32
    %904 = vector.broadcast %cst_252 : f32 to vector<8x128xf32>
    %905 = arith.subf %904, %896 : vector<8x128xf32>
    %906 = arith.mulf %905, %903 : vector<8x128xf32>
    %907 = arith.mulf %896, %835 : vector<8x128xf32>
    %908 = arith.addf %906, %907 : vector<8x128xf32>
    %909 = arith.index_cast %c3_i32_239 : i32 to index
    %c0_253 = arith.constant 0 : index
    %c0_254 = arith.constant 0 : index
    %910 = vector.load %arg15[%909, %c0_253, %c0_254] : memref<8x8x128xf32, #tpu.memory_space<vmem>>, vector<1x8x128xf32>
    %911 = vector.shape_cast %910 : vector<1x8x128xf32> to vector<8x128xf32>
    %912 = vector.shape_cast %877 : vector<8x128xf32> to vector<1x8x128xf32>
    tpu.vector_store %arg15[%909, %c0_253, %c0_254], %912 {strides = array<i32>} : memref<8x8x128xf32, #tpu.memory_space<vmem>>, vector<1x8x128xf32>,
    %913 = arith.index_cast %844 : i32 to index
    %c0_255 = arith.constant 0 : index
    %c0_256 = arith.constant 0 : index
    %914 = vector.load %arg16[%913, %c0_255, %c0_256] : memref<8x8x128xf32, #tpu.memory_space<vmem>>, vector<1x8x128xf32>
    %915 = vector.shape_cast %914 : vector<1x8x128xf32> to vector<8x128xf32>
    %916 = vector.shape_cast %908 : vector<8x128xf32> to vector<1x8x128xf32>
    tpu.vector_store %arg16[%913, %c0_255, %c0_256], %916 {strides = array<i32>} : memref<8x8x128xf32, #tpu.memory_space<vmem>>, vector<1x8x128xf32>,
    %c4_i32_257 = arith.constant 4 : i32
    %c7_i32_258 = arith.constant 7 : i32
    %917 = arith.subi %c7_i32_258, %c4_i32_257 : i32
    %cst_259 = arith.constant dense<0.000000e+00> : vector<8x384xf32>
    %918 = tpu.matmul %877, %620, %cst_259 {dimension_numbers = #tpu.dot_dimension_numbers<[1], [0], [0], [1], [0, 0, 1, 1], [], []>} : vector<8x128xf32>, vector<128x384xf32>, vector<8x384xf32> -> vector<8x384xf32>
    %cst_260 = arith.constant dense<0.000000e+00> : vector<8x384xf32>
    %919 = tpu.matmul %908, %621, %cst_260 {dimension_numbers = #tpu.dot_dimension_numbers<[1], [0], [0], [1], [0, 0, 1, 1], [], []>} : vector<8x128xf32>, vector<128x384xf32>, vector<8x384xf32> -> vector<8x384xf32>
    %920 = arith.index_cast %c4_i32_257 : i32 to index
    %c0_261 = arith.constant 0 : index
    %c0_262 = arith.constant 0 : index
    %921 = vector.load %arg18[%920, %c0_261, %c0_262] : memref<8x8x384xf32, #tpu.memory_space<vmem>>, vector<1x8x384xf32>
    %922 = vector.shape_cast %921 : vector<1x8x384xf32> to vector<8x384xf32>
    %923 = vector.extract_strided_slice %922 {offsets = [0, 0], sizes = [8, 128], strides = [1, 1]} : vector<8x384xf32> to vector<8x128xf32>
    %924 = vector.extract_strided_slice %918 {offsets = [0, 0], sizes = [8, 128], strides = [1, 1]} : vector<8x384xf32> to vector<8x128xf32>
    %925 = arith.addf %923, %924 : vector<8x128xf32>
    %926 = arith.negf %925 : vector<8x128xf32>
    %927 = math.exp %926 : vector<8x128xf32>
    %cst_263 = arith.constant 1.000000e+00 : f32
    %928 = vector.broadcast %cst_263 : f32 to vector<8x128xf32>
    %929 = arith.addf %928, %927 : vector<8x128xf32>
    %930 = arith.divf %928, %929 : vector<8x128xf32>
    %931 = vector.extract_strided_slice %922 {offsets = [0, 128], sizes = [8, 128], strides = [1, 1]} : vector<8x384xf32> to vector<8x128xf32>
    %932 = vector.extract_strided_slice %918 {offsets = [0, 128], sizes = [8, 128], strides = [1, 1]} : vector<8x384xf32> to vector<8x128xf32>
    %933 = arith.addf %931, %932 : vector<8x128xf32>
    %934 = arith.negf %933 : vector<8x128xf32>
    %935 = math.exp %934 : vector<8x128xf32>
    %cst_264 = arith.constant 1.000000e+00 : f32
    %936 = vector.broadcast %cst_264 : f32 to vector<8x128xf32>
    %937 = arith.addf %936, %935 : vector<8x128xf32>
    %938 = arith.divf %936, %937 : vector<8x128xf32>
    %939 = vector.extract_strided_slice %922 {offsets = [0, 256], sizes = [8, 128], strides = [1, 1]} : vector<8x384xf32> to vector<8x128xf32>
    %940 = vector.extract_strided_slice %918 {offsets = [0, 256], sizes = [8, 128], strides = [1, 1]} : vector<8x384xf32> to vector<8x128xf32>
    %941 = vector.broadcast %622 : vector<1x128xf32> to vector<8x128xf32>
    %942 = arith.addf %940, %941 : vector<8x128xf32>
    %943 = arith.mulf %930, %942 : vector<8x128xf32>
    %944 = arith.addf %939, %943 : vector<8x128xf32>
    %945 = math.tanh %944 : vector<8x128xf32>
    %cst_265 = arith.constant 1.000000e+00 : f32
    %946 = vector.broadcast %cst_265 : f32 to vector<8x128xf32>
    %947 = arith.subf %946, %938 : vector<8x128xf32>
    %948 = arith.mulf %947, %945 : vector<8x128xf32>
    %949 = arith.mulf %938, %877 : vector<8x128xf32>
    %950 = arith.addf %948, %949 : vector<8x128xf32>
    %951 = arith.index_cast %917 : i32 to index
    %c0_266 = arith.constant 0 : index
    %c0_267 = arith.constant 0 : index
    %952 = vector.load %arg19[%951, %c0_266, %c0_267] : memref<8x8x384xf32, #tpu.memory_space<vmem>>, vector<1x8x384xf32>
    %953 = vector.shape_cast %952 : vector<1x8x384xf32> to vector<8x384xf32>
    %954 = vector.extract_strided_slice %953 {offsets = [0, 0], sizes = [8, 128], strides = [1, 1]} : vector<8x384xf32> to vector<8x128xf32>
    %955 = vector.extract_strided_slice %919 {offsets = [0, 0], sizes = [8, 128], strides = [1, 1]} : vector<8x384xf32> to vector<8x128xf32>
    %956 = arith.addf %954, %955 : vector<8x128xf32>
    %957 = arith.negf %956 : vector<8x128xf32>
    %958 = math.exp %957 : vector<8x128xf32>
    %cst_268 = arith.constant 1.000000e+00 : f32
    %959 = vector.broadcast %cst_268 : f32 to vector<8x128xf32>
    %960 = arith.addf %959, %958 : vector<8x128xf32>
    %961 = arith.divf %959, %960 : vector<8x128xf32>
    %962 = vector.extract_strided_slice %953 {offsets = [0, 128], sizes = [8, 128], strides = [1, 1]} : vector<8x384xf32> to vector<8x128xf32>
    %963 = vector.extract_strided_slice %919 {offsets = [0, 128], sizes = [8, 128], strides = [1, 1]} : vector<8x384xf32> to vector<8x128xf32>
    %964 = arith.addf %962, %963 : vector<8x128xf32>
    %965 = arith.negf %964 : vector<8x128xf32>
    %966 = math.exp %965 : vector<8x128xf32>
    %cst_269 = arith.constant 1.000000e+00 : f32
    %967 = vector.broadcast %cst_269 : f32 to vector<8x128xf32>
    %968 = arith.addf %967, %966 : vector<8x128xf32>
    %969 = arith.divf %967, %968 : vector<8x128xf32>
    %970 = vector.extract_strided_slice %953 {offsets = [0, 256], sizes = [8, 128], strides = [1, 1]} : vector<8x384xf32> to vector<8x128xf32>
    %971 = vector.extract_strided_slice %919 {offsets = [0, 256], sizes = [8, 128], strides = [1, 1]} : vector<8x384xf32> to vector<8x128xf32>
    %972 = vector.broadcast %623 : vector<1x128xf32> to vector<8x128xf32>
    %973 = arith.addf %971, %972 : vector<8x128xf32>
    %974 = arith.mulf %961, %973 : vector<8x128xf32>
    %975 = arith.addf %970, %974 : vector<8x128xf32>
    %976 = math.tanh %975 : vector<8x128xf32>
    %cst_270 = arith.constant 1.000000e+00 : f32
    %977 = vector.broadcast %cst_270 : f32 to vector<8x128xf32>
    %978 = arith.subf %977, %969 : vector<8x128xf32>
    %979 = arith.mulf %978, %976 : vector<8x128xf32>
    %980 = arith.mulf %969, %908 : vector<8x128xf32>
    %981 = arith.addf %979, %980 : vector<8x128xf32>
    %982 = arith.index_cast %c4_i32_257 : i32 to index
    %c0_271 = arith.constant 0 : index
    %c0_272 = arith.constant 0 : index
    %983 = vector.load %arg15[%982, %c0_271, %c0_272] : memref<8x8x128xf32, #tpu.memory_space<vmem>>, vector<1x8x128xf32>
    %984 = vector.shape_cast %983 : vector<1x8x128xf32> to vector<8x128xf32>
    %985 = vector.shape_cast %950 : vector<8x128xf32> to vector<1x8x128xf32>
    tpu.vector_store %arg15[%982, %c0_271, %c0_272], %985 {strides = array<i32>} : memref<8x8x128xf32, #tpu.memory_space<vmem>>, vector<1x8x128xf32>,
    %986 = arith.index_cast %917 : i32 to index
    %c0_273 = arith.constant 0 : index
    %c0_274 = arith.constant 0 : index
    %987 = vector.load %arg16[%986, %c0_273, %c0_274] : memref<8x8x128xf32, #tpu.memory_space<vmem>>, vector<1x8x128xf32>
    %988 = vector.shape_cast %987 : vector<1x8x128xf32> to vector<8x128xf32>
    %989 = vector.shape_cast %981 : vector<8x128xf32> to vector<1x8x128xf32>
    tpu.vector_store %arg16[%986, %c0_273, %c0_274], %989 {strides = array<i32>} : memref<8x8x128xf32, #tpu.memory_space<vmem>>, vector<1x8x128xf32>,
    %c5_i32_275 = arith.constant 5 : i32
    %c7_i32_276 = arith.constant 7 : i32
    %990 = arith.subi %c7_i32_276, %c5_i32_275 : i32
    %cst_277 = arith.constant dense<0.000000e+00> : vector<8x384xf32>
    %991 = tpu.matmul %950, %620, %cst_277 {dimension_numbers = #tpu.dot_dimension_numbers<[1], [0], [0], [1], [0, 0, 1, 1], [], []>} : vector<8x128xf32>, vector<128x384xf32>, vector<8x384xf32> -> vector<8x384xf32>
    %cst_278 = arith.constant dense<0.000000e+00> : vector<8x384xf32>
    %992 = tpu.matmul %981, %621, %cst_278 {dimension_numbers = #tpu.dot_dimension_numbers<[1], [0], [0], [1], [0, 0, 1, 1], [], []>} : vector<8x128xf32>, vector<128x384xf32>, vector<8x384xf32> -> vector<8x384xf32>
    %993 = arith.index_cast %c5_i32_275 : i32 to index
    %c0_279 = arith.constant 0 : index
    %c0_280 = arith.constant 0 : index
    %994 = vector.load %arg18[%993, %c0_279, %c0_280] : memref<8x8x384xf32, #tpu.memory_space<vmem>>, vector<1x8x384xf32>
    %995 = vector.shape_cast %994 : vector<1x8x384xf32> to vector<8x384xf32>
    %996 = vector.extract_strided_slice %995 {offsets = [0, 0], sizes = [8, 128], strides = [1, 1]} : vector<8x384xf32> to vector<8x128xf32>
    %997 = vector.extract_strided_slice %991 {offsets = [0, 0], sizes = [8, 128], strides = [1, 1]} : vector<8x384xf32> to vector<8x128xf32>
    %998 = arith.addf %996, %997 : vector<8x128xf32>
    %999 = arith.negf %998 : vector<8x128xf32>
    %1000 = math.exp %999 : vector<8x128xf32>
    %cst_281 = arith.constant 1.000000e+00 : f32
    %1001 = vector.broadcast %cst_281 : f32 to vector<8x128xf32>
    %1002 = arith.addf %1001, %1000 : vector<8x128xf32>
    %1003 = arith.divf %1001, %1002 : vector<8x128xf32>
    %1004 = vector.extract_strided_slice %995 {offsets = [0, 128], sizes = [8, 128], strides = [1, 1]} : vector<8x384xf32> to vector<8x128xf32>
    %1005 = vector.extract_strided_slice %991 {offsets = [0, 128], sizes = [8, 128], strides = [1, 1]} : vector<8x384xf32> to vector<8x128xf32>
    %1006 = arith.addf %1004, %1005 : vector<8x128xf32>
    %1007 = arith.negf %1006 : vector<8x128xf32>
    %1008 = math.exp %1007 : vector<8x128xf32>
    %cst_282 = arith.constant 1.000000e+00 : f32
    %1009 = vector.broadcast %cst_282 : f32 to vector<8x128xf32>
    %1010 = arith.addf %1009, %1008 : vector<8x128xf32>
    %1011 = arith.divf %1009, %1010 : vector<8x128xf32>
    %1012 = vector.extract_strided_slice %995 {offsets = [0, 256], sizes = [8, 128], strides = [1, 1]} : vector<8x384xf32> to vector<8x128xf32>
    %1013 = vector.extract_strided_slice %991 {offsets = [0, 256], sizes = [8, 128], strides = [1, 1]} : vector<8x384xf32> to vector<8x128xf32>
    %1014 = vector.broadcast %622 : vector<1x128xf32> to vector<8x128xf32>
    %1015 = arith.addf %1013, %1014 : vector<8x128xf32>
    %1016 = arith.mulf %1003, %1015 : vector<8x128xf32>
    %1017 = arith.addf %1012, %1016 : vector<8x128xf32>
    %1018 = math.tanh %1017 : vector<8x128xf32>
    %cst_283 = arith.constant 1.000000e+00 : f32
    %1019 = vector.broadcast %cst_283 : f32 to vector<8x128xf32>
    %1020 = arith.subf %1019, %1011 : vector<8x128xf32>
    %1021 = arith.mulf %1020, %1018 : vector<8x128xf32>
    %1022 = arith.mulf %1011, %950 : vector<8x128xf32>
    %1023 = arith.addf %1021, %1022 : vector<8x128xf32>
    %1024 = arith.index_cast %990 : i32 to index
    %c0_284 = arith.constant 0 : index
    %c0_285 = arith.constant 0 : index
    %1025 = vector.load %arg19[%1024, %c0_284, %c0_285] : memref<8x8x384xf32, #tpu.memory_space<vmem>>, vector<1x8x384xf32>
    %1026 = vector.shape_cast %1025 : vector<1x8x384xf32> to vector<8x384xf32>
    %1027 = vector.extract_strided_slice %1026 {offsets = [0, 0], sizes = [8, 128], strides = [1, 1]} : vector<8x384xf32> to vector<8x128xf32>
    %1028 = vector.extract_strided_slice %992 {offsets = [0, 0], sizes = [8, 128], strides = [1, 1]} : vector<8x384xf32> to vector<8x128xf32>
    %1029 = arith.addf %1027, %1028 : vector<8x128xf32>
    %1030 = arith.negf %1029 : vector<8x128xf32>
    %1031 = math.exp %1030 : vector<8x128xf32>
    %cst_286 = arith.constant 1.000000e+00 : f32
    %1032 = vector.broadcast %cst_286 : f32 to vector<8x128xf32>
    %1033 = arith.addf %1032, %1031 : vector<8x128xf32>
    %1034 = arith.divf %1032, %1033 : vector<8x128xf32>
    %1035 = vector.extract_strided_slice %1026 {offsets = [0, 128], sizes = [8, 128], strides = [1, 1]} : vector<8x384xf32> to vector<8x128xf32>
    %1036 = vector.extract_strided_slice %992 {offsets = [0, 128], sizes = [8, 128], strides = [1, 1]} : vector<8x384xf32> to vector<8x128xf32>
    %1037 = arith.addf %1035, %1036 : vector<8x128xf32>
    %1038 = arith.negf %1037 : vector<8x128xf32>
    %1039 = math.exp %1038 : vector<8x128xf32>
    %cst_287 = arith.constant 1.000000e+00 : f32
    %1040 = vector.broadcast %cst_287 : f32 to vector<8x128xf32>
    %1041 = arith.addf %1040, %1039 : vector<8x128xf32>
    %1042 = arith.divf %1040, %1041 : vector<8x128xf32>
    %1043 = vector.extract_strided_slice %1026 {offsets = [0, 256], sizes = [8, 128], strides = [1, 1]} : vector<8x384xf32> to vector<8x128xf32>
    %1044 = vector.extract_strided_slice %992 {offsets = [0, 256], sizes = [8, 128], strides = [1, 1]} : vector<8x384xf32> to vector<8x128xf32>
    %1045 = vector.broadcast %623 : vector<1x128xf32> to vector<8x128xf32>
    %1046 = arith.addf %1044, %1045 : vector<8x128xf32>
    %1047 = arith.mulf %1034, %1046 : vector<8x128xf32>
    %1048 = arith.addf %1043, %1047 : vector<8x128xf32>
    %1049 = math.tanh %1048 : vector<8x128xf32>
    %cst_288 = arith.constant 1.000000e+00 : f32
    %1050 = vector.broadcast %cst_288 : f32 to vector<8x128xf32>
    %1051 = arith.subf %1050, %1042 : vector<8x128xf32>
    %1052 = arith.mulf %1051, %1049 : vector<8x128xf32>
    %1053 = arith.mulf %1042, %981 : vector<8x128xf32>
    %1054 = arith.addf %1052, %1053 : vector<8x128xf32>
    %1055 = arith.index_cast %c5_i32_275 : i32 to index
    %c0_289 = arith.constant 0 : index
    %c0_290 = arith.constant 0 : index
    %1056 = vector.load %arg15[%1055, %c0_289, %c0_290] : memref<8x8x128xf32, #tpu.memory_space<vmem>>, vector<1x8x128xf32>
    %1057 = vector.shape_cast %1056 : vector<1x8x128xf32> to vector<8x128xf32>
    %1058 = vector.shape_cast %1023 : vector<8x128xf32> to vector<1x8x128xf32>
    tpu.vector_store %arg15[%1055, %c0_289, %c0_290], %1058 {strides = array<i32>} : memref<8x8x128xf32, #tpu.memory_space<vmem>>, vector<1x8x128xf32>,
    %1059 = arith.index_cast %990 : i32 to index
    %c0_291 = arith.constant 0 : index
    %c0_292 = arith.constant 0 : index
    %1060 = vector.load %arg16[%1059, %c0_291, %c0_292] : memref<8x8x128xf32, #tpu.memory_space<vmem>>, vector<1x8x128xf32>
    %1061 = vector.shape_cast %1060 : vector<1x8x128xf32> to vector<8x128xf32>
    %1062 = vector.shape_cast %1054 : vector<8x128xf32> to vector<1x8x128xf32>
    tpu.vector_store %arg16[%1059, %c0_291, %c0_292], %1062 {strides = array<i32>} : memref<8x8x128xf32, #tpu.memory_space<vmem>>, vector<1x8x128xf32>,
    %c6_i32_293 = arith.constant 6 : i32
    %c7_i32_294 = arith.constant 7 : i32
    %1063 = arith.subi %c7_i32_294, %c6_i32_293 : i32
    %cst_295 = arith.constant dense<0.000000e+00> : vector<8x384xf32>
    %1064 = tpu.matmul %1023, %620, %cst_295 {dimension_numbers = #tpu.dot_dimension_numbers<[1], [0], [0], [1], [0, 0, 1, 1], [], []>} : vector<8x128xf32>, vector<128x384xf32>, vector<8x384xf32> -> vector<8x384xf32>
    %cst_296 = arith.constant dense<0.000000e+00> : vector<8x384xf32>
    %1065 = tpu.matmul %1054, %621, %cst_296 {dimension_numbers = #tpu.dot_dimension_numbers<[1], [0], [0], [1], [0, 0, 1, 1], [], []>} : vector<8x128xf32>, vector<128x384xf32>, vector<8x384xf32> -> vector<8x384xf32>
    %1066 = arith.index_cast %c6_i32_293 : i32 to index
    %c0_297 = arith.constant 0 : index
    %c0_298 = arith.constant 0 : index
    %1067 = vector.load %arg18[%1066, %c0_297, %c0_298] : memref<8x8x384xf32, #tpu.memory_space<vmem>>, vector<1x8x384xf32>
    %1068 = vector.shape_cast %1067 : vector<1x8x384xf32> to vector<8x384xf32>
    %1069 = vector.extract_strided_slice %1068 {offsets = [0, 0], sizes = [8, 128], strides = [1, 1]} : vector<8x384xf32> to vector<8x128xf32>
    %1070 = vector.extract_strided_slice %1064 {offsets = [0, 0], sizes = [8, 128], strides = [1, 1]} : vector<8x384xf32> to vector<8x128xf32>
    %1071 = arith.addf %1069, %1070 : vector<8x128xf32>
    %1072 = arith.negf %1071 : vector<8x128xf32>
    %1073 = math.exp %1072 : vector<8x128xf32>
    %cst_299 = arith.constant 1.000000e+00 : f32
    %1074 = vector.broadcast %cst_299 : f32 to vector<8x128xf32>
    %1075 = arith.addf %1074, %1073 : vector<8x128xf32>
    %1076 = arith.divf %1074, %1075 : vector<8x128xf32>
    %1077 = vector.extract_strided_slice %1068 {offsets = [0, 128], sizes = [8, 128], strides = [1, 1]} : vector<8x384xf32> to vector<8x128xf32>
    %1078 = vector.extract_strided_slice %1064 {offsets = [0, 128], sizes = [8, 128], strides = [1, 1]} : vector<8x384xf32> to vector<8x128xf32>
    %1079 = arith.addf %1077, %1078 : vector<8x128xf32>
    %1080 = arith.negf %1079 : vector<8x128xf32>
    %1081 = math.exp %1080 : vector<8x128xf32>
    %cst_300 = arith.constant 1.000000e+00 : f32
    %1082 = vector.broadcast %cst_300 : f32 to vector<8x128xf32>
    %1083 = arith.addf %1082, %1081 : vector<8x128xf32>
    %1084 = arith.divf %1082, %1083 : vector<8x128xf32>
    %1085 = vector.extract_strided_slice %1068 {offsets = [0, 256], sizes = [8, 128], strides = [1, 1]} : vector<8x384xf32> to vector<8x128xf32>
    %1086 = vector.extract_strided_slice %1064 {offsets = [0, 256], sizes = [8, 128], strides = [1, 1]} : vector<8x384xf32> to vector<8x128xf32>
    %1087 = vector.broadcast %622 : vector<1x128xf32> to vector<8x128xf32>
    %1088 = arith.addf %1086, %1087 : vector<8x128xf32>
    %1089 = arith.mulf %1076, %1088 : vector<8x128xf32>
    %1090 = arith.addf %1085, %1089 : vector<8x128xf32>
    %1091 = math.tanh %1090 : vector<8x128xf32>
    %cst_301 = arith.constant 1.000000e+00 : f32
    %1092 = vector.broadcast %cst_301 : f32 to vector<8x128xf32>
    %1093 = arith.subf %1092, %1084 : vector<8x128xf32>
    %1094 = arith.mulf %1093, %1091 : vector<8x128xf32>
    %1095 = arith.mulf %1084, %1023 : vector<8x128xf32>
    %1096 = arith.addf %1094, %1095 : vector<8x128xf32>
    %1097 = arith.index_cast %1063 : i32 to index
    %c0_302 = arith.constant 0 : index
    %c0_303 = arith.constant 0 : index
    %1098 = vector.load %arg19[%1097, %c0_302, %c0_303] : memref<8x8x384xf32, #tpu.memory_space<vmem>>, vector<1x8x384xf32>
    %1099 = vector.shape_cast %1098 : vector<1x8x384xf32> to vector<8x384xf32>
    %1100 = vector.extract_strided_slice %1099 {offsets = [0, 0], sizes = [8, 128], strides = [1, 1]} : vector<8x384xf32> to vector<8x128xf32>
    %1101 = vector.extract_strided_slice %1065 {offsets = [0, 0], sizes = [8, 128], strides = [1, 1]} : vector<8x384xf32> to vector<8x128xf32>
    %1102 = arith.addf %1100, %1101 : vector<8x128xf32>
    %1103 = arith.negf %1102 : vector<8x128xf32>
    %1104 = math.exp %1103 : vector<8x128xf32>
    %cst_304 = arith.constant 1.000000e+00 : f32
    %1105 = vector.broadcast %cst_304 : f32 to vector<8x128xf32>
    %1106 = arith.addf %1105, %1104 : vector<8x128xf32>
    %1107 = arith.divf %1105, %1106 : vector<8x128xf32>
    %1108 = vector.extract_strided_slice %1099 {offsets = [0, 128], sizes = [8, 128], strides = [1, 1]} : vector<8x384xf32> to vector<8x128xf32>
    %1109 = vector.extract_strided_slice %1065 {offsets = [0, 128], sizes = [8, 128], strides = [1, 1]} : vector<8x384xf32> to vector<8x128xf32>
    %1110 = arith.addf %1108, %1109 : vector<8x128xf32>
    %1111 = arith.negf %1110 : vector<8x128xf32>
    %1112 = math.exp %1111 : vector<8x128xf32>
    %cst_305 = arith.constant 1.000000e+00 : f32
    %1113 = vector.broadcast %cst_305 : f32 to vector<8x128xf32>
    %1114 = arith.addf %1113, %1112 : vector<8x128xf32>
    %1115 = arith.divf %1113, %1114 : vector<8x128xf32>
    %1116 = vector.extract_strided_slice %1099 {offsets = [0, 256], sizes = [8, 128], strides = [1, 1]} : vector<8x384xf32> to vector<8x128xf32>
    %1117 = vector.extract_strided_slice %1065 {offsets = [0, 256], sizes = [8, 128], strides = [1, 1]} : vector<8x384xf32> to vector<8x128xf32>
    %1118 = vector.broadcast %623 : vector<1x128xf32> to vector<8x128xf32>
    %1119 = arith.addf %1117, %1118 : vector<8x128xf32>
    %1120 = arith.mulf %1107, %1119 : vector<8x128xf32>
    %1121 = arith.addf %1116, %1120 : vector<8x128xf32>
    %1122 = math.tanh %1121 : vector<8x128xf32>
    %cst_306 = arith.constant 1.000000e+00 : f32
    %1123 = vector.broadcast %cst_306 : f32 to vector<8x128xf32>
    %1124 = arith.subf %1123, %1115 : vector<8x128xf32>
    %1125 = arith.mulf %1124, %1122 : vector<8x128xf32>
    %1126 = arith.mulf %1115, %1054 : vector<8x128xf32>
    %1127 = arith.addf %1125, %1126 : vector<8x128xf32>
    %1128 = arith.index_cast %c6_i32_293 : i32 to index
    %c0_307 = arith.constant 0 : index
    %c0_308 = arith.constant 0 : index
    %1129 = vector.load %arg15[%1128, %c0_307, %c0_308] : memref<8x8x128xf32, #tpu.memory_space<vmem>>, vector<1x8x128xf32>
    %1130 = vector.shape_cast %1129 : vector<1x8x128xf32> to vector<8x128xf32>
    %1131 = vector.shape_cast %1096 : vector<8x128xf32> to vector<1x8x128xf32>
    tpu.vector_store %arg15[%1128, %c0_307, %c0_308], %1131 {strides = array<i32>} : memref<8x8x128xf32, #tpu.memory_space<vmem>>, vector<1x8x128xf32>,
    %1132 = arith.index_cast %1063 : i32 to index
    %c0_309 = arith.constant 0 : index
    %c0_310 = arith.constant 0 : index
    %1133 = vector.load %arg16[%1132, %c0_309, %c0_310] : memref<8x8x128xf32, #tpu.memory_space<vmem>>, vector<1x8x128xf32>
    %1134 = vector.shape_cast %1133 : vector<1x8x128xf32> to vector<8x128xf32>
    %1135 = vector.shape_cast %1127 : vector<8x128xf32> to vector<1x8x128xf32>
    tpu.vector_store %arg16[%1132, %c0_309, %c0_310], %1135 {strides = array<i32>} : memref<8x8x128xf32, #tpu.memory_space<vmem>>, vector<1x8x128xf32>,
    %c7_i32_311 = arith.constant 7 : i32
    %c7_i32_312 = arith.constant 7 : i32
    %1136 = arith.subi %c7_i32_312, %c7_i32_311 : i32
    %cst_313 = arith.constant dense<0.000000e+00> : vector<8x384xf32>
    %1137 = tpu.matmul %1096, %620, %cst_313 {dimension_numbers = #tpu.dot_dimension_numbers<[1], [0], [0], [1], [0, 0, 1, 1], [], []>} : vector<8x128xf32>, vector<128x384xf32>, vector<8x384xf32> -> vector<8x384xf32>
    %cst_314 = arith.constant dense<0.000000e+00> : vector<8x384xf32>
    %1138 = tpu.matmul %1127, %621, %cst_314 {dimension_numbers = #tpu.dot_dimension_numbers<[1], [0], [0], [1], [0, 0, 1, 1], [], []>} : vector<8x128xf32>, vector<128x384xf32>, vector<8x384xf32> -> vector<8x384xf32>
    %1139 = arith.index_cast %c7_i32_311 : i32 to index
    %c0_315 = arith.constant 0 : index
    %c0_316 = arith.constant 0 : index
    %1140 = vector.load %arg18[%1139, %c0_315, %c0_316] : memref<8x8x384xf32, #tpu.memory_space<vmem>>, vector<1x8x384xf32>
    %1141 = vector.shape_cast %1140 : vector<1x8x384xf32> to vector<8x384xf32>
    %1142 = vector.extract_strided_slice %1141 {offsets = [0, 0], sizes = [8, 128], strides = [1, 1]} : vector<8x384xf32> to vector<8x128xf32>
    %1143 = vector.extract_strided_slice %1137 {offsets = [0, 0], sizes = [8, 128], strides = [1, 1]} : vector<8x384xf32> to vector<8x128xf32>
    %1144 = arith.addf %1142, %1143 : vector<8x128xf32>
    %1145 = arith.negf %1144 : vector<8x128xf32>
    %1146 = math.exp %1145 : vector<8x128xf32>
    %cst_317 = arith.constant 1.000000e+00 : f32
    %1147 = vector.broadcast %cst_317 : f32 to vector<8x128xf32>
    %1148 = arith.addf %1147, %1146 : vector<8x128xf32>
    %1149 = arith.divf %1147, %1148 : vector<8x128xf32>
    %1150 = vector.extract_strided_slice %1141 {offsets = [0, 128], sizes = [8, 128], strides = [1, 1]} : vector<8x384xf32> to vector<8x128xf32>
    %1151 = vector.extract_strided_slice %1137 {offsets = [0, 128], sizes = [8, 128], strides = [1, 1]} : vector<8x384xf32> to vector<8x128xf32>
    %1152 = arith.addf %1150, %1151 : vector<8x128xf32>
    %1153 = arith.negf %1152 : vector<8x128xf32>
    %1154 = math.exp %1153 : vector<8x128xf32>
    %cst_318 = arith.constant 1.000000e+00 : f32
    %1155 = vector.broadcast %cst_318 : f32 to vector<8x128xf32>
    %1156 = arith.addf %1155, %1154 : vector<8x128xf32>
    %1157 = arith.divf %1155, %1156 : vector<8x128xf32>
    %1158 = vector.extract_strided_slice %1141 {offsets = [0, 256], sizes = [8, 128], strides = [1, 1]} : vector<8x384xf32> to vector<8x128xf32>
    %1159 = vector.extract_strided_slice %1137 {offsets = [0, 256], sizes = [8, 128], strides = [1, 1]} : vector<8x384xf32> to vector<8x128xf32>
    %1160 = vector.broadcast %622 : vector<1x128xf32> to vector<8x128xf32>
    %1161 = arith.addf %1159, %1160 : vector<8x128xf32>
    %1162 = arith.mulf %1149, %1161 : vector<8x128xf32>
    %1163 = arith.addf %1158, %1162 : vector<8x128xf32>
    %1164 = math.tanh %1163 : vector<8x128xf32>
    %cst_319 = arith.constant 1.000000e+00 : f32
    %1165 = vector.broadcast %cst_319 : f32 to vector<8x128xf32>
    %1166 = arith.subf %1165, %1157 : vector<8x128xf32>
    %1167 = arith.mulf %1166, %1164 : vector<8x128xf32>
    %1168 = arith.mulf %1157, %1096 : vector<8x128xf32>
    %1169 = arith.addf %1167, %1168 : vector<8x128xf32>
    %1170 = arith.index_cast %1136 : i32 to index
    %c0_320 = arith.constant 0 : index
    %c0_321 = arith.constant 0 : index
    %1171 = vector.load %arg19[%1170, %c0_320, %c0_321] : memref<8x8x384xf32, #tpu.memory_space<vmem>>, vector<1x8x384xf32>
    %1172 = vector.shape_cast %1171 : vector<1x8x384xf32> to vector<8x384xf32>
    %1173 = vector.extract_strided_slice %1172 {offsets = [0, 0], sizes = [8, 128], strides = [1, 1]} : vector<8x384xf32> to vector<8x128xf32>
    %1174 = vector.extract_strided_slice %1138 {offsets = [0, 0], sizes = [8, 128], strides = [1, 1]} : vector<8x384xf32> to vector<8x128xf32>
    %1175 = arith.addf %1173, %1174 : vector<8x128xf32>
    %1176 = arith.negf %1175 : vector<8x128xf32>
    %1177 = math.exp %1176 : vector<8x128xf32>
    %cst_322 = arith.constant 1.000000e+00 : f32
    %1178 = vector.broadcast %cst_322 : f32 to vector<8x128xf32>
    %1179 = arith.addf %1178, %1177 : vector<8x128xf32>
    %1180 = arith.divf %1178, %1179 : vector<8x128xf32>
    %1181 = vector.extract_strided_slice %1172 {offsets = [0, 128], sizes = [8, 128], strides = [1, 1]} : vector<8x384xf32> to vector<8x128xf32>
    %1182 = vector.extract_strided_slice %1138 {offsets = [0, 128], sizes = [8, 128], strides = [1, 1]} : vector<8x384xf32> to vector<8x128xf32>
    %1183 = arith.addf %1181, %1182 : vector<8x128xf32>
    %1184 = arith.negf %1183 : vector<8x128xf32>
    %1185 = math.exp %1184 : vector<8x128xf32>
    %cst_323 = arith.constant 1.000000e+00 : f32
    %1186 = vector.broadcast %cst_323 : f32 to vector<8x128xf32>
    %1187 = arith.addf %1186, %1185 : vector<8x128xf32>
    %1188 = arith.divf %1186, %1187 : vector<8x128xf32>
    %1189 = vector.extract_strided_slice %1172 {offsets = [0, 256], sizes = [8, 128], strides = [1, 1]} : vector<8x384xf32> to vector<8x128xf32>
    %1190 = vector.extract_strided_slice %1138 {offsets = [0, 256], sizes = [8, 128], strides = [1, 1]} : vector<8x384xf32> to vector<8x128xf32>
    %1191 = vector.broadcast %623 : vector<1x128xf32> to vector<8x128xf32>
    %1192 = arith.addf %1190, %1191 : vector<8x128xf32>
    %1193 = arith.mulf %1180, %1192 : vector<8x128xf32>
    %1194 = arith.addf %1189, %1193 : vector<8x128xf32>
    %1195 = math.tanh %1194 : vector<8x128xf32>
    %cst_324 = arith.constant 1.000000e+00 : f32
    %1196 = vector.broadcast %cst_324 : f32 to vector<8x128xf32>
    %1197 = arith.subf %1196, %1188 : vector<8x128xf32>
    %1198 = arith.mulf %1197, %1195 : vector<8x128xf32>
    %1199 = arith.mulf %1188, %1127 : vector<8x128xf32>
    %1200 = arith.addf %1198, %1199 : vector<8x128xf32>
    %1201 = arith.index_cast %c7_i32_311 : i32 to index
    %c0_325 = arith.constant 0 : index
    %c0_326 = arith.constant 0 : index
    %1202 = vector.load %arg15[%1201, %c0_325, %c0_326] : memref<8x8x128xf32, #tpu.memory_space<vmem>>, vector<1x8x128xf32>
    %1203 = vector.shape_cast %1202 : vector<1x8x128xf32> to vector<8x128xf32>
    %1204 = vector.shape_cast %1169 : vector<8x128xf32> to vector<1x8x128xf32>
    tpu.vector_store %arg15[%1201, %c0_325, %c0_326], %1204 {strides = array<i32>} : memref<8x8x128xf32, #tpu.memory_space<vmem>>, vector<1x8x128xf32>,
    %1205 = arith.index_cast %1136 : i32 to index
    %c0_327 = arith.constant 0 : index
    %c0_328 = arith.constant 0 : index
    %1206 = vector.load %arg16[%1205, %c0_327, %c0_328] : memref<8x8x128xf32, #tpu.memory_space<vmem>>, vector<1x8x128xf32>
    %1207 = vector.shape_cast %1206 : vector<1x8x128xf32> to vector<8x128xf32>
    %1208 = vector.shape_cast %1200 : vector<8x128xf32> to vector<1x8x128xf32>
    tpu.vector_store %arg16[%1205, %c0_327, %c0_328], %1208 {strides = array<i32>} : memref<8x8x128xf32, #tpu.memory_space<vmem>>, vector<1x8x128xf32>,
    %c8_i32_329 = arith.constant 8 : i32
    %1209 = tpu.concatenate %1169, %1200 in 1 : vector<8x128xf32>, vector<8x128xf32> -> vector<8x256xf32>
    %c0_330 = arith.constant 0 : index
    %c0_331 = arith.constant 0 : index
    %1210 = vector.load %arg13[%c0_330, %c0_331] : memref<256x128xf32, #tpu.memory_space<vmem>>, vector<256x128xf32>
    %cst_332 = arith.constant dense<0.000000e+00> : vector<8x128xf32>
    %1211 = tpu.matmul %1209, %1210, %cst_332 {dimension_numbers = #tpu.dot_dimension_numbers<[1], [0], [0], [1], [0, 0, 1, 1], [], []>} : vector<8x256xf32>, vector<256x128xf32>, vector<8x128xf32> -> vector<8x128xf32>
    %c0_333 = arith.constant 0 : index
    %c0_334 = arith.constant 0 : index
    %1212 = vector.load %arg14[%c0_333, %c0_334] : memref<1x128xf32, #tpu.memory_space<vmem>>, vector<1x128xf32>
    %1213 = vector.broadcast %1212 : vector<1x128xf32> to vector<8x128xf32>
    %1214 = arith.addf %1211, %1213 : vector<8x128xf32>
    %1215 = math.tanh %1214 : vector<8x128xf32>
    %c0_335 = arith.constant 0 : index
    %c0_336 = arith.constant 0 : index
    %1216 = vector.load %arg17[%c0_335, %c0_336] : memref<8x128xf32, #tpu.memory_space<vmem>>, vector<8x128xf32>
    tpu.vector_store %arg17[%c0_335, %c0_336], %1215 {strides = array<i32>} : memref<8x128xf32, #tpu.memory_space<vmem>>, vector<8x128xf32>,
    return
  }
}

</mosaic_0001>

<llo_original>
// kernel: encoder_forward.1
$region0: #{encoder_forward.1}
  #allocation0 [shape = 'u32[]', space=smem, size = 0x4, offset = 0x4, fixed_abs, tag = 'smem constant byte address 0x4 - core index']
  #allocation1 [shape = 'u32[144,128]{1,0:T(1,128)}', space=vmem, size = 0x12000, scoped, tag = 'internal scratch']
  #allocation2 [shape = 'f32[8,8,384]{2,1,0:T(8,128)}', space=vmem, size = 0x18000, scoped, tag = 'scratch operand']
  #allocation3 [shape = 'f32[8,8,384]{2,1,0:T(8,128)}', space=vmem, size = 0x18000, scoped, tag = 'scratch operand']
  #allocation4 [shape = 'f32[8,8,128]{2,1,0:T(8,128)}', space=vmem, size = 0x8000, scoped, tag = 'scratch operand']
  #allocation5 [shape = 'f32[8,8,128]{2,1,0:T(8,128)}', space=vmem, size = 0x8000, scoped, tag = 'scratch operand']
  %s0 = inlined_call_operand.vmem [shape: f32[8,8,128], index: 0, kind: input, shape index: {}]
  %s1 = inlined_call_operand.hbm [shape: f32[128,768], index: 1, kind: input, shape index: {}]
  %s2 = inlined_call_operand.vmem [shape: f32[1,768], index: 2, kind: input, shape index: {}]
  %s3 = inlined_call_operand.hbm [shape: f32[128,384], index: 3, kind: input, shape index: {}]
  %s4 = inlined_call_operand.vmem [shape: f32[1,128], index: 4, kind: input, shape index: {}]
  %s5 = inlined_call_operand.hbm [shape: f32[128,384], index: 5, kind: input, shape index: {}]
  %s6 = inlined_call_operand.vmem [shape: f32[1,128], index: 6, kind: input, shape index: {}]
  %s7 = inlined_call_operand.hbm [shape: f32[256,768], index: 7, kind: input, shape index: {}]
  %s8 = inlined_call_operand.vmem [shape: f32[1,768], index: 8, kind: input, shape index: {}]
  %s9 = inlined_call_operand.hbm [shape: f32[128,384], index: 9, kind: input, shape index: {}]
  %s10 = inlined_call_operand.vmem [shape: f32[1,128], index: 10, kind: input, shape index: {}]
  %s11 = inlined_call_operand.hbm [shape: f32[128,384], index: 11, kind: input, shape index: {}]
  %s12 = inlined_call_operand.vmem [shape: f32[1,128], index: 12, kind: input, shape index: {}]
  %s13 = inlined_call_operand.vmem [shape: f32[256,128], index: 13, kind: input, shape index: {}]
  %s14 = inlined_call_operand.vmem [shape: f32[1,128], index: 14, kind: input, shape index: {}]
  %s15 = inlined_call_operand.vmem [shape: f32[8,8,128], index: 15, kind: output, shape index: {0}]
  %s16 = inlined_call_operand.vmem [shape: f32[8,8,128], index: 16, kind: output, shape index: {1}]
  %s17 = inlined_call_operand.vmem [shape: f32[8,128], index: 17, kind: output, shape index: {2}]
  %18 = xla_tuple %s15, %s16, %s17
  %s19 = sld [smem:[#allocation0]]
  $region110: #{encoder_forward.1} parent=0
    _
  %s21 = ssub.s32 1, %s19
  %s22 = scalar_select 0, %s21, %s19
  $region1: #{encoder_forward.1} parent=0
    #allocation6 [shape = 'u8[393216]{0}', space=vmem, size = 0x60000, scoped, tag = 'input window, operand 1, single buffered']
    #allocation7 [shape = 's32[1]{0}', space=sflag, size = 0x4, scoped, tag = 'scoped memory for encoder_forward.1']
    #allocation8 [shape = 'u8[196608]{0}', space=vmem, size = 0x30000, scoped, tag = 'input window, operand 3, single buffered']
    #allocation9 [shape = 's32[1]{0}', space=sflag, size = 0x4, scoped, tag = 'scoped memory for encoder_forward.1']
    #allocation10 [shape = 'u8[196608]{0}', space=vmem, size = 0x30000, scoped, tag = 'input window, operand 5, single buffered']
    #allocation11 [shape = 'u8[786432]{0}', space=vmem, size = 0xc0000, scoped, tag = 'input window, operand 7, single buffered']
    #allocation12 [shape = 's32[1]{0}', space=sflag, size = 0x4, scoped, tag = 'scoped memory for encoder_forward.1']
    #allocation13 [shape = 'u8[196608]{0}', space=vmem, size = 0x30000, scoped, tag = 'input window, operand 9, single buffered']
    #allocation14 [shape = 'u8[196608]{0}', space=vmem, size = 0x30000, scoped, tag = 'input window, operand 11, single buffered']
    #allocation15 [shape = 's32[1]{0}', space=sflag, size = 0x4, scoped, tag = 'scoped memory for encoder_forward.1']
    %23 = vsyncpa [#allocation7], 0
    %24 = vsyncpa [#allocation9], 0
    %25 = vsyncpa [#allocation12], 0
    %26 = vsyncpa [#allocation15], 0
    // Predicated region
    $region2: #{encoder_forward.1} parent=1 // pred_check
      _
    $region3: #{encoder_forward.1} parent=1 // pred_check_branch
      %28 = sbr.rel (0) target = $region5
    $region4: #{encoder_forward.1} parent=1 // pred_region
      _
    $region5: #{encoder_forward.1} parent=1 // pred_fallthru
      _
    // Predicated region
    $region6: #{encoder_forward.1} parent=1 // pred_check
      _
    $region7: #{encoder_forward.1} parent=1 // pred_check_branch
      %30 = sbr.rel (0) target = $region9
    $region8: #{encoder_forward.1} parent=1 // pred_region
      %s32 = ssub.s32 12288, 12288
      %33 = vsyncadd [#allocation7], %s32
      %s34 = sshll.u32 [#allocation6], 4
      %s35 = int_to_ptr.vmem [resolvable:$true] %s34
      %40 = dma.hbm_to_vmem [thread:$0]  %s1, 12288, %s35, [#allocation7], 768, 768, 48
    $region9: #{encoder_forward.1} parent=1 // pred_fallthru
      _
    // Predicated region
    $region10: #{encoder_forward.1} parent=1 // pred_check
      _
    $region11: #{encoder_forward.1} parent=1 // pred_check_branch
      %42 = sbr.rel (0) target = $region13
    $region12: #{encoder_forward.1} parent=1 // pred_region
      _
    $region13: #{encoder_forward.1} parent=1 // pred_fallthru
      _
    // Predicated region
    $region14: #{encoder_forward.1} parent=1 // pred_check
      _
    $region15: #{encoder_forward.1} parent=1 // pred_check_branch
      %44 = sbr.rel (0) target = $region17
    $region16: #{encoder_forward.1} parent=1 // pred_region
      %s46 = ssub.s32 6144, 6144
      %47 = vsyncadd [#allocation9], %s46
      %s48 = sshll.u32 [#allocation8], 4
      %s49 = int_to_ptr.vmem [resolvable:$true] %s48
      %54 = dma.hbm_to_vmem [thread:$0]  %s3, 6144, %s49, [#allocation9], 384, 384, 24
    $region17: #{encoder_forward.1} parent=1 // pred_fallthru
      _
    // Predicated region
    $region18: #{encoder_forward.1} parent=1 // pred_check
      _
    $region19: #{encoder_forward.1} parent=1 // pred_check_branch
      %56 = sbr.rel (0) target = $region21
    $region20: #{encoder_forward.1} parent=1 // pred_region
      _
    $region21: #{encoder_forward.1} parent=1 // pred_fallthru
      _
    // Predicated region
    $region22: #{encoder_forward.1} parent=1 // pred_check
      _
    $region23: #{encoder_forward.1} parent=1 // pred_check_branch
      %58 = sbr.rel (0) target = $region25
    $region24: #{encoder_forward.1} parent=1 // pred_region
      %s60 = ssub.s32 6144, 6144
      %61 = vsyncadd [#allocation9], %s60
      %s62 = sshll.u32 [#allocation10], 4
      %s63 = int_to_ptr.vmem [resolvable:$true] %s62
      %68 = dma.hbm_to_vmem [thread:$0]  %s5, 6144, %s63, [#allocation9], 384, 384, 24
    $region25: #{encoder_forward.1} parent=1 // pred_fallthru
      _
    // Predicated region
    $region26: #{encoder_forward.1} parent=1 // pred_check
      _
    $region27: #{encoder_forward.1} parent=1 // pred_check_branch
      %70 = sbr.rel (0) target = $region29
    $region28: #{encoder_forward.1} parent=1 // pred_region
      _
    $region29: #{encoder_forward.1} parent=1 // pred_fallthru
      _
    // Predicated region
    $region30: #{encoder_forward.1} parent=1 // pred_check
      _
    $region31: #{encoder_forward.1} parent=1 // pred_check_branch
      %72 = sbr.rel (0) target = $region33
    $region32: #{encoder_forward.1} parent=1 // pred_region
      %s74 = ssub.s32 24576, 24576
      %75 = vsyncadd [#allocation12], %s74
      %s76 = sshll.u32 [#allocation11], 4
      %s77 = int_to_ptr.vmem [resolvable:$true] %s76
      %82 = dma.hbm_to_vmem [thread:$0]  %s7, 24576, %s77, [#allocation12], 768, 768, 48
    $region33: #{encoder_forward.1} parent=1 // pred_fallthru
      _
    // Predicated region
    $region34: #{encoder_forward.1} parent=1 // pred_check
      _
    $region35: #{encoder_forward.1} parent=1 // pred_check_branch
      %84 = sbr.rel (0) target = $region37
    $region36: #{encoder_forward.1} parent=1 // pred_region
      _
    $region37: #{encoder_forward.1} parent=1 // pred_fallthru
      _
    // Predicated region
    $region38: #{encoder_forward.1} parent=1 // pred_check
      _
    $region39: #{encoder_forward.1} parent=1 // pred_check_branch
      %86 = sbr.rel (0) target = $region41
    $region40: #{encoder_forward.1} parent=1 // pred_region
      %s88 = ssub.s32 6144, 6144
      %89 = vsyncadd [#allocation12], %s88
      %s90 = sshll.u32 [#allocation13], 4
      %s91 = int_to_ptr.vmem [resolvable:$true] %s90
      %96 = dma.hbm_to_vmem [thread:$0]  %s9, 6144, %s91, [#allocation12], 384, 384, 24
    $region41: #{encoder_forward.1} parent=1 // pred_fallthru
      _
    // Predicated region
    $region42: #{encoder_forward.1} parent=1 // pred_check
      _
    $region43: #{encoder_forward.1} parent=1 // pred_check_branch
      %98 = sbr.rel (0) target = $region45
    $region44: #{encoder_forward.1} parent=1 // pred_region
      _
    $region45: #{encoder_forward.1} parent=1 // pred_fallthru
      _
    // Predicated region
    $region46: #{encoder_forward.1} parent=1 // pred_check
      _
    $region47: #{encoder_forward.1} parent=1 // pred_check_branch
      %100 = sbr.rel (0) target = $region49
    $region48: #{encoder_forward.1} parent=1 // pred_region
      %s102 = ssub.s32 6144, 6144
      %103 = vsyncadd [#allocation15], %s102
      %s104 = sshll.u32 [#allocation14], 4
      %s105 = int_to_ptr.vmem [resolvable:$true] %s104
      %110 = dma.hbm_to_vmem [thread:$0]  %s11, 6144, %s105, [#allocation15], 384, 384, 24
    $region49: #{encoder_forward.1} parent=1 // pred_fallthru
      _
    // Predicated region
    $region50: #{encoder_forward.1} parent=1 // pred_check
      _
    $region51: #{encoder_forward.1} parent=1 // pred_check_branch
      %112 = sbr.rel (0) target = $region53
    $region52: #{encoder_forward.1} parent=1 // pred_region
      _
    $region53: #{encoder_forward.1} parent=1 // pred_fallthru
      _
    // Predicated region
    $region54: #{encoder_forward.1} parent=1 // pred_check
      _
    $region55: #{encoder_forward.1} parent=1 // pred_check_branch
      %114 = sbr.rel (0) target = $region57
    $region56: #{encoder_forward.1} parent=1 // pred_region
      _
    $region57: #{encoder_forward.1} parent=1 // pred_fallthru
      _
    // Predicated region
    $region58: #{encoder_forward.1} parent=1 // pred_check
      _
    $region59: #{encoder_forward.1} parent=1 // pred_check_branch
      %116 = sbr.rel (0) target = $region61
    $region60: #{encoder_forward.1} parent=1 // pred_region
      _
    $region61: #{encoder_forward.1} parent=1 // pred_fallthru
      _
    // Predicated region
    $region62: #{encoder_forward.1} parent=1 // pred_check
      _
    $region63: #{encoder_forward.1} parent=1 // pred_check_branch
      %118 = sbr.rel (0) target = $region65
    $region64: #{encoder_forward.1} parent=1 // pred_region
      %119 = dma.done [#allocation7], 12288
    $region65: #{encoder_forward.1} parent=1 // pred_fallthru
      _
    // Predicated region
    $region66: #{encoder_forward.1} parent=1 // pred_check
      _
    $region67: #{encoder_forward.1} parent=1 // pred_check_branch
      %121 = sbr.rel (0) target = $region69
    $region68: #{encoder_forward.1} parent=1 // pred_region
      %122 = dma.done [#allocation9], 6144
    $region69: #{encoder_forward.1} parent=1 // pred_fallthru
      _
    // Predicated region
    $region70: #{encoder_forward.1} parent=1 // pred_check
      _
    $region71: #{encoder_forward.1} parent=1 // pred_check_branch
      %124 = sbr.rel (0) target = $region73
    $region72: #{encoder_forward.1} parent=1 // pred_region
      %125 = dma.done [#allocation9], 6144
    $region73: #{encoder_forward.1} parent=1 // pred_fallthru
      _
    // Predicated region
    $region74: #{encoder_forward.1} parent=1 // pred_check
      _
    $region75: #{encoder_forward.1} parent=1 // pred_check_branch
      %127 = sbr.rel (0) target = $region77
    $region76: #{encoder_forward.1} parent=1 // pred_region
      %128 = dma.done [#allocation12], 24576
    $region77: #{encoder_forward.1} parent=1 // pred_fallthru
      _
    // Predicated region
    $region78: #{encoder_forward.1} parent=1 // pred_check
      _
    $region79: #{encoder_forward.1} parent=1 // pred_check_branch
      %130 = sbr.rel (0) target = $region81
    $region80: #{encoder_forward.1} parent=1 // pred_region
      %131 = dma.done [#allocation12], 6144
    $region81: #{encoder_forward.1} parent=1 // pred_fallthru
      _
    // Predicated region
    $region82: #{encoder_forward.1} parent=1 // pred_check
      _
    $region83: #{encoder_forward.1} parent=1 // pred_check_branch
      %133 = sbr.rel (0) target = $region85
    $region84: #{encoder_forward.1} parent=1 // pred_region
      %134 = dma.done [#allocation15], 6144
    $region85: #{encoder_forward.1} parent=1 // pred_fallthru
      _
    %v135 = vld [vmem:[%s0] sm:$0xff]
    %v136 = vld [vmem:[%s0 + $0x8] sm:$0xff]
    %v137 = vld [vmem:[%s0 + $0x10] sm:$0xff]
    %v138 = vld [vmem:[%s0 + $0x18] sm:$0xff]
    %v139 = vld [vmem:[%s0 + $0x20] sm:$0xff]
    %v140 = vld [vmem:[%s0 + $0x28] sm:$0xff]
    %v141 = vld [vmem:[%s0 + $0x30] sm:$0xff]
    %v142 = vld [vmem:[%s0 + $0x38] sm:$0xff]
    %v143 = vld [vmem:[#allocation6] sm:$0xff]
    %v144 = vld [vmem:[#allocation6 + $0x8] sm:$0xff]
    %v145 = vld [vmem:[#allocation6 + $0x10] sm:$0xff]
    %v146 = vld [vmem:[#allocation6 + $0x18] sm:$0xff]
    %v147 = vld [vmem:[#allocation6 + $0x20] sm:$0xff]
    %v148 = vld [vmem:[#allocation6 + $0x28] sm:$0xff]
    %v149 = vld [vmem:[#allocation6 + $0x30] sm:$0xff]
    %v150 = vld [vmem:[#allocation6 + $0x38] sm:$0xff]
    %v151 = vld [vmem:[#allocation6 + $0x40] sm:$0xff]
    %v152 = vld [vmem:[#allocation6 + $0x48] sm:$0xff]
    %v153 = vld [vmem:[#allocation6 + $0x50] sm:$0xff]
    %v154 = vld [vmem:[#allocation6 + $0x58] sm:$0xff]
    %v155 = vld [vmem:[#allocation6 + $0x60] sm:$0xff]
    %v156 = vld [vmem:[#allocation6 + $0x68] sm:$0xff]
    %v157 = vld [vmem:[#allocation6 + $0x70] sm:$0xff]
    %v158 = vld [vmem:[#allocation6 + $0x78] sm:$0xff]
    %v159 = vld [vmem:[#allocation6 + $0x80] sm:$0xff]
    %v160 = vld [vmem:[#allocation6 + $0x88] sm:$0xff]
    %v161 = vld [vmem:[#allocation6 + $0x90] sm:$0xff]
    %v162 = vld [vmem:[#allocation6 + $0x98] sm:$0xff]
    %v163 = vld [vmem:[#allocation6 + $0xa0] sm:$0xff]
    %v164 = vld [vmem:[#allocation6 + $0xa8] sm:$0xff]
    %v165 = vld [vmem:[#allocation6 + $0xb0] sm:$0xff]
    %v166 = vld [vmem:[#allocation6 + $0xb8] sm:$0xff]
    %v167 = vld [vmem:[#allocation6 + $0xc0] sm:$0xff]
    %v168 = vld [vmem:[#allocation6 + $0xc8] sm:$0xff]
    %v169 = vld [vmem:[#allocation6 + $0xd0] sm:$0xff]
    %v170 = vld [vmem:[#allocation6 + $0xd8] sm:$0xff]
    %v171 = vld [vmem:[#allocation6 + $0xe0] sm:$0xff]
    %v172 = vld [vmem:[#allocation6 + $0xe8] sm:$0xff]
    %v173 = vld [vmem:[#allocation6 + $0xf0] sm:$0xff]
    %v174 = vld [vmem:[#allocation6 + $0xf8] sm:$0xff]
    %v175 = vld [vmem:[#allocation6 + $0x100] sm:$0xff]
    %v176 = vld [vmem:[#allocation6 + $0x108] sm:$0xff]
    %v177 = vld [vmem:[#allocation6 + $0x110] sm:$0xff]
    %v178 = vld [vmem:[#allocation6 + $0x118] sm:$0xff]
    %v179 = vld [vmem:[#allocation6 + $0x120] sm:$0xff]
    %v180 = vld [vmem:[#allocation6 + $0x128] sm:$0xff]
    %v181 = vld [vmem:[#allocation6 + $0x130] sm:$0xff]
    %v182 = vld [vmem:[#allocation6 + $0x138] sm:$0xff]
    %v183 = vld [vmem:[#allocation6 + $0x140] sm:$0xff]
    %v184 = vld [vmem:[#allocation6 + $0x148] sm:$0xff]
    %v185 = vld [vmem:[#allocation6 + $0x150] sm:$0xff]
    %v186 = vld [vmem:[#allocation6 + $0x158] sm:$0xff]
    %v187 = vld [vmem:[#allocation6 + $0x160] sm:$0xff]
    %v188 = vld [vmem:[#allocation6 + $0x168] sm:$0xff]
    %v189 = vld [vmem:[#allocation6 + $0x170] sm:$0xff]
    %v190 = vld [vmem:[#allocation6 + $0x178] sm:$0xff]
    %v191 = vld [vmem:[#allocation6 + $0x180] sm:$0xff]
    %v192 = vld [vmem:[#allocation6 + $0x188] sm:$0xff]
    %v193 = vld [vmem:[#allocation6 + $0x190] sm:$0xff]
    %v194 = vld [vmem:[#allocation6 + $0x198] sm:$0xff]
    %v195 = vld [vmem:[#allocation6 + $0x1a0] sm:$0xff]
    %v196 = vld [vmem:[#allocation6 + $0x1a8] sm:$0xff]
    %v197 = vld [vmem:[#allocation6 + $0x1b0] sm:$0xff]
    %v198 = vld [vmem:[#allocation6 + $0x1b8] sm:$0xff]
    %v199 = vld [vmem:[#allocation6 + $0x1c0] sm:$0xff]
    %v200 = vld [vmem:[#allocation6 + $0x1c8] sm:$0xff]
    %v201 = vld [vmem:[#allocation6 + $0x1d0] sm:$0xff]
    %v202 = vld [vmem:[#allocation6 + $0x1d8] sm:$0xff]
    %v203 = vld [vmem:[#allocation6 + $0x1e0] sm:$0xff]
    %v204 = vld [vmem:[#allocation6 + $0x1e8] sm:$0xff]
    %v205 = vld [vmem:[#allocation6 + $0x1f0] sm:$0xff]
    %v206 = vld [vmem:[#allocation6 + $0x1f8] sm:$0xff]
    %v207 = vld [vmem:[#allocation6 + $0x200] sm:$0xff]
    %v208 = vld [vmem:[#allocation6 + $0x208] sm:$0xff]
    %v209 = vld [vmem:[#allocation6 + $0x210] sm:$0xff]
    %v210 = vld [vmem:[#allocation6 + $0x218] sm:$0xff]
    %v211 = vld [vmem:[#allocation6 + $0x220] sm:$0xff]
    %v212 = vld [vmem:[#allocation6 + $0x228] sm:$0xff]
    %v213 = vld [vmem:[#allocation6 + $0x230] sm:$0xff]
    %v214 = vld [vmem:[#allocation6 + $0x238] sm:$0xff]
    %v215 = vld [vmem:[#allocation6 + $0x240] sm:$0xff]
    %v216 = vld [vmem:[#allocation6 + $0x248] sm:$0xff]
    %v217 = vld [vmem:[#allocation6 + $0x250] sm:$0xff]
    %v218 = vld [vmem:[#allocation6 + $0x258] sm:$0xff]
    %v219 = vld [vmem:[#allocation6 + $0x260] sm:$0xff]
    %v220 = vld [vmem:[#allocation6 + $0x268] sm:$0xff]
    %v221 = vld [vmem:[#allocation6 + $0x270] sm:$0xff]
    %v222 = vld [vmem:[#allocation6 + $0x278] sm:$0xff]
    %v223 = vld [vmem:[#allocation6 + $0x280] sm:$0xff]
    %v224 = vld [vmem:[#allocation6 + $0x288] sm:$0xff]
    %v225 = vld [vmem:[#allocation6 + $0x290] sm:$0xff]
    %v226 = vld [vmem:[#allocation6 + $0x298] sm:$0xff]
    %v227 = vld [vmem:[#allocation6 + $0x2a0] sm:$0xff]
    %v228 = vld [vmem:[#allocation6 + $0x2a8] sm:$0xff]
    %v229 = vld [vmem:[#allocation6 + $0x2b0] sm:$0xff]
    %v230 = vld [vmem:[#allocation6 + $0x2b8] sm:$0xff]
    %v231 = vld [vmem:[#allocation6 + $0x2c0] sm:$0xff]
    %v232 = vld [vmem:[#allocation6 + $0x2c8] sm:$0xff]
    %v233 = vld [vmem:[#allocation6 + $0x2d0] sm:$0xff]
    %v234 = vld [vmem:[#allocation6 + $0x2d8] sm:$0xff]
    %v235 = vld [vmem:[#allocation6 + $0x2e0] sm:$0xff]
    %v236 = vld [vmem:[#allocation6 + $0x2e8] sm:$0xff]
    %v237 = vld [vmem:[#allocation6 + $0x2f0] sm:$0xff]
    %v238 = vld [vmem:[#allocation6 + $0x2f8] sm:$0xff]
    %v239 = vld [vmem:[%s2] sm:$0x3f]
    %v241 = vlaneseq
    %v242 = vshrl.u32 %v241, 7
    %v243 = vsub.s32 0, %v242
    %v244 = vrot.slane %v239, %v243
    %v245 = vlaneseq
    %v246 = vshrl.u32 %v245, 7
    %v247 = vsub.s32 1, %v246
    %v248 = vrot.slane %v239, %v247
    %v249 = vlaneseq
    %v250 = vshrl.u32 %v249, 7
    %v251 = vsub.s32 2, %v250
    %v252 = vrot.slane %v239, %v251
    %v253 = vlaneseq
    %v254 = vshrl.u32 %v253, 7
    %v255 = vsub.s32 3, %v254
    %v256 = vrot.slane %v239, %v255
    %v257 = vlaneseq
    %v258 = vshrl.u32 %v257, 7
    %v259 = vsub.s32 4, %v258
    %v260 = vrot.slane %v239, %v259
    %v261 = vlaneseq
    %v262 = vshrl.u32 %v261, 7
    %v263 = vsub.s32 5, %v262
    %v264 = vrot.slane %v239, %v263
    %271 = vmatprep.subr.mxu0 %v144
    %272 = vmatpush1.msra.mxu0 %v143
    %273 = vmatprep.subr.mxu0 %v150
    %274 = vmatpush1.msra.mxu0 %v149
    %275 = vmatprep.subr.mxu0 %v156
    %276 = vmatpush1.msra.mxu0 %v155
    %277 = vmatprep.subr.mxu0 %v162
    %278 = vmatpush1.msra.mxu0 %v161
    %279 = vmatprep.subr.mxu0 %v168
    %280 = vmatpush1.msra.mxu0 %v167
    %281 = vmatprep.subr.mxu0 %v174
    %282 = vmatpush1.msra.mxu0 %v173
    %283 = vmatprep.subr.mxu0 %v180
    %284 = vmatpush1.msra.mxu0 %v179
    %285 = vmatprep.subr.mxu0 %v186
    %286 = vmatpush1.msra.mxu0 %v185
    %287 = vmatprep.subr.mxu0 %v192
    %288 = vmatpush1.msra.mxu0 %v191
    %289 = vmatprep.subr.mxu0 %v198
    %290 = vmatpush1.msra.mxu0 %v197
    %291 = vmatprep.subr.mxu0 %v204
    %292 = vmatpush1.msra.mxu0 %v203
    %293 = vmatprep.subr.mxu0 %v210
    %294 = vmatpush1.msra.mxu0 %v209
    %295 = vmatprep.subr.mxu0 %v216
    %296 = vmatpush1.msra.mxu0 %v215
    %297 = vmatprep.subr.mxu0 %v222
    %298 = vmatpush1.msra.mxu0 %v221
    %299 = vmatprep.subr.mxu0 %v228
    %300 = vmatpush1.msra.mxu0 %v227
    %301 = vmatprep.subr.mxu0 %v234
    %302 = vmatpush1.msra.mxu0 %v233
    %303 = vmatprep.subr.mxu0 0.0
    %304 = vmatpush1.msra.mxu0 0.0
    %305 = vmatprep.subr.mxu0 0.0
    %306 = vmatpush1.msra.mxu0 0.0
    %307 = vmatprep.subr.mxu0 0.0
    %308 = vmatpush1.msra.mxu0 0.0
    %309 = vmatprep.subr.mxu0 0.0
    %310 = vmatpush1.msra.mxu0 0.0
    %311 = vmatprep.subr.mxu0 0.0
    %312 = vmatpush1.msra.mxu0 0.0
    %313 = vmatprep.subr.mxu0 0.0
    %314 = vmatpush1.msra.mxu0 0.0
    %315 = vmatprep.subr.mxu0 0.0
    %316 = vmatpush1.msra.mxu0 0.0
    %317 = vmatprep.subr.mxu0 0.0
    %318 = vmatpush1.msra.mxu0 0.0
    %319 = vmatprep.subr.mxu0 0.0
    %320 = vmatpush1.msra.mxu0 0.0
    %321 = vmatprep.subr.mxu0 0.0
    %322 = vmatpush1.msra.mxu0 0.0
    %323 = vmatprep.subr.mxu0 0.0
    %324 = vmatpush1.msra.mxu0 0.0
    %325 = vmatprep.subr.mxu0 0.0
    %326 = vmatpush1.msra.mxu0 0.0
    %327 = vmatprep.subr.mxu0 0.0
    %328 = vmatpush1.msra.mxu0 0.0
    %329 = vmatprep.subr.mxu0 0.0
    %330 = vmatpush1.msra.mxu0 0.0
    %331 = vmatprep.subr.mxu0 0.0
    %332 = vmatpush1.msra.mxu0 0.0
    %333 = vmatprep.subr.mxu0 0.0
    %334 = vmatpush1.msra.mxu0 0.0
    %335 = vmatprep.mubr.f32.mxu0 0.0
    %336 = vmatmul.mubr.f32.gmra.mrb[0].mxu0 %v135
    %v337 = vpop.f32.mrb[0].mxu0
    %v338 = vadd.f32 %v244, %v337
    %v339 = vpop.f32.mrb[0].mxu0
    %v340 = vadd.f32 %v248, %v339
    %341 = vmatprep.mubr.f32.mxu0 0.0
    %342 = vmatmul.mubr.f32.gmra.mrb[0].mxu0 %v136
    %v343 = vpop.f32.mrb[0].mxu0
    %v344 = vadd.f32 %v244, %v343
    %v345 = vpop.f32.mrb[0].mxu0
    %v346 = vadd.f32 %v248, %v345
    %347 = vmatprep.mubr.f32.mxu0 0.0
    %348 = vmatmul.mubr.f32.gmra.mrb[0].mxu0 %v137
    %v349 = vpop.f32.mrb[0].mxu0
    %v350 = vadd.f32 %v244, %v349
    %v351 = vpop.f32.mrb[0].mxu0
    %v352 = vadd.f32 %v248, %v351
    %353 = vmatprep.mubr.f32.mxu0 0.0
    %354 = vmatmul.mubr.f32.gmra.mrb[0].mxu0 %v138
    %v355 = vpop.f32.mrb[0].mxu0
    %v356 = vadd.f32 %v244, %v355
    %v357 = vpop.f32.mrb[0].mxu0
    %v358 = vadd.f32 %v248, %v357
    %359 = vmatprep.mubr.f32.mxu0 0.0
    %360 = vmatmul.mubr.f32.gmra.mrb[0].mxu0 %v139
    %v361 = vpop.f32.mrb[0].mxu0
    %v362 = vadd.f32 %v244, %v361
    %v363 = vpop.f32.mrb[0].mxu0
    %v364 = vadd.f32 %v248, %v363
    %365 = vmatprep.mubr.f32.mxu0 0.0
    %366 = vmatmul.mubr.f32.gmra.mrb[0].mxu0 %v140
    %v367 = vpop.f32.mrb[0].mxu0
    %v368 = vadd.f32 %v244, %v367
    %v369 = vpop.f32.mrb[0].mxu0
    %v370 = vadd.f32 %v248, %v369
    %371 = vmatprep.mubr.f32.mxu0 0.0
    %372 = vmatmul.mubr.f32.gmra.mrb[0].mxu0 %v141
    %v373 = vpop.f32.mrb[0].mxu0
    %v374 = vadd.f32 %v244, %v373
    %v375 = vpop.f32.mrb[0].mxu0
    %v376 = vadd.f32 %v248, %v375
    %377 = vmatprep.mubr.f32.mxu0 0.0
    %378 = vmatmul.mubr.f32.gmra.mrb[0].mxu0 %v142
    %v379 = vpop.f32.mrb[0].mxu0
    %v380 = vadd.f32 %v244, %v379
    %v381 = vpop.f32.mrb[0].mxu0
    %v382 = vadd.f32 %v248, %v381
    %383 = vdwg.mxu0
    %384 = vmatprep.subr.mxu0 %v146
    %385 = vmatpush1.msra.mxu0 %v145
    %386 = vmatprep.subr.mxu0 %v152
    %387 = vmatpush1.msra.mxu0 %v151
    %388 = vmatprep.subr.mxu0 %v158
    %389 = vmatpush1.msra.mxu0 %v157
    %390 = vmatprep.subr.mxu0 %v164
    %391 = vmatpush1.msra.mxu0 %v163
    %392 = vmatprep.subr.mxu0 %v170
    %393 = vmatpush1.msra.mxu0 %v169
    %394 = vmatprep.subr.mxu0 %v176
    %395 = vmatpush1.msra.mxu0 %v175
    %396 = vmatprep.subr.mxu0 %v182
    %397 = vmatpush1.msra.mxu0 %v181
    %398 = vmatprep.subr.mxu0 %v188
    %399 = vmatpush1.msra.mxu0 %v187
    %400 = vmatprep.subr.mxu0 %v194
    %401 = vmatpush1.msra.mxu0 %v193
    %402 = vmatprep.subr.mxu0 %v200
    %403 = vmatpush1.msra.mxu0 %v199
    %404 = vmatprep.subr.mxu0 %v206
    %405 = vmatpush1.msra.mxu0 %v205
    %406 = vmatprep.subr.mxu0 %v212
    %407 = vmatpush1.msra.mxu0 %v211
    %408 = vmatprep.subr.mxu0 %v218
    %409 = vmatpush1.msra.mxu0 %v217
    %410 = vmatprep.subr.mxu0 %v224
    %411 = vmatpush1.msra.mxu0 %v223
    %412 = vmatprep.subr.mxu0 %v230
    %413 = vmatpush1.msra.mxu0 %v229
    %414 = vmatprep.subr.mxu0 %v236
    %415 = vmatpush1.msra.mxu0 %v235
    %416 = vmatprep.subr.mxu0 0.0
    %417 = vmatpush1.msra.mxu0 0.0
    %418 = vmatprep.subr.mxu0 0.0
    %419 = vmatpush1.msra.mxu0 0.0
    %420 = vmatprep.subr.mxu0 0.0
    %421 = vmatpush1.msra.mxu0 0.0
    %422 = vmatprep.subr.mxu0 0.0
    %423 = vmatpush1.msra.mxu0 0.0
    %424 = vmatprep.subr.mxu0 0.0
    %425 = vmatpush1.msra.mxu0 0.0
    %426 = vmatprep.subr.mxu0 0.0
    %427 = vmatpush1.msra.mxu0 0.0
    %428 = vmatprep.subr.mxu0 0.0
    %429 = vmatpush1.msra.mxu0 0.0
    %430 = vmatprep.subr.mxu0 0.0
    %431 = vmatpush1.msra.mxu0 0.0
    %432 = vmatprep.subr.mxu0 0.0
    %433 = vmatpush1.msra.mxu0 0.0
    %434 = vmatprep.subr.mxu0 0.0
    %435 = vmatpush1.msra.mxu0 0.0
    %436 = vmatprep.subr.mxu0 0.0
    %437 = vmatpush1.msra.mxu0 0.0
    %438 = vmatprep.subr.mxu0 0.0
    %439 = vmatpush1.msra.mxu0 0.0
    %440 = vmatprep.subr.mxu0 0.0
    %441 = vmatpush1.msra.mxu0 0.0
    %442 = vmatprep.subr.mxu0 0.0
    %443 = vmatpush1.msra.mxu0 0.0
    %444 = vmatprep.subr.mxu0 0.0
    %445 = vmatpush1.msra.mxu0 0.0
    %446 = vmatprep.subr.mxu0 0.0
    %447 = vmatpush1.msra.mxu0 0.0
    %448 = vmatprep.mubr.f32.mxu0 0.0
    %449 = vmatmul.mubr.f32.gmra.mrb[0].mxu0 %v135
    %v450 = vpop.f32.mrb[0].mxu0
    %v451 = vadd.f32 %v252, %v450
    %v452 = vpop.f32.mrb[0].mxu0
    %v453 = vadd.f32 %v256, %v452
    %454 = vmatprep.mubr.f32.mxu0 0.0
    %455 = vmatmul.mubr.f32.gmra.mrb[0].mxu0 %v136
    %v456 = vpop.f32.mrb[0].mxu0
    %v457 = vadd.f32 %v252, %v456
    %v458 = vpop.f32.mrb[0].mxu0
    %v459 = vadd.f32 %v256, %v458
    %460 = vmatprep.mubr.f32.mxu0 0.0
    %461 = vmatmul.mubr.f32.gmra.mrb[0].mxu0 %v137
    %v462 = vpop.f32.mrb[0].mxu0
    %v463 = vadd.f32 %v252, %v462
    %v464 = vpop.f32.mrb[0].mxu0
    %v465 = vadd.f32 %v256, %v464
    %466 = vmatprep.mubr.f32.mxu0 0.0
    %467 = vmatmul.mubr.f32.gmra.mrb[0].mxu0 %v138
    %v468 = vpop.f32.mrb[0].mxu0
    %v469 = vadd.f32 %v252, %v468
    %v470 = vpop.f32.mrb[0].mxu0
    %v471 = vadd.f32 %v256, %v470
    %472 = vmatprep.mubr.f32.mxu0 0.0
    %473 = vmatmul.mubr.f32.gmra.mrb[0].mxu0 %v139
    %v474 = vpop.f32.mrb[0].mxu0
    %v475 = vadd.f32 %v252, %v474
    %v476 = vpop.f32.mrb[0].mxu0
    %v477 = vadd.f32 %v256, %v476
    %478 = vmatprep.mubr.f32.mxu0 0.0
    %479 = vmatmul.mubr.f32.gmra.mrb[0].mxu0 %v140
    %v480 = vpop.f32.mrb[0].mxu0
    %v481 = vadd.f32 %v252, %v480
    %v482 = vpop.f32.mrb[0].mxu0
    %v483 = vadd.f32 %v256, %v482
    %484 = vmatprep.mubr.f32.mxu0 0.0
    %485 = vmatmul.mubr.f32.gmra.mrb[0].mxu0 %v141
    %v486 = vpop.f32.mrb[0].mxu0
    %v487 = vadd.f32 %v252, %v486
    %v488 = vpop.f32.mrb[0].mxu0
    %v489 = vadd.f32 %v256, %v488
    %490 = vmatprep.mubr.f32.mxu0 0.0
    %491 = vmatmul.mubr.f32.gmra.mrb[0].mxu0 %v142
    %v492 = vpop.f32.mrb[0].mxu0
    %v493 = vadd.f32 %v252, %v492
    %v494 = vpop.f32.mrb[0].mxu0
    %v495 = vadd.f32 %v256, %v494
    %496 = vdwg.mxu0
    %497 = vmatprep.subr.mxu0 %v148
    %498 = vmatpush1.msra.mxu0 %v147
    %499 = vmatprep.subr.mxu0 %v154
    %500 = vmatpush1.msra.mxu0 %v153
    %501 = vmatprep.subr.mxu0 %v160
    %502 = vmatpush1.msra.mxu0 %v159
    %503 = vmatprep.subr.mxu0 %v166
    %504 = vmatpush1.msra.mxu0 %v165
    %505 = vmatprep.subr.mxu0 %v172
    %506 = vmatpush1.msra.mxu0 %v171
    %507 = vmatprep.subr.mxu0 %v178
    %508 = vmatpush1.msra.mxu0 %v177
    %509 = vmatprep.subr.mxu0 %v184
    %510 = vmatpush1.msra.mxu0 %v183
    %511 = vmatprep.subr.mxu0 %v190
    %512 = vmatpush1.msra.mxu0 %v189
    %513 = vmatprep.subr.mxu0 %v196
    %514 = vmatpush1.msra.mxu0 %v195
    %515 = vmatprep.subr.mxu0 %v202
    %516 = vmatpush1.msra.mxu0 %v201
    %517 = vmatprep.subr.mxu0 %v208
    %518 = vmatpush1.msra.mxu0 %v207
    %519 = vmatprep.subr.mxu0 %v214
    %520 = vmatpush1.msra.mxu0 %v213
    %521 = vmatprep.subr.mxu0 %v220
    %522 = vmatpush1.msra.mxu0 %v219
    %523 = vmatprep.subr.mxu0 %v226
    %524 = vmatpush1.msra.mxu0 %v225
    %525 = vmatprep.subr.mxu0 %v232
    %526 = vmatpush1.msra.mxu0 %v231
    %527 = vmatprep.subr.mxu0 %v238
    %528 = vmatpush1.msra.mxu0 %v237
    %529 = vmatprep.subr.mxu0 0.0
    %530 = vmatpush1.msra.mxu0 0.0
    %531 = vmatprep.subr.mxu0 0.0
    %532 = vmatpush1.msra.mxu0 0.0
    %533 = vmatprep.subr.mxu0 0.0
    %534 = vmatpush1.msra.mxu0 0.0
    %535 = vmatprep.subr.mxu0 0.0
    %536 = vmatpush1.msra.mxu0 0.0
    %537 = vmatprep.subr.mxu0 0.0
    %538 = vmatpush1.msra.mxu0 0.0
    %539 = vmatprep.subr.mxu0 0.0
    %540 = vmatpush1.msra.mxu0 0.0
    %541 = vmatprep.subr.mxu0 0.0
    %542 = vmatpush1.msra.mxu0 0.0
    %543 = vmatprep.subr.mxu0 0.0
    %544 = vmatpush1.msra.mxu0 0.0
    %545 = vmatprep.subr.mxu0 0.0
    %546 = vmatpush1.msra.mxu0 0.0
    %547 = vmatprep.subr.mxu0 0.0
    %548 = vmatpush1.msra.mxu0 0.0
    %549 = vmatprep.subr.mxu0 0.0
    %550 = vmatpush1.msra.mxu0 0.0
    %551 = vmatprep.subr.mxu0 0.0
    %552 = vmatpush1.msra.mxu0 0.0
    %553 = vmatprep.subr.mxu0 0.0
    %554 = vmatpush1.msra.mxu0 0.0
    %555 = vmatprep.subr.mxu0 0.0
    %556 = vmatpush1.msra.mxu0 0.0
    %557 = vmatprep.subr.mxu0 0.0
    %558 = vmatpush1.msra.mxu0 0.0
    %559 = vmatprep.subr.mxu0 0.0
    %560 = vmatpush1.msra.mxu0 0.0
    %561 = vmatprep.mubr.f32.mxu0 0.0
    %562 = vmatmul.mubr.f32.gmra.mrb[0].mxu0 %v135
    %v563 = vpop.f32.mrb[0].mxu0
    %v564 = vadd.f32 %v260, %v563
    %v565 = vpop.f32.mrb[0].mxu0
    %v566 = vadd.f32 %v264, %v565
    %567 = vmatprep.mubr.f32.mxu0 0.0
    %568 = vmatmul.mubr.f32.gmra.mrb[0].mxu0 %v136
    %v569 = vpop.f32.mrb[0].mxu0
    %v570 = vadd.f32 %v260, %v569
    %v571 = vpop.f32.mrb[0].mxu0
    %v572 = vadd.f32 %v264, %v571
    %573 = vmatprep.mubr.f32.mxu0 0.0
    %574 = vmatmul.mubr.f32.gmra.mrb[0].mxu0 %v137
    %v575 = vpop.f32.mrb[0].mxu0
    %v576 = vadd.f32 %v260, %v575
    %v577 = vpop.f32.mrb[0].mxu0
    %v578 = vadd.f32 %v264, %v577
    %579 = vmatprep.mubr.f32.mxu0 0.0
    %580 = vmatmul.mubr.f32.gmra.mrb[0].mxu0 %v138
    %v581 = vpop.f32.mrb[0].mxu0
    %v582 = vadd.f32 %v260, %v581
    %v583 = vpop.f32.mrb[0].mxu0
    %v584 = vadd.f32 %v264, %v583
    %585 = vmatprep.mubr.f32.mxu0 0.0
    %586 = vmatmul.mubr.f32.gmra.mrb[0].mxu0 %v139
    %v587 = vpop.f32.mrb[0].mxu0
    %v588 = vadd.f32 %v260, %v587
    %v589 = vpop.f32.mrb[0].mxu0
    %v590 = vadd.f32 %v264, %v589
    %591 = vmatprep.mubr.f32.mxu0 0.0
    %592 = vmatmul.mubr.f32.gmra.mrb[0].mxu0 %v140
    %v593 = vpop.f32.mrb[0].mxu0
    %v594 = vadd.f32 %v260, %v593
    %v595 = vpop.f32.mrb[0].mxu0
    %v596 = vadd.f32 %v264, %v595
    %597 = vmatprep.mubr.f32.mxu0 0.0
    %598 = vmatmul.mubr.f32.gmra.mrb[0].mxu0 %v141
    %v599 = vpop.f32.mrb[0].mxu0
    %v600 = vadd.f32 %v260, %v599
    %v601 = vpop.f32.mrb[0].mxu0
    %v602 = vadd.f32 %v264, %v601
    %603 = vmatprep.mubr.f32.mxu0 0.0
    %604 = vmatmul.mubr.f32.gmra.mrb[0].mxu0 %v142
    %v605 = vpop.f32.mrb[0].mxu0
    %v606 = vadd.f32 %v260, %v605
    %v607 = vpop.f32.mrb[0].mxu0
    %v608 = vadd.f32 %v264, %v607
    %609 = vdwg.mxu0
    %610 = vst [vmem:[#allocation2] sm:$0xff] %v338
    %611 = vst [vmem:[#allocation2 + $0x8] sm:$0xff] %v340
    %612 = vst [vmem:[#allocation2 + $0x10] sm:$0xff] %v451
    %613 = vst [vmem:[#allocation2 + $0x18] sm:$0xff] %v344
    %614 = vst [vmem:[#allocation2 + $0x20] sm:$0xff] %v346
    %615 = vst [vmem:[#allocation2 + $0x28] sm:$0xff] %v457
    %616 = vst [vmem:[#allocation2 + $0x30] sm:$0xff] %v350
    %617 = vst [vmem:[#allocation2 + $0x38] sm:$0xff] %v352
    %618 = vst [vmem:[#allocation2 + $0x40] sm:$0xff] %v463
    %619 = vst [vmem:[#allocation2 + $0x48] sm:$0xff] %v356
    %620 = vst [vmem:[#allocation2 + $0x50] sm:$0xff] %v358
    %621 = vst [vmem:[#allocation2 + $0x58] sm:$0xff] %v469
    %622 = vst [vmem:[#allocation2 + $0x60] sm:$0xff] %v362
    %623 = vst [vmem:[#allocation2 + $0x68] sm:$0xff] %v364
    %624 = vst [vmem:[#allocation2 + $0x70] sm:$0xff] %v475
    %625 = vst [vmem:[#allocation2 + $0x78] sm:$0xff] %v368
    %626 = vst [vmem:[#allocation2 + $0x80] sm:$0xff] %v370
    %627 = vst [vmem:[#allocation2 + $0x88] sm:$0xff] %v481
    %628 = vst [vmem:[#allocation2 + $0x90] sm:$0xff] %v374
    %629 = vst [vmem:[#allocation2 + $0x98] sm:$0xff] %v376
    %630 = vst [vmem:[#allocation2 + $0xa0] sm:$0xff] %v487
    %631 = vst [vmem:[#allocation2 + $0xa8] sm:$0xff] %v380
    %632 = vst [vmem:[#allocation2 + $0xb0] sm:$0xff] %v382
    %633 = vst [vmem:[#allocation2 + $0xb8] sm:$0xff] %v493
    %634 = vst [vmem:[#allocation3] sm:$0xff] %v453
    %635 = vst [vmem:[#allocation3 + $0x8] sm:$0xff] %v564
    %636 = vst [vmem:[#allocation3 + $0x10] sm:$0xff] %v566
    %637 = vst [vmem:[#allocation3 + $0x18] sm:$0xff] %v459
    %638 = vst [vmem:[#allocation3 + $0x20] sm:$0xff] %v570
    %639 = vst [vmem:[#allocation3 + $0x28] sm:$0xff] %v572
    %640 = vst [vmem:[#allocation3 + $0x30] sm:$0xff] %v465
    %641 = vst [vmem:[#allocation3 + $0x38] sm:$0xff] %v576
    %642 = vst [vmem:[#allocation3 + $0x40] sm:$0xff] %v578
    %643 = vst [vmem:[#allocation3 + $0x48] sm:$0xff] %v471
    %644 = vst [vmem:[#allocation3 + $0x50] sm:$0xff] %v582
    %645 = vst [vmem:[#allocation3 + $0x58] sm:$0xff] %v584
    %646 = vst [vmem:[#allocation3 + $0x60] sm:$0xff] %v477
    %647 = vst [vmem:[#allocation3 + $0x68] sm:$0xff] %v588
    %648 = vst [vmem:[#allocation3 + $0x70] sm:$0xff] %v590
    %649 = vst [vmem:[#allocation3 + $0x78] sm:$0xff] %v483
    %650 = vst [vmem:[#allocation3 + $0x80] sm:$0xff] %v594
    %651 = vst [vmem:[#allocation3 + $0x88] sm:$0xff] %v596
    %652 = vst [vmem:[#allocation3 + $0x90] sm:$0xff] %v489
    %653 = vst [vmem:[#allocation3 + $0x98] sm:$0xff] %v600
    %654 = vst [vmem:[#allocation3 + $0xa0] sm:$0xff] %v602
    %655 = vst [vmem:[#allocation3 + $0xa8] sm:$0xff] %v495
    %656 = vst [vmem:[#allocation3 + $0xb0] sm:$0xff] %v606
    %657 = vst [vmem:[#allocation3 + $0xb8] sm:$0xff] %v608
    %v658 = vld [vmem:[#allocation8] sm:$0xff]
    %v659 = vld [vmem:[#allocation8 + $0x8] sm:$0xff]
    %v660 = vld [vmem:[#allocation8 + $0x10] sm:$0xff]
    %v661 = vld [vmem:[#allocation8 + $0x18] sm:$0xff]
    %v662 = vld [vmem:[#allocation8 + $0x20] sm:$0xff]
    %v663 = vld [vmem:[#allocation8 + $0x28] sm:$0xff]
    %v664 = vld [vmem:[#allocation8 + $0x30] sm:$0xff]
    %v665 = vld [vmem:[#allocation8 + $0x38] sm:$0xff]
    %v666 = vld [vmem:[#allocation8 + $0x40] sm:$0xff]
    %v667 = vld [vmem:[#allocation8 + $0x48] sm:$0xff]
    %v668 = vld [vmem:[#allocation8 + $0x50] sm:$0xff]
    %v669 = vld [vmem:[#allocation8 + $0x58] sm:$0xff]
    %v670 = vld [vmem:[#allocation8 + $0x60] sm:$0xff]
    %v671 = vld [vmem:[#allocation8 + $0x68] sm:$0xff]
    %v672 = vld [vmem:[#allocation8 + $0x70] sm:$0xff]
    %v673 = vld [vmem:[#allocation8 + $0x78] sm:$0xff]
    %v674 = vld [vmem:[#allocation8 + $0x80] sm:$0xff]
    %v675 = vld [vmem:[#allocation8 + $0x88] sm:$0xff]
    %v676 = vld [vmem:[#allocation8 + $0x90] sm:$0xff]
    %v677 = vld [vmem:[#allocation8 + $0x98] sm:$0xff]
    %v678 = vld [vmem:[#allocation8 + $0xa0] sm:$0xff]
    %v679 = vld [vmem:[#allocation8 + $0xa8] sm:$0xff]
    %v680 = vld [vmem:[#allocation8 + $0xb0] sm:$0xff]
    %v681 = vld [vmem:[#allocation8 + $0xb8] sm:$0xff]
    %v682 = vld [vmem:[#allocation8 + $0xc0] sm:$0xff]
    %v683 = vld [vmem:[#allocation8 + $0xc8] sm:$0xff]
    %v684 = vld [vmem:[#allocation8 + $0xd0] sm:$0xff]
    %v685 = vld [vmem:[#allocation8 + $0xd8] sm:$0xff]
    %v686 = vld [vmem:[#allocation8 + $0xe0] sm:$0xff]
    %v687 = vld [vmem:[#allocation8 + $0xe8] sm:$0xff]
    %v688 = vld [vmem:[#allocation8 + $0xf0] sm:$0xff]
    %v689 = vld [vmem:[#allocation8 + $0xf8] sm:$0xff]
    %v690 = vld [vmem:[#allocation8 + $0x100] sm:$0xff]
    %v691 = vld [vmem:[#allocation8 + $0x108] sm:$0xff]
    %v692 = vld [vmem:[#allocation8 + $0x110] sm:$0xff]
    %v693 = vld [vmem:[#allocation8 + $0x118] sm:$0xff]
    %v694 = vld [vmem:[#allocation8 + $0x120] sm:$0xff]
    %v695 = vld [vmem:[#allocation8 + $0x128] sm:$0xff]
    %v696 = vld [vmem:[#allocation8 + $0x130] sm:$0xff]
    %v697 = vld [vmem:[#allocation8 + $0x138] sm:$0xff]
    %v698 = vld [vmem:[#allocation8 + $0x140] sm:$0xff]
    %v699 = vld [vmem:[#allocation8 + $0x148] sm:$0xff]
    %v700 = vld [vmem:[#allocation8 + $0x150] sm:$0xff]
    %v701 = vld [vmem:[#allocation8 + $0x158] sm:$0xff]
    %v702 = vld [vmem:[#allocation8 + $0x160] sm:$0xff]
    %v703 = vld [vmem:[#allocation8 + $0x168] sm:$0xff]
    %v704 = vld [vmem:[#allocation8 + $0x170] sm:$0xff]
    %v705 = vld [vmem:[#allocation8 + $0x178] sm:$0xff]
    %v706 = vld [vmem:[#allocation10] sm:$0xff]
    %v707 = vld [vmem:[#allocation10 + $0x8] sm:$0xff]
    %v708 = vld [vmem:[#allocation10 + $0x10] sm:$0xff]
    %v709 = vld [vmem:[#allocation10 + $0x18] sm:$0xff]
    %v710 = vld [vmem:[#allocation10 + $0x20] sm:$0xff]
    %v711 = vld [vmem:[#allocation10 + $0x28] sm:$0xff]
    %v712 = vld [vmem:[#allocation10 + $0x30] sm:$0xff]
    %v713 = vld [vmem:[#allocation10 + $0x38] sm:$0xff]
    %v714 = vld [vmem:[#allocation10 + $0x40] sm:$0xff]
    %v715 = vld [vmem:[#allocation10 + $0x48] sm:$0xff]
    %v716 = vld [vmem:[#allocation10 + $0x50] sm:$0xff]
    %v717 = vld [vmem:[#allocation10 + $0x58] sm:$0xff]
    %v718 = vld [vmem:[#allocation10 + $0x60] sm:$0xff]
    %v719 = vld [vmem:[#allocation10 + $0x68] sm:$0xff]
    %v720 = vld [vmem:[#allocation10 + $0x70] sm:$0xff]
    %v721 = vld [vmem:[#allocation10 + $0x78] sm:$0xff]
    %v722 = vld [vmem:[#allocation10 + $0x80] sm:$0xff]
    %v723 = vld [vmem:[#allocation10 + $0x88] sm:$0xff]
    %v724 = vld [vmem:[#allocation10 + $0x90] sm:$0xff]
    %v725 = vld [vmem:[#allocation10 + $0x98] sm:$0xff]
    %v726 = vld [vmem:[#allocation10 + $0xa0] sm:$0xff]
    %v727 = vld [vmem:[#allocation10 + $0xa8] sm:$0xff]
    %v728 = vld [vmem:[#allocation10 + $0xb0] sm:$0xff]
    %v729 = vld [vmem:[#allocation10 + $0xb8] sm:$0xff]
    %v730 = vld [vmem:[#allocation10 + $0xc0] sm:$0xff]
    %v731 = vld [vmem:[#allocation10 + $0xc8] sm:$0xff]
    %v732 = vld [vmem:[#allocation10 + $0xd0] sm:$0xff]
    %v733 = vld [vmem:[#allocation10 + $0xd8] sm:$0xff]
    %v734 = vld [vmem:[#allocation10 + $0xe0] sm:$0xff]
    %v735 = vld [vmem:[#allocation10 + $0xe8] sm:$0xff]
    %v736 = vld [vmem:[#allocation10 + $0xf0] sm:$0xff]
    %v737 = vld [vmem:[#allocation10 + $0xf8] sm:$0xff]
    %v738 = vld [vmem:[#allocation10 + $0x100] sm:$0xff]
    %v739 = vld [vmem:[#allocation10 + $0x108] sm:$0xff]
    %v740 = vld [vmem:[#allocation10 + $0x110] sm:$0xff]
    %v741 = vld [vmem:[#allocation10 + $0x118] sm:$0xff]
    %v742 = vld [vmem:[#allocation10 + $0x120] sm:$0xff]
    %v743 = vld [vmem:[#allocation10 + $0x128] sm:$0xff]
    %v744 = vld [vmem:[#allocation10 + $0x130] sm:$0xff]
    %v745 = vld [vmem:[#allocation10 + $0x138] sm:$0xff]
    %v746 = vld [vmem:[#allocation10 + $0x140] sm:$0xff]
    %v747 = vld [vmem:[#allocation10 + $0x148] sm:$0xff]
    %v748 = vld [vmem:[#allocation10 + $0x150] sm:$0xff]
    %v749 = vld [vmem:[#allocation10 + $0x158] sm:$0xff]
    %v750 = vld [vmem:[#allocation10 + $0x160] sm:$0xff]
    %v751 = vld [vmem:[#allocation10 + $0x168] sm:$0xff]
    %v752 = vld [vmem:[#allocation10 + $0x170] sm:$0xff]
    %v753 = vld [vmem:[#allocation10 + $0x178] sm:$0xff]
    %v754 = vld [vmem:[%s4] sm:$0x1]
    %v755 = vld [vmem:[%s6] sm:$0x1]
    %756 = vmatprep.subr.mxu0 %v659
    %757 = vmatpush1.msra.mxu0 %v658
    %758 = vmatprep.subr.mxu0 %v662
    %759 = vmatpush1.msra.mxu0 %v661
    %760 = vmatprep.subr.mxu0 %v665
    %761 = vmatpush1.msra.mxu0 %v664
    %762 = vmatprep.subr.mxu0 %v668
    %763 = vmatpush1.msra.mxu0 %v667
    %764 = vmatprep.subr.mxu0 %v671
    %765 = vmatpush1.msra.mxu0 %v670
    %766 = vmatprep.subr.mxu0 %v674
    %767 = vmatpush1.msra.mxu0 %v673
    %768 = vmatprep.subr.mxu0 %v677
    %769 = vmatpush1.msra.mxu0 %v676
    %770 = vmatprep.subr.mxu0 %v680
    %771 = vmatpush1.msra.mxu0 %v679
    %772 = vmatprep.subr.mxu0 %v683
    %773 = vmatpush1.msra.mxu0 %v682
    %774 = vmatprep.subr.mxu0 %v686
    %775 = vmatpush1.msra.mxu0 %v685
    %776 = vmatprep.subr.mxu0 %v689
    %777 = vmatpush1.msra.mxu0 %v688
    %778 = vmatprep.subr.mxu0 %v692
    %779 = vmatpush1.msra.mxu0 %v691
    %780 = vmatprep.subr.mxu0 %v695
    %781 = vmatpush1.msra.mxu0 %v694
    %782 = vmatprep.subr.mxu0 %v698
    %783 = vmatpush1.msra.mxu0 %v697
    %784 = vmatprep.subr.mxu0 %v701
    %785 = vmatpush1.msra.mxu0 %v700
    %786 = vmatprep.subr.mxu0 %v704
    %787 = vmatpush1.msra.mxu0 %v703
    %788 = vmatprep.subr.mxu0 0.0
    %789 = vmatpush1.msra.mxu0 0.0
    %790 = vmatprep.subr.mxu0 0.0
    %791 = vmatpush1.msra.mxu0 0.0
    %792 = vmatprep.subr.mxu0 0.0
    %793 = vmatpush1.msra.mxu0 0.0
    %794 = vmatprep.subr.mxu0 0.0
    %795 = vmatpush1.msra.mxu0 0.0
    %796 = vmatprep.subr.mxu0 0.0
    %797 = vmatpush1.msra.mxu0 0.0
    %798 = vmatprep.subr.mxu0 0.0
    %799 = vmatpush1.msra.mxu0 0.0
    %800 = vmatprep.subr.mxu0 0.0
    %801 = vmatpush1.msra.mxu0 0.0
    %802 = vmatprep.subr.mxu0 0.0
    %803 = vmatpush1.msra.mxu0 0.0
    %804 = vmatprep.subr.mxu0 0.0
    %805 = vmatpush1.msra.mxu0 0.0
    %806 = vmatprep.subr.mxu0 0.0
    %807 = vmatpush1.msra.mxu0 0.0
    %808 = vmatprep.subr.mxu0 0.0
    %809 = vmatpush1.msra.mxu0 0.0
    %810 = vmatprep.subr.mxu0 0.0
    %811 = vmatpush1.msra.mxu0 0.0
    %812 = vmatprep.subr.mxu0 0.0
    %813 = vmatpush1.msra.mxu0 0.0
    %814 = vmatprep.subr.mxu0 0.0
    %815 = vmatpush1.msra.mxu0 0.0
    %816 = vmatprep.subr.mxu0 0.0
    %817 = vmatpush1.msra.mxu0 0.0
    %818 = vmatprep.subr.mxu0 0.0
    %819 = vmatpush1.msra.mxu0 0.0
    %820 = vmatprep.mubr.f32.mxu0 0.0
    %821 = vmatmul.mubr.f32.gmra.mrb[0].mxu0 0.0
    %v822 = vpop.f32.mrb[0].mxu0
    %v823 = vadd.f32 0.0, %v822
    %v824 = vpop.f32.mrb[0].mxu0
    %v825 = vadd.f32 0.0, %v824
    %826 = vdwg.mxu0
    %827 = vmatprep.subr.mxu0 0.0
    %828 = vmatpush1.msra.mxu0 %v660
    %829 = vmatprep.subr.mxu0 0.0
    %830 = vmatpush1.msra.mxu0 %v663
    %831 = vmatprep.subr.mxu0 0.0
    %832 = vmatpush1.msra.mxu0 %v666
    %833 = vmatprep.subr.mxu0 0.0
    %834 = vmatpush1.msra.mxu0 %v669
    %835 = vmatprep.subr.mxu0 0.0
    %836 = vmatpush1.msra.mxu0 %v672
    %837 = vmatprep.subr.mxu0 0.0
    %838 = vmatpush1.msra.mxu0 %v675
    %839 = vmatprep.subr.mxu0 0.0
    %840 = vmatpush1.msra.mxu0 %v678
    %841 = vmatprep.subr.mxu0 0.0
    %842 = vmatpush1.msra.mxu0 %v681
    %843 = vmatprep.subr.mxu0 0.0
    %844 = vmatpush1.msra.mxu0 %v684
    %845 = vmatprep.subr.mxu0 0.0
    %846 = vmatpush1.msra.mxu0 %v687
    %847 = vmatprep.subr.mxu0 0.0
    %848 = vmatpush1.msra.mxu0 %v690
    %849 = vmatprep.subr.mxu0 0.0
    %850 = vmatpush1.msra.mxu0 %v693
    %851 = vmatprep.subr.mxu0 0.0
    %852 = vmatpush1.msra.mxu0 %v696
    %853 = vmatprep.subr.mxu0 0.0
    %854 = vmatpush1.msra.mxu0 %v699
    %855 = vmatprep.subr.mxu0 0.0
    %856 = vmatpush1.msra.mxu0 %v702
    %857 = vmatprep.subr.mxu0 0.0
    %858 = vmatpush1.msra.mxu0 %v705
    %859 = vmatprep.subr.mxu0 0.0
    %860 = vmatpush1.msra.mxu0 0.0
    %861 = vmatprep.subr.mxu0 0.0
    %862 = vmatpush1.msra.mxu0 0.0
    %863 = vmatprep.subr.mxu0 0.0
    %864 = vmatpush1.msra.mxu0 0.0
    %865 = vmatprep.subr.mxu0 0.0
    %866 = vmatpush1.msra.mxu0 0.0
    %867 = vmatprep.subr.mxu0 0.0
    %868 = vmatpush1.msra.mxu0 0.0
    %869 = vmatprep.subr.mxu0 0.0
    %870 = vmatpush1.msra.mxu0 0.0
    %871 = vmatprep.subr.mxu0 0.0
    %872 = vmatpush1.msra.mxu0 0.0
    %873 = vmatprep.subr.mxu0 0.0
    %874 = vmatpush1.msra.mxu0 0.0
    %875 = vmatprep.subr.mxu0 0.0
    %876 = vmatpush1.msra.mxu0 0.0
    %877 = vmatprep.subr.mxu0 0.0
    %878 = vmatpush1.msra.mxu0 0.0
    %879 = vmatprep.subr.mxu0 0.0
    %880 = vmatpush1.msra.mxu0 0.0
    %881 = vmatprep.subr.mxu0 0.0
    %882 = vmatpush1.msra.mxu0 0.0
    %883 = vmatprep.subr.mxu0 0.0
    %884 = vmatpush1.msra.mxu0 0.0
    %885 = vmatprep.subr.mxu0 0.0
    %886 = vmatpush1.msra.mxu0 0.0
    %887 = vmatprep.subr.mxu0 0.0
    %888 = vmatpush1.msra.mxu0 0.0
    %889 = vmatprep.subr.mxu0 0.0
    %890 = vmatpush1.msra.mxu0 0.0
    %891 = vmatprep.mubr.f32.mxu0 0.0
    %892 = vmatmul.mubr.f32.gmra.mrb[0].mxu0 0.0
    %v893 = vpop.f32.mrb[0].mxu0
    %v894 = vadd.f32 0.0, %v893
    %v895 = vpop.f32.mrb[0].mxu0
    %896 = vdwg.mxu0
    %897 = vmatprep.subr.mxu0 %v707
    %898 = vmatpush1.msra.mxu0 %v706
    %899 = vmatprep.subr.mxu0 %v710
    %900 = vmatpush1.msra.mxu0 %v709
    %901 = vmatprep.subr.mxu0 %v713
    %902 = vmatpush1.msra.mxu0 %v712
    %903 = vmatprep.subr.mxu0 %v716
    %904 = vmatpush1.msra.mxu0 %v715
    %905 = vmatprep.subr.mxu0 %v719
    %906 = vmatpush1.msra.mxu0 %v718
    %907 = vmatprep.subr.mxu0 %v722
    %908 = vmatpush1.msra.mxu0 %v721
    %909 = vmatprep.subr.mxu0 %v725
    %910 = vmatpush1.msra.mxu0 %v724
    %911 = vmatprep.subr.mxu0 %v728
    %912 = vmatpush1.msra.mxu0 %v727
    %913 = vmatprep.subr.mxu0 %v731
    %914 = vmatpush1.msra.mxu0 %v730
    %915 = vmatprep.subr.mxu0 %v734
    %916 = vmatpush1.msra.mxu0 %v733
    %917 = vmatprep.subr.mxu0 %v737
    %918 = vmatpush1.msra.mxu0 %v736
    %919 = vmatprep.subr.mxu0 %v740
    %920 = vmatpush1.msra.mxu0 %v739
    %921 = vmatprep.subr.mxu0 %v743
    %922 = vmatpush1.msra.mxu0 %v742
    %923 = vmatprep.subr.mxu0 %v746
    %924 = vmatpush1.msra.mxu0 %v745
    %925 = vmatprep.subr.mxu0 %v749
    %926 = vmatpush1.msra.mxu0 %v748
    %927 = vmatprep.subr.mxu0 %v752
    %928 = vmatpush1.msra.mxu0 %v751
    %929 = vmatprep.subr.mxu0 0.0
    %930 = vmatpush1.msra.mxu0 0.0
    %931 = vmatprep.subr.mxu0 0.0
    %932 = vmatpush1.msra.mxu0 0.0
    %933 = vmatprep.subr.mxu0 0.0
    %934 = vmatpush1.msra.mxu0 0.0
    %935 = vmatprep.subr.mxu0 0.0
    %936 = vmatpush1.msra.mxu0 0.0
    %937 = vmatprep.subr.mxu0 0.0
    %938 = vmatpush1.msra.mxu0 0.0
    %939 = vmatprep.subr.mxu0 0.0
    %940 = vmatpush1.msra.mxu0 0.0
    %941 = vmatprep.subr.mxu0 0.0
    %942 = vmatpush1.msra.mxu0 0.0
    %943 = vmatprep.subr.mxu0 0.0
    %944 = vmatpush1.msra.mxu0 0.0
    %945 = vmatprep.subr.mxu0 0.0
    %946 = vmatpush1.msra.mxu0 0.0
    %947 = vmatprep.subr.mxu0 0.0
    %948 = vmatpush1.msra.mxu0 0.0
    %949 = vmatprep.subr.mxu0 0.0
    %950 = vmatpush1.msra.mxu0 0.0
    %951 = vmatprep.subr.mxu0 0.0
    %952 = vmatpush1.msra.mxu0 0.0
    %953 = vmatprep.subr.mxu0 0.0
    %954 = vmatpush1.msra.mxu0 0.0
    %955 = vmatprep.subr.mxu0 0.0
    %956 = vmatpush1.msra.mxu0 0.0
    %957 = vmatprep.subr.mxu0 0.0
    %958 = vmatpush1.msra.mxu0 0.0
    %959 = vmatprep.subr.mxu0 0.0
    %960 = vmatpush1.msra.mxu0 0.0
    %961 = vmatprep.mubr.f32.mxu0 0.0
    %962 = vmatmul.mubr.f32.gmra.mrb[0].mxu0 0.0
    %v963 = vpop.f32.mrb[0].mxu0
    %v964 = vadd.f32 0.0, %v963
    %v965 = vpop.f32.mrb[0].mxu0
    %v966 = vadd.f32 0.0, %v965
    %967 = vdwg.mxu0
    %968 = vmatprep.subr.mxu0 0.0
    %969 = vmatpush1.msra.mxu0 %v708
    %970 = vmatprep.subr.mxu0 0.0
    %971 = vmatpush1.msra.mxu0 %v711
    %972 = vmatprep.subr.mxu0 0.0
    %973 = vmatpush1.msra.mxu0 %v714
    %974 = vmatprep.subr.mxu0 0.0
    %975 = vmatpush1.msra.mxu0 %v717
    %976 = vmatprep.subr.mxu0 0.0
    %977 = vmatpush1.msra.mxu0 %v720
    %978 = vmatprep.subr.mxu0 0.0
    %979 = vmatpush1.msra.mxu0 %v723
    %980 = vmatprep.subr.mxu0 0.0
    %981 = vmatpush1.msra.mxu0 %v726
    %982 = vmatprep.subr.mxu0 0.0
    %983 = vmatpush1.msra.mxu0 %v729
    %984 = vmatprep.subr.mxu0 0.0
    %985 = vmatpush1.msra.mxu0 %v732
    %986 = vmatprep.subr.mxu0 0.0
    %987 = vmatpush1.msra.mxu0 %v735
    %988 = vmatprep.subr.mxu0 0.0
    %989 = vmatpush1.msra.mxu0 %v738
    %990 = vmatprep.subr.mxu0 0.0
    %991 = vmatpush1.msra.mxu0 %v741
    %992 = vmatprep.subr.mxu0 0.0
    %993 = vmatpush1.msra.mxu0 %v744
    %994 = vmatprep.subr.mxu0 0.0
    %995 = vmatpush1.msra.mxu0 %v747
    %996 = vmatprep.subr.mxu0 0.0
    %997 = vmatpush1.msra.mxu0 %v750
    %998 = vmatprep.subr.mxu0 0.0
    %999 = vmatpush1.msra.mxu0 %v753
    %1000 = vmatprep.subr.mxu0 0.0
    %1001 = vmatpush1.msra.mxu0 0.0
    %1002 = vmatprep.subr.mxu0 0.0
    %1003 = vmatpush1.msra.mxu0 0.0
    %1004 = vmatprep.subr.mxu0 0.0
    %1005 = vmatpush1.msra.mxu0 0.0
    %1006 = vmatprep.subr.mxu0 0.0
    %1007 = vmatpush1.msra.mxu0 0.0
    %1008 = vmatprep.subr.mxu0 0.0
    %1009 = vmatpush1.msra.mxu0 0.0
    %1010 = vmatprep.subr.mxu0 0.0
    %1011 = vmatpush1.msra.mxu0 0.0
    %1012 = vmatprep.subr.mxu0 0.0
    %1013 = vmatpush1.msra.mxu0 0.0
    %1014 = vmatprep.subr.mxu0 0.0
    %1015 = vmatpush1.msra.mxu0 0.0
    %1016 = vmatprep.subr.mxu0 0.0
    %1017 = vmatpush1.msra.mxu0 0.0
    %1018 = vmatprep.subr.mxu0 0.0
    %1019 = vmatpush1.msra.mxu0 0.0
    %1020 = vmatprep.subr.mxu0 0.0
    %1021 = vmatpush1.msra.mxu0 0.0
    %1022 = vmatprep.subr.mxu0 0.0
    %1023 = vmatpush1.msra.mxu0 0.0
    %1024 = vmatprep.subr.mxu0 0.0
    %1025 = vmatpush1.msra.mxu0 0.0
    %1026 = vmatprep.subr.mxu0 0.0
    %1027 = vmatpush1.msra.mxu0 0.0
    %1028 = vmatprep.subr.mxu0 0.0
    %1029 = vmatpush1.msra.mxu0 0.0
    %1030 = vmatprep.subr.mxu0 0.0
    %1031 = vmatpush1.msra.mxu0 0.0
    %1032 = vmatprep.mubr.f32.mxu0 0.0
    %1033 = vmatmul.mubr.f32.gmra.mrb[0].mxu0 0.0
    %v1034 = vpop.f32.mrb[0].mxu0
    %v1035 = vadd.f32 0.0, %v1034
    %v1036 = vpop.f32.mrb[0].mxu0
    %1037 = vdwg.mxu0
    %v1038 = vld [vmem:[#allocation2] sm:$0xff]
    %v1039 = vld [vmem:[#allocation2 + $0x8] sm:$0xff]
    %v1040 = vld [vmem:[#allocation2 + $0x10] sm:$0xff]
    %v1041 = vadd.f32 %v1038, %v823
    %v1042 = vxor.u32 %v1041, 2147483648
    %v1043 = vmul.f32 %v1042, 1.442695
    %v1044 = vpow.pop %v1043
    %v1045 = vadd.f32 %v1044, 1.0
    %v1046 = vrcp.pop %v1045
    %v1047 = vmul.f32 1.0, %v1046
    %v1048 = vadd.f32 %v1039, %v825
    %v1049 = vxor.u32 %v1048, 2147483648
    %v1050 = vmul.f32 %v1049, 1.442695
    %v1051 = vpow.pop %v1050
    %v1052 = vadd.f32 %v1051, 1.0
    %v1053 = vrcp.pop %v1052
    %v1054 = vmul.f32 1.0, %v1053
    %v1056 = vlaneseq
    %v1057 = vshrl.u32 %v1056, 7
    %v1058 = vsub.s32 0, %v1057
    %v1059 = vrot.slane %v754, %v1058
    %v1061 = vadd.f32 %v894, %v1059
    %v1062 = vmul.f32 %v1047, %v1061
    %v1063 = vadd.f32 %v1040, %v1062
    %v1064 = vtanh.pop %v1063
    %v1065 = vsub.f32 1.0, %v1054
    %v1066 = vmul.f32 %v1065, %v1064
    %v1067 = vmul.f32 %v1054, 0.0
    %v1068 = vadd.f32 %v1066, %v1067
    %s1069 = scalar_lea.vmem [#allocation3], 168
    %v1070 = vld [vmem:[%s1069] sm:$0xff]
    %v1071 = vld [vmem:[%s1069 + $0x8] sm:$0xff]
    %v1072 = vld [vmem:[%s1069 + $0x10] sm:$0xff]
    %v1073 = vadd.f32 %v1070, %v964
    %v1074 = vxor.u32 %v1073, 2147483648
    %v1075 = vmul.f32 %v1074, 1.442695
    %v1076 = vpow.pop %v1075
    %v1077 = vadd.f32 %v1076, 1.0
    %v1078 = vrcp.pop %v1077
    %v1079 = vmul.f32 1.0, %v1078
    %v1080 = vadd.f32 %v1071, %v966
    %v1081 = vxor.u32 %v1080, 2147483648
    %v1082 = vmul.f32 %v1081, 1.442695
    %v1083 = vpow.pop %v1082
    %v1084 = vadd.f32 %v1083, 1.0
    %v1085 = vrcp.pop %v1084
    %v1086 = vmul.f32 1.0, %v1085
    %v1088 = vlaneseq
    %v1089 = vshrl.u32 %v1088, 7
    %v1090 = vsub.s32 0, %v1089
    %v1091 = vrot.slane %v755, %v1090
    %v1093 = vadd.f32 %v1035, %v1091
    %v1094 = vmul.f32 %v1079, %v1093
    %v1095 = vadd.f32 %v1072, %v1094
    %v1096 = vtanh.pop %v1095
    %v1097 = vsub.f32 1.0, %v1086
    %v1098 = vmul.f32 %v1097, %v1096
    %v1099 = vmul.f32 %v1086, 0.0
    %v1100 = vadd.f32 %v1098, %v1099
    %1101 = vst [vmem:[#allocation4] sm:$0xff] %v1068
    %s1102 = scalar_lea.vmem [#allocation5], 56
    %1103 = vst [vmem:[%s1102] sm:$0xff] %v1100
    %1104 = vmatprep.subr.mxu0 %v659
    %1105 = vmatpush1.msra.mxu0 %v658
    %1106 = vmatprep.subr.mxu0 %v662
    %1107 = vmatpush1.msra.mxu0 %v661
    %1108 = vmatprep.subr.mxu0 %v665
    %1109 = vmatpush1.msra.mxu0 %v664
    %1110 = vmatprep.subr.mxu0 %v668
    %1111 = vmatpush1.msra.mxu0 %v667
    %1112 = vmatprep.subr.mxu0 %v671
    %1113 = vmatpush1.msra.mxu0 %v670
    %1114 = vmatprep.subr.mxu0 %v674
    %1115 = vmatpush1.msra.mxu0 %v673
    %1116 = vmatprep.subr.mxu0 %v677
    %1117 = vmatpush1.msra.mxu0 %v676
    %1118 = vmatprep.subr.mxu0 %v680
    %1119 = vmatpush1.msra.mxu0 %v679
    %1120 = vmatprep.subr.mxu0 %v683
    %1121 = vmatpush1.msra.mxu0 %v682
    %1122 = vmatprep.subr.mxu0 %v686
    %1123 = vmatpush1.msra.mxu0 %v685
    %1124 = vmatprep.subr.mxu0 %v689
    %1125 = vmatpush1.msra.mxu0 %v688
    %1126 = vmatprep.subr.mxu0 %v692
    %1127 = vmatpush1.msra.mxu0 %v691
    %1128 = vmatprep.subr.mxu0 %v695
    %1129 = vmatpush1.msra.mxu0 %v694
    %1130 = vmatprep.subr.mxu0 %v698
    %1131 = vmatpush1.msra.mxu0 %v697
    %1132 = vmatprep.subr.mxu0 %v701
    %1133 = vmatpush1.msra.mxu0 %v700
    %1134 = vmatprep.subr.mxu0 %v704
    %1135 = vmatpush1.msra.mxu0 %v703
    %1136 = vmatprep.subr.mxu0 0.0
    %1137 = vmatpush1.msra.mxu0 0.0
    %1138 = vmatprep.subr.mxu0 0.0
    %1139 = vmatpush1.msra.mxu0 0.0
    %1140 = vmatprep.subr.mxu0 0.0
    %1141 = vmatpush1.msra.mxu0 0.0
    %1142 = vmatprep.subr.mxu0 0.0
    %1143 = vmatpush1.msra.mxu0 0.0
    %1144 = vmatprep.subr.mxu0 0.0
    %1145 = vmatpush1.msra.mxu0 0.0
    %1146 = vmatprep.subr.mxu0 0.0
    %1147 = vmatpush1.msra.mxu0 0.0
    %1148 = vmatprep.subr.mxu0 0.0
    %1149 = vmatpush1.msra.mxu0 0.0
    %1150 = vmatprep.subr.mxu0 0.0
    %1151 = vmatpush1.msra.mxu0 0.0
    %1152 = vmatprep.subr.mxu0 0.0
    %1153 = vmatpush1.msra.mxu0 0.0
    %1154 = vmatprep.subr.mxu0 0.0
    %1155 = vmatpush1.msra.mxu0 0.0
    %1156 = vmatprep.subr.mxu0 0.0
    %1157 = vmatpush1.msra.mxu0 0.0
    %1158 = vmatprep.subr.mxu0 0.0
    %1159 = vmatpush1.msra.mxu0 0.0
    %1160 = vmatprep.subr.mxu0 0.0
    %1161 = vmatpush1.msra.mxu0 0.0
    %1162 = vmatprep.subr.mxu0 0.0
    %1163 = vmatpush1.msra.mxu0 0.0
    %1164 = vmatprep.subr.mxu0 0.0
    %1165 = vmatpush1.msra.mxu0 0.0
    %1166 = vmatprep.subr.mxu0 0.0
    %1167 = vmatpush1.msra.mxu0 0.0
    %1168 = vmatprep.mubr.f32.mxu0 0.0
    %1169 = vmatmul.mubr.f32.gmra.mrb[0].mxu0 %v1068
    %v1170 = vpop.f32.mrb[0].mxu0
    %v1171 = vadd.f32 0.0, %v1170
    %v1172 = vpop.f32.mrb[0].mxu0
    %v1173 = vadd.f32 0.0, %v1172
    %1174 = vdwg.mxu0
    %1175 = vmatprep.subr.mxu0 0.0
    %1176 = vmatpush1.msra.mxu0 %v660
    %1177 = vmatprep.subr.mxu0 0.0
    %1178 = vmatpush1.msra.mxu0 %v663
    %1179 = vmatprep.subr.mxu0 0.0
    %1180 = vmatpush1.msra.mxu0 %v666
    %1181 = vmatprep.subr.mxu0 0.0
    %1182 = vmatpush1.msra.mxu0 %v669
    %1183 = vmatprep.subr.mxu0 0.0
    %1184 = vmatpush1.msra.mxu0 %v672
    %1185 = vmatprep.subr.mxu0 0.0
    %1186 = vmatpush1.msra.mxu0 %v675
    %1187 = vmatprep.subr.mxu0 0.0
    %1188 = vmatpush1.msra.mxu0 %v678
    %1189 = vmatprep.subr.mxu0 0.0
    %1190 = vmatpush1.msra.mxu0 %v681
    %1191 = vmatprep.subr.mxu0 0.0
    %1192 = vmatpush1.msra.mxu0 %v684
    %1193 = vmatprep.subr.mxu0 0.0
    %1194 = vmatpush1.msra.mxu0 %v687
    %1195 = vmatprep.subr.mxu0 0.0
    %1196 = vmatpush1.msra.mxu0 %v690
    %1197 = vmatprep.subr.mxu0 0.0
    %1198 = vmatpush1.msra.mxu0 %v693
    %1199 = vmatprep.subr.mxu0 0.0
    %1200 = vmatpush1.msra.mxu0 %v696
    %1201 = vmatprep.subr.mxu0 0.0
    %1202 = vmatpush1.msra.mxu0 %v699
    %1203 = vmatprep.subr.mxu0 0.0
    %1204 = vmatpush1.msra.mxu0 %v702
    %1205 = vmatprep.subr.mxu0 0.0
    %1206 = vmatpush1.msra.mxu0 %v705
    %1207 = vmatprep.subr.mxu0 0.0
    %1208 = vmatpush1.msra.mxu0 0.0
    %1209 = vmatprep.subr.mxu0 0.0
    %1210 = vmatpush1.msra.mxu0 0.0
    %1211 = vmatprep.subr.mxu0 0.0
    %1212 = vmatpush1.msra.mxu0 0.0
    %1213 = vmatprep.subr.mxu0 0.0
    %1214 = vmatpush1.msra.mxu0 0.0
    %1215 = vmatprep.subr.mxu0 0.0
    %1216 = vmatpush1.msra.mxu0 0.0
    %1217 = vmatprep.subr.mxu0 0.0
    %1218 = vmatpush1.msra.mxu0 0.0
    %1219 = vmatprep.subr.mxu0 0.0
    %1220 = vmatpush1.msra.mxu0 0.0
    %1221 = vmatprep.subr.mxu0 0.0
    %1222 = vmatpush1.msra.mxu0 0.0
    %1223 = vmatprep.subr.mxu0 0.0
    %1224 = vmatpush1.msra.mxu0 0.0
    %1225 = vmatprep.subr.mxu0 0.0
    %1226 = vmatpush1.msra.mxu0 0.0
    %1227 = vmatprep.subr.mxu0 0.0
    %1228 = vmatpush1.msra.mxu0 0.0
    %1229 = vmatprep.subr.mxu0 0.0
    %1230 = vmatpush1.msra.mxu0 0.0
    %1231 = vmatprep.subr.mxu0 0.0
    %1232 = vmatpush1.msra.mxu0 0.0
    %1233 = vmatprep.subr.mxu0 0.0
    %1234 = vmatpush1.msra.mxu0 0.0
    %1235 = vmatprep.subr.mxu0 0.0
    %1236 = vmatpush1.msra.mxu0 0.0
    %1237 = vmatprep.subr.mxu0 0.0
    %1238 = vmatpush1.msra.mxu0 0.0
    %1239 = vmatprep.mubr.f32.mxu0 0.0
    %1240 = vmatmul.mubr.f32.gmra.mrb[0].mxu0 %v1068
    %v1241 = vpop.f32.mrb[0].mxu0
    %v1242 = vadd.f32 0.0, %v1241
    %v1243 = vpop.f32.mrb[0].mxu0
    %1244 = vdwg.mxu0
    %1245 = vmatprep.subr.mxu0 %v707
    %1246 = vmatpush1.msra.mxu0 %v706
    %1247 = vmatprep.subr.mxu0 %v710
    %1248 = vmatpush1.msra.mxu0 %v709
    %1249 = vmatprep.subr.mxu0 %v713
    %1250 = vmatpush1.msra.mxu0 %v712
    %1251 = vmatprep.subr.mxu0 %v716
    %1252 = vmatpush1.msra.mxu0 %v715
    %1253 = vmatprep.subr.mxu0 %v719
    %1254 = vmatpush1.msra.mxu0 %v718
    %1255 = vmatprep.subr.mxu0 %v722
    %1256 = vmatpush1.msra.mxu0 %v721
    %1257 = vmatprep.subr.mxu0 %v725
    %1258 = vmatpush1.msra.mxu0 %v724
    %1259 = vmatprep.subr.mxu0 %v728
    %1260 = vmatpush1.msra.mxu0 %v727
    %1261 = vmatprep.subr.mxu0 %v731
    %1262 = vmatpush1.msra.mxu0 %v730
    %1263 = vmatprep.subr.mxu0 %v734
    %1264 = vmatpush1.msra.mxu0 %v733
    %1265 = vmatprep.subr.mxu0 %v737
    %1266 = vmatpush1.msra.mxu0 %v736
    %1267 = vmatprep.subr.mxu0 %v740
    %1268 = vmatpush1.msra.mxu0 %v739
    %1269 = vmatprep.subr.mxu0 %v743
    %1270 = vmatpush1.msra.mxu0 %v742
    %1271 = vmatprep.subr.mxu0 %v746
    %1272 = vmatpush1.msra.mxu0 %v745
    %1273 = vmatprep.subr.mxu0 %v749
    %1274 = vmatpush1.msra.mxu0 %v748
    %1275 = vmatprep.subr.mxu0 %v752
    %1276 = vmatpush1.msra.mxu0 %v751
    %1277 = vmatprep.subr.mxu0 0.0
    %1278 = vmatpush1.msra.mxu0 0.0
    %1279 = vmatprep.subr.mxu0 0.0
    %1280 = vmatpush1.msra.mxu0 0.0
    %1281 = vmatprep.subr.mxu0 0.0
    %1282 = vmatpush1.msra.mxu0 0.0
    %1283 = vmatprep.subr.mxu0 0.0
    %1284 = vmatpush1.msra.mxu0 0.0
    %1285 = vmatprep.subr.mxu0 0.0
    %1286 = vmatpush1.msra.mxu0 0.0
    %1287 = vmatprep.subr.mxu0 0.0
    %1288 = vmatpush1.msra.mxu0 0.0
    %1289 = vmatprep.subr.mxu0 0.0
    %1290 = vmatpush1.msra.mxu0 0.0
    %1291 = vmatprep.subr.mxu0 0.0
    %1292 = vmatpush1.msra.mxu0 0.0
    %1293 = vmatprep.subr.mxu0 0.0
    %1294 = vmatpush1.msra.mxu0 0.0
    %1295 = vmatprep.subr.mxu0 0.0
    %1296 = vmatpush1.msra.mxu0 0.0
    %1297 = vmatprep.subr.mxu0 0.0
    %1298 = vmatpush1.msra.mxu0 0.0
    %1299 = vmatprep.subr.mxu0 0.0
    %1300 = vmatpush1.msra.mxu0 0.0
    %1301 = vmatprep.subr.mxu0 0.0
    %1302 = vmatpush1.msra.mxu0 0.0
    %1303 = vmatprep.subr.mxu0 0.0
    %1304 = vmatpush1.msra.mxu0 0.0
    %1305 = vmatprep.subr.mxu0 0.0
    %1306 = vmatpush1.msra.mxu0 0.0
    %1307 = vmatprep.subr.mxu0 0.0
    %1308 = vmatpush1.msra.mxu0 0.0
    %1309 = vmatprep.mubr.f32.mxu0 0.0
    %1310 = vmatmul.mubr.f32.gmra.mrb[0].mxu0 %v1100
    %v1311 = vpop.f32.mrb[0].mxu0
    %v1312 = vadd.f32 0.0, %v1311
    %v1313 = vpop.f32.mrb[0].mxu0
    %v1314 = vadd.f32 0.0, %v1313
    %1315 = vdwg.mxu0
    %1316 = vmatprep.subr.mxu0 0.0
    %1317 = vmatpush1.msra.mxu0 %v708
    %1318 = vmatprep.subr.mxu0 0.0
    %1319 = vmatpush1.msra.mxu0 %v711
    %1320 = vmatprep.subr.mxu0 0.0
    %1321 = vmatpush1.msra.mxu0 %v714
    %1322 = vmatprep.subr.mxu0 0.0
    %1323 = vmatpush1.msra.mxu0 %v717
    %1324 = vmatprep.subr.mxu0 0.0
    %1325 = vmatpush1.msra.mxu0 %v720
    %1326 = vmatprep.subr.mxu0 0.0
    %1327 = vmatpush1.msra.mxu0 %v723
    %1328 = vmatprep.subr.mxu0 0.0
    %1329 = vmatpush1.msra.mxu0 %v726
    %1330 = vmatprep.subr.mxu0 0.0
    %1331 = vmatpush1.msra.mxu0 %v729
    %1332 = vmatprep.subr.mxu0 0.0
    %1333 = vmatpush1.msra.mxu0 %v732
    %1334 = vmatprep.subr.mxu0 0.0
    %1335 = vmatpush1.msra.mxu0 %v735
    %1336 = vmatprep.subr.mxu0 0.0
    %1337 = vmatpush1.msra.mxu0 %v738
    %1338 = vmatprep.subr.mxu0 0.0
    %1339 = vmatpush1.msra.mxu0 %v741
    %1340 = vmatprep.subr.mxu0 0.0
    %1341 = vmatpush1.msra.mxu0 %v744
    %1342 = vmatprep.subr.mxu0 0.0
    %1343 = vmatpush1.msra.mxu0 %v747
    %1344 = vmatprep.subr.mxu0 0.0
    %1345 = vmatpush1.msra.mxu0 %v750
    %1346 = vmatprep.subr.mxu0 0.0
    %1347 = vmatpush1.msra.mxu0 %v753
    %1348 = vmatprep.subr.mxu0 0.0
    %1349 = vmatpush1.msra.mxu0 0.0
    %1350 = vmatprep.subr.mxu0 0.0
    %1351 = vmatpush1.msra.mxu0 0.0
    %1352 = vmatprep.subr.mxu0 0.0
    %1353 = vmatpush1.msra.mxu0 0.0
    %1354 = vmatprep.subr.mxu0 0.0
    %1355 = vmatpush1.msra.mxu0 0.0
    %1356 = vmatprep.subr.mxu0 0.0
    %1357 = vmatpush1.msra.mxu0 0.0
    %1358 = vmatprep.subr.mxu0 0.0
    %1359 = vmatpush1.msra.mxu0 0.0
    %1360 = vmatprep.subr.mxu0 0.0
    %1361 = vmatpush1.msra.mxu0 0.0
    %1362 = vmatprep.subr.mxu0 0.0
    %1363 = vmatpush1.msra.mxu0 0.0
    %1364 = vmatprep.subr.mxu0 0.0
    %1365 = vmatpush1.msra.mxu0 0.0
    %1366 = vmatprep.subr.mxu0 0.0
    %1367 = vmatpush1.msra.mxu0 0.0
    %1368 = vmatprep.subr.mxu0 0.0
    %1369 = vmatpush1.msra.mxu0 0.0
    %1370 = vmatprep.subr.mxu0 0.0
    %1371 = vmatpush1.msra.mxu0 0.0
    %1372 = vmatprep.subr.mxu0 0.0
    %1373 = vmatpush1.msra.mxu0 0.0
    %1374 = vmatprep.subr.mxu0 0.0
    %1375 = vmatpush1.msra.mxu0 0.0
    %1376 = vmatprep.subr.mxu0 0.0
    %1377 = vmatpush1.msra.mxu0 0.0
    %1378 = vmatprep.subr.mxu0 0.0
    %1379 = vmatpush1.msra.mxu0 0.0
    %1380 = vmatprep.mubr.f32.mxu0 0.0
    %1381 = vmatmul.mubr.f32.gmra.mrb[0].mxu0 %v1100
    %v1382 = vpop.f32.mrb[0].mxu0
    %v1383 = vadd.f32 0.0, %v1382
    %v1384 = vpop.f32.mrb[0].mxu0
    %1385 = vdwg.mxu0
    %s1386 = scalar_lea.vmem [#allocation2], 24
    %v1387 = vld [vmem:[%s1386] sm:$0xff]
    %v1388 = vld [vmem:[%s1386 + $0x8] sm:$0xff]
    %v1389 = vld [vmem:[%s1386 + $0x10] sm:$0xff]
    %v1390 = vadd.f32 %v1387, %v1171
    %v1391 = vxor.u32 %v1390, 2147483648
    %v1392 = vmul.f32 %v1391, 1.442695
    %v1393 = vpow.pop %v1392
    %v1394 = vadd.f32 %v1393, 1.0
    %v1395 = vrcp.pop %v1394
    %v1396 = vmul.f32 1.0, %v1395
    %v1397 = vadd.f32 %v1388, %v1173
    %v1398 = vxor.u32 %v1397, 2147483648
    %v1399 = vmul.f32 %v1398, 1.442695
    %v1400 = vpow.pop %v1399
    %v1401 = vadd.f32 %v1400, 1.0
    %v1402 = vrcp.pop %v1401
    %v1403 = vmul.f32 1.0, %v1402
    %v1404 = vadd.f32 %v1242, %v1059
    %v1405 = vmul.f32 %v1396, %v1404
    %v1406 = vadd.f32 %v1389, %v1405
    %v1407 = vtanh.pop %v1406
    %v1408 = vsub.f32 1.0, %v1403
    %v1409 = vmul.f32 %v1408, %v1407
    %v1410 = vmul.f32 %v1403, %v1068
    %v1411 = vadd.f32 %v1409, %v1410
    %s1412 = scalar_lea.vmem [#allocation3], 144
    %v1413 = vld [vmem:[%s1412] sm:$0xff]
    %v1414 = vld [vmem:[%s1412 + $0x8] sm:$0xff]
    %v1415 = vld [vmem:[%s1412 + $0x10] sm:$0xff]
    %v1416 = vadd.f32 %v1413, %v1312
    %v1417 = vxor.u32 %v1416, 2147483648
    %v1418 = vmul.f32 %v1417, 1.442695
    %v1419 = vpow.pop %v1418
    %v1420 = vadd.f32 %v1419, 1.0
    %v1421 = vrcp.pop %v1420
    %v1422 = vmul.f32 1.0, %v1421
    %v1423 = vadd.f32 %v1414, %v1314
    %v1424 = vxor.u32 %v1423, 2147483648
    %v1425 = vmul.f32 %v1424, 1.442695
    %v1426 = vpow.pop %v1425
    %v1427 = vadd.f32 %v1426, 1.0
    %v1428 = vrcp.pop %v1427
    %v1429 = vmul.f32 1.0, %v1428
    %v1430 = vadd.f32 %v1383, %v1091
    %v1431 = vmul.f32 %v1422, %v1430
    %v1432 = vadd.f32 %v1415, %v1431
    %v1433 = vtanh.pop %v1432
    %v1434 = vsub.f32 1.0, %v1429
    %v1435 = vmul.f32 %v1434, %v1433
    %v1436 = vmul.f32 %v1429, %v1100
    %v1437 = vadd.f32 %v1435, %v1436
    %s1438 = scalar_lea.vmem [#allocation4], 8
    %1439 = vst [vmem:[%s1438] sm:$0xff] %v1411
    %s1440 = scalar_lea.vmem [#allocation5], 48
    %1441 = vst [vmem:[%s1440] sm:$0xff] %v1437
    %1442 = vmatprep.subr.mxu0 %v659
    %1443 = vmatpush1.msra.mxu0 %v658
    %1444 = vmatprep.subr.mxu0 %v662
    %1445 = vmatpush1.msra.mxu0 %v661
    %1446 = vmatprep.subr.mxu0 %v665
    %1447 = vmatpush1.msra.mxu0 %v664
    %1448 = vmatprep.subr.mxu0 %v668
    %1449 = vmatpush1.msra.mxu0 %v667
    %1450 = vmatprep.subr.mxu0 %v671
    %1451 = vmatpush1.msra.mxu0 %v670
    %1452 = vmatprep.subr.mxu0 %v674
    %1453 = vmatpush1.msra.mxu0 %v673
    %1454 = vmatprep.subr.mxu0 %v677
    %1455 = vmatpush1.msra.mxu0 %v676
    %1456 = vmatprep.subr.mxu0 %v680
    %1457 = vmatpush1.msra.mxu0 %v679
    %1458 = vmatprep.subr.mxu0 %v683
    %1459 = vmatpush1.msra.mxu0 %v682
    %1460 = vmatprep.subr.mxu0 %v686
    %1461 = vmatpush1.msra.mxu0 %v685
    %1462 = vmatprep.subr.mxu0 %v689
    %1463 = vmatpush1.msra.mxu0 %v688
    %1464 = vmatprep.subr.mxu0 %v692
    %1465 = vmatpush1.msra.mxu0 %v691
    %1466 = vmatprep.subr.mxu0 %v695
    %1467 = vmatpush1.msra.mxu0 %v694
    %1468 = vmatprep.subr.mxu0 %v698
    %1469 = vmatpush1.msra.mxu0 %v697
    %1470 = vmatprep.subr.mxu0 %v701
    %1471 = vmatpush1.msra.mxu0 %v700
    %1472 = vmatprep.subr.mxu0 %v704
    %1473 = vmatpush1.msra.mxu0 %v703
    %1474 = vmatprep.subr.mxu0 0.0
    %1475 = vmatpush1.msra.mxu0 0.0
    %1476 = vmatprep.subr.mxu0 0.0
    %1477 = vmatpush1.msra.mxu0 0.0
    %1478 = vmatprep.subr.mxu0 0.0
    %1479 = vmatpush1.msra.mxu0 0.0
    %1480 = vmatprep.subr.mxu0 0.0
    %1481 = vmatpush1.msra.mxu0 0.0
    %1482 = vmatprep.subr.mxu0 0.0
    %1483 = vmatpush1.msra.mxu0 0.0
    %1484 = vmatprep.subr.mxu0 0.0
    %1485 = vmatpush1.msra.mxu0 0.0
    %1486 = vmatprep.subr.mxu0 0.0
    %1487 = vmatpush1.msra.mxu0 0.0
    %1488 = vmatprep.subr.mxu0 0.0
    %1489 = vmatpush1.msra.mxu0 0.0
    %1490 = vmatprep.subr.mxu0 0.0
    %1491 = vmatpush1.msra.mxu0 0.0
    %1492 = vmatprep.subr.mxu0 0.0
    %1493 = vmatpush1.msra.mxu0 0.0
    %1494 = vmatprep.subr.mxu0 0.0
    %1495 = vmatpush1.msra.mxu0 0.0
    %1496 = vmatprep.subr.mxu0 0.0
    %1497 = vmatpush1.msra.mxu0 0.0
    %1498 = vmatprep.subr.mxu0 0.0
    %1499 = vmatpush1.msra.mxu0 0.0
    %1500 = vmatprep.subr.mxu0 0.0
    %1501 = vmatpush1.msra.mxu0 0.0
    %1502 = vmatprep.subr.mxu0 0.0
    %1503 = vmatpush1.msra.mxu0 0.0
    %1504 = vmatprep.subr.mxu0 0.0
    %1505 = vmatpush1.msra.mxu0 0.0
    %1506 = vmatprep.mubr.f32.mxu0 0.0
    %1507 = vmatmul.mubr.f32.gmra.mrb[0].mxu0 %v1411
    %v1508 = vpop.f32.mrb[0].mxu0
    %v1509 = vadd.f32 0.0, %v1508
    %v1510 = vpop.f32.mrb[0].mxu0
    %v1511 = vadd.f32 0.0, %v1510
    %1512 = vdwg.mxu0
    %1513 = vmatprep.subr.mxu0 0.0
    %1514 = vmatpush1.msra.mxu0 %v660
    %1515 = vmatprep.subr.mxu0 0.0
    %1516 = vmatpush1.msra.mxu0 %v663
    %1517 = vmatprep.subr.mxu0 0.0
    %1518 = vmatpush1.msra.mxu0 %v666
    %1519 = vmatprep.subr.mxu0 0.0
    %1520 = vmatpush1.msra.mxu0 %v669
    %1521 = vmatprep.subr.mxu0 0.0
    %1522 = vmatpush1.msra.mxu0 %v672
    %1523 = vmatprep.subr.mxu0 0.0
    %1524 = vmatpush1.msra.mxu0 %v675
    %1525 = vmatprep.subr.mxu0 0.0
    %1526 = vmatpush1.msra.mxu0 %v678
    %1527 = vmatprep.subr.mxu0 0.0
    %1528 = vmatpush1.msra.mxu0 %v681
    %1529 = vmatprep.subr.mxu0 0.0
    %1530 = vmatpush1.msra.mxu0 %v684
    %1531 = vmatprep.subr.mxu0 0.0
    %1532 = vmatpush1.msra.mxu0 %v687
    %1533 = vmatprep.subr.mxu0 0.0
    %1534 = vmatpush1.msra.mxu0 %v690
    %1535 = vmatprep.subr.mxu0 0.0
    %1536 = vmatpush1.msra.mxu0 %v693
    %1537 = vmatprep.subr.mxu0 0.0
    %1538 = vmatpush1.msra.mxu0 %v696
    %1539 = vmatprep.subr.mxu0 0.0
    %1540 = vmatpush1.msra.mxu0 %v699
    %1541 = vmatprep.subr.mxu0 0.0
    %1542 = vmatpush1.msra.mxu0 %v702
    %1543 = vmatprep.subr.mxu0 0.0
    %1544 = vmatpush1.msra.mxu0 %v705
    %1545 = vmatprep.subr.mxu0 0.0
    %1546 = vmatpush1.msra.mxu0 0.0
    %1547 = vmatprep.subr.mxu0 0.0
    %1548 = vmatpush1.msra.mxu0 0.0
    %1549 = vmatprep.subr.mxu0 0.0
    %1550 = vmatpush1.msra.mxu0 0.0
    %1551 = vmatprep.subr.mxu0 0.0
    %1552 = vmatpush1.msra.mxu0 0.0
    %1553 = vmatprep.subr.mxu0 0.0
    %1554 = vmatpush1.msra.mxu0 0.0
    %1555 = vmatprep.subr.mxu0 0.0
    %1556 = vmatpush1.msra.mxu0 0.0
    %1557 = vmatprep.subr.mxu0 0.0
    %1558 = vmatpush1.msra.mxu0 0.0
    %1559 = vmatprep.subr.mxu0 0.0
    %1560 = vmatpush1.msra.mxu0 0.0
    %1561 = vmatprep.subr.mxu0 0.0
    %1562 = vmatpush1.msra.mxu0 0.0
    %1563 = vmatprep.subr.mxu0 0.0
    %1564 = vmatpush1.msra.mxu0 0.0
    %1565 = vmatprep.subr.mxu0 0.0
    %1566 = vmatpush1.msra.mxu0 0.0
    %1567 = vmatprep.subr.mxu0 0.0
    %1568 = vmatpush1.msra.mxu0 0.0
    %1569 = vmatprep.subr.mxu0 0.0
    %1570 = vmatpush1.msra.mxu0 0.0
    %1571 = vmatprep.subr.mxu0 0.0
    %1572 = vmatpush1.msra.mxu0 0.0
    %1573 = vmatprep.subr.mxu0 0.0
    %1574 = vmatpush1.msra.mxu0 0.0
    %1575 = vmatprep.subr.mxu0 0.0
    %1576 = vmatpush1.msra.mxu0 0.0
    %1577 = vmatprep.mubr.f32.mxu0 0.0
    %1578 = vmatmul.mubr.f32.gmra.mrb[0].mxu0 %v1411
    %v1579 = vpop.f32.mrb[0].mxu0
    %v1580 = vadd.f32 0.0, %v1579
    %v1581 = vpop.f32.mrb[0].mxu0
    %1582 = vdwg.mxu0
    %1583 = vmatprep.subr.mxu0 %v707
    %1584 = vmatpush1.msra.mxu0 %v706
    %1585 = vmatprep.subr.mxu0 %v710
    %1586 = vmatpush1.msra.mxu0 %v709
    %1587 = vmatprep.subr.mxu0 %v713
    %1588 = vmatpush1.msra.mxu0 %v712
    %1589 = vmatprep.subr.mxu0 %v716
    %1590 = vmatpush1.msra.mxu0 %v715
    %1591 = vmatprep.subr.mxu0 %v719
    %1592 = vmatpush1.msra.mxu0 %v718
    %1593 = vmatprep.subr.mxu0 %v722
    %1594 = vmatpush1.msra.mxu0 %v721
    %1595 = vmatprep.subr.mxu0 %v725
    %1596 = vmatpush1.msra.mxu0 %v724
    %1597 = vmatprep.subr.mxu0 %v728
    %1598 = vmatpush1.msra.mxu0 %v727
    %1599 = vmatprep.subr.mxu0 %v731
    %1600 = vmatpush1.msra.mxu0 %v730
    %1601 = vmatprep.subr.mxu0 %v734
    %1602 = vmatpush1.msra.mxu0 %v733
    %1603 = vmatprep.subr.mxu0 %v737
    %1604 = vmatpush1.msra.mxu0 %v736
    %1605 = vmatprep.subr.mxu0 %v740
    %1606 = vmatpush1.msra.mxu0 %v739
    %1607 = vmatprep.subr.mxu0 %v743
    %1608 = vmatpush1.msra.mxu0 %v742
    %1609 = vmatprep.subr.mxu0 %v746
    %1610 = vmatpush1.msra.mxu0 %v745
    %1611 = vmatprep.subr.mxu0 %v749
    %1612 = vmatpush1.msra.mxu0 %v748
    %1613 = vmatprep.subr.mxu0 %v752
    %1614 = vmatpush1.msra.mxu0 %v751
    %1615 = vmatprep.subr.mxu0 0.0
    %1616 = vmatpush1.msra.mxu0 0.0
    %1617 = vmatprep.subr.mxu0 0.0
    %1618 = vmatpush1.msra.mxu0 0.0
    %1619 = vmatprep.subr.mxu0 0.0
    %1620 = vmatpush1.msra.mxu0 0.0
    %1621 = vmatprep.subr.mxu0 0.0
    %1622 = vmatpush1.msra.mxu0 0.0
    %1623 = vmatprep.subr.mxu0 0.0
    %1624 = vmatpush1.msra.mxu0 0.0
    %1625 = vmatprep.subr.mxu0 0.0
    %1626 = vmatpush1.msra.mxu0 0.0
    %1627 = vmatprep.subr.mxu0 0.0
    %1628 = vmatpush1.msra.mxu0 0.0
    %1629 = vmatprep.subr.mxu0 0.0
    %1630 = vmatpush1.msra.mxu0 0.0
    %1631 = vmatprep.subr.mxu0 0.0
    %1632 = vmatpush1.msra.mxu0 0.0
    %1633 = vmatprep.subr.mxu0 0.0
    %1634 = vmatpush1.msra.mxu0 0.0
    %1635 = vmatprep.subr.mxu0 0.0
    %1636 = vmatpush1.msra.mxu0 0.0
    %1637 = vmatprep.subr.mxu0 0.0
    %1638 = vmatpush1.msra.mxu0 0.0
    %1639 = vmatprep.subr.mxu0 0.0
    %1640 = vmatpush1.msra.mxu0 0.0
    %1641 = vmatprep.subr.mxu0 0.0
    %1642 = vmatpush1.msra.mxu0 0.0
    %1643 = vmatprep.subr.mxu0 0.0
    %1644 = vmatpush1.msra.mxu0 0.0
    %1645 = vmatprep.subr.mxu0 0.0
    %1646 = vmatpush1.msra.mxu0 0.0
    %1647 = vmatprep.mubr.f32.mxu0 0.0
    %1648 = vmatmul.mubr.f32.gmra.mrb[0].mxu0 %v1437
    %v1649 = vpop.f32.mrb[0].mxu0
    %v1650 = vadd.f32 0.0, %v1649
    %v1651 = vpop.f32.mrb[0].mxu0
    %v1652 = vadd.f32 0.0, %v1651
    %1653 = vdwg.mxu0
    %1654 = vmatprep.subr.mxu0 0.0
    %1655 = vmatpush1.msra.mxu0 %v708
    %1656 = vmatprep.subr.mxu0 0.0
    %1657 = vmatpush1.msra.mxu0 %v711
    %1658 = vmatprep.subr.mxu0 0.0
    %1659 = vmatpush1.msra.mxu0 %v714
    %1660 = vmatprep.subr.mxu0 0.0
    %1661 = vmatpush1.msra.mxu0 %v717
    %1662 = vmatprep.subr.mxu0 0.0
    %1663 = vmatpush1.msra.mxu0 %v720
    %1664 = vmatprep.subr.mxu0 0.0
    %1665 = vmatpush1.msra.mxu0 %v723
    %1666 = vmatprep.subr.mxu0 0.0
    %1667 = vmatpush1.msra.mxu0 %v726
    %1668 = vmatprep.subr.mxu0 0.0
    %1669 = vmatpush1.msra.mxu0 %v729
    %1670 = vmatprep.subr.mxu0 0.0
    %1671 = vmatpush1.msra.mxu0 %v732
    %1672 = vmatprep.subr.mxu0 0.0
    %1673 = vmatpush1.msra.mxu0 %v735
    %1674 = vmatprep.subr.mxu0 0.0
    %1675 = vmatpush1.msra.mxu0 %v738
    %1676 = vmatprep.subr.mxu0 0.0
    %1677 = vmatpush1.msra.mxu0 %v741
    %1678 = vmatprep.subr.mxu0 0.0
    %1679 = vmatpush1.msra.mxu0 %v744
    %1680 = vmatprep.subr.mxu0 0.0
    %1681 = vmatpush1.msra.mxu0 %v747
    %1682 = vmatprep.subr.mxu0 0.0
    %1683 = vmatpush1.msra.mxu0 %v750
    %1684 = vmatprep.subr.mxu0 0.0
    %1685 = vmatpush1.msra.mxu0 %v753
    %1686 = vmatprep.subr.mxu0 0.0
    %1687 = vmatpush1.msra.mxu0 0.0
    %1688 = vmatprep.subr.mxu0 0.0
    %1689 = vmatpush1.msra.mxu0 0.0
    %1690 = vmatprep.subr.mxu0 0.0
    %1691 = vmatpush1.msra.mxu0 0.0
    %1692 = vmatprep.subr.mxu0 0.0
    %1693 = vmatpush1.msra.mxu0 0.0
    %1694 = vmatprep.subr.mxu0 0.0
    %1695 = vmatpush1.msra.mxu0 0.0
    %1696 = vmatprep.subr.mxu0 0.0
    %1697 = vmatpush1.msra.mxu0 0.0
    %1698 = vmatprep.subr.mxu0 0.0
    %1699 = vmatpush1.msra.mxu0 0.0
    %1700 = vmatprep.subr.mxu0 0.0
    %1701 = vmatpush1.msra.mxu0 0.0
    %1702 = vmatprep.subr.mxu0 0.0
    %1703 = vmatpush1.msra.mxu0 0.0
    %1704 = vmatprep.subr.mxu0 0.0
    %1705 = vmatpush1.msra.mxu0 0.0
    %1706 = vmatprep.subr.mxu0 0.0
    %1707 = vmatpush1.msra.mxu0 0.0
    %1708 = vmatprep.subr.mxu0 0.0
    %1709 = vmatpush1.msra.mxu0 0.0
    %1710 = vmatprep.subr.mxu0 0.0
    %1711 = vmatpush1.msra.mxu0 0.0
    %1712 = vmatprep.subr.mxu0 0.0
    %1713 = vmatpush1.msra.mxu0 0.0
    %1714 = vmatprep.subr.mxu0 0.0
    %1715 = vmatpush1.msra.mxu0 0.0
    %1716 = vmatprep.subr.mxu0 0.0
    %1717 = vmatpush1.msra.mxu0 0.0
    %1718 = vmatprep.mubr.f32.mxu0 0.0
    %1719 = vmatmul.mubr.f32.gmra.mrb[0].mxu0 %v1437
    %v1720 = vpop.f32.mrb[0].mxu0
    %v1721 = vadd.f32 0.0, %v1720
    %v1722 = vpop.f32.mrb[0].mxu0
    %1723 = vdwg.mxu0
    %s1724 = scalar_lea.vmem [#allocation2], 48
    %v1725 = vld [vmem:[%s1724] sm:$0xff]
    %v1726 = vld [vmem:[%s1724 + $0x8] sm:$0xff]
    %v1727 = vld [vmem:[%s1724 + $0x10] sm:$0xff]
    %v1728 = vadd.f32 %v1725, %v1509
    %v1729 = vxor.u32 %v1728, 2147483648
    %v1730 = vmul.f32 %v1729, 1.442695
    %v1731 = vpow.pop %v1730
    %v1732 = vadd.f32 %v1731, 1.0
    %v1733 = vrcp.pop %v1732
    %v1734 = vmul.f32 1.0, %v1733
    %v1735 = vadd.f32 %v1726, %v1511
    %v1736 = vxor.u32 %v1735, 2147483648
    %v1737 = vmul.f32 %v1736, 1.442695
    %v1738 = vpow.pop %v1737
    %v1739 = vadd.f32 %v1738, 1.0
    %v1740 = vrcp.pop %v1739
    %v1741 = vmul.f32 1.0, %v1740
    %v1742 = vadd.f32 %v1580, %v1059
    %v1743 = vmul.f32 %v1734, %v1742
    %v1744 = vadd.f32 %v1727, %v1743
    %v1745 = vtanh.pop %v1744
    %v1746 = vsub.f32 1.0, %v1741
    %v1747 = vmul.f32 %v1746, %v1745
    %v1748 = vmul.f32 %v1741, %v1411
    %v1749 = vadd.f32 %v1747, %v1748
    %s1750 = scalar_lea.vmem [#allocation3], 120
    %v1751 = vld [vmem:[%s1750] sm:$0xff]
    %v1752 = vld [vmem:[%s1750 + $0x8] sm:$0xff]
    %v1753 = vld [vmem:[%s1750 + $0x10] sm:$0xff]
    %v1754 = vadd.f32 %v1751, %v1650
    %v1755 = vxor.u32 %v1754, 2147483648
    %v1756 = vmul.f32 %v1755, 1.442695
    %v1757 = vpow.pop %v1756
    %v1758 = vadd.f32 %v1757, 1.0
    %v1759 = vrcp.pop %v1758
    %v1760 = vmul.f32 1.0, %v1759
    %v1761 = vadd.f32 %v1752, %v1652
    %v1762 = vxor.u32 %v1761, 2147483648
    %v1763 = vmul.f32 %v1762, 1.442695
    %v1764 = vpow.pop %v1763
    %v1765 = vadd.f32 %v1764, 1.0
    %v1766 = vrcp.pop %v1765
    %v1767 = vmul.f32 1.0, %v1766
    %v1768 = vadd.f32 %v1721, %v1091
    %v1769 = vmul.f32 %v1760, %v1768
    %v1770 = vadd.f32 %v1753, %v1769
    %v1771 = vtanh.pop %v1770
    %v1772 = vsub.f32 1.0, %v1767
    %v1773 = vmul.f32 %v1772, %v1771
    %v1774 = vmul.f32 %v1767, %v1437
    %v1775 = vadd.f32 %v1773, %v1774
    %s1776 = scalar_lea.vmem [#allocation4], 16
    %1777 = vst [vmem:[%s1776] sm:$0xff] %v1749
    %s1778 = scalar_lea.vmem [#allocation5], 40
    %1779 = vst [vmem:[%s1778] sm:$0xff] %v1775
    %1780 = vmatprep.subr.mxu0 %v659
    %1781 = vmatpush1.msra.mxu0 %v658
    %1782 = vmatprep.subr.mxu0 %v662
    %1783 = vmatpush1.msra.mxu0 %v661
    %1784 = vmatprep.subr.mxu0 %v665
    %1785 = vmatpush1.msra.mxu0 %v664
    %1786 = vmatprep.subr.mxu0 %v668
    %1787 = vmatpush1.msra.mxu0 %v667
    %1788 = vmatprep.subr.mxu0 %v671
    %1789 = vmatpush1.msra.mxu0 %v670
    %1790 = vmatprep.subr.mxu0 %v674
    %1791 = vmatpush1.msra.mxu0 %v673
    %1792 = vmatprep.subr.mxu0 %v677
    %1793 = vmatpush1.msra.mxu0 %v676
    %1794 = vmatprep.subr.mxu0 %v680
    %1795 = vmatpush1.msra.mxu0 %v679
    %1796 = vmatprep.subr.mxu0 %v683
    %1797 = vmatpush1.msra.mxu0 %v682
    %1798 = vmatprep.subr.mxu0 %v686
    %1799 = vmatpush1.msra.mxu0 %v685
    %1800 = vmatprep.subr.mxu0 %v689
    %1801 = vmatpush1.msra.mxu0 %v688
    %1802 = vmatprep.subr.mxu0 %v692
    %1803 = vmatpush1.msra.mxu0 %v691
    %1804 = vmatprep.subr.mxu0 %v695
    %1805 = vmatpush1.msra.mxu0 %v694
    %1806 = vmatprep.subr.mxu0 %v698
    %1807 = vmatpush1.msra.mxu0 %v697
    %1808 = vmatprep.subr.mxu0 %v701
    %1809 = vmatpush1.msra.mxu0 %v700
    %1810 = vmatprep.subr.mxu0 %v704
    %1811 = vmatpush1.msra.mxu0 %v703
    %1812 = vmatprep.subr.mxu0 0.0
    %1813 = vmatpush1.msra.mxu0 0.0
    %1814 = vmatprep.subr.mxu0 0.0
    %1815 = vmatpush1.msra.mxu0 0.0
    %1816 = vmatprep.subr.mxu0 0.0
    %1817 = vmatpush1.msra.mxu0 0.0
    %1818 = vmatprep.subr.mxu0 0.0
    %1819 = vmatpush1.msra.mxu0 0.0
    %1820 = vmatprep.subr.mxu0 0.0
    %1821 = vmatpush1.msra.mxu0 0.0
    %1822 = vmatprep.subr.mxu0 0.0
    %1823 = vmatpush1.msra.mxu0 0.0
    %1824 = vmatprep.subr.mxu0 0.0
    %1825 = vmatpush1.msra.mxu0 0.0
    %1826 = vmatprep.subr.mxu0 0.0
    %1827 = vmatpush1.msra.mxu0 0.0
    %1828 = vmatprep.subr.mxu0 0.0
    %1829 = vmatpush1.msra.mxu0 0.0
    %1830 = vmatprep.subr.mxu0 0.0
    %1831 = vmatpush1.msra.mxu0 0.0
    %1832 = vmatprep.subr.mxu0 0.0
    %1833 = vmatpush1.msra.mxu0 0.0
    %1834 = vmatprep.subr.mxu0 0.0
    %1835 = vmatpush1.msra.mxu0 0.0
    %1836 = vmatprep.subr.mxu0 0.0
    %1837 = vmatpush1.msra.mxu0 0.0
    %1838 = vmatprep.subr.mxu0 0.0
    %1839 = vmatpush1.msra.mxu0 0.0
    %1840 = vmatprep.subr.mxu0 0.0
    %1841 = vmatpush1.msra.mxu0 0.0
    %1842 = vmatprep.subr.mxu0 0.0
    %1843 = vmatpush1.msra.mxu0 0.0
    %1844 = vmatprep.mubr.f32.mxu0 0.0
    %1845 = vmatmul.mubr.f32.gmra.mrb[0].mxu0 %v1749
    %v1846 = vpop.f32.mrb[0].mxu0
    %v1847 = vadd.f32 0.0, %v1846
    %v1848 = vpop.f32.mrb[0].mxu0
    %v1849 = vadd.f32 0.0, %v1848
    %1850 = vdwg.mxu0
    %1851 = vmatprep.subr.mxu0 0.0
    %1852 = vmatpush1.msra.mxu0 %v660
    %1853 = vmatprep.subr.mxu0 0.0
    %1854 = vmatpush1.msra.mxu0 %v663
    %1855 = vmatprep.subr.mxu0 0.0
    %1856 = vmatpush1.msra.mxu0 %v666
    %1857 = vmatprep.subr.mxu0 0.0
    %1858 = vmatpush1.msra.mxu0 %v669
    %1859 = vmatprep.subr.mxu0 0.0
    %1860 = vmatpush1.msra.mxu0 %v672
    %1861 = vmatprep.subr.mxu0 0.0
    %1862 = vmatpush1.msra.mxu0 %v675
    %1863 = vmatprep.subr.mxu0 0.0
    %1864 = vmatpush1.msra.mxu0 %v678
    %1865 = vmatprep.subr.mxu0 0.0
    %1866 = vmatpush1.msra.mxu0 %v681
    %1867 = vmatprep.subr.mxu0 0.0
    %1868 = vmatpush1.msra.mxu0 %v684
    %1869 = vmatprep.subr.mxu0 0.0
    %1870 = vmatpush1.msra.mxu0 %v687
    %1871 = vmatprep.subr.mxu0 0.0
    %1872 = vmatpush1.msra.mxu0 %v690
    %1873 = vmatprep.subr.mxu0 0.0
    %1874 = vmatpush1.msra.mxu0 %v693
    %1875 = vmatprep.subr.mxu0 0.0
    %1876 = vmatpush1.msra.mxu0 %v696
    %1877 = vmatprep.subr.mxu0 0.0
    %1878 = vmatpush1.msra.mxu0 %v699
    %1879 = vmatprep.subr.mxu0 0.0
    %1880 = vmatpush1.msra.mxu0 %v702
    %1881 = vmatprep.subr.mxu0 0.0
    %1882 = vmatpush1.msra.mxu0 %v705
    %1883 = vmatprep.subr.mxu0 0.0
    %1884 = vmatpush1.msra.mxu0 0.0
    %1885 = vmatprep.subr.mxu0 0.0
    %1886 = vmatpush1.msra.mxu0 0.0
    %1887 = vmatprep.subr.mxu0 0.0
    %1888 = vmatpush1.msra.mxu0 0.0
    %1889 = vmatprep.subr.mxu0 0.0
    %1890 = vmatpush1.msra.mxu0 0.0
    %1891 = vmatprep.subr.mxu0 0.0
    %1892 = vmatpush1.msra.mxu0 0.0
    %1893 = vmatprep.subr.mxu0 0.0
    %1894 = vmatpush1.msra.mxu0 0.0
    %1895 = vmatprep.subr.mxu0 0.0
    %1896 = vmatpush1.msra.mxu0 0.0
    %1897 = vmatprep.subr.mxu0 0.0
    %1898 = vmatpush1.msra.mxu0 0.0
    %1899 = vmatprep.subr.mxu0 0.0
    %1900 = vmatpush1.msra.mxu0 0.0
    %1901 = vmatprep.subr.mxu0 0.0
    %1902 = vmatpush1.msra.mxu0 0.0
    %1903 = vmatprep.subr.mxu0 0.0
    %1904 = vmatpush1.msra.mxu0 0.0
    %1905 = vmatprep.subr.mxu0 0.0
    %1906 = vmatpush1.msra.mxu0 0.0
    %1907 = vmatprep.subr.mxu0 0.0
    %1908 = vmatpush1.msra.mxu0 0.0
    %1909 = vmatprep.subr.mxu0 0.0
    %1910 = vmatpush1.msra.mxu0 0.0
    %1911 = vmatprep.subr.mxu0 0.0
    %1912 = vmatpush1.msra.mxu0 0.0
    %1913 = vmatprep.subr.mxu0 0.0
    %1914 = vmatpush1.msra.mxu0 0.0
    %1915 = vmatprep.mubr.f32.mxu0 0.0
    %1916 = vmatmul.mubr.f32.gmra.mrb[0].mxu0 %v1749
    %v1917 = vpop.f32.mrb[0].mxu0
    %v1918 = vadd.f32 0.0, %v1917
    %v1919 = vpop.f32.mrb[0].mxu0
    %1920 = vdwg.mxu0
    %1921 = vmatprep.subr.mxu0 %v707
    %1922 = vmatpush1.msra.mxu0 %v706
    %1923 = vmatprep.subr.mxu0 %v710
    %1924 = vmatpush1.msra.mxu0 %v709
    %1925 = vmatprep.subr.mxu0 %v713
    %1926 = vmatpush1.msra.mxu0 %v712
    %1927 = vmatprep.subr.mxu0 %v716
    %1928 = vmatpush1.msra.mxu0 %v715
    %1929 = vmatprep.subr.mxu0 %v719
    %1930 = vmatpush1.msra.mxu0 %v718
    %1931 = vmatprep.subr.mxu0 %v722
    %1932 = vmatpush1.msra.mxu0 %v721
    %1933 = vmatprep.subr.mxu0 %v725
    %1934 = vmatpush1.msra.mxu0 %v724
    %1935 = vmatprep.subr.mxu0 %v728
    %1936 = vmatpush1.msra.mxu0 %v727
    %1937 = vmatprep.subr.mxu0 %v731
    %1938 = vmatpush1.msra.mxu0 %v730
    %1939 = vmatprep.subr.mxu0 %v734
    %1940 = vmatpush1.msra.mxu0 %v733
    %1941 = vmatprep.subr.mxu0 %v737
    %1942 = vmatpush1.msra.mxu0 %v736
    %1943 = vmatprep.subr.mxu0 %v740
    %1944 = vmatpush1.msra.mxu0 %v739
    %1945 = vmatprep.subr.mxu0 %v743
    %1946 = vmatpush1.msra.mxu0 %v742
    %1947 = vmatprep.subr.mxu0 %v746
    %1948 = vmatpush1.msra.mxu0 %v745
    %1949 = vmatprep.subr.mxu0 %v749
    %1950 = vmatpush1.msra.mxu0 %v748
    %1951 = vmatprep.subr.mxu0 %v752
    %1952 = vmatpush1.msra.mxu0 %v751
    %1953 = vmatprep.subr.mxu0 0.0
    %1954 = vmatpush1.msra.mxu0 0.0
    %1955 = vmatprep.subr.mxu0 0.0
    %1956 = vmatpush1.msra.mxu0 0.0
    %1957 = vmatprep.subr.mxu0 0.0
    %1958 = vmatpush1.msra.mxu0 0.0
    %1959 = vmatprep.subr.mxu0 0.0
    %1960 = vmatpush1.msra.mxu0 0.0
    %1961 = vmatprep.subr.mxu0 0.0
    %1962 = vmatpush1.msra.mxu0 0.0
    %1963 = vmatprep.subr.mxu0 0.0
    %1964 = vmatpush1.msra.mxu0 0.0
    %1965 = vmatprep.subr.mxu0 0.0
    %1966 = vmatpush1.msra.mxu0 0.0
    %1967 = vmatprep.subr.mxu0 0.0
    %1968 = vmatpush1.msra.mxu0 0.0
    %1969 = vmatprep.subr.mxu0 0.0
    %1970 = vmatpush1.msra.mxu0 0.0
    %1971 = vmatprep.subr.mxu0 0.0
    %1972 = vmatpush1.msra.mxu0 0.0
    %1973 = vmatprep.subr.mxu0 0.0
    %1974 = vmatpush1.msra.mxu0 0.0
    %1975 = vmatprep.subr.mxu0 0.0
    %1976 = vmatpush1.msra.mxu0 0.0
    %1977 = vmatprep.subr.mxu0 0.0
    %1978 = vmatpush1.msra.mxu0 0.0
    %1979 = vmatprep.subr.mxu0 0.0
    %1980 = vmatpush1.msra.mxu0 0.0
    %1981 = vmatprep.subr.mxu0 0.0
    %1982 = vmatpush1.msra.mxu0 0.0
    %1983 = vmatprep.subr.mxu0 0.0
    %1984 = vmatpush1.msra.mxu0 0.0
    %1985 = vmatprep.mubr.f32.mxu0 0.0
    %1986 = vmatmul.mubr.f32.gmra.mrb[0].mxu0 %v1775
    %v1987 = vpop.f32.mrb[0].mxu0
    %v1988 = vadd.f32 0.0, %v1987
    %v1989 = vpop.f32.mrb[0].mxu0
    %v1990 = vadd.f32 0.0, %v1989
    %1991 = vdwg.mxu0
    %1992 = vmatprep.subr.mxu0 0.0
    %1993 = vmatpush1.msra.mxu0 %v708
    %1994 = vmatprep.subr.mxu0 0.0
    %1995 = vmatpush1.msra.mxu0 %v711
    %1996 = vmatprep.subr.mxu0 0.0
    %1997 = vmatpush1.msra.mxu0 %v714
    %1998 = vmatprep.subr.mxu0 0.0
    %1999 = vmatpush1.msra.mxu0 %v717
    %2000 = vmatprep.subr.mxu0 0.0
    %2001 = vmatpush1.msra.mxu0 %v720
    %2002 = vmatprep.subr.mxu0 0.0
    %2003 = vmatpush1.msra.mxu0 %v723
    %2004 = vmatprep.subr.mxu0 0.0
    %2005 = vmatpush1.msra.mxu0 %v726
    %2006 = vmatprep.subr.mxu0 0.0
    %2007 = vmatpush1.msra.mxu0 %v729
    %2008 = vmatprep.subr.mxu0 0.0
    %2009 = vmatpush1.msra.mxu0 %v732
    %2010 = vmatprep.subr.mxu0 0.0
    %2011 = vmatpush1.msra.mxu0 %v735
    %2012 = vmatprep.subr.mxu0 0.0
    %2013 = vmatpush1.msra.mxu0 %v738
    %2014 = vmatprep.subr.mxu0 0.0
    %2015 = vmatpush1.msra.mxu0 %v741
    %2016 = vmatprep.subr.mxu0 0.0
    %2017 = vmatpush1.msra.mxu0 %v744
    %2018 = vmatprep.subr.mxu0 0.0
    %2019 = vmatpush1.msra.mxu0 %v747
    %2020 = vmatprep.subr.mxu0 0.0
    %2021 = vmatpush1.msra.mxu0 %v750
    %2022 = vmatprep.subr.mxu0 0.0
    %2023 = vmatpush1.msra.mxu0 %v753
    %2024 = vmatprep.subr.mxu0 0.0
    %2025 = vmatpush1.msra.mxu0 0.0
    %2026 = vmatprep.subr.mxu0 0.0
    %2027 = vmatpush1.msra.mxu0 0.0
    %2028 = vmatprep.subr.mxu0 0.0
    %2029 = vmatpush1.msra.mxu0 0.0
    %2030 = vmatprep.subr.mxu0 0.0
    %2031 = vmatpush1.msra.mxu0 0.0
    %2032 = vmatprep.subr.mxu0 0.0
    %2033 = vmatpush1.msra.mxu0 0.0
    %2034 = vmatprep.subr.mxu0 0.0
    %2035 = vmatpush1.msra.mxu0 0.0
    %2036 = vmatprep.subr.mxu0 0.0
    %2037 = vmatpush1.msra.mxu0 0.0
    %2038 = vmatprep.subr.mxu0 0.0
    %2039 = vmatpush1.msra.mxu0 0.0
    %2040 = vmatprep.subr.mxu0 0.0
    %2041 = vmatpush1.msra.mxu0 0.0
    %2042 = vmatprep.subr.mxu0 0.0
    %2043 = vmatpush1.msra.mxu0 0.0
    %2044 = vmatprep.subr.mxu0 0.0
    %2045 = vmatpush1.msra.mxu0 0.0
    %2046 = vmatprep.subr.mxu0 0.0
    %2047 = vmatpush1.msra.mxu0 0.0
    %2048 = vmatprep.subr.mxu0 0.0
    %2049 = vmatpush1.msra.mxu0 0.0
    %2050 = vmatprep.subr.mxu0 0.0
    %2051 = vmatpush1.msra.mxu0 0.0
    %2052 = vmatprep.subr.mxu0 0.0
    %2053 = vmatpush1.msra.mxu0 0.0
    %2054 = vmatprep.subr.mxu0 0.0
    %2055 = vmatpush1.msra.mxu0 0.0
    %2056 = vmatprep.mubr.f32.mxu0 0.0
    %2057 = vmatmul.mubr.f32.gmra.mrb[0].mxu0 %v1775
    %v2058 = vpop.f32.mrb[0].mxu0
    %v2059 = vadd.f32 0.0, %v2058
    %v2060 = vpop.f32.mrb[0].mxu0
    %2061 = vdwg.mxu0
    %s2062 = scalar_lea.vmem [#allocation2], 72
    %v2063 = vld [vmem:[%s2062] sm:$0xff]
    %v2064 = vld [vmem:[%s2062 + $0x8] sm:$0xff]
    %v2065 = vld [vmem:[%s2062 + $0x10] sm:$0xff]
    %v2066 = vadd.f32 %v2063, %v1847
    %v2067 = vxor.u32 %v2066, 2147483648
    %v2068 = vmul.f32 %v2067, 1.442695
    %v2069 = vpow.pop %v2068
    %v2070 = vadd.f32 %v2069, 1.0
    %v2071 = vrcp.pop %v2070
    %v2072 = vmul.f32 1.0, %v2071
    %v2073 = vadd.f32 %v2064, %v1849
    %v2074 = vxor.u32 %v2073, 2147483648
    %v2075 = vmul.f32 %v2074, 1.442695
    %v2076 = vpow.pop %v2075
    %v2077 = vadd.f32 %v2076, 1.0
    %v2078 = vrcp.pop %v2077
    %v2079 = vmul.f32 1.0, %v2078
    %v2080 = vadd.f32 %v1918, %v1059
    %v2081 = vmul.f32 %v2072, %v2080
    %v2082 = vadd.f32 %v2065, %v2081
    %v2083 = vtanh.pop %v2082
    %v2084 = vsub.f32 1.0, %v2079
    %v2085 = vmul.f32 %v2084, %v2083
    %v2086 = vmul.f32 %v2079, %v1749
    %v2087 = vadd.f32 %v2085, %v2086
    %s2088 = scalar_lea.vmem [#allocation3], 96
    %v2089 = vld [vmem:[%s2088] sm:$0xff]
    %v2090 = vld [vmem:[%s2088 + $0x8] sm:$0xff]
    %v2091 = vld [vmem:[%s2088 + $0x10] sm:$0xff]
    %v2092 = vadd.f32 %v2089, %v1988
    %v2093 = vxor.u32 %v2092, 2147483648
    %v2094 = vmul.f32 %v2093, 1.442695
    %v2095 = vpow.pop %v2094
    %v2096 = vadd.f32 %v2095, 1.0
    %v2097 = vrcp.pop %v2096
    %v2098 = vmul.f32 1.0, %v2097
    %v2099 = vadd.f32 %v2090, %v1990
    %v2100 = vxor.u32 %v2099, 2147483648
    %v2101 = vmul.f32 %v2100, 1.442695
    %v2102 = vpow.pop %v2101
    %v2103 = vadd.f32 %v2102, 1.0
    %v2104 = vrcp.pop %v2103
    %v2105 = vmul.f32 1.0, %v2104
    %v2106 = vadd.f32 %v2059, %v1091
    %v2107 = vmul.f32 %v2098, %v2106
    %v2108 = vadd.f32 %v2091, %v2107
    %v2109 = vtanh.pop %v2108
    %v2110 = vsub.f32 1.0, %v2105
    %v2111 = vmul.f32 %v2110, %v2109
    %v2112 = vmul.f32 %v2105, %v1775
    %v2113 = vadd.f32 %v2111, %v2112
    %s2114 = scalar_lea.vmem [#allocation4], 24
    %2115 = vst [vmem:[%s2114] sm:$0xff] %v2087
    %s2116 = scalar_lea.vmem [#allocation5], 32
    %2117 = vst [vmem:[%s2116] sm:$0xff] %v2113
    %2118 = vmatprep.subr.mxu0 %v659
    %2119 = vmatpush1.msra.mxu0 %v658
    %2120 = vmatprep.subr.mxu0 %v662
    %2121 = vmatpush1.msra.mxu0 %v661
    %2122 = vmatprep.subr.mxu0 %v665
    %2123 = vmatpush1.msra.mxu0 %v664
    %2124 = vmatprep.subr.mxu0 %v668
    %2125 = vmatpush1.msra.mxu0 %v667
    %2126 = vmatprep.subr.mxu0 %v671
    %2127 = vmatpush1.msra.mxu0 %v670
    %2128 = vmatprep.subr.mxu0 %v674
    %2129 = vmatpush1.msra.mxu0 %v673
    %2130 = vmatprep.subr.mxu0 %v677
    %2131 = vmatpush1.msra.mxu0 %v676
    %2132 = vmatprep.subr.mxu0 %v680
    %2133 = vmatpush1.msra.mxu0 %v679
    %2134 = vmatprep.subr.mxu0 %v683
    %2135 = vmatpush1.msra.mxu0 %v682
    %2136 = vmatprep.subr.mxu0 %v686
    %2137 = vmatpush1.msra.mxu0 %v685
    %2138 = vmatprep.subr.mxu0 %v689
    %2139 = vmatpush1.msra.mxu0 %v688
    %2140 = vmatprep.subr.mxu0 %v692
    %2141 = vmatpush1.msra.mxu0 %v691
    %2142 = vmatprep.subr.mxu0 %v695
    %2143 = vmatpush1.msra.mxu0 %v694
    %2144 = vmatprep.subr.mxu0 %v698
    %2145 = vmatpush1.msra.mxu0 %v697
    %2146 = vmatprep.subr.mxu0 %v701
    %2147 = vmatpush1.msra.mxu0 %v700
    %2148 = vmatprep.subr.mxu0 %v704
    %2149 = vmatpush1.msra.mxu0 %v703
    %2150 = vmatprep.subr.mxu0 0.0
    %2151 = vmatpush1.msra.mxu0 0.0
    %2152 = vmatprep.subr.mxu0 0.0
    %2153 = vmatpush1.msra.mxu0 0.0
    %2154 = vmatprep.subr.mxu0 0.0
    %2155 = vmatpush1.msra.mxu0 0.0
    %2156 = vmatprep.subr.mxu0 0.0
    %2157 = vmatpush1.msra.mxu0 0.0
    %2158 = vmatprep.subr.mxu0 0.0
    %2159 = vmatpush1.msra.mxu0 0.0
    %2160 = vmatprep.subr.mxu0 0.0
    %2161 = vmatpush1.msra.mxu0 0.0
    %2162 = vmatprep.subr.mxu0 0.0
    %2163 = vmatpush1.msra.mxu0 0.0
    %2164 = vmatprep.subr.mxu0 0.0
    %2165 = vmatpush1.msra.mxu0 0.0
    %2166 = vmatprep.subr.mxu0 0.0
    %2167 = vmatpush1.msra.mxu0 0.0
    %2168 = vmatprep.subr.mxu0 0.0
    %2169 = vmatpush1.msra.mxu0 0.0
    %2170 = vmatprep.subr.mxu0 0.0
    %2171 = vmatpush1.msra.mxu0 0.0
    %2172 = vmatprep.subr.mxu0 0.0
    %2173 = vmatpush1.msra.mxu0 0.0
    %2174 = vmatprep.subr.mxu0 0.0
    %2175 = vmatpush1.msra.mxu0 0.0
    %2176 = vmatprep.subr.mxu0 0.0
    %2177 = vmatpush1.msra.mxu0 0.0
    %2178 = vmatprep.subr.mxu0 0.0
    %2179 = vmatpush1.msra.mxu0 0.0
    %2180 = vmatprep.subr.mxu0 0.0
    %2181 = vmatpush1.msra.mxu0 0.0
    %2182 = vmatprep.mubr.f32.mxu0 0.0
    %2183 = vmatmul.mubr.f32.gmra.mrb[0].mxu0 %v2087
    %v2184 = vpop.f32.mrb[0].mxu0
    %v2185 = vadd.f32 0.0, %v2184
    %v2186 = vpop.f32.mrb[0].mxu0
    %v2187 = vadd.f32 0.0, %v2186
    %2188 = vdwg.mxu0
    %2189 = vmatprep.subr.mxu0 0.0
    %2190 = vmatpush1.msra.mxu0 %v660
    %2191 = vmatprep.subr.mxu0 0.0
    %2192 = vmatpush1.msra.mxu0 %v663
    %2193 = vmatprep.subr.mxu0 0.0
    %2194 = vmatpush1.msra.mxu0 %v666
    %2195 = vmatprep.subr.mxu0 0.0
    %2196 = vmatpush1.msra.mxu0 %v669
    %2197 = vmatprep.subr.mxu0 0.0
    %2198 = vmatpush1.msra.mxu0 %v672
    %2199 = vmatprep.subr.mxu0 0.0
    %2200 = vmatpush1.msra.mxu0 %v675
    %2201 = vmatprep.subr.mxu0 0.0
    %2202 = vmatpush1.msra.mxu0 %v678
    %2203 = vmatprep.subr.mxu0 0.0
    %2204 = vmatpush1.msra.mxu0 %v681
    %2205 = vmatprep.subr.mxu0 0.0
    %2206 = vmatpush1.msra.mxu0 %v684
    %2207 = vmatprep.subr.mxu0 0.0
    %2208 = vmatpush1.msra.mxu0 %v687
    %2209 = vmatprep.subr.mxu0 0.0
    %2210 = vmatpush1.msra.mxu0 %v690
    %2211 = vmatprep.subr.mxu0 0.0
    %2212 = vmatpush1.msra.mxu0 %v693
    %2213 = vmatprep.subr.mxu0 0.0
    %2214 = vmatpush1.msra.mxu0 %v696
    %2215 = vmatprep.subr.mxu0 0.0
    %2216 = vmatpush1.msra.mxu0 %v699
    %2217 = vmatprep.subr.mxu0 0.0
    %2218 = vmatpush1.msra.mxu0 %v702
    %2219 = vmatprep.subr.mxu0 0.0
    %2220 = vmatpush1.msra.mxu0 %v705
    %2221 = vmatprep.subr.mxu0 0.0
    %2222 = vmatpush1.msra.mxu0 0.0
    %2223 = vmatprep.subr.mxu0 0.0
    %2224 = vmatpush1.msra.mxu0 0.0
    %2225 = vmatprep.subr.mxu0 0.0
    %2226 = vmatpush1.msra.mxu0 0.0
    %2227 = vmatprep.subr.mxu0 0.0
    %2228 = vmatpush1.msra.mxu0 0.0
    %2229 = vmatprep.subr.mxu0 0.0
    %2230 = vmatpush1.msra.mxu0 0.0
    %2231 = vmatprep.subr.mxu0 0.0
    %2232 = vmatpush1.msra.mxu0 0.0
    %2233 = vmatprep.subr.mxu0 0.0
    %2234 = vmatpush1.msra.mxu0 0.0
    %2235 = vmatprep.subr.mxu0 0.0
    %2236 = vmatpush1.msra.mxu0 0.0
    %2237 = vmatprep.subr.mxu0 0.0
    %2238 = vmatpush1.msra.mxu0 0.0
    %2239 = vmatprep.subr.mxu0 0.0
    %2240 = vmatpush1.msra.mxu0 0.0
    %2241 = vmatprep.subr.mxu0 0.0
    %2242 = vmatpush1.msra.mxu0 0.0
    %2243 = vmatprep.subr.mxu0 0.0
    %2244 = vmatpush1.msra.mxu0 0.0
    %2245 = vmatprep.subr.mxu0 0.0
    %2246 = vmatpush1.msra.mxu0 0.0
    %2247 = vmatprep.subr.mxu0 0.0
    %2248 = vmatpush1.msra.mxu0 0.0
    %2249 = vmatprep.subr.mxu0 0.0
    %2250 = vmatpush1.msra.mxu0 0.0
    %2251 = vmatprep.subr.mxu0 0.0
    %2252 = vmatpush1.msra.mxu0 0.0
    %2253 = vmatprep.mubr.f32.mxu0 0.0
    %2254 = vmatmul.mubr.f32.gmra.mrb[0].mxu0 %v2087
    %v2255 = vpop.f32.mrb[0].mxu0
    %v2256 = vadd.f32 0.0, %v2255
    %v2257 = vpop.f32.mrb[0].mxu0
    %2258 = vdwg.mxu0
    %2259 = vmatprep.subr.mxu0 %v707
    %2260 = vmatpush1.msra.mxu0 %v706
    %2261 = vmatprep.subr.mxu0 %v710
    %2262 = vmatpush1.msra.mxu0 %v709
    %2263 = vmatprep.subr.mxu0 %v713
    %2264 = vmatpush1.msra.mxu0 %v712
    %2265 = vmatprep.subr.mxu0 %v716
    %2266 = vmatpush1.msra.mxu0 %v715
    %2267 = vmatprep.subr.mxu0 %v719
    %2268 = vmatpush1.msra.mxu0 %v718
    %2269 = vmatprep.subr.mxu0 %v722
    %2270 = vmatpush1.msra.mxu0 %v721
    %2271 = vmatprep.subr.mxu0 %v725
    %2272 = vmatpush1.msra.mxu0 %v724
    %2273 = vmatprep.subr.mxu0 %v728
    %2274 = vmatpush1.msra.mxu0 %v727
    %2275 = vmatprep.subr.mxu0 %v731
    %2276 = vmatpush1.msra.mxu0 %v730
    %2277 = vmatprep.subr.mxu0 %v734
    %2278 = vmatpush1.msra.mxu0 %v733
    %2279 = vmatprep.subr.mxu0 %v737
    %2280 = vmatpush1.msra.mxu0 %v736
    %2281 = vmatprep.subr.mxu0 %v740
    %2282 = vmatpush1.msra.mxu0 %v739
    %2283 = vmatprep.subr.mxu0 %v743
    %2284 = vmatpush1.msra.mxu0 %v742
    %2285 = vmatprep.subr.mxu0 %v746
    %2286 = vmatpush1.msra.mxu0 %v745
    %2287 = vmatprep.subr.mxu0 %v749
    %2288 = vmatpush1.msra.mxu0 %v748
    %2289 = vmatprep.subr.mxu0 %v752
    %2290 = vmatpush1.msra.mxu0 %v751
    %2291 = vmatprep.subr.mxu0 0.0
    %2292 = vmatpush1.msra.mxu0 0.0
    %2293 = vmatprep.subr.mxu0 0.0
    %2294 = vmatpush1.msra.mxu0 0.0
    %2295 = vmatprep.subr.mxu0 0.0
    %2296 = vmatpush1.msra.mxu0 0.0
    %2297 = vmatprep.subr.mxu0 0.0
    %2298 = vmatpush1.msra.mxu0 0.0
    %2299 = vmatprep.subr.mxu0 0.0
    %2300 = vmatpush1.msra.mxu0 0.0
    %2301 = vmatprep.subr.mxu0 0.0
    %2302 = vmatpush1.msra.mxu0 0.0
    %2303 = vmatprep.subr.mxu0 0.0
    %2304 = vmatpush1.msra.mxu0 0.0
    %2305 = vmatprep.subr.mxu0 0.0
    %2306 = vmatpush1.msra.mxu0 0.0
    %2307 = vmatprep.subr.mxu0 0.0
    %2308 = vmatpush1.msra.mxu0 0.0
    %2309 = vmatprep.subr.mxu0 0.0
    %2310 = vmatpush1.msra.mxu0 0.0
    %2311 = vmatprep.subr.mxu0 0.0
    %2312 = vmatpush1.msra.mxu0 0.0
    %2313 = vmatprep.subr.mxu0 0.0
    %2314 = vmatpush1.msra.mxu0 0.0
    %2315 = vmatprep.subr.mxu0 0.0
    %2316 = vmatpush1.msra.mxu0 0.0
    %2317 = vmatprep.subr.mxu0 0.0
    %2318 = vmatpush1.msra.mxu0 0.0
    %2319 = vmatprep.subr.mxu0 0.0
    %2320 = vmatpush1.msra.mxu0 0.0
    %2321 = vmatprep.subr.mxu0 0.0
    %2322 = vmatpush1.msra.mxu0 0.0
    %2323 = vmatprep.mubr.f32.mxu0 0.0
    %2324 = vmatmul.mubr.f32.gmra.mrb[0].mxu0 %v2113
    %v2325 = vpop.f32.mrb[0].mxu0
    %v2326 = vadd.f32 0.0, %v2325
    %v2327 = vpop.f32.mrb[0].mxu0
    %v2328 = vadd.f32 0.0, %v2327
    %2329 = vdwg.mxu0
    %2330 = vmatprep.subr.mxu0 0.0
    %2331 = vmatpush1.msra.mxu0 %v708
    %2332 = vmatprep.subr.mxu0 0.0
    %2333 = vmatpush1.msra.mxu0 %v711
    %2334 = vmatprep.subr.mxu0 0.0
    %2335 = vmatpush1.msra.mxu0 %v714
    %2336 = vmatprep.subr.mxu0 0.0
    %2337 = vmatpush1.msra.mxu0 %v717
    %2338 = vmatprep.subr.mxu0 0.0
    %2339 = vmatpush1.msra.mxu0 %v720
    %2340 = vmatprep.subr.mxu0 0.0
    %2341 = vmatpush1.msra.mxu0 %v723
    %2342 = vmatprep.subr.mxu0 0.0
    %2343 = vmatpush1.msra.mxu0 %v726
    %2344 = vmatprep.subr.mxu0 0.0
    %2345 = vmatpush1.msra.mxu0 %v729
    %2346 = vmatprep.subr.mxu0 0.0
    %2347 = vmatpush1.msra.mxu0 %v732
    %2348 = vmatprep.subr.mxu0 0.0
    %2349 = vmatpush1.msra.mxu0 %v735
    %2350 = vmatprep.subr.mxu0 0.0
    %2351 = vmatpush1.msra.mxu0 %v738
    %2352 = vmatprep.subr.mxu0 0.0
    %2353 = vmatpush1.msra.mxu0 %v741
    %2354 = vmatprep.subr.mxu0 0.0
    %2355 = vmatpush1.msra.mxu0 %v744
    %2356 = vmatprep.subr.mxu0 0.0
    %2357 = vmatpush1.msra.mxu0 %v747
    %2358 = vmatprep.subr.mxu0 0.0
    %2359 = vmatpush1.msra.mxu0 %v750
    %2360 = vmatprep.subr.mxu0 0.0
    %2361 = vmatpush1.msra.mxu0 %v753
    %2362 = vmatprep.subr.mxu0 0.0
    %2363 = vmatpush1.msra.mxu0 0.0
    %2364 = vmatprep.subr.mxu0 0.0
    %2365 = vmatpush1.msra.mxu0 0.0
    %2366 = vmatprep.subr.mxu0 0.0
    %2367 = vmatpush1.msra.mxu0 0.0
    %2368 = vmatprep.subr.mxu0 0.0
    %2369 = vmatpush1.msra.mxu0 0.0
    %2370 = vmatprep.subr.mxu0 0.0
    %2371 = vmatpush1.msra.mxu0 0.0
    %2372 = vmatprep.subr.mxu0 0.0
    %2373 = vmatpush1.msra.mxu0 0.0
    %2374 = vmatprep.subr.mxu0 0.0
    %2375 = vmatpush1.msra.mxu0 0.0
    %2376 = vmatprep.subr.mxu0 0.0
    %2377 = vmatpush1.msra.mxu0 0.0
    %2378 = vmatprep.subr.mxu0 0.0
    %2379 = vmatpush1.msra.mxu0 0.0
    %2380 = vmatprep.subr.mxu0 0.0
    %2381 = vmatpush1.msra.mxu0 0.0
    %2382 = vmatprep.subr.mxu0 0.0
    %2383 = vmatpush1.msra.mxu0 0.0
    %2384 = vmatprep.subr.mxu0 0.0
    %2385 = vmatpush1.msra.mxu0 0.0
    %2386 = vmatprep.subr.mxu0 0.0
    %2387 = vmatpush1.msra.mxu0 0.0
    %2388 = vmatprep.subr.mxu0 0.0
    %2389 = vmatpush1.msra.mxu0 0.0
    %2390 = vmatprep.subr.mxu0 0.0
    %2391 = vmatpush1.msra.mxu0 0.0
    %2392 = vmatprep.subr.mxu0 0.0
    %2393 = vmatpush1.msra.mxu0 0.0
    %2394 = vmatprep.mubr.f32.mxu0 0.0
    %2395 = vmatmul.mubr.f32.gmra.mrb[0].mxu0 %v2113
    %v2396 = vpop.f32.mrb[0].mxu0
    %v2397 = vadd.f32 0.0, %v2396
    %v2398 = vpop.f32.mrb[0].mxu0
    %2399 = vdwg.mxu0
    %s2400 = scalar_lea.vmem [#allocation2], 96
    %v2401 = vld [vmem:[%s2400] sm:$0xff]
    %v2402 = vld [vmem:[%s2400 + $0x8] sm:$0xff]
    %v2403 = vld [vmem:[%s2400 + $0x10] sm:$0xff]
    %v2404 = vadd.f32 %v2401, %v2185
    %v2405 = vxor.u32 %v2404, 2147483648
    %v2406 = vmul.f32 %v2405, 1.442695
    %v2407 = vpow.pop %v2406
    %v2408 = vadd.f32 %v2407, 1.0
    %v2409 = vrcp.pop %v2408
    %v2410 = vmul.f32 1.0, %v2409
    %v2411 = vadd.f32 %v2402, %v2187
    %v2412 = vxor.u32 %v2411, 2147483648
    %v2413 = vmul.f32 %v2412, 1.442695
    %v2414 = vpow.pop %v2413
    %v2415 = vadd.f32 %v2414, 1.0
    %v2416 = vrcp.pop %v2415
    %v2417 = vmul.f32 1.0, %v2416
    %v2418 = vadd.f32 %v2256, %v1059
    %v2419 = vmul.f32 %v2410, %v2418
    %v2420 = vadd.f32 %v2403, %v2419
    %v2421 = vtanh.pop %v2420
    %v2422 = vsub.f32 1.0, %v2417
    %v2423 = vmul.f32 %v2422, %v2421
    %v2424 = vmul.f32 %v2417, %v2087
    %v2425 = vadd.f32 %v2423, %v2424
    %s2426 = scalar_lea.vmem [#allocation3], 72
    %v2427 = vld [vmem:[%s2426] sm:$0xff]
    %v2428 = vld [vmem:[%s2426 + $0x8] sm:$0xff]
    %v2429 = vld [vmem:[%s2426 + $0x10] sm:$0xff]
    %v2430 = vadd.f32 %v2427, %v2326
    %v2431 = vxor.u32 %v2430, 2147483648
    %v2432 = vmul.f32 %v2431, 1.442695
    %v2433 = vpow.pop %v2432
    %v2434 = vadd.f32 %v2433, 1.0
    %v2435 = vrcp.pop %v2434
    %v2436 = vmul.f32 1.0, %v2435
    %v2437 = vadd.f32 %v2428, %v2328
    %v2438 = vxor.u32 %v2437, 2147483648
    %v2439 = vmul.f32 %v2438, 1.442695
    %v2440 = vpow.pop %v2439
    %v2441 = vadd.f32 %v2440, 1.0
    %v2442 = vrcp.pop %v2441
    %v2443 = vmul.f32 1.0, %v2442
    %v2444 = vadd.f32 %v2397, %v1091
    %v2445 = vmul.f32 %v2436, %v2444
    %v2446 = vadd.f32 %v2429, %v2445
    %v2447 = vtanh.pop %v2446
    %v2448 = vsub.f32 1.0, %v2443
    %v2449 = vmul.f32 %v2448, %v2447
    %v2450 = vmul.f32 %v2443, %v2113
    %v2451 = vadd.f32 %v2449, %v2450
    %s2452 = scalar_lea.vmem [#allocation4], 32
    %2453 = vst [vmem:[%s2452] sm:$0xff] %v2425
    %s2454 = scalar_lea.vmem [#allocation5], 24
    %2455 = vst [vmem:[%s2454] sm:$0xff] %v2451
    %2456 = vmatprep.subr.mxu0 %v659
    %2457 = vmatpush1.msra.mxu0 %v658
    %2458 = vmatprep.subr.mxu0 %v662
    %2459 = vmatpush1.msra.mxu0 %v661
    %2460 = vmatprep.subr.mxu0 %v665
    %2461 = vmatpush1.msra.mxu0 %v664
    %2462 = vmatprep.subr.mxu0 %v668
    %2463 = vmatpush1.msra.mxu0 %v667
    %2464 = vmatprep.subr.mxu0 %v671
    %2465 = vmatpush1.msra.mxu0 %v670
    %2466 = vmatprep.subr.mxu0 %v674
    %2467 = vmatpush1.msra.mxu0 %v673
    %2468 = vmatprep.subr.mxu0 %v677
    %2469 = vmatpush1.msra.mxu0 %v676
    %2470 = vmatprep.subr.mxu0 %v680
    %2471 = vmatpush1.msra.mxu0 %v679
    %2472 = vmatprep.subr.mxu0 %v683
    %2473 = vmatpush1.msra.mxu0 %v682
    %2474 = vmatprep.subr.mxu0 %v686
    %2475 = vmatpush1.msra.mxu0 %v685
    %2476 = vmatprep.subr.mxu0 %v689
    %2477 = vmatpush1.msra.mxu0 %v688
    %2478 = vmatprep.subr.mxu0 %v692
    %2479 = vmatpush1.msra.mxu0 %v691
    %2480 = vmatprep.subr.mxu0 %v695
    %2481 = vmatpush1.msra.mxu0 %v694
    %2482 = vmatprep.subr.mxu0 %v698
    %2483 = vmatpush1.msra.mxu0 %v697
    %2484 = vmatprep.subr.mxu0 %v701
    %2485 = vmatpush1.msra.mxu0 %v700
    %2486 = vmatprep.subr.mxu0 %v704
    %2487 = vmatpush1.msra.mxu0 %v703
    %2488 = vmatprep.subr.mxu0 0.0
    %2489 = vmatpush1.msra.mxu0 0.0
    %2490 = vmatprep.subr.mxu0 0.0
    %2491 = vmatpush1.msra.mxu0 0.0
    %2492 = vmatprep.subr.mxu0 0.0
    %2493 = vmatpush1.msra.mxu0 0.0
    %2494 = vmatprep.subr.mxu0 0.0
    %2495 = vmatpush1.msra.mxu0 0.0
    %2496 = vmatprep.subr.mxu0 0.0
    %2497 = vmatpush1.msra.mxu0 0.0
    %2498 = vmatprep.subr.mxu0 0.0
    %2499 = vmatpush1.msra.mxu0 0.0
    %2500 = vmatprep.subr.mxu0 0.0
    %2501 = vmatpush1.msra.mxu0 0.0
    %2502 = vmatprep.subr.mxu0 0.0
    %2503 = vmatpush1.msra.mxu0 0.0
    %2504 = vmatprep.subr.mxu0 0.0
    %2505 = vmatpush1.msra.mxu0 0.0
    %2506 = vmatprep.subr.mxu0 0.0
    %2507 = vmatpush1.msra.mxu0 0.0
    %2508 = vmatprep.subr.mxu0 0.0
    %2509 = vmatpush1.msra.mxu0 0.0
    %2510 = vmatprep.subr.mxu0 0.0
    %2511 = vmatpush1.msra.mxu0 0.0
    %2512 = vmatprep.subr.mxu0 0.0
    %2513 = vmatpush1.msra.mxu0 0.0
    %2514 = vmatprep.subr.mxu0 0.0
    %2515 = vmatpush1.msra.mxu0 0.0
    %2516 = vmatprep.subr.mxu0 0.0
    %2517 = vmatpush1.msra.mxu0 0.0
    %2518 = vmatprep.subr.mxu0 0.0
    %2519 = vmatpush1.msra.mxu0 0.0
    %2520 = vmatprep.mubr.f32.mxu0 0.0
    %2521 = vmatmul.mubr.f32.gmra.mrb[0].mxu0 %v2425
    %v2522 = vpop.f32.mrb[0].mxu0
    %v2523 = vadd.f32 0.0, %v2522
    %v2524 = vpop.f32.mrb[0].mxu0
    %v2525 = vadd.f32 0.0, %v2524
    %2526 = vdwg.mxu0
    %2527 = vmatprep.subr.mxu0 0.0
    %2528 = vmatpush1.msra.mxu0 %v660
    %2529 = vmatprep.subr.mxu0 0.0
    %2530 = vmatpush1.msra.mxu0 %v663
    %2531 = vmatprep.subr.mxu0 0.0
    %2532 = vmatpush1.msra.mxu0 %v666
    %2533 = vmatprep.subr.mxu0 0.0
    %2534 = vmatpush1.msra.mxu0 %v669
    %2535 = vmatprep.subr.mxu0 0.0
    %2536 = vmatpush1.msra.mxu0 %v672
    %2537 = vmatprep.subr.mxu0 0.0
    %2538 = vmatpush1.msra.mxu0 %v675
    %2539 = vmatprep.subr.mxu0 0.0
    %2540 = vmatpush1.msra.mxu0 %v678
    %2541 = vmatprep.subr.mxu0 0.0
    %2542 = vmatpush1.msra.mxu0 %v681
    %2543 = vmatprep.subr.mxu0 0.0
    %2544 = vmatpush1.msra.mxu0 %v684
    %2545 = vmatprep.subr.mxu0 0.0
    %2546 = vmatpush1.msra.mxu0 %v687
    %2547 = vmatprep.subr.mxu0 0.0
    %2548 = vmatpush1.msra.mxu0 %v690
    %2549 = vmatprep.subr.mxu0 0.0
    %2550 = vmatpush1.msra.mxu0 %v693
    %2551 = vmatprep.subr.mxu0 0.0
    %2552 = vmatpush1.msra.mxu0 %v696
    %2553 = vmatprep.subr.mxu0 0.0
    %2554 = vmatpush1.msra.mxu0 %v699
    %2555 = vmatprep.subr.mxu0 0.0
    %2556 = vmatpush1.msra.mxu0 %v702
    %2557 = vmatprep.subr.mxu0 0.0
    %2558 = vmatpush1.msra.mxu0 %v705
    %2559 = vmatprep.subr.mxu0 0.0
    %2560 = vmatpush1.msra.mxu0 0.0
    %2561 = vmatprep.subr.mxu0 0.0
    %2562 = vmatpush1.msra.mxu0 0.0
    %2563 = vmatprep.subr.mxu0 0.0
    %2564 = vmatpush1.msra.mxu0 0.0
    %2565 = vmatprep.subr.mxu0 0.0
    %2566 = vmatpush1.msra.mxu0 0.0
    %2567 = vmatprep.subr.mxu0 0.0
    %2568 = vmatpush1.msra.mxu0 0.0
    %2569 = vmatprep.subr.mxu0 0.0
    %2570 = vmatpush1.msra.mxu0 0.0
    %2571 = vmatprep.subr.mxu0 0.0
    %2572 = vmatpush1.msra.mxu0 0.0
    %2573 = vmatprep.subr.mxu0 0.0
    %2574 = vmatpush1.msra.mxu0 0.0
    %2575 = vmatprep.subr.mxu0 0.0
    %2576 = vmatpush1.msra.mxu0 0.0
    %2577 = vmatprep.subr.mxu0 0.0
    %2578 = vmatpush1.msra.mxu0 0.0
    %2579 = vmatprep.subr.mxu0 0.0
    %2580 = vmatpush1.msra.mxu0 0.0
    %2581 = vmatprep.subr.mxu0 0.0
    %2582 = vmatpush1.msra.mxu0 0.0
    %2583 = vmatprep.subr.mxu0 0.0
    %2584 = vmatpush1.msra.mxu0 0.0
    %2585 = vmatprep.subr.mxu0 0.0
    %2586 = vmatpush1.msra.mxu0 0.0
    %2587 = vmatprep.subr.mxu0 0.0
    %2588 = vmatpush1.msra.mxu0 0.0
    %2589 = vmatprep.subr.mxu0 0.0
    %2590 = vmatpush1.msra.mxu0 0.0
    %2591 = vmatprep.mubr.f32.mxu0 0.0
    %2592 = vmatmul.mubr.f32.gmra.mrb[0].mxu0 %v2425
    %v2593 = vpop.f32.mrb[0].mxu0
    %v2594 = vadd.f32 0.0, %v2593
    %v2595 = vpop.f32.mrb[0].mxu0
    %2596 = vdwg.mxu0
    %2597 = vmatprep.subr.mxu0 %v707
    %2598 = vmatpush1.msra.mxu0 %v706
    %2599 = vmatprep.subr.mxu0 %v710
    %2600 = vmatpush1.msra.mxu0 %v709
    %2601 = vmatprep.subr.mxu0 %v713
    %2602 = vmatpush1.msra.mxu0 %v712
    %2603 = vmatprep.subr.mxu0 %v716
    %2604 = vmatpush1.msra.mxu0 %v715
    %2605 = vmatprep.subr.mxu0 %v719
    %2606 = vmatpush1.msra.mxu0 %v718
    %2607 = vmatprep.subr.mxu0 %v722
    %2608 = vmatpush1.msra.mxu0 %v721
    %2609 = vmatprep.subr.mxu0 %v725
    %2610 = vmatpush1.msra.mxu0 %v724
    %2611 = vmatprep.subr.mxu0 %v728
    %2612 = vmatpush1.msra.mxu0 %v727
    %2613 = vmatprep.subr.mxu0 %v731
    %2614 = vmatpush1.msra.mxu0 %v730
    %2615 = vmatprep.subr.mxu0 %v734
    %2616 = vmatpush1.msra.mxu0 %v733
    %2617 = vmatprep.subr.mxu0 %v737
    %2618 = vmatpush1.msra.mxu0 %v736
    %2619 = vmatprep.subr.mxu0 %v740
    %2620 = vmatpush1.msra.mxu0 %v739
    %2621 = vmatprep.subr.mxu0 %v743
    %2622 = vmatpush1.msra.mxu0 %v742
    %2623 = vmatprep.subr.mxu0 %v746
    %2624 = vmatpush1.msra.mxu0 %v745
    %2625 = vmatprep.subr.mxu0 %v749
    %2626 = vmatpush1.msra.mxu0 %v748
    %2627 = vmatprep.subr.mxu0 %v752
    %2628 = vmatpush1.msra.mxu0 %v751
    %2629 = vmatprep.subr.mxu0 0.0
    %2630 = vmatpush1.msra.mxu0 0.0
    %2631 = vmatprep.subr.mxu0 0.0
    %2632 = vmatpush1.msra.mxu0 0.0
    %2633 = vmatprep.subr.mxu0 0.0
    %2634 = vmatpush1.msra.mxu0 0.0
    %2635 = vmatprep.subr.mxu0 0.0
    %2636 = vmatpush1.msra.mxu0 0.0
    %2637 = vmatprep.subr.mxu0 0.0
    %2638 = vmatpush1.msra.mxu0 0.0
    %2639 = vmatprep.subr.mxu0 0.0
    %2640 = vmatpush1.msra.mxu0 0.0
    %2641 = vmatprep.subr.mxu0 0.0
    %2642 = vmatpush1.msra.mxu0 0.0
    %2643 = vmatprep.subr.mxu0 0.0
    %2644 = vmatpush1.msra.mxu0 0.0
    %2645 = vmatprep.subr.mxu0 0.0
    %2646 = vmatpush1.msra.mxu0 0.0
    %2647 = vmatprep.subr.mxu0 0.0
    %2648 = vmatpush1.msra.mxu0 0.0
    %2649 = vmatprep.subr.mxu0 0.0
    %2650 = vmatpush1.msra.mxu0 0.0
    %2651 = vmatprep.subr.mxu0 0.0
    %2652 = vmatpush1.msra.mxu0 0.0
    %2653 = vmatprep.subr.mxu0 0.0
    %2654 = vmatpush1.msra.mxu0 0.0
    %2655 = vmatprep.subr.mxu0 0.0
    %2656 = vmatpush1.msra.mxu0 0.0
    %2657 = vmatprep.subr.mxu0 0.0
    %2658 = vmatpush1.msra.mxu0 0.0
    %2659 = vmatprep.subr.mxu0 0.0
    %2660 = vmatpush1.msra.mxu0 0.0
    %2661 = vmatprep.mubr.f32.mxu0 0.0
    %2662 = vmatmul.mubr.f32.gmra.mrb[0].mxu0 %v2451
    %v2663 = vpop.f32.mrb[0].mxu0
    %v2664 = vadd.f32 0.0, %v2663
    %v2665 = vpop.f32.mrb[0].mxu0
    %v2666 = vadd.f32 0.0, %v2665
    %2667 = vdwg.mxu0
    %2668 = vmatprep.subr.mxu0 0.0
    %2669 = vmatpush1.msra.mxu0 %v708
    %2670 = vmatprep.subr.mxu0 0.0
    %2671 = vmatpush1.msra.mxu0 %v711
    %2672 = vmatprep.subr.mxu0 0.0
    %2673 = vmatpush1.msra.mxu0 %v714
    %2674 = vmatprep.subr.mxu0 0.0
    %2675 = vmatpush1.msra.mxu0 %v717
    %2676 = vmatprep.subr.mxu0 0.0
    %2677 = vmatpush1.msra.mxu0 %v720
    %2678 = vmatprep.subr.mxu0 0.0
    %2679 = vmatpush1.msra.mxu0 %v723
    %2680 = vmatprep.subr.mxu0 0.0
    %2681 = vmatpush1.msra.mxu0 %v726
    %2682 = vmatprep.subr.mxu0 0.0
    %2683 = vmatpush1.msra.mxu0 %v729
    %2684 = vmatprep.subr.mxu0 0.0
    %2685 = vmatpush1.msra.mxu0 %v732
    %2686 = vmatprep.subr.mxu0 0.0
    %2687 = vmatpush1.msra.mxu0 %v735
    %2688 = vmatprep.subr.mxu0 0.0
    %2689 = vmatpush1.msra.mxu0 %v738
    %2690 = vmatprep.subr.mxu0 0.0
    %2691 = vmatpush1.msra.mxu0 %v741
    %2692 = vmatprep.subr.mxu0 0.0
    %2693 = vmatpush1.msra.mxu0 %v744
    %2694 = vmatprep.subr.mxu0 0.0
    %2695 = vmatpush1.msra.mxu0 %v747
    %2696 = vmatprep.subr.mxu0 0.0
    %2697 = vmatpush1.msra.mxu0 %v750
    %2698 = vmatprep.subr.mxu0 0.0
    %2699 = vmatpush1.msra.mxu0 %v753
    %2700 = vmatprep.subr.mxu0 0.0
    %2701 = vmatpush1.msra.mxu0 0.0
    %2702 = vmatprep.subr.mxu0 0.0
    %2703 = vmatpush1.msra.mxu0 0.0
    %2704 = vmatprep.subr.mxu0 0.0
    %2705 = vmatpush1.msra.mxu0 0.0
    %2706 = vmatprep.subr.mxu0 0.0
    %2707 = vmatpush1.msra.mxu0 0.0
    %2708 = vmatprep.subr.mxu0 0.0
    %2709 = vmatpush1.msra.mxu0 0.0
    %2710 = vmatprep.subr.mxu0 0.0
    %2711 = vmatpush1.msra.mxu0 0.0
    %2712 = vmatprep.subr.mxu0 0.0
    %2713 = vmatpush1.msra.mxu0 0.0
    %2714 = vmatprep.subr.mxu0 0.0
    %2715 = vmatpush1.msra.mxu0 0.0
    %2716 = vmatprep.subr.mxu0 0.0
    %2717 = vmatpush1.msra.mxu0 0.0
    %2718 = vmatprep.subr.mxu0 0.0
    %2719 = vmatpush1.msra.mxu0 0.0
    %2720 = vmatprep.subr.mxu0 0.0
    %2721 = vmatpush1.msra.mxu0 0.0
    %2722 = vmatprep.subr.mxu0 0.0
    %2723 = vmatpush1.msra.mxu0 0.0
    %2724 = vmatprep.subr.mxu0 0.0
    %2725 = vmatpush1.msra.mxu0 0.0
    %2726 = vmatprep.subr.mxu0 0.0
    %2727 = vmatpush1.msra.mxu0 0.0
    %2728 = vmatprep.subr.mxu0 0.0
    %2729 = vmatpush1.msra.mxu0 0.0
    %2730 = vmatprep.subr.mxu0 0.0
    %2731 = vmatpush1.msra.mxu0 0.0
    %2732 = vmatprep.mubr.f32.mxu0 0.0
    %2733 = vmatmul.mubr.f32.gmra.mrb[0].mxu0 %v2451
    %v2734 = vpop.f32.mrb[0].mxu0
    %v2735 = vadd.f32 0.0, %v2734
    %v2736 = vpop.f32.mrb[0].mxu0
    %2737 = vdwg.mxu0
    %s2738 = scalar_lea.vmem [#allocation2], 120
    %v2739 = vld [vmem:[%s2738] sm:$0xff]
    %v2740 = vld [vmem:[%s2738 + $0x8] sm:$0xff]
    %v2741 = vld [vmem:[%s2738 + $0x10] sm:$0xff]
    %v2742 = vadd.f32 %v2739, %v2523
    %v2743 = vxor.u32 %v2742, 2147483648
    %v2744 = vmul.f32 %v2743, 1.442695
    %v2745 = vpow.pop %v2744
    %v2746 = vadd.f32 %v2745, 1.0
    %v2747 = vrcp.pop %v2746
    %v2748 = vmul.f32 1.0, %v2747
    %v2749 = vadd.f32 %v2740, %v2525
    %v2750 = vxor.u32 %v2749, 2147483648
    %v2751 = vmul.f32 %v2750, 1.442695
    %v2752 = vpow.pop %v2751
    %v2753 = vadd.f32 %v2752, 1.0
    %v2754 = vrcp.pop %v2753
    %v2755 = vmul.f32 1.0, %v2754
    %v2756 = vadd.f32 %v2594, %v1059
    %v2757 = vmul.f32 %v2748, %v2756
    %v2758 = vadd.f32 %v2741, %v2757
    %v2759 = vtanh.pop %v2758
    %v2760 = vsub.f32 1.0, %v2755
    %v2761 = vmul.f32 %v2760, %v2759
    %v2762 = vmul.f32 %v2755, %v2425
    %v2763 = vadd.f32 %v2761, %v2762
    %s2764 = scalar_lea.vmem [#allocation3], 48
    %v2765 = vld [vmem:[%s2764] sm:$0xff]
    %v2766 = vld [vmem:[%s2764 + $0x8] sm:$0xff]
    %v2767 = vld [vmem:[%s2764 + $0x10] sm:$0xff]
    %v2768 = vadd.f32 %v2765, %v2664
    %v2769 = vxor.u32 %v2768, 2147483648
    %v2770 = vmul.f32 %v2769, 1.442695
    %v2771 = vpow.pop %v2770
    %v2772 = vadd.f32 %v2771, 1.0
    %v2773 = vrcp.pop %v2772
    %v2774 = vmul.f32 1.0, %v2773
    %v2775 = vadd.f32 %v2766, %v2666
    %v2776 = vxor.u32 %v2775, 2147483648
    %v2777 = vmul.f32 %v2776, 1.442695
    %v2778 = vpow.pop %v2777
    %v2779 = vadd.f32 %v2778, 1.0
    %v2780 = vrcp.pop %v2779
    %v2781 = vmul.f32 1.0, %v2780
    %v2782 = vadd.f32 %v2735, %v1091
    %v2783 = vmul.f32 %v2774, %v2782
    %v2784 = vadd.f32 %v2767, %v2783
    %v2785 = vtanh.pop %v2784
    %v2786 = vsub.f32 1.0, %v2781
    %v2787 = vmul.f32 %v2786, %v2785
    %v2788 = vmul.f32 %v2781, %v2451
    %v2789 = vadd.f32 %v2787, %v2788
    %s2790 = scalar_lea.vmem [#allocation4], 40
    %2791 = vst [vmem:[%s2790] sm:$0xff] %v2763
    %s2792 = scalar_lea.vmem [#allocation5], 16
    %2793 = vst [vmem:[%s2792] sm:$0xff] %v2789
    %2794 = vmatprep.subr.mxu0 %v659
    %2795 = vmatpush1.msra.mxu0 %v658
    %2796 = vmatprep.subr.mxu0 %v662
    %2797 = vmatpush1.msra.mxu0 %v661
    %2798 = vmatprep.subr.mxu0 %v665
    %2799 = vmatpush1.msra.mxu0 %v664
    %2800 = vmatprep.subr.mxu0 %v668
    %2801 = vmatpush1.msra.mxu0 %v667
    %2802 = vmatprep.subr.mxu0 %v671
    %2803 = vmatpush1.msra.mxu0 %v670
    %2804 = vmatprep.subr.mxu0 %v674
    %2805 = vmatpush1.msra.mxu0 %v673
    %2806 = vmatprep.subr.mxu0 %v677
    %2807 = vmatpush1.msra.mxu0 %v676
    %2808 = vmatprep.subr.mxu0 %v680
    %2809 = vmatpush1.msra.mxu0 %v679
    %2810 = vmatprep.subr.mxu0 %v683
    %2811 = vmatpush1.msra.mxu0 %v682
    %2812 = vmatprep.subr.mxu0 %v686
    %2813 = vmatpush1.msra.mxu0 %v685
    %2814 = vmatprep.subr.mxu0 %v689
    %2815 = vmatpush1.msra.mxu0 %v688
    %2816 = vmatprep.subr.mxu0 %v692
    %2817 = vmatpush1.msra.mxu0 %v691
    %2818 = vmatprep.subr.mxu0 %v695
    %2819 = vmatpush1.msra.mxu0 %v694
    %2820 = vmatprep.subr.mxu0 %v698
    %2821 = vmatpush1.msra.mxu0 %v697
    %2822 = vmatprep.subr.mxu0 %v701
    %2823 = vmatpush1.msra.mxu0 %v700
    %2824 = vmatprep.subr.mxu0 %v704
    %2825 = vmatpush1.msra.mxu0 %v703
    %2826 = vmatprep.subr.mxu0 0.0
    %2827 = vmatpush1.msra.mxu0 0.0
    %2828 = vmatprep.subr.mxu0 0.0
    %2829 = vmatpush1.msra.mxu0 0.0
    %2830 = vmatprep.subr.mxu0 0.0
    %2831 = vmatpush1.msra.mxu0 0.0
    %2832 = vmatprep.subr.mxu0 0.0
    %2833 = vmatpush1.msra.mxu0 0.0
    %2834 = vmatprep.subr.mxu0 0.0
    %2835 = vmatpush1.msra.mxu0 0.0
    %2836 = vmatprep.subr.mxu0 0.0
    %2837 = vmatpush1.msra.mxu0 0.0
    %2838 = vmatprep.subr.mxu0 0.0
    %2839 = vmatpush1.msra.mxu0 0.0
    %2840 = vmatprep.subr.mxu0 0.0
    %2841 = vmatpush1.msra.mxu0 0.0
    %2842 = vmatprep.subr.mxu0 0.0
    %2843 = vmatpush1.msra.mxu0 0.0
    %2844 = vmatprep.subr.mxu0 0.0
    %2845 = vmatpush1.msra.mxu0 0.0
    %2846 = vmatprep.subr.mxu0 0.0
    %2847 = vmatpush1.msra.mxu0 0.0
    %2848 = vmatprep.subr.mxu0 0.0
    %2849 = vmatpush1.msra.mxu0 0.0
    %2850 = vmatprep.subr.mxu0 0.0
    %2851 = vmatpush1.msra.mxu0 0.0
    %2852 = vmatprep.subr.mxu0 0.0
    %2853 = vmatpush1.msra.mxu0 0.0
    %2854 = vmatprep.subr.mxu0 0.0
    %2855 = vmatpush1.msra.mxu0 0.0
    %2856 = vmatprep.subr.mxu0 0.0
    %2857 = vmatpush1.msra.mxu0 0.0
    %2858 = vmatprep.mubr.f32.mxu0 0.0
    %2859 = vmatmul.mubr.f32.gmra.mrb[0].mxu0 %v2763
    %v2860 = vpop.f32.mrb[0].mxu0
    %v2861 = vadd.f32 0.0, %v2860
    %v2862 = vpop.f32.mrb[0].mxu0
    %v2863 = vadd.f32 0.0, %v2862
    %2864 = vdwg.mxu0
    %2865 = vmatprep.subr.mxu0 0.0
    %2866 = vmatpush1.msra.mxu0 %v660
    %2867 = vmatprep.subr.mxu0 0.0
    %2868 = vmatpush1.msra.mxu0 %v663
    %2869 = vmatprep.subr.mxu0 0.0
    %2870 = vmatpush1.msra.mxu0 %v666
    %2871 = vmatprep.subr.mxu0 0.0
    %2872 = vmatpush1.msra.mxu0 %v669
    %2873 = vmatprep.subr.mxu0 0.0
    %2874 = vmatpush1.msra.mxu0 %v672
    %2875 = vmatprep.subr.mxu0 0.0
    %2876 = vmatpush1.msra.mxu0 %v675
    %2877 = vmatprep.subr.mxu0 0.0
    %2878 = vmatpush1.msra.mxu0 %v678
    %2879 = vmatprep.subr.mxu0 0.0
    %2880 = vmatpush1.msra.mxu0 %v681
    %2881 = vmatprep.subr.mxu0 0.0
    %2882 = vmatpush1.msra.mxu0 %v684
    %2883 = vmatprep.subr.mxu0 0.0
    %2884 = vmatpush1.msra.mxu0 %v687
    %2885 = vmatprep.subr.mxu0 0.0
    %2886 = vmatpush1.msra.mxu0 %v690
    %2887 = vmatprep.subr.mxu0 0.0
    %2888 = vmatpush1.msra.mxu0 %v693
    %2889 = vmatprep.subr.mxu0 0.0
    %2890 = vmatpush1.msra.mxu0 %v696
    %2891 = vmatprep.subr.mxu0 0.0
    %2892 = vmatpush1.msra.mxu0 %v699
    %2893 = vmatprep.subr.mxu0 0.0
    %2894 = vmatpush1.msra.mxu0 %v702
    %2895 = vmatprep.subr.mxu0 0.0
    %2896 = vmatpush1.msra.mxu0 %v705
    %2897 = vmatprep.subr.mxu0 0.0
    %2898 = vmatpush1.msra.mxu0 0.0
    %2899 = vmatprep.subr.mxu0 0.0
    %2900 = vmatpush1.msra.mxu0 0.0
    %2901 = vmatprep.subr.mxu0 0.0
    %2902 = vmatpush1.msra.mxu0 0.0
    %2903 = vmatprep.subr.mxu0 0.0
    %2904 = vmatpush1.msra.mxu0 0.0
    %2905 = vmatprep.subr.mxu0 0.0
    %2906 = vmatpush1.msra.mxu0 0.0
    %2907 = vmatprep.subr.mxu0 0.0
    %2908 = vmatpush1.msra.mxu0 0.0
    %2909 = vmatprep.subr.mxu0 0.0
    %2910 = vmatpush1.msra.mxu0 0.0
    %2911 = vmatprep.subr.mxu0 0.0
    %2912 = vmatpush1.msra.mxu0 0.0
    %2913 = vmatprep.subr.mxu0 0.0
    %2914 = vmatpush1.msra.mxu0 0.0
    %2915 = vmatprep.subr.mxu0 0.0
    %2916 = vmatpush1.msra.mxu0 0.0
    %2917 = vmatprep.subr.mxu0 0.0
    %2918 = vmatpush1.msra.mxu0 0.0
    %2919 = vmatprep.subr.mxu0 0.0
    %2920 = vmatpush1.msra.mxu0 0.0
    %2921 = vmatprep.subr.mxu0 0.0
    %2922 = vmatpush1.msra.mxu0 0.0
    %2923 = vmatprep.subr.mxu0 0.0
    %2924 = vmatpush1.msra.mxu0 0.0
    %2925 = vmatprep.subr.mxu0 0.0
    %2926 = vmatpush1.msra.mxu0 0.0
    %2927 = vmatprep.subr.mxu0 0.0
    %2928 = vmatpush1.msra.mxu0 0.0
    %2929 = vmatprep.mubr.f32.mxu0 0.0
    %2930 = vmatmul.mubr.f32.gmra.mrb[0].mxu0 %v2763
    %v2931 = vpop.f32.mrb[0].mxu0
    %v2932 = vadd.f32 0.0, %v2931
    %v2933 = vpop.f32.mrb[0].mxu0
    %2934 = vdwg.mxu0
    %2935 = vmatprep.subr.mxu0 %v707
    %2936 = vmatpush1.msra.mxu0 %v706
    %2937 = vmatprep.subr.mxu0 %v710
    %2938 = vmatpush1.msra.mxu0 %v709
    %2939 = vmatprep.subr.mxu0 %v713
    %2940 = vmatpush1.msra.mxu0 %v712
    %2941 = vmatprep.subr.mxu0 %v716
    %2942 = vmatpush1.msra.mxu0 %v715
    %2943 = vmatprep.subr.mxu0 %v719
    %2944 = vmatpush1.msra.mxu0 %v718
    %2945 = vmatprep.subr.mxu0 %v722
    %2946 = vmatpush1.msra.mxu0 %v721
    %2947 = vmatprep.subr.mxu0 %v725
    %2948 = vmatpush1.msra.mxu0 %v724
    %2949 = vmatprep.subr.mxu0 %v728
    %2950 = vmatpush1.msra.mxu0 %v727
    %2951 = vmatprep.subr.mxu0 %v731
    %2952 = vmatpush1.msra.mxu0 %v730
    %2953 = vmatprep.subr.mxu0 %v734
    %2954 = vmatpush1.msra.mxu0 %v733
    %2955 = vmatprep.subr.mxu0 %v737
    %2956 = vmatpush1.msra.mxu0 %v736
    %2957 = vmatprep.subr.mxu0 %v740
    %2958 = vmatpush1.msra.mxu0 %v739
    %2959 = vmatprep.subr.mxu0 %v743
    %2960 = vmatpush1.msra.mxu0 %v742
    %2961 = vmatprep.subr.mxu0 %v746
    %2962 = vmatpush1.msra.mxu0 %v745
    %2963 = vmatprep.subr.mxu0 %v749
    %2964 = vmatpush1.msra.mxu0 %v748
    %2965 = vmatprep.subr.mxu0 %v752
    %2966 = vmatpush1.msra.mxu0 %v751
    %2967 = vmatprep.subr.mxu0 0.0
    %2968 = vmatpush1.msra.mxu0 0.0
    %2969 = vmatprep.subr.mxu0 0.0
    %2970 = vmatpush1.msra.mxu0 0.0
    %2971 = vmatprep.subr.mxu0 0.0
    %2972 = vmatpush1.msra.mxu0 0.0
    %2973 = vmatprep.subr.mxu0 0.0
    %2974 = vmatpush1.msra.mxu0 0.0
    %2975 = vmatprep.subr.mxu0 0.0
    %2976 = vmatpush1.msra.mxu0 0.0
    %2977 = vmatprep.subr.mxu0 0.0
    %2978 = vmatpush1.msra.mxu0 0.0
    %2979 = vmatprep.subr.mxu0 0.0
    %2980 = vmatpush1.msra.mxu0 0.0
    %2981 = vmatprep.subr.mxu0 0.0
    %2982 = vmatpush1.msra.mxu0 0.0
    %2983 = vmatprep.subr.mxu0 0.0
    %2984 = vmatpush1.msra.mxu0 0.0
    %2985 = vmatprep.subr.mxu0 0.0
    %2986 = vmatpush1.msra.mxu0 0.0
    %2987 = vmatprep.subr.mxu0 0.0
    %2988 = vmatpush1.msra.mxu0 0.0
    %2989 = vmatprep.subr.mxu0 0.0
    %2990 = vmatpush1.msra.mxu0 0.0
    %2991 = vmatprep.subr.mxu0 0.0
    %2992 = vmatpush1.msra.mxu0 0.0
    %2993 = vmatprep.subr.mxu0 0.0
    %2994 = vmatpush1.msra.mxu0 0.0
    %2995 = vmatprep.subr.mxu0 0.0
    %2996 = vmatpush1.msra.mxu0 0.0
    %2997 = vmatprep.subr.mxu0 0.0
    %2998 = vmatpush1.msra.mxu0 0.0
    %2999 = vmatprep.mubr.f32.mxu0 0.0
    %3000 = vmatmul.mubr.f32.gmra.mrb[0].mxu0 %v2789
    %v3001 = vpop.f32.mrb[0].mxu0
    %v3002 = vadd.f32 0.0, %v3001
    %v3003 = vpop.f32.mrb[0].mxu0
    %v3004 = vadd.f32 0.0, %v3003
    %3005 = vdwg.mxu0
    %3006 = vmatprep.subr.mxu0 0.0
    %3007 = vmatpush1.msra.mxu0 %v708
    %3008 = vmatprep.subr.mxu0 0.0
    %3009 = vmatpush1.msra.mxu0 %v711
    %3010 = vmatprep.subr.mxu0 0.0
    %3011 = vmatpush1.msra.mxu0 %v714
    %3012 = vmatprep.subr.mxu0 0.0
    %3013 = vmatpush1.msra.mxu0 %v717
    %3014 = vmatprep.subr.mxu0 0.0
    %3015 = vmatpush1.msra.mxu0 %v720
    %3016 = vmatprep.subr.mxu0 0.0
    %3017 = vmatpush1.msra.mxu0 %v723
    %3018 = vmatprep.subr.mxu0 0.0
    %3019 = vmatpush1.msra.mxu0 %v726
    %3020 = vmatprep.subr.mxu0 0.0
    %3021 = vmatpush1.msra.mxu0 %v729
    %3022 = vmatprep.subr.mxu0 0.0
    %3023 = vmatpush1.msra.mxu0 %v732
    %3024 = vmatprep.subr.mxu0 0.0
    %3025 = vmatpush1.msra.mxu0 %v735
    %3026 = vmatprep.subr.mxu0 0.0
    %3027 = vmatpush1.msra.mxu0 %v738
    %3028 = vmatprep.subr.mxu0 0.0
    %3029 = vmatpush1.msra.mxu0 %v741
    %3030 = vmatprep.subr.mxu0 0.0
    %3031 = vmatpush1.msra.mxu0 %v744
    %3032 = vmatprep.subr.mxu0 0.0
    %3033 = vmatpush1.msra.mxu0 %v747
    %3034 = vmatprep.subr.mxu0 0.0
    %3035 = vmatpush1.msra.mxu0 %v750
    %3036 = vmatprep.subr.mxu0 0.0
    %3037 = vmatpush1.msra.mxu0 %v753
    %3038 = vmatprep.subr.mxu0 0.0
    %3039 = vmatpush1.msra.mxu0 0.0
    %3040 = vmatprep.subr.mxu0 0.0
    %3041 = vmatpush1.msra.mxu0 0.0
    %3042 = vmatprep.subr.mxu0 0.0
    %3043 = vmatpush1.msra.mxu0 0.0
    %3044 = vmatprep.subr.mxu0 0.0
    %3045 = vmatpush1.msra.mxu0 0.0
    %3046 = vmatprep.subr.mxu0 0.0
    %3047 = vmatpush1.msra.mxu0 0.0
    %3048 = vmatprep.subr.mxu0 0.0
    %3049 = vmatpush1.msra.mxu0 0.0
    %3050 = vmatprep.subr.mxu0 0.0
    %3051 = vmatpush1.msra.mxu0 0.0
    %3052 = vmatprep.subr.mxu0 0.0
    %3053 = vmatpush1.msra.mxu0 0.0
    %3054 = vmatprep.subr.mxu0 0.0
    %3055 = vmatpush1.msra.mxu0 0.0
    %3056 = vmatprep.subr.mxu0 0.0
    %3057 = vmatpush1.msra.mxu0 0.0
    %3058 = vmatprep.subr.mxu0 0.0
    %3059 = vmatpush1.msra.mxu0 0.0
    %3060 = vmatprep.subr.mxu0 0.0
    %3061 = vmatpush1.msra.mxu0 0.0
    %3062 = vmatprep.subr.mxu0 0.0
    %3063 = vmatpush1.msra.mxu0 0.0
    %3064 = vmatprep.subr.mxu0 0.0
    %3065 = vmatpush1.msra.mxu0 0.0
    %3066 = vmatprep.subr.mxu0 0.0
    %3067 = vmatpush1.msra.mxu0 0.0
    %3068 = vmatprep.subr.mxu0 0.0
    %3069 = vmatpush1.msra.mxu0 0.0
    %3070 = vmatprep.mubr.f32.mxu0 0.0
    %3071 = vmatmul.mubr.f32.gmra.mrb[0].mxu0 %v2789
    %v3072 = vpop.f32.mrb[0].mxu0
    %v3073 = vadd.f32 0.0, %v3072
    %v3074 = vpop.f32.mrb[0].mxu0
    %3075 = vdwg.mxu0
    %s3076 = scalar_lea.vmem [#allocation2], 144
    %v3077 = vld [vmem:[%s3076] sm:$0xff]
    %v3078 = vld [vmem:[%s3076 + $0x8] sm:$0xff]
    %v3079 = vld [vmem:[%s3076 + $0x10] sm:$0xff]
    %v3080 = vadd.f32 %v3077, %v2861
    %v3081 = vxor.u32 %v3080, 2147483648
    %v3082 = vmul.f32 %v3081, 1.442695
    %v3083 = vpow.pop %v3082
    %v3084 = vadd.f32 %v3083, 1.0
    %v3085 = vrcp.pop %v3084
    %v3086 = vmul.f32 1.0, %v3085
    %v3087 = vadd.f32 %v3078, %v2863
    %v3088 = vxor.u32 %v3087, 2147483648
    %v3089 = vmul.f32 %v3088, 1.442695
    %v3090 = vpow.pop %v3089
    %v3091 = vadd.f32 %v3090, 1.0
    %v3092 = vrcp.pop %v3091
    %v3093 = vmul.f32 1.0, %v3092
    %v3094 = vadd.f32 %v2932, %v1059
    %v3095 = vmul.f32 %v3086, %v3094
    %v3096 = vadd.f32 %v3079, %v3095
    %v3097 = vtanh.pop %v3096
    %v3098 = vsub.f32 1.0, %v3093
    %v3099 = vmul.f32 %v3098, %v3097
    %v3100 = vmul.f32 %v3093, %v2763
    %v3101 = vadd.f32 %v3099, %v3100
    %s3102 = scalar_lea.vmem [#allocation3], 24
    %v3103 = vld [vmem:[%s3102] sm:$0xff]
    %v3104 = vld [vmem:[%s3102 + $0x8] sm:$0xff]
    %v3105 = vld [vmem:[%s3102 + $0x10] sm:$0xff]
    %v3106 = vadd.f32 %v3103, %v3002
    %v3107 = vxor.u32 %v3106, 2147483648
    %v3108 = vmul.f32 %v3107, 1.442695
    %v3109 = vpow.pop %v3108
    %v3110 = vadd.f32 %v3109, 1.0
    %v3111 = vrcp.pop %v3110
    %v3112 = vmul.f32 1.0, %v3111
    %v3113 = vadd.f32 %v3104, %v3004
    %v3114 = vxor.u32 %v3113, 2147483648
    %v3115 = vmul.f32 %v3114, 1.442695
    %v3116 = vpow.pop %v3115
    %v3117 = vadd.f32 %v3116, 1.0
    %v3118 = vrcp.pop %v3117
    %v3119 = vmul.f32 1.0, %v3118
    %v3120 = vadd.f32 %v3073, %v1091
    %v3121 = vmul.f32 %v3112, %v3120
    %v3122 = vadd.f32 %v3105, %v3121
    %v3123 = vtanh.pop %v3122
    %v3124 = vsub.f32 1.0, %v3119
    %v3125 = vmul.f32 %v3124, %v3123
    %v3126 = vmul.f32 %v3119, %v2789
    %v3127 = vadd.f32 %v3125, %v3126
    %s3128 = scalar_lea.vmem [#allocation4], 48
    %3129 = vst [vmem:[%s3128] sm:$0xff] %v3101
    %s3130 = scalar_lea.vmem [#allocation5], 8
    %3131 = vst [vmem:[%s3130] sm:$0xff] %v3127
    %3132 = vmatprep.subr.mxu0 %v659
    %3133 = vmatpush1.msra.mxu0 %v658
    %3134 = vmatprep.subr.mxu0 %v662
    %3135 = vmatpush1.msra.mxu0 %v661
    %3136 = vmatprep.subr.mxu0 %v665
    %3137 = vmatpush1.msra.mxu0 %v664
    %3138 = vmatprep.subr.mxu0 %v668
    %3139 = vmatpush1.msra.mxu0 %v667
    %3140 = vmatprep.subr.mxu0 %v671
    %3141 = vmatpush1.msra.mxu0 %v670
    %3142 = vmatprep.subr.mxu0 %v674
    %3143 = vmatpush1.msra.mxu0 %v673
    %3144 = vmatprep.subr.mxu0 %v677
    %3145 = vmatpush1.msra.mxu0 %v676
    %3146 = vmatprep.subr.mxu0 %v680
    %3147 = vmatpush1.msra.mxu0 %v679
    %3148 = vmatprep.subr.mxu0 %v683
    %3149 = vmatpush1.msra.mxu0 %v682
    %3150 = vmatprep.subr.mxu0 %v686
    %3151 = vmatpush1.msra.mxu0 %v685
    %3152 = vmatprep.subr.mxu0 %v689
    %3153 = vmatpush1.msra.mxu0 %v688
    %3154 = vmatprep.subr.mxu0 %v692
    %3155 = vmatpush1.msra.mxu0 %v691
    %3156 = vmatprep.subr.mxu0 %v695
    %3157 = vmatpush1.msra.mxu0 %v694
    %3158 = vmatprep.subr.mxu0 %v698
    %3159 = vmatpush1.msra.mxu0 %v697
    %3160 = vmatprep.subr.mxu0 %v701
    %3161 = vmatpush1.msra.mxu0 %v700
    %3162 = vmatprep.subr.mxu0 %v704
    %3163 = vmatpush1.msra.mxu0 %v703
    %3164 = vmatprep.subr.mxu0 0.0
    %3165 = vmatpush1.msra.mxu0 0.0
    %3166 = vmatprep.subr.mxu0 0.0
    %3167 = vmatpush1.msra.mxu0 0.0
    %3168 = vmatprep.subr.mxu0 0.0
    %3169 = vmatpush1.msra.mxu0 0.0
    %3170 = vmatprep.subr.mxu0 0.0
    %3171 = vmatpush1.msra.mxu0 0.0
    %3172 = vmatprep.subr.mxu0 0.0
    %3173 = vmatpush1.msra.mxu0 0.0
    %3174 = vmatprep.subr.mxu0 0.0
    %3175 = vmatpush1.msra.mxu0 0.0
    %3176 = vmatprep.subr.mxu0 0.0
    %3177 = vmatpush1.msra.mxu0 0.0
    %3178 = vmatprep.subr.mxu0 0.0
    %3179 = vmatpush1.msra.mxu0 0.0
    %3180 = vmatprep.subr.mxu0 0.0
    %3181 = vmatpush1.msra.mxu0 0.0
    %3182 = vmatprep.subr.mxu0 0.0
    %3183 = vmatpush1.msra.mxu0 0.0
    %3184 = vmatprep.subr.mxu0 0.0
    %3185 = vmatpush1.msra.mxu0 0.0
    %3186 = vmatprep.subr.mxu0 0.0
    %3187 = vmatpush1.msra.mxu0 0.0
    %3188 = vmatprep.subr.mxu0 0.0
    %3189 = vmatpush1.msra.mxu0 0.0
    %3190 = vmatprep.subr.mxu0 0.0
    %3191 = vmatpush1.msra.mxu0 0.0
    %3192 = vmatprep.subr.mxu0 0.0
    %3193 = vmatpush1.msra.mxu0 0.0
    %3194 = vmatprep.subr.mxu0 0.0
    %3195 = vmatpush1.msra.mxu0 0.0
    %3196 = vmatprep.mubr.f32.mxu0 0.0
    %3197 = vmatmul.mubr.f32.gmra.mrb[0].mxu0 %v3101
    %v3198 = vpop.f32.mrb[0].mxu0
    %v3199 = vadd.f32 0.0, %v3198
    %v3200 = vpop.f32.mrb[0].mxu0
    %v3201 = vadd.f32 0.0, %v3200
    %3202 = vdwg.mxu0
    %3203 = vmatprep.subr.mxu0 0.0
    %3204 = vmatpush1.msra.mxu0 %v660
    %3205 = vmatprep.subr.mxu0 0.0
    %3206 = vmatpush1.msra.mxu0 %v663
    %3207 = vmatprep.subr.mxu0 0.0
    %3208 = vmatpush1.msra.mxu0 %v666
    %3209 = vmatprep.subr.mxu0 0.0
    %3210 = vmatpush1.msra.mxu0 %v669
    %3211 = vmatprep.subr.mxu0 0.0
    %3212 = vmatpush1.msra.mxu0 %v672
    %3213 = vmatprep.subr.mxu0 0.0
    %3214 = vmatpush1.msra.mxu0 %v675
    %3215 = vmatprep.subr.mxu0 0.0
    %3216 = vmatpush1.msra.mxu0 %v678
    %3217 = vmatprep.subr.mxu0 0.0
    %3218 = vmatpush1.msra.mxu0 %v681
    %3219 = vmatprep.subr.mxu0 0.0
    %3220 = vmatpush1.msra.mxu0 %v684
    %3221 = vmatprep.subr.mxu0 0.0
    %3222 = vmatpush1.msra.mxu0 %v687
    %3223 = vmatprep.subr.mxu0 0.0
    %3224 = vmatpush1.msra.mxu0 %v690
    %3225 = vmatprep.subr.mxu0 0.0
    %3226 = vmatpush1.msra.mxu0 %v693
    %3227 = vmatprep.subr.mxu0 0.0
    %3228 = vmatpush1.msra.mxu0 %v696
    %3229 = vmatprep.subr.mxu0 0.0
    %3230 = vmatpush1.msra.mxu0 %v699
    %3231 = vmatprep.subr.mxu0 0.0
    %3232 = vmatpush1.msra.mxu0 %v702
    %3233 = vmatprep.subr.mxu0 0.0
    %3234 = vmatpush1.msra.mxu0 %v705
    %3235 = vmatprep.subr.mxu0 0.0
    %3236 = vmatpush1.msra.mxu0 0.0
    %3237 = vmatprep.subr.mxu0 0.0
    %3238 = vmatpush1.msra.mxu0 0.0
    %3239 = vmatprep.subr.mxu0 0.0
    %3240 = vmatpush1.msra.mxu0 0.0
    %3241 = vmatprep.subr.mxu0 0.0
    %3242 = vmatpush1.msra.mxu0 0.0
    %3243 = vmatprep.subr.mxu0 0.0
    %3244 = vmatpush1.msra.mxu0 0.0
    %3245 = vmatprep.subr.mxu0 0.0
    %3246 = vmatpush1.msra.mxu0 0.0
    %3247 = vmatprep.subr.mxu0 0.0
    %3248 = vmatpush1.msra.mxu0 0.0
    %3249 = vmatprep.subr.mxu0 0.0
    %3250 = vmatpush1.msra.mxu0 0.0
    %3251 = vmatprep.subr.mxu0 0.0
    %3252 = vmatpush1.msra.mxu0 0.0
    %3253 = vmatprep.subr.mxu0 0.0
    %3254 = vmatpush1.msra.mxu0 0.0
    %3255 = vmatprep.subr.mxu0 0.0
    %3256 = vmatpush1.msra.mxu0 0.0
    %3257 = vmatprep.subr.mxu0 0.0
    %3258 = vmatpush1.msra.mxu0 0.0
    %3259 = vmatprep.subr.mxu0 0.0
    %3260 = vmatpush1.msra.mxu0 0.0
    %3261 = vmatprep.subr.mxu0 0.0
    %3262 = vmatpush1.msra.mxu0 0.0
    %3263 = vmatprep.subr.mxu0 0.0
    %3264 = vmatpush1.msra.mxu0 0.0
    %3265 = vmatprep.subr.mxu0 0.0
    %3266 = vmatpush1.msra.mxu0 0.0
    %3267 = vmatprep.mubr.f32.mxu0 0.0
    %3268 = vmatmul.mubr.f32.gmra.mrb[0].mxu0 %v3101
    %v3269 = vpop.f32.mrb[0].mxu0
    %v3270 = vadd.f32 0.0, %v3269
    %v3271 = vpop.f32.mrb[0].mxu0
    %3272 = vdwg.mxu0
    %3273 = vmatprep.subr.mxu0 %v707
    %3274 = vmatpush1.msra.mxu0 %v706
    %3275 = vmatprep.subr.mxu0 %v710
    %3276 = vmatpush1.msra.mxu0 %v709
    %3277 = vmatprep.subr.mxu0 %v713
    %3278 = vmatpush1.msra.mxu0 %v712
    %3279 = vmatprep.subr.mxu0 %v716
    %3280 = vmatpush1.msra.mxu0 %v715
    %3281 = vmatprep.subr.mxu0 %v719
    %3282 = vmatpush1.msra.mxu0 %v718
    %3283 = vmatprep.subr.mxu0 %v722
    %3284 = vmatpush1.msra.mxu0 %v721
    %3285 = vmatprep.subr.mxu0 %v725
    %3286 = vmatpush1.msra.mxu0 %v724
    %3287 = vmatprep.subr.mxu0 %v728
    %3288 = vmatpush1.msra.mxu0 %v727
    %3289 = vmatprep.subr.mxu0 %v731
    %3290 = vmatpush1.msra.mxu0 %v730
    %3291 = vmatprep.subr.mxu0 %v734
    %3292 = vmatpush1.msra.mxu0 %v733
    %3293 = vmatprep.subr.mxu0 %v737
    %3294 = vmatpush1.msra.mxu0 %v736
    %3295 = vmatprep.subr.mxu0 %v740
    %3296 = vmatpush1.msra.mxu0 %v739
    %3297 = vmatprep.subr.mxu0 %v743
    %3298 = vmatpush1.msra.mxu0 %v742
    %3299 = vmatprep.subr.mxu0 %v746
    %3300 = vmatpush1.msra.mxu0 %v745
    %3301 = vmatprep.subr.mxu0 %v749
    %3302 = vmatpush1.msra.mxu0 %v748
    %3303 = vmatprep.subr.mxu0 %v752
    %3304 = vmatpush1.msra.mxu0 %v751
    %3305 = vmatprep.subr.mxu0 0.0
    %3306 = vmatpush1.msra.mxu0 0.0
    %3307 = vmatprep.subr.mxu0 0.0
    %3308 = vmatpush1.msra.mxu0 0.0
    %3309 = vmatprep.subr.mxu0 0.0
    %3310 = vmatpush1.msra.mxu0 0.0
    %3311 = vmatprep.subr.mxu0 0.0
    %3312 = vmatpush1.msra.mxu0 0.0
    %3313 = vmatprep.subr.mxu0 0.0
    %3314 = vmatpush1.msra.mxu0 0.0
    %3315 = vmatprep.subr.mxu0 0.0
    %3316 = vmatpush1.msra.mxu0 0.0
    %3317 = vmatprep.subr.mxu0 0.0
    %3318 = vmatpush1.msra.mxu0 0.0
    %3319 = vmatprep.subr.mxu0 0.0
    %3320 = vmatpush1.msra.mxu0 0.0
    %3321 = vmatprep.subr.mxu0 0.0
    %3322 = vmatpush1.msra.mxu0 0.0
    %3323 = vmatprep.subr.mxu0 0.0
    %3324 = vmatpush1.msra.mxu0 0.0
    %3325 = vmatprep.subr.mxu0 0.0
    %3326 = vmatpush1.msra.mxu0 0.0
    %3327 = vmatprep.subr.mxu0 0.0
    %3328 = vmatpush1.msra.mxu0 0.0
    %3329 = vmatprep.subr.mxu0 0.0
    %3330 = vmatpush1.msra.mxu0 0.0
    %3331 = vmatprep.subr.mxu0 0.0
    %3332 = vmatpush1.msra.mxu0 0.0
    %3333 = vmatprep.subr.mxu0 0.0
    %3334 = vmatpush1.msra.mxu0 0.0
    %3335 = vmatprep.subr.mxu0 0.0
    %3336 = vmatpush1.msra.mxu0 0.0
    %3337 = vmatprep.mubr.f32.mxu0 0.0
    %3338 = vmatmul.mubr.f32.gmra.mrb[0].mxu0 %v3127
    %v3339 = vpop.f32.mrb[0].mxu0
    %v3340 = vadd.f32 0.0, %v3339
    %v3341 = vpop.f32.mrb[0].mxu0
    %v3342 = vadd.f32 0.0, %v3341
    %3343 = vdwg.mxu0
    %3344 = vmatprep.subr.mxu0 0.0
    %3345 = vmatpush1.msra.mxu0 %v708
    %3346 = vmatprep.subr.mxu0 0.0
    %3347 = vmatpush1.msra.mxu0 %v711
    %3348 = vmatprep.subr.mxu0 0.0
    %3349 = vmatpush1.msra.mxu0 %v714
    %3350 = vmatprep.subr.mxu0 0.0
    %3351 = vmatpush1.msra.mxu0 %v717
    %3352 = vmatprep.subr.mxu0 0.0
    %3353 = vmatpush1.msra.mxu0 %v720
    %3354 = vmatprep.subr.mxu0 0.0
    %3355 = vmatpush1.msra.mxu0 %v723
    %3356 = vmatprep.subr.mxu0 0.0
    %3357 = vmatpush1.msra.mxu0 %v726
    %3358 = vmatprep.subr.mxu0 0.0
    %3359 = vmatpush1.msra.mxu0 %v729
    %3360 = vmatprep.subr.mxu0 0.0
    %3361 = vmatpush1.msra.mxu0 %v732
    %3362 = vmatprep.subr.mxu0 0.0
    %3363 = vmatpush1.msra.mxu0 %v735
    %3364 = vmatprep.subr.mxu0 0.0
    %3365 = vmatpush1.msra.mxu0 %v738
    %3366 = vmatprep.subr.mxu0 0.0
    %3367 = vmatpush1.msra.mxu0 %v741
    %3368 = vmatprep.subr.mxu0 0.0
    %3369 = vmatpush1.msra.mxu0 %v744
    %3370 = vmatprep.subr.mxu0 0.0
    %3371 = vmatpush1.msra.mxu0 %v747
    %3372 = vmatprep.subr.mxu0 0.0
    %3373 = vmatpush1.msra.mxu0 %v750
    %3374 = vmatprep.subr.mxu0 0.0
    %3375 = vmatpush1.msra.mxu0 %v753
    %3376 = vmatprep.subr.mxu0 0.0
    %3377 = vmatpush1.msra.mxu0 0.0
    %3378 = vmatprep.subr.mxu0 0.0
    %3379 = vmatpush1.msra.mxu0 0.0
    %3380 = vmatprep.subr.mxu0 0.0
    %3381 = vmatpush1.msra.mxu0 0.0
    %3382 = vmatprep.subr.mxu0 0.0
    %3383 = vmatpush1.msra.mxu0 0.0
    %3384 = vmatprep.subr.mxu0 0.0
    %3385 = vmatpush1.msra.mxu0 0.0
    %3386 = vmatprep.subr.mxu0 0.0
    %3387 = vmatpush1.msra.mxu0 0.0
    %3388 = vmatprep.subr.mxu0 0.0
    %3389 = vmatpush1.msra.mxu0 0.0
    %3390 = vmatprep.subr.mxu0 0.0
    %3391 = vmatpush1.msra.mxu0 0.0
    %3392 = vmatprep.subr.mxu0 0.0
    %3393 = vmatpush1.msra.mxu0 0.0
    %3394 = vmatprep.subr.mxu0 0.0
    %3395 = vmatpush1.msra.mxu0 0.0
    %3396 = vmatprep.subr.mxu0 0.0
    %3397 = vmatpush1.msra.mxu0 0.0
    %3398 = vmatprep.subr.mxu0 0.0
    %3399 = vmatpush1.msra.mxu0 0.0
    %3400 = vmatprep.subr.mxu0 0.0
    %3401 = vmatpush1.msra.mxu0 0.0
    %3402 = vmatprep.subr.mxu0 0.0
    %3403 = vmatpush1.msra.mxu0 0.0
    %3404 = vmatprep.subr.mxu0 0.0
    %3405 = vmatpush1.msra.mxu0 0.0
    %3406 = vmatprep.subr.mxu0 0.0
    %3407 = vmatpush1.msra.mxu0 0.0
    %3408 = vmatprep.mubr.f32.mxu0 0.0
    %3409 = vmatmul.mubr.f32.gmra.mrb[0].mxu0 %v3127
    %v3410 = vpop.f32.mrb[0].mxu0
    %v3411 = vadd.f32 0.0, %v3410
    %v3412 = vpop.f32.mrb[0].mxu0
    %3413 = vdwg.mxu0
    %s3414 = scalar_lea.vmem [#allocation2], 168
    %v3415 = vld [vmem:[%s3414] sm:$0xff]
    %v3416 = vld [vmem:[%s3414 + $0x8] sm:$0xff]
    %v3417 = vld [vmem:[%s3414 + $0x10] sm:$0xff]
    %v3418 = vadd.f32 %v3415, %v3199
    %v3419 = vxor.u32 %v3418, 2147483648
    %v3420 = vmul.f32 %v3419, 1.442695
    %v3421 = vpow.pop %v3420
    %v3422 = vadd.f32 %v3421, 1.0
    %v3423 = vrcp.pop %v3422
    %v3424 = vmul.f32 1.0, %v3423
    %v3425 = vadd.f32 %v3416, %v3201
    %v3426 = vxor.u32 %v3425, 2147483648
    %v3427 = vmul.f32 %v3426, 1.442695
    %v3428 = vpow.pop %v3427
    %v3429 = vadd.f32 %v3428, 1.0
    %v3430 = vrcp.pop %v3429
    %v3431 = vmul.f32 1.0, %v3430
    %v3432 = vadd.f32 %v3270, %v1059
    %v3433 = vmul.f32 %v3424, %v3432
    %v3434 = vadd.f32 %v3417, %v3433
    %v3435 = vtanh.pop %v3434
    %v3436 = vsub.f32 1.0, %v3431
    %v3437 = vmul.f32 %v3436, %v3435
    %v3438 = vmul.f32 %v3431, %v3101
    %v3439 = vadd.f32 %v3437, %v3438
    %v3440 = vld [vmem:[#allocation3] sm:$0xff]
    %v3441 = vld [vmem:[#allocation3 + $0x8] sm:$0xff]
    %v3442 = vld [vmem:[#allocation3 + $0x10] sm:$0xff]
    %v3443 = vadd.f32 %v3440, %v3340
    %v3444 = vxor.u32 %v3443, 2147483648
    %v3445 = vmul.f32 %v3444, 1.442695
    %v3446 = vpow.pop %v3445
    %v3447 = vadd.f32 %v3446, 1.0
    %v3448 = vrcp.pop %v3447
    %v3449 = vmul.f32 1.0, %v3448
    %v3450 = vadd.f32 %v3441, %v3342
    %v3451 = vxor.u32 %v3450, 2147483648
    %v3452 = vmul.f32 %v3451, 1.442695
    %v3453 = vpow.pop %v3452
    %v3454 = vadd.f32 %v3453, 1.0
    %v3455 = vrcp.pop %v3454
    %v3456 = vmul.f32 1.0, %v3455
    %v3457 = vadd.f32 %v3411, %v1091
    %v3458 = vmul.f32 %v3449, %v3457
    %v3459 = vadd.f32 %v3442, %v3458
    %v3460 = vtanh.pop %v3459
    %v3461 = vsub.f32 1.0, %v3456
    %v3462 = vmul.f32 %v3461, %v3460
    %v3463 = vmul.f32 %v3456, %v3127
    %v3464 = vadd.f32 %v3462, %v3463
    %s3465 = scalar_lea.vmem [#allocation4], 56
    %3466 = vst [vmem:[%s3465] sm:$0xff] %v3439
    %3467 = vst [vmem:[#allocation5] sm:$0xff] %v3464
    %v3468 = vld [vmem:[#allocation4] sm:$0xff]
    %v3469 = vld [vmem:[#allocation4 + $0x8] sm:$0xff]
    %v3470 = vld [vmem:[#allocation4 + $0x10] sm:$0xff]
    %v3471 = vld [vmem:[#allocation4 + $0x18] sm:$0xff]
    %v3472 = vld [vmem:[#allocation4 + $0x20] sm:$0xff]
    %v3473 = vld [vmem:[#allocation4 + $0x28] sm:$0xff]
    %v3474 = vld [vmem:[#allocation4 + $0x30] sm:$0xff]
    %v3475 = vld [vmem:[#allocation4 + $0x38] sm:$0xff]
    %v3476 = vld [vmem:[#allocation5] sm:$0xff]
    %v3477 = vld [vmem:[#allocation5 + $0x8] sm:$0xff]
    %v3478 = vld [vmem:[#allocation5 + $0x10] sm:$0xff]
    %v3479 = vld [vmem:[#allocation5 + $0x18] sm:$0xff]
    %v3480 = vld [vmem:[#allocation5 + $0x20] sm:$0xff]
    %v3481 = vld [vmem:[#allocation5 + $0x28] sm:$0xff]
    %v3482 = vld [vmem:[#allocation5 + $0x30] sm:$0xff]
    %v3483 = vld [vmem:[#allocation5 + $0x38] sm:$0xff]
    %v3484 = vld [vmem:[#allocation11] sm:$0xff]
    %v3485 = vld [vmem:[#allocation11 + $0x8] sm:$0xff]
    %v3486 = vld [vmem:[#allocation11 + $0x10] sm:$0xff]
    %v3487 = vld [vmem:[#allocation11 + $0x18] sm:$0xff]
    %v3488 = vld [vmem:[#allocation11 + $0x20] sm:$0xff]
    %v3489 = vld [vmem:[#allocation11 + $0x28] sm:$0xff]
    %v3490 = vld [vmem:[#allocation11 + $0x30] sm:$0xff]
    %v3491 = vld [vmem:[#allocation11 + $0x38] sm:$0xff]
    %v3492 = vld [vmem:[#allocation11 + $0x40] sm:$0xff]
    %v3493 = vld [vmem:[#allocation11 + $0x48] sm:$0xff]
    %v3494 = vld [vmem:[#allocation11 + $0x50] sm:$0xff]
    %v3495 = vld [vmem:[#allocation11 + $0x58] sm:$0xff]
    %v3496 = vld [vmem:[#allocation11 + $0x60] sm:$0xff]
    %v3497 = vld [vmem:[#allocation11 + $0x68] sm:$0xff]
    %v3498 = vld [vmem:[#allocation11 + $0x70] sm:$0xff]
    %v3499 = vld [vmem:[#allocation11 + $0x78] sm:$0xff]
    %v3500 = vld [vmem:[#allocation11 + $0x80] sm:$0xff]
    %v3501 = vld [vmem:[#allocation11 + $0x88] sm:$0xff]
    %v3502 = vld [vmem:[#allocation11 + $0x90] sm:$0xff]
    %v3503 = vld [vmem:[#allocation11 + $0x98] sm:$0xff]
    %v3504 = vld [vmem:[#allocation11 + $0xa0] sm:$0xff]
    %v3505 = vld [vmem:[#allocation11 + $0xa8] sm:$0xff]
    %v3506 = vld [vmem:[#allocation11 + $0xb0] sm:$0xff]
    %v3507 = vld [vmem:[#allocation11 + $0xb8] sm:$0xff]
    %v3508 = vld [vmem:[#allocation11 + $0xc0] sm:$0xff]
    %v3509 = vld [vmem:[#allocation11 + $0xc8] sm:$0xff]
    %v3510 = vld [vmem:[#allocation11 + $0xd0] sm:$0xff]
    %v3511 = vld [vmem:[#allocation11 + $0xd8] sm:$0xff]
    %v3512 = vld [vmem:[#allocation11 + $0xe0] sm:$0xff]
    %v3513 = vld [vmem:[#allocation11 + $0xe8] sm:$0xff]
    %v3514 = vld [vmem:[#allocation11 + $0xf0] sm:$0xff]
    %v3515 = vld [vmem:[#allocation11 + $0xf8] sm:$0xff]
    %v3516 = vld [vmem:[#allocation11 + $0x100] sm:$0xff]
    %v3517 = vld [vmem:[#allocation11 + $0x108] sm:$0xff]
    %v3518 = vld [vmem:[#allocation11 + $0x110] sm:$0xff]
    %v3519 = vld [vmem:[#allocation11 + $0x118] sm:$0xff]
    %v3520 = vld [vmem:[#allocation11 + $0x120] sm:$0xff]
    %v3521 = vld [vmem:[#allocation11 + $0x128] sm:$0xff]
    %v3522 = vld [vmem:[#allocation11 + $0x130] sm:$0xff]
    %v3523 = vld [vmem:[#allocation11 + $0x138] sm:$0xff]
    %v3524 = vld [vmem:[#allocation11 + $0x140] sm:$0xff]
    %v3525 = vld [vmem:[#allocation11 + $0x148] sm:$0xff]
    %v3526 = vld [vmem:[#allocation11 + $0x150] sm:$0xff]
    %v3527 = vld [vmem:[#allocation11 + $0x158] sm:$0xff]
    %v3528 = vld [vmem:[#allocation11 + $0x160] sm:$0xff]
    %v3529 = vld [vmem:[#allocation11 + $0x168] sm:$0xff]
    %v3530 = vld [vmem:[#allocation11 + $0x170] sm:$0xff]
    %v3531 = vld [vmem:[#allocation11 + $0x178] sm:$0xff]
    %v3532 = vld [vmem:[#allocation11 + $0x180] sm:$0xff]
    %v3533 = vld [vmem:[#allocation11 + $0x188] sm:$0xff]
    %v3534 = vld [vmem:[#allocation11 + $0x190] sm:$0xff]
    %v3535 = vld [vmem:[#allocation11 + $0x198] sm:$0xff]
    %v3536 = vld [vmem:[#allocation11 + $0x1a0] sm:$0xff]
    %v3537 = vld [vmem:[#allocation11 + $0x1a8] sm:$0xff]
    %v3538 = vld [vmem:[#allocation11 + $0x1b0] sm:$0xff]
    %v3539 = vld [vmem:[#allocation11 + $0x1b8] sm:$0xff]
    %v3540 = vld [vmem:[#allocation11 + $0x1c0] sm:$0xff]
    %v3541 = vld [vmem:[#allocation11 + $0x1c8] sm:$0xff]
    %v3542 = vld [vmem:[#allocation11 + $0x1d0] sm:$0xff]
    %v3543 = vld [vmem:[#allocation11 + $0x1d8] sm:$0xff]
    %v3544 = vld [vmem:[#allocation11 + $0x1e0] sm:$0xff]
    %v3545 = vld [vmem:[#allocation11 + $0x1e8] sm:$0xff]
    %v3546 = vld [vmem:[#allocation11 + $0x1f0] sm:$0xff]
    %v3547 = vld [vmem:[#allocation11 + $0x1f8] sm:$0xff]
    %v3548 = vld [vmem:[#allocation11 + $0x200] sm:$0xff]
    %v3549 = vld [vmem:[#allocation11 + $0x208] sm:$0xff]
    %v3550 = vld [vmem:[#allocation11 + $0x210] sm:$0xff]
    %v3551 = vld [vmem:[#allocation11 + $0x218] sm:$0xff]
    %v3552 = vld [vmem:[#allocation11 + $0x220] sm:$0xff]
    %v3553 = vld [vmem:[#allocation11 + $0x228] sm:$0xff]
    %v3554 = vld [vmem:[#allocation11 + $0x230] sm:$0xff]
    %v3555 = vld [vmem:[#allocation11 + $0x238] sm:$0xff]
    %v3556 = vld [vmem:[#allocation11 + $0x240] sm:$0xff]
    %v3557 = vld [vmem:[#allocation11 + $0x248] sm:$0xff]
    %v3558 = vld [vmem:[#allocation11 + $0x250] sm:$0xff]
    %v3559 = vld [vmem:[#allocation11 + $0x258] sm:$0xff]
    %v3560 = vld [vmem:[#allocation11 + $0x260] sm:$0xff]
    %v3561 = vld [vmem:[#allocation11 + $0x268] sm:$0xff]
    %v3562 = vld [vmem:[#allocation11 + $0x270] sm:$0xff]
    %v3563 = vld [vmem:[#allocation11 + $0x278] sm:$0xff]
    %v3564 = vld [vmem:[#allocation11 + $0x280] sm:$0xff]
    %v3565 = vld [vmem:[#allocation11 + $0x288] sm:$0xff]
    %v3566 = vld [vmem:[#allocation11 + $0x290] sm:$0xff]
    %v3567 = vld [vmem:[#allocation11 + $0x298] sm:$0xff]
    %v3568 = vld [vmem:[#allocation11 + $0x2a0] sm:$0xff]
    %v3569 = vld [vmem:[#allocation11 + $0x2a8] sm:$0xff]
    %v3570 = vld [vmem:[#allocation11 + $0x2b0] sm:$0xff]
    %v3571 = vld [vmem:[#allocation11 + $0x2b8] sm:$0xff]
    %v3572 = vld [vmem:[#allocation11 + $0x2c0] sm:$0xff]
    %v3573 = vld [vmem:[#allocation11 + $0x2c8] sm:$0xff]
    %v3574 = vld [vmem:[#allocation11 + $0x2d0] sm:$0xff]
    %v3575 = vld [vmem:[#allocation11 + $0x2d8] sm:$0xff]
    %v3576 = vld [vmem:[#allocation11 + $0x2e0] sm:$0xff]
    %v3577 = vld [vmem:[#allocation11 + $0x2e8] sm:$0xff]
    %v3578 = vld [vmem:[#allocation11 + $0x2f0] sm:$0xff]
    %v3579 = vld [vmem:[#allocation11 + $0x2f8] sm:$0xff]
    %v3580 = vld [vmem:[#allocation11 + $0x300] sm:$0xff]
    %v3581 = vld [vmem:[#allocation11 + $0x308] sm:$0xff]
    %v3582 = vld [vmem:[#allocation11 + $0x310] sm:$0xff]
    %v3583 = vld [vmem:[#allocation11 + $0x318] sm:$0xff]
    %v3584 = vld [vmem:[#allocation11 + $0x320] sm:$0xff]
    %v3585 = vld [vmem:[#allocation11 + $0x328] sm:$0xff]
    %v3586 = vld [vmem:[#allocation11 + $0x330] sm:$0xff]
    %v3587 = vld [vmem:[#allocation11 + $0x338] sm:$0xff]
    %v3588 = vld [vmem:[#allocation11 + $0x340] sm:$0xff]
    %v3589 = vld [vmem:[#allocation11 + $0x348] sm:$0xff]
    %v3590 = vld [vmem:[#allocation11 + $0x350] sm:$0xff]
    %v3591 = vld [vmem:[#allocation11 + $0x358] sm:$0xff]
    %v3592 = vld [vmem:[#allocation11 + $0x360] sm:$0xff]
    %v3593 = vld [vmem:[#allocation11 + $0x368] sm:$0xff]
    %v3594 = vld [vmem:[#allocation11 + $0x370] sm:$0xff]
    %v3595 = vld [vmem:[#allocation11 + $0x378] sm:$0xff]
    %v3596 = vld [vmem:[#allocation11 + $0x380] sm:$0xff]
    %v3597 = vld [vmem:[#allocation11 + $0x388] sm:$0xff]
    %v3598 = vld [vmem:[#allocation11 + $0x390] sm:$0xff]
    %v3599 = vld [vmem:[#allocation11 + $0x398] sm:$0xff]
    %v3600 = vld [vmem:[#allocation11 + $0x3a0] sm:$0xff]
    %v3601 = vld [vmem:[#allocation11 + $0x3a8] sm:$0xff]
    %v3602 = vld [vmem:[#allocation11 + $0x3b0] sm:$0xff]
    %v3603 = vld [vmem:[#allocation11 + $0x3b8] sm:$0xff]
    %v3604 = vld [vmem:[#allocation11 + $0x3c0] sm:$0xff]
    %v3605 = vld [vmem:[#allocation11 + $0x3c8] sm:$0xff]
    %v3606 = vld [vmem:[#allocation11 + $0x3d0] sm:$0xff]
    %v3607 = vld [vmem:[#allocation11 + $0x3d8] sm:$0xff]
    %v3608 = vld [vmem:[#allocation11 + $0x3e0] sm:$0xff]
    %v3609 = vld [vmem:[#allocation11 + $0x3e8] sm:$0xff]
    %v3610 = vld [vmem:[#allocation11 + $0x3f0] sm:$0xff]
    %v3611 = vld [vmem:[#allocation11 + $0x3f8] sm:$0xff]
    %v3612 = vld [vmem:[#allocation11 + $0x400] sm:$0xff]
    %v3613 = vld [vmem:[#allocation11 + $0x408] sm:$0xff]
    %v3614 = vld [vmem:[#allocation11 + $0x410] sm:$0xff]
    %v3615 = vld [vmem:[#allocation11 + $0x418] sm:$0xff]
    %v3616 = vld [vmem:[#allocation11 + $0x420] sm:$0xff]
    %v3617 = vld [vmem:[#allocation11 + $0x428] sm:$0xff]
    %v3618 = vld [vmem:[#allocation11 + $0x430] sm:$0xff]
    %v3619 = vld [vmem:[#allocation11 + $0x438] sm:$0xff]
    %v3620 = vld [vmem:[#allocation11 + $0x440] sm:$0xff]
    %v3621 = vld [vmem:[#allocation11 + $0x448] sm:$0xff]
    %v3622 = vld [vmem:[#allocation11 + $0x450] sm:$0xff]
    %v3623 = vld [vmem:[#allocation11 + $0x458] sm:$0xff]
    %v3624 = vld [vmem:[#allocation11 + $0x460] sm:$0xff]
    %v3625 = vld [vmem:[#allocation11 + $0x468] sm:$0xff]
    %v3626 = vld [vmem:[#allocation11 + $0x470] sm:$0xff]
    %v3627 = vld [vmem:[#allocation11 + $0x478] sm:$0xff]
    %v3628 = vld [vmem:[#allocation11 + $0x480] sm:$0xff]
    %v3629 = vld [vmem:[#allocation11 + $0x488] sm:$0xff]
    %v3630 = vld [vmem:[#allocation11 + $0x490] sm:$0xff]
    %v3631 = vld [vmem:[#allocation11 + $0x498] sm:$0xff]
    %v3632 = vld [vmem:[#allocation11 + $0x4a0] sm:$0xff]
    %v3633 = vld [vmem:[#allocation11 + $0x4a8] sm:$0xff]
    %v3634 = vld [vmem:[#allocation11 + $0x4b0] sm:$0xff]
    %v3635 = vld [vmem:[#allocation11 + $0x4b8] sm:$0xff]
    %v3636 = vld [vmem:[#allocation11 + $0x4c0] sm:$0xff]
    %v3637 = vld [vmem:[#allocation11 + $0x4c8] sm:$0xff]
    %v3638 = vld [vmem:[#allocation11 + $0x4d0] sm:$0xff]
    %v3639 = vld [vmem:[#allocation11 + $0x4d8] sm:$0xff]
    %v3640 = vld [vmem:[#allocation11 + $0x4e0] sm:$0xff]
    %v3641 = vld [vmem:[#allocation11 + $0x4e8] sm:$0xff]
    %v3642 = vld [vmem:[#allocation11 + $0x4f0] sm:$0xff]
    %v3643 = vld [vmem:[#allocation11 + $0x4f8] sm:$0xff]
    %v3644 = vld [vmem:[#allocation11 + $0x500] sm:$0xff]
    %v3645 = vld [vmem:[#allocation11 + $0x508] sm:$0xff]
    %v3646 = vld [vmem:[#allocation11 + $0x510] sm:$0xff]
    %v3647 = vld [vmem:[#allocation11 + $0x518] sm:$0xff]
    %v3648 = vld [vmem:[#allocation11 + $0x520] sm:$0xff]
    %v3649 = vld [vmem:[#allocation11 + $0x528] sm:$0xff]
    %v3650 = vld [vmem:[#allocation11 + $0x530] sm:$0xff]
    %v3651 = vld [vmem:[#allocation11 + $0x538] sm:$0xff]
    %v3652 = vld [vmem:[#allocation11 + $0x540] sm:$0xff]
    %v3653 = vld [vmem:[#allocation11 + $0x548] sm:$0xff]
    %v3654 = vld [vmem:[#allocation11 + $0x550] sm:$0xff]
    %v3655 = vld [vmem:[#allocation11 + $0x558] sm:$0xff]
    %v3656 = vld [vmem:[#allocation11 + $0x560] sm:$0xff]
    %v3657 = vld [vmem:[#allocation11 + $0x568] sm:$0xff]
    %v3658 = vld [vmem:[#allocation11 + $0x570] sm:$0xff]
    %v3659 = vld [vmem:[#allocation11 + $0x578] sm:$0xff]
    %v3660 = vld [vmem:[#allocation11 + $0x580] sm:$0xff]
    %v3661 = vld [vmem:[#allocation11 + $0x588] sm:$0xff]
    %v3662 = vld [vmem:[#allocation11 + $0x590] sm:$0xff]
    %v3663 = vld [vmem:[#allocation11 + $0x598] sm:$0xff]
    %v3664 = vld [vmem:[#allocation11 + $0x5a0] sm:$0xff]
    %v3665 = vld [vmem:[#allocation11 + $0x5a8] sm:$0xff]
    %v3666 = vld [vmem:[#allocation11 + $0x5b0] sm:$0xff]
    %v3667 = vld [vmem:[#allocation11 + $0x5b8] sm:$0xff]
    %v3668 = vld [vmem:[#allocation11 + $0x5c0] sm:$0xff]
    %v3669 = vld [vmem:[#allocation11 + $0x5c8] sm:$0xff]
    %v3670 = vld [vmem:[#allocation11 + $0x5d0] sm:$0xff]
    %v3671 = vld [vmem:[#allocation11 + $0x5d8] sm:$0xff]
    %v3672 = vld [vmem:[#allocation11 + $0x5e0] sm:$0xff]
    %v3673 = vld [vmem:[#allocation11 + $0x5e8] sm:$0xff]
    %v3674 = vld [vmem:[#allocation11 + $0x5f0] sm:$0xff]
    %v3675 = vld [vmem:[#allocation11 + $0x5f8] sm:$0xff]
    %3676 = vmatprep.subr.mxu0 %v3581
    %3677 = vmatpush1.msra.mxu0 %v3580
    %3678 = vmatprep.subr.mxu0 %v3587
    %3679 = vmatpush1.msra.mxu0 %v3586
    %3680 = vmatprep.subr.mxu0 %v3593
    %3681 = vmatpush1.msra.mxu0 %v3592
    %3682 = vmatprep.subr.mxu0 %v3599
    %3683 = vmatpush1.msra.mxu0 %v3598
    %3684 = vmatprep.subr.mxu0 %v3605
    %3685 = vmatpush1.msra.mxu0 %v3604
    %3686 = vmatprep.subr.mxu0 %v3611
    %3687 = vmatpush1.msra.mxu0 %v3610
    %3688 = vmatprep.subr.mxu0 %v3617
    %3689 = vmatpush1.msra.mxu0 %v3616
    %3690 = vmatprep.subr.mxu0 %v3623
    %3691 = vmatpush1.msra.mxu0 %v3622
    %3692 = vmatprep.subr.mxu0 %v3629
    %3693 = vmatpush1.msra.mxu0 %v3628
    %3694 = vmatprep.subr.mxu0 %v3635
    %3695 = vmatpush1.msra.mxu0 %v3634
    %3696 = vmatprep.subr.mxu0 %v3641
    %3697 = vmatpush1.msra.mxu0 %v3640
    %3698 = vmatprep.subr.mxu0 %v3647
    %3699 = vmatpush1.msra.mxu0 %v3646
    %3700 = vmatprep.subr.mxu0 %v3653
    %3701 = vmatpush1.msra.mxu0 %v3652
    %3702 = vmatprep.subr.mxu0 %v3659
    %3703 = vmatpush1.msra.mxu0 %v3658
    %3704 = vmatprep.subr.mxu0 %v3665
    %3705 = vmatpush1.msra.mxu0 %v3664
    %3706 = vmatprep.subr.mxu0 %v3671
    %3707 = vmatpush1.msra.mxu0 %v3670
    %3708 = vmatprep.subr.mxu0 0.0
    %3709 = vmatpush1.msra.mxu0 0.0
    %3710 = vmatprep.subr.mxu0 0.0
    %3711 = vmatpush1.msra.mxu0 0.0
    %3712 = vmatprep.subr.mxu0 0.0
    %3713 = vmatpush1.msra.mxu0 0.0
    %3714 = vmatprep.subr.mxu0 0.0
    %3715 = vmatpush1.msra.mxu0 0.0
    %3716 = vmatprep.subr.mxu0 0.0
    %3717 = vmatpush1.msra.mxu0 0.0
    %3718 = vmatprep.subr.mxu0 0.0
    %3719 = vmatpush1.msra.mxu0 0.0
    %3720 = vmatprep.subr.mxu0 0.0
    %3721 = vmatpush1.msra.mxu0 0.0
    %3722 = vmatprep.subr.mxu0 0.0
    %3723 = vmatpush1.msra.mxu0 0.0
    %3724 = vmatprep.subr.mxu0 0.0
    %3725 = vmatpush1.msra.mxu0 0.0
    %3726 = vmatprep.subr.mxu0 0.0
    %3727 = vmatpush1.msra.mxu0 0.0
    %3728 = vmatprep.subr.mxu0 0.0
    %3729 = vmatpush1.msra.mxu0 0.0
    %3730 = vmatprep.subr.mxu0 0.0
    %3731 = vmatpush1.msra.mxu0 0.0
    %3732 = vmatprep.subr.mxu0 0.0
    %3733 = vmatpush1.msra.mxu0 0.0
    %3734 = vmatprep.subr.mxu0 0.0
    %3735 = vmatpush1.msra.mxu0 0.0
    %3736 = vmatprep.subr.mxu0 0.0
    %3737 = vmatpush1.msra.mxu0 0.0
    %3738 = vmatprep.subr.mxu0 0.0
    %3739 = vmatpush1.msra.mxu0 0.0
    %3740 = vmatprep.mubr.f32.mxu0 0.0
    %3741 = vmatmul.mubr.f32.gmra.mrb[0].mxu0 %v3476
    %v3742 = vpop.f32.mrb[0].mxu0
    %v3743 = vadd.f32 0.0, %v3742
    %v3744 = vpop.f32.mrb[0].mxu0
    %v3745 = vadd.f32 0.0, %v3744
    %3746 = vmatprep.mubr.f32.mxu0 0.0
    %3747 = vmatmul.mubr.f32.gmra.mrb[0].mxu0 %v3477
    %v3748 = vpop.f32.mrb[0].mxu0
    %v3749 = vadd.f32 0.0, %v3748
    %v3750 = vpop.f32.mrb[0].mxu0
    %v3751 = vadd.f32 0.0, %v3750
    %3752 = vmatprep.mubr.f32.mxu0 0.0
    %3753 = vmatmul.mubr.f32.gmra.mrb[0].mxu0 %v3478
    %v3754 = vpop.f32.mrb[0].mxu0
    %v3755 = vadd.f32 0.0, %v3754
    %v3756 = vpop.f32.mrb[0].mxu0
    %v3757 = vadd.f32 0.0, %v3756
    %3758 = vmatprep.mubr.f32.mxu0 0.0
    %3759 = vmatmul.mubr.f32.gmra.mrb[0].mxu0 %v3479
    %v3760 = vpop.f32.mrb[0].mxu0
    %v3761 = vadd.f32 0.0, %v3760
    %v3762 = vpop.f32.mrb[0].mxu0
    %v3763 = vadd.f32 0.0, %v3762
    %3764 = vmatprep.mubr.f32.mxu0 0.0
    %3765 = vmatmul.mubr.f32.gmra.mrb[0].mxu0 %v3480
    %v3766 = vpop.f32.mrb[0].mxu0
    %v3767 = vadd.f32 0.0, %v3766
    %v3768 = vpop.f32.mrb[0].mxu0
    %v3769 = vadd.f32 0.0, %v3768
    %3770 = vmatprep.mubr.f32.mxu0 0.0
    %3771 = vmatmul.mubr.f32.gmra.mrb[0].mxu0 %v3481
    %v3772 = vpop.f32.mrb[0].mxu0
    %v3773 = vadd.f32 0.0, %v3772
    %v3774 = vpop.f32.mrb[0].mxu0
    %v3775 = vadd.f32 0.0, %v3774
    %3776 = vmatprep.mubr.f32.mxu0 0.0
    %3777 = vmatmul.mubr.f32.gmra.mrb[0].mxu0 %v3482
    %v3778 = vpop.f32.mrb[0].mxu0
    %v3779 = vadd.f32 0.0, %v3778
    %v3780 = vpop.f32.mrb[0].mxu0
    %v3781 = vadd.f32 0.0, %v3780
    %3782 = vmatprep.mubr.f32.mxu0 0.0
    %3783 = vmatmul.mubr.f32.gmra.mrb[0].mxu0 %v3483
    %v3784 = vpop.f32.mrb[0].mxu0
    %v3785 = vadd.f32 0.0, %v3784
    %v3786 = vpop.f32.mrb[0].mxu0
    %v3787 = vadd.f32 0.0, %v3786
    %3788 = vdwg.mxu0
    %3789 = vmatprep.subr.mxu0 %v3583
    %3790 = vmatpush1.msra.mxu0 %v3582
    %3791 = vmatprep.subr.mxu0 %v3589
    %3792 = vmatpush1.msra.mxu0 %v3588
    %3793 = vmatprep.subr.mxu0 %v3595
    %3794 = vmatpush1.msra.mxu0 %v3594
    %3795 = vmatprep.subr.mxu0 %v3601
    %3796 = vmatpush1.msra.mxu0 %v3600
    %3797 = vmatprep.subr.mxu0 %v3607
    %3798 = vmatpush1.msra.mxu0 %v3606
    %3799 = vmatprep.subr.mxu0 %v3613
    %3800 = vmatpush1.msra.mxu0 %v3612
    %3801 = vmatprep.subr.mxu0 %v3619
    %3802 = vmatpush1.msra.mxu0 %v3618
    %3803 = vmatprep.subr.mxu0 %v3625
    %3804 = vmatpush1.msra.mxu0 %v3624
    %3805 = vmatprep.subr.mxu0 %v3631
    %3806 = vmatpush1.msra.mxu0 %v3630
    %3807 = vmatprep.subr.mxu0 %v3637
    %3808 = vmatpush1.msra.mxu0 %v3636
    %3809 = vmatprep.subr.mxu0 %v3643
    %3810 = vmatpush1.msra.mxu0 %v3642
    %3811 = vmatprep.subr.mxu0 %v3649
    %3812 = vmatpush1.msra.mxu0 %v3648
    %3813 = vmatprep.subr.mxu0 %v3655
    %3814 = vmatpush1.msra.mxu0 %v3654
    %3815 = vmatprep.subr.mxu0 %v3661
    %3816 = vmatpush1.msra.mxu0 %v3660
    %3817 = vmatprep.subr.mxu0 %v3667
    %3818 = vmatpush1.msra.mxu0 %v3666
    %3819 = vmatprep.subr.mxu0 %v3673
    %3820 = vmatpush1.msra.mxu0 %v3672
    %3821 = vmatprep.subr.mxu0 0.0
    %3822 = vmatpush1.msra.mxu0 0.0
    %3823 = vmatprep.subr.mxu0 0.0
    %3824 = vmatpush1.msra.mxu0 0.0
    %3825 = vmatprep.subr.mxu0 0.0
    %3826 = vmatpush1.msra.mxu0 0.0
    %3827 = vmatprep.subr.mxu0 0.0
    %3828 = vmatpush1.msra.mxu0 0.0
    %3829 = vmatprep.subr.mxu0 0.0
    %3830 = vmatpush1.msra.mxu0 0.0
    %3831 = vmatprep.subr.mxu0 0.0
    %3832 = vmatpush1.msra.mxu0 0.0
    %3833 = vmatprep.subr.mxu0 0.0
    %3834 = vmatpush1.msra.mxu0 0.0
    %3835 = vmatprep.subr.mxu0 0.0
    %3836 = vmatpush1.msra.mxu0 0.0
    %3837 = vmatprep.subr.mxu0 0.0
    %3838 = vmatpush1.msra.mxu0 0.0
    %3839 = vmatprep.subr.mxu0 0.0
    %3840 = vmatpush1.msra.mxu0 0.0
    %3841 = vmatprep.subr.mxu0 0.0
    %3842 = vmatpush1.msra.mxu0 0.0
    %3843 = vmatprep.subr.mxu0 0.0
    %3844 = vmatpush1.msra.mxu0 0.0
    %3845 = vmatprep.subr.mxu0 0.0
    %3846 = vmatpush1.msra.mxu0 0.0
    %3847 = vmatprep.subr.mxu0 0.0
    %3848 = vmatpush1.msra.mxu0 0.0
    %3849 = vmatprep.subr.mxu0 0.0
    %3850 = vmatpush1.msra.mxu0 0.0
    %3851 = vmatprep.subr.mxu0 0.0
    %3852 = vmatpush1.msra.mxu0 0.0
    %3853 = vmatprep.mubr.f32.mxu0 0.0
    %3854 = vmatmul.mubr.f32.gmra.mrb[0].mxu0 %v3476
    %v3855 = vpop.f32.mrb[0].mxu0
    %v3856 = vadd.f32 0.0, %v3855
    %v3857 = vpop.f32.mrb[0].mxu0
    %v3858 = vadd.f32 0.0, %v3857
    %3859 = vmatprep.mubr.f32.mxu0 0.0
    %3860 = vmatmul.mubr.f32.gmra.mrb[0].mxu0 %v3477
    %v3861 = vpop.f32.mrb[0].mxu0
    %v3862 = vadd.f32 0.0, %v3861
    %v3863 = vpop.f32.mrb[0].mxu0
    %v3864 = vadd.f32 0.0, %v3863
    %3865 = vmatprep.mubr.f32.mxu0 0.0
    %3866 = vmatmul.mubr.f32.gmra.mrb[0].mxu0 %v3478
    %v3867 = vpop.f32.mrb[0].mxu0
    %v3868 = vadd.f32 0.0, %v3867
    %v3869 = vpop.f32.mrb[0].mxu0
    %v3870 = vadd.f32 0.0, %v3869
    %3871 = vmatprep.mubr.f32.mxu0 0.0
    %3872 = vmatmul.mubr.f32.gmra.mrb[0].mxu0 %v3479
    %v3873 = vpop.f32.mrb[0].mxu0
    %v3874 = vadd.f32 0.0, %v3873
    %v3875 = vpop.f32.mrb[0].mxu0
    %v3876 = vadd.f32 0.0, %v3875
    %3877 = vmatprep.mubr.f32.mxu0 0.0
    %3878 = vmatmul.mubr.f32.gmra.mrb[0].mxu0 %v3480
    %v3879 = vpop.f32.mrb[0].mxu0
    %v3880 = vadd.f32 0.0, %v3879
    %v3881 = vpop.f32.mrb[0].mxu0
    %v3882 = vadd.f32 0.0, %v3881
    %3883 = vmatprep.mubr.f32.mxu0 0.0
    %3884 = vmatmul.mubr.f32.gmra.mrb[0].mxu0 %v3481
    %v3885 = vpop.f32.mrb[0].mxu0
    %v3886 = vadd.f32 0.0, %v3885
    %v3887 = vpop.f32.mrb[0].mxu0
    %v3888 = vadd.f32 0.0, %v3887
    %3889 = vmatprep.mubr.f32.mxu0 0.0
    %3890 = vmatmul.mubr.f32.gmra.mrb[0].mxu0 %v3482
    %v3891 = vpop.f32.mrb[0].mxu0
    %v3892 = vadd.f32 0.0, %v3891
    %v3893 = vpop.f32.mrb[0].mxu0
    %v3894 = vadd.f32 0.0, %v3893
    %3895 = vmatprep.mubr.f32.mxu0 0.0
    %3896 = vmatmul.mubr.f32.gmra.mrb[0].mxu0 %v3483
    %v3897 = vpop.f32.mrb[0].mxu0
    %v3898 = vadd.f32 0.0, %v3897
    %v3899 = vpop.f32.mrb[0].mxu0
    %v3900 = vadd.f32 0.0, %v3899
    %3901 = vdwg.mxu0
    %3902 = vmatprep.subr.mxu0 %v3585
    %3903 = vmatpush1.msra.mxu0 %v3584
    %3904 = vmatprep.subr.mxu0 %v3591
    %3905 = vmatpush1.msra.mxu0 %v3590
    %3906 = vmatprep.subr.mxu0 %v3597
    %3907 = vmatpush1.msra.mxu0 %v3596
    %3908 = vmatprep.subr.mxu0 %v3603
    %3909 = vmatpush1.msra.mxu0 %v3602
    %3910 = vmatprep.subr.mxu0 %v3609
    %3911 = vmatpush1.msra.mxu0 %v3608
    %3912 = vmatprep.subr.mxu0 %v3615
    %3913 = vmatpush1.msra.mxu0 %v3614
    %3914 = vmatprep.subr.mxu0 %v3621
    %3915 = vmatpush1.msra.mxu0 %v3620
    %3916 = vmatprep.subr.mxu0 %v3627
    %3917 = vmatpush1.msra.mxu0 %v3626
    %3918 = vmatprep.subr.mxu0 %v3633
    %3919 = vmatpush1.msra.mxu0 %v3632
    %3920 = vmatprep.subr.mxu0 %v3639
    %3921 = vmatpush1.msra.mxu0 %v3638
    %3922 = vmatprep.subr.mxu0 %v3645
    %3923 = vmatpush1.msra.mxu0 %v3644
    %3924 = vmatprep.subr.mxu0 %v3651
    %3925 = vmatpush1.msra.mxu0 %v3650
    %3926 = vmatprep.subr.mxu0 %v3657
    %3927 = vmatpush1.msra.mxu0 %v3656
    %3928 = vmatprep.subr.mxu0 %v3663
    %3929 = vmatpush1.msra.mxu0 %v3662
    %3930 = vmatprep.subr.mxu0 %v3669
    %3931 = vmatpush1.msra.mxu0 %v3668
    %3932 = vmatprep.subr.mxu0 %v3675
    %3933 = vmatpush1.msra.mxu0 %v3674
    %3934 = vmatprep.subr.mxu0 0.0
    %3935 = vmatpush1.msra.mxu0 0.0
    %3936 = vmatprep.subr.mxu0 0.0
    %3937 = vmatpush1.msra.mxu0 0.0
    %3938 = vmatprep.subr.mxu0 0.0
    %3939 = vmatpush1.msra.mxu0 0.0
    %3940 = vmatprep.subr.mxu0 0.0
    %3941 = vmatpush1.msra.mxu0 0.0
    %3942 = vmatprep.subr.mxu0 0.0
    %3943 = vmatpush1.msra.mxu0 0.0
    %3944 = vmatprep.subr.mxu0 0.0
    %3945 = vmatpush1.msra.mxu0 0.0
    %3946 = vmatprep.subr.mxu0 0.0
    %3947 = vmatpush1.msra.mxu0 0.0
    %3948 = vmatprep.subr.mxu0 0.0
    %3949 = vmatpush1.msra.mxu0 0.0
    %3950 = vmatprep.subr.mxu0 0.0
    %3951 = vmatpush1.msra.mxu0 0.0
    %3952 = vmatprep.subr.mxu0 0.0
    %3953 = vmatpush1.msra.mxu0 0.0
    %3954 = vmatprep.subr.mxu0 0.0
    %3955 = vmatpush1.msra.mxu0 0.0
    %3956 = vmatprep.subr.mxu0 0.0
    %3957 = vmatpush1.msra.mxu0 0.0
    %3958 = vmatprep.subr.mxu0 0.0
    %3959 = vmatpush1.msra.mxu0 0.0
    %3960 = vmatprep.subr.mxu0 0.0
    %3961 = vmatpush1.msra.mxu0 0.0
    %3962 = vmatprep.subr.mxu0 0.0
    %3963 = vmatpush1.msra.mxu0 0.0
    %3964 = vmatprep.subr.mxu0 0.0
    %3965 = vmatpush1.msra.mxu0 0.0
    %3966 = vmatprep.mubr.f32.mxu0 0.0
    %3967 = vmatmul.mubr.f32.gmra.mrb[0].mxu0 %v3476
    %v3968 = vpop.f32.mrb[0].mxu0
    %v3969 = vadd.f32 0.0, %v3968
    %v3970 = vpop.f32.mrb[0].mxu0
    %v3971 = vadd.f32 0.0, %v3970
    %3972 = vmatprep.mubr.f32.mxu0 0.0
    %3973 = vmatmul.mubr.f32.gmra.mrb[0].mxu0 %v3477
    %v3974 = vpop.f32.mrb[0].mxu0
    %v3975 = vadd.f32 0.0, %v3974
    %v3976 = vpop.f32.mrb[0].mxu0
    %v3977 = vadd.f32 0.0, %v3976
    %3978 = vmatprep.mubr.f32.mxu0 0.0
    %3979 = vmatmul.mubr.f32.gmra.mrb[0].mxu0 %v3478
    %v3980 = vpop.f32.mrb[0].mxu0
    %v3981 = vadd.f32 0.0, %v3980
    %v3982 = vpop.f32.mrb[0].mxu0
    %v3983 = vadd.f32 0.0, %v3982
    %3984 = vmatprep.mubr.f32.mxu0 0.0
    %3985 = vmatmul.mubr.f32.gmra.mrb[0].mxu0 %v3479
    %v3986 = vpop.f32.mrb[0].mxu0
    %v3987 = vadd.f32 0.0, %v3986
    %v3988 = vpop.f32.mrb[0].mxu0
    %v3989 = vadd.f32 0.0, %v3988
    %3990 = vmatprep.mubr.f32.mxu0 0.0
    %3991 = vmatmul.mubr.f32.gmra.mrb[0].mxu0 %v3480
    %v3992 = vpop.f32.mrb[0].mxu0
    %v3993 = vadd.f32 0.0, %v3992
    %v3994 = vpop.f32.mrb[0].mxu0
    %v3995 = vadd.f32 0.0, %v3994
    %3996 = vmatprep.mubr.f32.mxu0 0.0
    %3997 = vmatmul.mubr.f32.gmra.mrb[0].mxu0 %v3481
    %v3998 = vpop.f32.mrb[0].mxu0
    %v3999 = vadd.f32 0.0, %v3998
    %v4000 = vpop.f32.mrb[0].mxu0
    %v4001 = vadd.f32 0.0, %v4000
    %4002 = vmatprep.mubr.f32.mxu0 0.0
    %4003 = vmatmul.mubr.f32.gmra.mrb[0].mxu0 %v3482
    %v4004 = vpop.f32.mrb[0].mxu0
    %v4005 = vadd.f32 0.0, %v4004
    %v4006 = vpop.f32.mrb[0].mxu0
    %v4007 = vadd.f32 0.0, %v4006
    %4008 = vmatprep.mubr.f32.mxu0 0.0
    %4009 = vmatmul.mubr.f32.gmra.mrb[0].mxu0 %v3483
    %v4010 = vpop.f32.mrb[0].mxu0
    %v4011 = vadd.f32 0.0, %v4010
    %v4012 = vpop.f32.mrb[0].mxu0
    %v4013 = vadd.f32 0.0, %v4012
    %4014 = vdwg.mxu0
    %4015 = vmatprep.subr.mxu0 %v3485
    %4016 = vmatpush1.msra.mxu0 %v3484
    %4017 = vmatprep.subr.mxu0 %v3491
    %4018 = vmatpush1.msra.mxu0 %v3490
    %4019 = vmatprep.subr.mxu0 %v3497
    %4020 = vmatpush1.msra.mxu0 %v3496
    %4021 = vmatprep.subr.mxu0 %v3503
    %4022 = vmatpush1.msra.mxu0 %v3502
    %4023 = vmatprep.subr.mxu0 %v3509
    %4024 = vmatpush1.msra.mxu0 %v3508
    %4025 = vmatprep.subr.mxu0 %v3515
    %4026 = vmatpush1.msra.mxu0 %v3514
    %4027 = vmatprep.subr.mxu0 %v3521
    %4028 = vmatpush1.msra.mxu0 %v3520
    %4029 = vmatprep.subr.mxu0 %v3527
    %4030 = vmatpush1.msra.mxu0 %v3526
    %4031 = vmatprep.subr.mxu0 %v3533
    %4032 = vmatpush1.msra.mxu0 %v3532
    %4033 = vmatprep.subr.mxu0 %v3539
    %4034 = vmatpush1.msra.mxu0 %v3538
    %4035 = vmatprep.subr.mxu0 %v3545
    %4036 = vmatpush1.msra.mxu0 %v3544
    %4037 = vmatprep.subr.mxu0 %v3551
    %4038 = vmatpush1.msra.mxu0 %v3550
    %4039 = vmatprep.subr.mxu0 %v3557
    %4040 = vmatpush1.msra.mxu0 %v3556
    %4041 = vmatprep.subr.mxu0 %v3563
    %4042 = vmatpush1.msra.mxu0 %v3562
    %4043 = vmatprep.subr.mxu0 %v3569
    %4044 = vmatpush1.msra.mxu0 %v3568
    %4045 = vmatprep.subr.mxu0 %v3575
    %4046 = vmatpush1.msra.mxu0 %v3574
    %4047 = vmatprep.subr.mxu0 0.0
    %4048 = vmatpush1.msra.mxu0 0.0
    %4049 = vmatprep.subr.mxu0 0.0
    %4050 = vmatpush1.msra.mxu0 0.0
    %4051 = vmatprep.subr.mxu0 0.0
    %4052 = vmatpush1.msra.mxu0 0.0
    %4053 = vmatprep.subr.mxu0 0.0
    %4054 = vmatpush1.msra.mxu0 0.0
    %4055 = vmatprep.subr.mxu0 0.0
    %4056 = vmatpush1.msra.mxu0 0.0
    %4057 = vmatprep.subr.mxu0 0.0
    %4058 = vmatpush1.msra.mxu0 0.0
    %4059 = vmatprep.subr.mxu0 0.0
    %4060 = vmatpush1.msra.mxu0 0.0
    %4061 = vmatprep.subr.mxu0 0.0
    %4062 = vmatpush1.msra.mxu0 0.0
    %4063 = vmatprep.subr.mxu0 0.0
    %4064 = vmatpush1.msra.mxu0 0.0
    %4065 = vmatprep.subr.mxu0 0.0
    %4066 = vmatpush1.msra.mxu0 0.0
    %4067 = vmatprep.subr.mxu0 0.0
    %4068 = vmatpush1.msra.mxu0 0.0
    %4069 = vmatprep.subr.mxu0 0.0
    %4070 = vmatpush1.msra.mxu0 0.0
    %4071 = vmatprep.subr.mxu0 0.0
    %4072 = vmatpush1.msra.mxu0 0.0
    %4073 = vmatprep.subr.mxu0 0.0
    %4074 = vmatpush1.msra.mxu0 0.0
    %4075 = vmatprep.subr.mxu0 0.0
    %4076 = vmatpush1.msra.mxu0 0.0
    %4077 = vmatprep.subr.mxu0 0.0
    %4078 = vmatpush1.msra.mxu0 0.0
    %4079 = vmatprep.mubr.f32.mxu0 0.0
    %4080 = vmatmul.mubr.f32.gmra.mrb[0].mxu0 %v3468
    %v4081 = vpop.f32.mrb[0].mxu0
    %v4082 = vadd.f32 %v3743, %v4081
    %v4083 = vpop.f32.mrb[0].mxu0
    %v4084 = vadd.f32 %v3745, %v4083
    %4085 = vmatprep.mubr.f32.mxu0 0.0
    %4086 = vmatmul.mubr.f32.gmra.mrb[0].mxu0 %v3469
    %v4087 = vpop.f32.mrb[0].mxu0
    %v4088 = vadd.f32 %v3749, %v4087
    %v4089 = vpop.f32.mrb[0].mxu0
    %v4090 = vadd.f32 %v3751, %v4089
    %4091 = vmatprep.mubr.f32.mxu0 0.0
    %4092 = vmatmul.mubr.f32.gmra.mrb[0].mxu0 %v3470
    %v4093 = vpop.f32.mrb[0].mxu0
    %v4094 = vadd.f32 %v3755, %v4093
    %v4095 = vpop.f32.mrb[0].mxu0
    %v4096 = vadd.f32 %v3757, %v4095
    %4097 = vmatprep.mubr.f32.mxu0 0.0
    %4098 = vmatmul.mubr.f32.gmra.mrb[0].mxu0 %v3471
    %v4099 = vpop.f32.mrb[0].mxu0
    %v4100 = vadd.f32 %v3761, %v4099
    %v4101 = vpop.f32.mrb[0].mxu0
    %v4102 = vadd.f32 %v3763, %v4101
    %4103 = vmatprep.mubr.f32.mxu0 0.0
    %4104 = vmatmul.mubr.f32.gmra.mrb[0].mxu0 %v3472
    %v4105 = vpop.f32.mrb[0].mxu0
    %v4106 = vadd.f32 %v3767, %v4105
    %v4107 = vpop.f32.mrb[0].mxu0
    %v4108 = vadd.f32 %v3769, %v4107
    %4109 = vmatprep.mubr.f32.mxu0 0.0
    %4110 = vmatmul.mubr.f32.gmra.mrb[0].mxu0 %v3473
    %v4111 = vpop.f32.mrb[0].mxu0
    %v4112 = vadd.f32 %v3773, %v4111
    %v4113 = vpop.f32.mrb[0].mxu0
    %v4114 = vadd.f32 %v3775, %v4113
    %4115 = vmatprep.mubr.f32.mxu0 0.0
    %4116 = vmatmul.mubr.f32.gmra.mrb[0].mxu0 %v3474
    %v4117 = vpop.f32.mrb[0].mxu0
    %v4118 = vadd.f32 %v3779, %v4117
    %v4119 = vpop.f32.mrb[0].mxu0
    %v4120 = vadd.f32 %v3781, %v4119
    %4121 = vmatprep.mubr.f32.mxu0 0.0
    %4122 = vmatmul.mubr.f32.gmra.mrb[0].mxu0 %v3475
    %v4123 = vpop.f32.mrb[0].mxu0
    %v4124 = vadd.f32 %v3785, %v4123
    %v4125 = vpop.f32.mrb[0].mxu0
    %v4126 = vadd.f32 %v3787, %v4125
    %4127 = vdwg.mxu0
    %4128 = vmatprep.subr.mxu0 %v3487
    %4129 = vmatpush1.msra.mxu0 %v3486
    %4130 = vmatprep.subr.mxu0 %v3493
    %4131 = vmatpush1.msra.mxu0 %v3492
    %4132 = vmatprep.subr.mxu0 %v3499
    %4133 = vmatpush1.msra.mxu0 %v3498
    %4134 = vmatprep.subr.mxu0 %v3505
    %4135 = vmatpush1.msra.mxu0 %v3504
    %4136 = vmatprep.subr.mxu0 %v3511
    %4137 = vmatpush1.msra.mxu0 %v3510
    %4138 = vmatprep.subr.mxu0 %v3517
    %4139 = vmatpush1.msra.mxu0 %v3516
    %4140 = vmatprep.subr.mxu0 %v3523
    %4141 = vmatpush1.msra.mxu0 %v3522
    %4142 = vmatprep.subr.mxu0 %v3529
    %4143 = vmatpush1.msra.mxu0 %v3528
    %4144 = vmatprep.subr.mxu0 %v3535
    %4145 = vmatpush1.msra.mxu0 %v3534
    %4146 = vmatprep.subr.mxu0 %v3541
    %4147 = vmatpush1.msra.mxu0 %v3540
    %4148 = vmatprep.subr.mxu0 %v3547
    %4149 = vmatpush1.msra.mxu0 %v3546
    %4150 = vmatprep.subr.mxu0 %v3553
    %4151 = vmatpush1.msra.mxu0 %v3552
    %4152 = vmatprep.subr.mxu0 %v3559
    %4153 = vmatpush1.msra.mxu0 %v3558
    %4154 = vmatprep.subr.mxu0 %v3565
    %4155 = vmatpush1.msra.mxu0 %v3564
    %4156 = vmatprep.subr.mxu0 %v3571
    %4157 = vmatpush1.msra.mxu0 %v3570
    %4158 = vmatprep.subr.mxu0 %v3577
    %4159 = vmatpush1.msra.mxu0 %v3576
    %4160 = vmatprep.subr.mxu0 0.0
    %4161 = vmatpush1.msra.mxu0 0.0
    %4162 = vmatprep.subr.mxu0 0.0
    %4163 = vmatpush1.msra.mxu0 0.0
    %4164 = vmatprep.subr.mxu0 0.0
    %4165 = vmatpush1.msra.mxu0 0.0
    %4166 = vmatprep.subr.mxu0 0.0
    %4167 = vmatpush1.msra.mxu0 0.0
    %4168 = vmatprep.subr.mxu0 0.0
    %4169 = vmatpush1.msra.mxu0 0.0
    %4170 = vmatprep.subr.mxu0 0.0
    %4171 = vmatpush1.msra.mxu0 0.0
    %4172 = vmatprep.subr.mxu0 0.0
    %4173 = vmatpush1.msra.mxu0 0.0
    %4174 = vmatprep.subr.mxu0 0.0
    %4175 = vmatpush1.msra.mxu0 0.0
    %4176 = vmatprep.subr.mxu0 0.0
    %4177 = vmatpush1.msra.mxu0 0.0
    %4178 = vmatprep.subr.mxu0 0.0
    %4179 = vmatpush1.msra.mxu0 0.0
    %4180 = vmatprep.subr.mxu0 0.0
    %4181 = vmatpush1.msra.mxu0 0.0
    %4182 = vmatprep.subr.mxu0 0.0
    %4183 = vmatpush1.msra.mxu0 0.0
    %4184 = vmatprep.subr.mxu0 0.0
    %4185 = vmatpush1.msra.mxu0 0.0
    %4186 = vmatprep.subr.mxu0 0.0
    %4187 = vmatpush1.msra.mxu0 0.0
    %4188 = vmatprep.subr.mxu0 0.0
    %4189 = vmatpush1.msra.mxu0 0.0
    %4190 = vmatprep.subr.mxu0 0.0
    %4191 = vmatpush1.msra.mxu0 0.0
    %4192 = vmatprep.mubr.f32.mxu0 0.0
    %4193 = vmatmul.mubr.f32.gmra.mrb[0].mxu0 %v3468
    %v4194 = vpop.f32.mrb[0].mxu0
    %v4195 = vadd.f32 %v3856, %v4194
    %v4196 = vpop.f32.mrb[0].mxu0
    %v4197 = vadd.f32 %v3858, %v4196
    %4198 = vmatprep.mubr.f32.mxu0 0.0
    %4199 = vmatmul.mubr.f32.gmra.mrb[0].mxu0 %v3469
    %v4200 = vpop.f32.mrb[0].mxu0
    %v4201 = vadd.f32 %v3862, %v4200
    %v4202 = vpop.f32.mrb[0].mxu0
    %v4203 = vadd.f32 %v3864, %v4202
    %4204 = vmatprep.mubr.f32.mxu0 0.0
    %4205 = vmatmul.mubr.f32.gmra.mrb[0].mxu0 %v3470
    %v4206 = vpop.f32.mrb[0].mxu0
    %v4207 = vadd.f32 %v3868, %v4206
    %v4208 = vpop.f32.mrb[0].mxu0
    %v4209 = vadd.f32 %v3870, %v4208
    %4210 = vmatprep.mubr.f32.mxu0 0.0
    %4211 = vmatmul.mubr.f32.gmra.mrb[0].mxu0 %v3471
    %v4212 = vpop.f32.mrb[0].mxu0
    %v4213 = vadd.f32 %v3874, %v4212
    %v4214 = vpop.f32.mrb[0].mxu0
    %v4215 = vadd.f32 %v3876, %v4214
    %4216 = vmatprep.mubr.f32.mxu0 0.0
    %4217 = vmatmul.mubr.f32.gmra.mrb[0].mxu0 %v3472
    %v4218 = vpop.f32.mrb[0].mxu0
    %v4219 = vadd.f32 %v3880, %v4218
    %v4220 = vpop.f32.mrb[0].mxu0
    %v4221 = vadd.f32 %v3882, %v4220
    %4222 = vmatprep.mubr.f32.mxu0 0.0
    %4223 = vmatmul.mubr.f32.gmra.mrb[0].mxu0 %v3473
    %v4224 = vpop.f32.mrb[0].mxu0
    %v4225 = vadd.f32 %v3886, %v4224
    %v4226 = vpop.f32.mrb[0].mxu0
    %v4227 = vadd.f32 %v3888, %v4226
    %4228 = vmatprep.mubr.f32.mxu0 0.0
    %4229 = vmatmul.mubr.f32.gmra.mrb[0].mxu0 %v3474
    %v4230 = vpop.f32.mrb[0].mxu0
    %v4231 = vadd.f32 %v3892, %v4230
    %v4232 = vpop.f32.mrb[0].mxu0
    %v4233 = vadd.f32 %v3894, %v4232
    %4234 = vmatprep.mubr.f32.mxu0 0.0
    %4235 = vmatmul.mubr.f32.gmra.mrb[0].mxu0 %v3475
    %v4236 = vpop.f32.mrb[0].mxu0
    %v4237 = vadd.f32 %v3898, %v4236
    %v4238 = vpop.f32.mrb[0].mxu0
    %v4239 = vadd.f32 %v3900, %v4238
    %4240 = vdwg.mxu0
    %4241 = vmatprep.subr.mxu0 %v3489
    %4242 = vmatpush1.msra.mxu0 %v3488
    %4243 = vmatprep.subr.mxu0 %v3495
    %4244 = vmatpush1.msra.mxu0 %v3494
    %4245 = vmatprep.subr.mxu0 %v3501
    %4246 = vmatpush1.msra.mxu0 %v3500
    %4247 = vmatprep.subr.mxu0 %v3507
    %4248 = vmatpush1.msra.mxu0 %v3506
    %4249 = vmatprep.subr.mxu0 %v3513
    %4250 = vmatpush1.msra.mxu0 %v3512
    %4251 = vmatprep.subr.mxu0 %v3519
    %4252 = vmatpush1.msra.mxu0 %v3518
    %4253 = vmatprep.subr.mxu0 %v3525
    %4254 = vmatpush1.msra.mxu0 %v3524
    %4255 = vmatprep.subr.mxu0 %v3531
    %4256 = vmatpush1.msra.mxu0 %v3530
    %4257 = vmatprep.subr.mxu0 %v3537
    %4258 = vmatpush1.msra.mxu0 %v3536
    %4259 = vmatprep.subr.mxu0 %v3543
    %4260 = vmatpush1.msra.mxu0 %v3542
    %4261 = vmatprep.subr.mxu0 %v3549
    %4262 = vmatpush1.msra.mxu0 %v3548
    %4263 = vmatprep.subr.mxu0 %v3555
    %4264 = vmatpush1.msra.mxu0 %v3554
    %4265 = vmatprep.subr.mxu0 %v3561
    %4266 = vmatpush1.msra.mxu0 %v3560
    %4267 = vmatprep.subr.mxu0 %v3567
    %4268 = vmatpush1.msra.mxu0 %v3566
    %4269 = vmatprep.subr.mxu0 %v3573
    %4270 = vmatpush1.msra.mxu0 %v3572
    %4271 = vmatprep.subr.mxu0 %v3579
    %4272 = vmatpush1.msra.mxu0 %v3578
    %4273 = vmatprep.subr.mxu0 0.0
    %4274 = vmatpush1.msra.mxu0 0.0
    %4275 = vmatprep.subr.mxu0 0.0
    %4276 = vmatpush1.msra.mxu0 0.0
    %4277 = vmatprep.subr.mxu0 0.0
    %4278 = vmatpush1.msra.mxu0 0.0
    %4279 = vmatprep.subr.mxu0 0.0
    %4280 = vmatpush1.msra.mxu0 0.0
    %4281 = vmatprep.subr.mxu0 0.0
    %4282 = vmatpush1.msra.mxu0 0.0
    %4283 = vmatprep.subr.mxu0 0.0
    %4284 = vmatpush1.msra.mxu0 0.0
    %4285 = vmatprep.subr.mxu0 0.0
    %4286 = vmatpush1.msra.mxu0 0.0
    %4287 = vmatprep.subr.mxu0 0.0
    %4288 = vmatpush1.msra.mxu0 0.0
    %4289 = vmatprep.subr.mxu0 0.0
    %4290 = vmatpush1.msra.mxu0 0.0
    %4291 = vmatprep.subr.mxu0 0.0
    %4292 = vmatpush1.msra.mxu0 0.0
    %4293 = vmatprep.subr.mxu0 0.0
    %4294 = vmatpush1.msra.mxu0 0.0
    %4295 = vmatprep.subr.mxu0 0.0
    %4296 = vmatpush1.msra.mxu0 0.0
    %4297 = vmatprep.subr.mxu0 0.0
    %4298 = vmatpush1.msra.mxu0 0.0
    %4299 = vmatprep.subr.mxu0 0.0
    %4300 = vmatpush1.msra.mxu0 0.0
    %4301 = vmatprep.subr.mxu0 0.0
    %4302 = vmatpush1.msra.mxu0 0.0
    %4303 = vmatprep.subr.mxu0 0.0
    %4304 = vmatpush1.msra.mxu0 0.0
    %4305 = vmatprep.mubr.f32.mxu0 0.0
    %4306 = vmatmul.mubr.f32.gmra.mrb[0].mxu0 %v3468
    %v4307 = vpop.f32.mrb[0].mxu0
    %v4308 = vadd.f32 %v3969, %v4307
    %v4309 = vpop.f32.mrb[0].mxu0
    %v4310 = vadd.f32 %v3971, %v4309
    %4311 = vmatprep.mubr.f32.mxu0 0.0
    %4312 = vmatmul.mubr.f32.gmra.mrb[0].mxu0 %v3469
    %v4313 = vpop.f32.mrb[0].mxu0
    %v4314 = vadd.f32 %v3975, %v4313
    %v4315 = vpop.f32.mrb[0].mxu0
    %v4316 = vadd.f32 %v3977, %v4315
    %4317 = vmatprep.mubr.f32.mxu0 0.0
    %4318 = vmatmul.mubr.f32.gmra.mrb[0].mxu0 %v3470
    %v4319 = vpop.f32.mrb[0].mxu0
    %v4320 = vadd.f32 %v3981, %v4319
    %v4321 = vpop.f32.mrb[0].mxu0
    %v4322 = vadd.f32 %v3983, %v4321
    %4323 = vmatprep.mubr.f32.mxu0 0.0
    %4324 = vmatmul.mubr.f32.gmra.mrb[0].mxu0 %v3471
    %v4325 = vpop.f32.mrb[0].mxu0
    %v4326 = vadd.f32 %v3987, %v4325
    %v4327 = vpop.f32.mrb[0].mxu0
    %v4328 = vadd.f32 %v3989, %v4327
    %4329 = vmatprep.mubr.f32.mxu0 0.0
    %4330 = vmatmul.mubr.f32.gmra.mrb[0].mxu0 %v3472
    %v4331 = vpop.f32.mrb[0].mxu0
    %v4332 = vadd.f32 %v3993, %v4331
    %v4333 = vpop.f32.mrb[0].mxu0
    %v4334 = vadd.f32 %v3995, %v4333
    %4335 = vmatprep.mubr.f32.mxu0 0.0
    %4336 = vmatmul.mubr.f32.gmra.mrb[0].mxu0 %v3473
    %v4337 = vpop.f32.mrb[0].mxu0
    %v4338 = vadd.f32 %v3999, %v4337
    %v4339 = vpop.f32.mrb[0].mxu0
    %v4340 = vadd.f32 %v4001, %v4339
    %4341 = vmatprep.mubr.f32.mxu0 0.0
    %4342 = vmatmul.mubr.f32.gmra.mrb[0].mxu0 %v3474
    %v4343 = vpop.f32.mrb[0].mxu0
    %v4344 = vadd.f32 %v4005, %v4343
    %v4345 = vpop.f32.mrb[0].mxu0
    %v4346 = vadd.f32 %v4007, %v4345
    %4347 = vmatprep.mubr.f32.mxu0 0.0
    %4348 = vmatmul.mubr.f32.gmra.mrb[0].mxu0 %v3475
    %v4349 = vpop.f32.mrb[0].mxu0
    %v4350 = vadd.f32 %v4011, %v4349
    %v4351 = vpop.f32.mrb[0].mxu0
    %v4352 = vadd.f32 %v4013, %v4351
    %4353 = vdwg.mxu0
    %v4354 = vld [vmem:[%s8] sm:$0x3f]
    %v4356 = vlaneseq
    %v4357 = vshrl.u32 %v4356, 7
    %v4358 = vsub.s32 0, %v4357
    %v4359 = vrot.slane %v4354, %v4358
    %v4360 = vlaneseq
    %v4361 = vshrl.u32 %v4360, 7
    %v4362 = vsub.s32 1, %v4361
    %v4363 = vrot.slane %v4354, %v4362
    %v4364 = vlaneseq
    %v4365 = vshrl.u32 %v4364, 7
    %v4366 = vsub.s32 2, %v4365
    %v4367 = vrot.slane %v4354, %v4366
    %v4368 = vlaneseq
    %v4369 = vshrl.u32 %v4368, 7
    %v4370 = vsub.s32 3, %v4369
    %v4371 = vrot.slane %v4354, %v4370
    %v4372 = vlaneseq
    %v4373 = vshrl.u32 %v4372, 7
    %v4374 = vsub.s32 4, %v4373
    %v4375 = vrot.slane %v4354, %v4374
    %v4376 = vlaneseq
    %v4377 = vshrl.u32 %v4376, 7
    %v4378 = vsub.s32 5, %v4377
    %v4379 = vrot.slane %v4354, %v4378
    %v4386 = vadd.f32 %v4082, %v4359
    %v4387 = vadd.f32 %v4084, %v4363
    %v4388 = vadd.f32 %v4195, %v4367
    %v4389 = vadd.f32 %v4197, %v4371
    %v4390 = vadd.f32 %v4308, %v4375
    %v4391 = vadd.f32 %v4310, %v4379
    %v4392 = vadd.f32 %v4088, %v4359
    %v4393 = vadd.f32 %v4090, %v4363
    %v4394 = vadd.f32 %v4201, %v4367
    %v4395 = vadd.f32 %v4203, %v4371
    %v4396 = vadd.f32 %v4314, %v4375
    %v4397 = vadd.f32 %v4316, %v4379
    %v4398 = vadd.f32 %v4094, %v4359
    %v4399 = vadd.f32 %v4096, %v4363
    %v4400 = vadd.f32 %v4207, %v4367
    %v4401 = vadd.f32 %v4209, %v4371
    %v4402 = vadd.f32 %v4320, %v4375
    %v4403 = vadd.f32 %v4322, %v4379
    %v4404 = vadd.f32 %v4100, %v4359
    %v4405 = vadd.f32 %v4102, %v4363
    %v4406 = vadd.f32 %v4213, %v4367
    %v4407 = vadd.f32 %v4215, %v4371
    %v4408 = vadd.f32 %v4326, %v4375
    %v4409 = vadd.f32 %v4328, %v4379
    %v4410 = vadd.f32 %v4106, %v4359
    %v4411 = vadd.f32 %v4108, %v4363
    %v4412 = vadd.f32 %v4219, %v4367
    %v4413 = vadd.f32 %v4221, %v4371
    %v4414 = vadd.f32 %v4332, %v4375
    %v4415 = vadd.f32 %v4334, %v4379
    %v4416 = vadd.f32 %v4112, %v4359
    %v4417 = vadd.f32 %v4114, %v4363
    %v4418 = vadd.f32 %v4225, %v4367
    %v4419 = vadd.f32 %v4227, %v4371
    %v4420 = vadd.f32 %v4338, %v4375
    %v4421 = vadd.f32 %v4340, %v4379
    %v4422 = vadd.f32 %v4118, %v4359
    %v4423 = vadd.f32 %v4120, %v4363
    %v4424 = vadd.f32 %v4231, %v4367
    %v4425 = vadd.f32 %v4233, %v4371
    %v4426 = vadd.f32 %v4344, %v4375
    %v4427 = vadd.f32 %v4346, %v4379
    %v4428 = vadd.f32 %v4124, %v4359
    %v4429 = vadd.f32 %v4126, %v4363
    %v4430 = vadd.f32 %v4237, %v4367
    %v4431 = vadd.f32 %v4239, %v4371
    %v4432 = vadd.f32 %v4350, %v4375
    %v4433 = vadd.f32 %v4352, %v4379
    %4434 = vst [vmem:[#allocation2] sm:$0xff] %v4386
    %4435 = vst [vmem:[#allocation2 + $0x8] sm:$0xff] %v4387
    %4436 = vst [vmem:[#allocation2 + $0x10] sm:$0xff] %v4388
    %4437 = vst [vmem:[#allocation2 + $0x18] sm:$0xff] %v4392
    %4438 = vst [vmem:[#allocation2 + $0x20] sm:$0xff] %v4393
    %4439 = vst [vmem:[#allocation2 + $0x28] sm:$0xff] %v4394
    %4440 = vst [vmem:[#allocation2 + $0x30] sm:$0xff] %v4398
    %4441 = vst [vmem:[#allocation2 + $0x38] sm:$0xff] %v4399
    %4442 = vst [vmem:[#allocation2 + $0x40] sm:$0xff] %v4400
    %4443 = vst [vmem:[#allocation2 + $0x48] sm:$0xff] %v4404
    %4444 = vst [vmem:[#allocation2 + $0x50] sm:$0xff] %v4405
    %4445 = vst [vmem:[#allocation2 + $0x58] sm:$0xff] %v4406
    %4446 = vst [vmem:[#allocation2 + $0x60] sm:$0xff] %v4410
    %4447 = vst [vmem:[#allocation2 + $0x68] sm:$0xff] %v4411
    %4448 = vst [vmem:[#allocation2 + $0x70] sm:$0xff] %v4412
    %4449 = vst [vmem:[#allocation2 + $0x78] sm:$0xff] %v4416
    %4450 = vst [vmem:[#allocation2 + $0x80] sm:$0xff] %v4417
    %4451 = vst [vmem:[#allocation2 + $0x88] sm:$0xff] %v4418
    %4452 = vst [vmem:[#allocation2 + $0x90] sm:$0xff] %v4422
    %4453 = vst [vmem:[#allocation2 + $0x98] sm:$0xff] %v4423
    %4454 = vst [vmem:[#allocation2 + $0xa0] sm:$0xff] %v4424
    %4455 = vst [vmem:[#allocation2 + $0xa8] sm:$0xff] %v4428
    %4456 = vst [vmem:[#allocation2 + $0xb0] sm:$0xff] %v4429
    %4457 = vst [vmem:[#allocation2 + $0xb8] sm:$0xff] %v4430
    %4458 = vst [vmem:[#allocation3] sm:$0xff] %v4389
    %4459 = vst [vmem:[#allocation3 + $0x8] sm:$0xff] %v4390
    %4460 = vst [vmem:[#allocation3 + $0x10] sm:$0xff] %v4391
    %4461 = vst [vmem:[#allocation3 + $0x18] sm:$0xff] %v4395
    %4462 = vst [vmem:[#allocation3 + $0x20] sm:$0xff] %v4396
    %4463 = vst [vmem:[#allocation3 + $0x28] sm:$0xff] %v4397
    %4464 = vst [vmem:[#allocation3 + $0x30] sm:$0xff] %v4401
    %4465 = vst [vmem:[#allocation3 + $0x38] sm:$0xff] %v4402
    %4466 = vst [vmem:[#allocation3 + $0x40] sm:$0xff] %v4403
    %4467 = vst [vmem:[#allocation3 + $0x48] sm:$0xff] %v4407
    %4468 = vst [vmem:[#allocation3 + $0x50] sm:$0xff] %v4408
    %4469 = vst [vmem:[#allocation3 + $0x58] sm:$0xff] %v4409
    %4470 = vst [vmem:[#allocation3 + $0x60] sm:$0xff] %v4413
    %4471 = vst [vmem:[#allocation3 + $0x68] sm:$0xff] %v4414
    %4472 = vst [vmem:[#allocation3 + $0x70] sm:$0xff] %v4415
    %4473 = vst [vmem:[#allocation3 + $0x78] sm:$0xff] %v4419
    %4474 = vst [vmem:[#allocation3 + $0x80] sm:$0xff] %v4420
    %4475 = vst [vmem:[#allocation3 + $0x88] sm:$0xff] %v4421
    %4476 = vst [vmem:[#allocation3 + $0x90] sm:$0xff] %v4425
    %4477 = vst [vmem:[#allocation3 + $0x98] sm:$0xff] %v4426
    %4478 = vst [vmem:[#allocation3 + $0xa0] sm:$0xff] %v4427
    %4479 = vst [vmem:[#allocation3 + $0xa8] sm:$0xff] %v4431
    %4480 = vst [vmem:[#allocation3 + $0xb0] sm:$0xff] %v4432
    %4481 = vst [vmem:[#allocation3 + $0xb8] sm:$0xff] %v4433
    %v4482 = vld [vmem:[#allocation13] sm:$0xff]
    %v4483 = vld [vmem:[#allocation13 + $0x8] sm:$0xff]
    %v4484 = vld [vmem:[#allocation13 + $0x10] sm:$0xff]
    %v4485 = vld [vmem:[#allocation13 + $0x18] sm:$0xff]
    %v4486 = vld [vmem:[#allocation13 + $0x20] sm:$0xff]
    %v4487 = vld [vmem:[#allocation13 + $0x28] sm:$0xff]
    %v4488 = vld [vmem:[#allocation13 + $0x30] sm:$0xff]
    %v4489 = vld [vmem:[#allocation13 + $0x38] sm:$0xff]
    %v4490 = vld [vmem:[#allocation13 + $0x40] sm:$0xff]
    %v4491 = vld [vmem:[#allocation13 + $0x48] sm:$0xff]
    %v4492 = vld [vmem:[#allocation13 + $0x50] sm:$0xff]
    %v4493 = vld [vmem:[#allocation13 + $0x58] sm:$0xff]
    %v4494 = vld [vmem:[#allocation13 + $0x60] sm:$0xff]
    %v4495 = vld [vmem:[#allocation13 + $0x68] sm:$0xff]
    %v4496 = vld [vmem:[#allocation13 + $0x70] sm:$0xff]
    %v4497 = vld [vmem:[#allocation13 + $0x78] sm:$0xff]
    %v4498 = vld [vmem:[#allocation13 + $0x80] sm:$0xff]
    %v4499 = vld [vmem:[#allocation13 + $0x88] sm:$0xff]
    %v4500 = vld [vmem:[#allocation13 + $0x90] sm:$0xff]
    %v4501 = vld [vmem:[#allocation13 + $0x98] sm:$0xff]
    %v4502 = vld [vmem:[#allocation13 + $0xa0] sm:$0xff]
    %v4503 = vld [vmem:[#allocation13 + $0xa8] sm:$0xff]
    %v4504 = vld [vmem:[#allocation13 + $0xb0] sm:$0xff]
    %v4505 = vld [vmem:[#allocation13 + $0xb8] sm:$0xff]
    %v4506 = vld [vmem:[#allocation13 + $0xc0] sm:$0xff]
    %v4507 = vld [vmem:[#allocation13 + $0xc8] sm:$0xff]
    %v4508 = vld [vmem:[#allocation13 + $0xd0] sm:$0xff]
    %v4509 = vld [vmem:[#allocation13 + $0xd8] sm:$0xff]
    %v4510 = vld [vmem:[#allocation13 + $0xe0] sm:$0xff]
    %v4511 = vld [vmem:[#allocation13 + $0xe8] sm:$0xff]
    %v4512 = vld [vmem:[#allocation13 + $0xf0] sm:$0xff]
    %v4513 = vld [vmem:[#allocation13 + $0xf8] sm:$0xff]
    %v4514 = vld [vmem:[#allocation13 + $0x100] sm:$0xff]
    %v4515 = vld [vmem:[#allocation13 + $0x108] sm:$0xff]
    %v4516 = vld [vmem:[#allocation13 + $0x110] sm:$0xff]
    %v4517 = vld [vmem:[#allocation13 + $0x118] sm:$0xff]
    %v4518 = vld [vmem:[#allocation13 + $0x120] sm:$0xff]
    %v4519 = vld [vmem:[#allocation13 + $0x128] sm:$0xff]
    %v4520 = vld [vmem:[#allocation13 + $0x130] sm:$0xff]
    %v4521 = vld [vmem:[#allocation13 + $0x138] sm:$0xff]
    %v4522 = vld [vmem:[#allocation13 + $0x140] sm:$0xff]
    %v4523 = vld [vmem:[#allocation13 + $0x148] sm:$0xff]
    %v4524 = vld [vmem:[#allocation13 + $0x150] sm:$0xff]
    %v4525 = vld [vmem:[#allocation13 + $0x158] sm:$0xff]
    %v4526 = vld [vmem:[#allocation13 + $0x160] sm:$0xff]
    %v4527 = vld [vmem:[#allocation13 + $0x168] sm:$0xff]
    %v4528 = vld [vmem:[#allocation13 + $0x170] sm:$0xff]
    %v4529 = vld [vmem:[#allocation13 + $0x178] sm:$0xff]
    %v4530 = vld [vmem:[#allocation14] sm:$0xff]
    %v4531 = vld [vmem:[#allocation14 + $0x8] sm:$0xff]
    %v4532 = vld [vmem:[#allocation14 + $0x10] sm:$0xff]
    %v4533 = vld [vmem:[#allocation14 + $0x18] sm:$0xff]
    %v4534 = vld [vmem:[#allocation14 + $0x20] sm:$0xff]
    %v4535 = vld [vmem:[#allocation14 + $0x28] sm:$0xff]
    %v4536 = vld [vmem:[#allocation14 + $0x30] sm:$0xff]
    %v4537 = vld [vmem:[#allocation14 + $0x38] sm:$0xff]
    %v4538 = vld [vmem:[#allocation14 + $0x40] sm:$0xff]
    %v4539 = vld [vmem:[#allocation14 + $0x48] sm:$0xff]
    %v4540 = vld [vmem:[#allocation14 + $0x50] sm:$0xff]
    %v4541 = vld [vmem:[#allocation14 + $0x58] sm:$0xff]
    %v4542 = vld [vmem:[#allocation14 + $0x60] sm:$0xff]
    %v4543 = vld [vmem:[#allocation14 + $0x68] sm:$0xff]
    %v4544 = vld [vmem:[#allocation14 + $0x70] sm:$0xff]
    %v4545 = vld [vmem:[#allocation14 + $0x78] sm:$0xff]
    %v4546 = vld [vmem:[#allocation14 + $0x80] sm:$0xff]
    %v4547 = vld [vmem:[#allocation14 + $0x88] sm:$0xff]
    %v4548 = vld [vmem:[#allocation14 + $0x90] sm:$0xff]
    %v4549 = vld [vmem:[#allocation14 + $0x98] sm:$0xff]
    %v4550 = vld [vmem:[#allocation14 + $0xa0] sm:$0xff]
    %v4551 = vld [vmem:[#allocation14 + $0xa8] sm:$0xff]
    %v4552 = vld [vmem:[#allocation14 + $0xb0] sm:$0xff]
    %v4553 = vld [vmem:[#allocation14 + $0xb8] sm:$0xff]
    %v4554 = vld [vmem:[#allocation14 + $0xc0] sm:$0xff]
    %v4555 = vld [vmem:[#allocation14 + $0xc8] sm:$0xff]
    %v4556 = vld [vmem:[#allocation14 + $0xd0] sm:$0xff]
    %v4557 = vld [vmem:[#allocation14 + $0xd8] sm:$0xff]
    %v4558 = vld [vmem:[#allocation14 + $0xe0] sm:$0xff]
    %v4559 = vld [vmem:[#allocation14 + $0xe8] sm:$0xff]
    %v4560 = vld [vmem:[#allocation14 + $0xf0] sm:$0xff]
    %v4561 = vld [vmem:[#allocation14 + $0xf8] sm:$0xff]
    %v4562 = vld [vmem:[#allocation14 + $0x100] sm:$0xff]
    %v4563 = vld [vmem:[#allocation14 + $0x108] sm:$0xff]
    %v4564 = vld [vmem:[#allocation14 + $0x110] sm:$0xff]
    %v4565 = vld [vmem:[#allocation14 + $0x118] sm:$0xff]
    %v4566 = vld [vmem:[#allocation14 + $0x120] sm:$0xff]
    %v4567 = vld [vmem:[#allocation14 + $0x128] sm:$0xff]
    %v4568 = vld [vmem:[#allocation14 + $0x130] sm:$0xff]
    %v4569 = vld [vmem:[#allocation14 + $0x138] sm:$0xff]
    %v4570 = vld [vmem:[#allocation14 + $0x140] sm:$0xff]
    %v4571 = vld [vmem:[#allocation14 + $0x148] sm:$0xff]
    %v4572 = vld [vmem:[#allocation14 + $0x150] sm:$0xff]
    %v4573 = vld [vmem:[#allocation14 + $0x158] sm:$0xff]
    %v4574 = vld [vmem:[#allocation14 + $0x160] sm:$0xff]
    %v4575 = vld [vmem:[#allocation14 + $0x168] sm:$0xff]
    %v4576 = vld [vmem:[#allocation14 + $0x170] sm:$0xff]
    %v4577 = vld [vmem:[#allocation14 + $0x178] sm:$0xff]
    %v4578 = vld [vmem:[%s10] sm:$0x1]
    %v4579 = vld [vmem:[%s12] sm:$0x1]
    %4580 = vmatprep.subr.mxu0 %v4483
    %4581 = vmatpush1.msra.mxu0 %v4482
    %4582 = vmatprep.subr.mxu0 %v4486
    %4583 = vmatpush1.msra.mxu0 %v4485
    %4584 = vmatprep.subr.mxu0 %v4489
    %4585 = vmatpush1.msra.mxu0 %v4488
    %4586 = vmatprep.subr.mxu0 %v4492
    %4587 = vmatpush1.msra.mxu0 %v4491
    %4588 = vmatprep.subr.mxu0 %v4495
    %4589 = vmatpush1.msra.mxu0 %v4494
    %4590 = vmatprep.subr.mxu0 %v4498
    %4591 = vmatpush1.msra.mxu0 %v4497
    %4592 = vmatprep.subr.mxu0 %v4501
    %4593 = vmatpush1.msra.mxu0 %v4500
    %4594 = vmatprep.subr.mxu0 %v4504
    %4595 = vmatpush1.msra.mxu0 %v4503
    %4596 = vmatprep.subr.mxu0 %v4507
    %4597 = vmatpush1.msra.mxu0 %v4506
    %4598 = vmatprep.subr.mxu0 %v4510
    %4599 = vmatpush1.msra.mxu0 %v4509
    %4600 = vmatprep.subr.mxu0 %v4513
    %4601 = vmatpush1.msra.mxu0 %v4512
    %4602 = vmatprep.subr.mxu0 %v4516
    %4603 = vmatpush1.msra.mxu0 %v4515
    %4604 = vmatprep.subr.mxu0 %v4519
    %4605 = vmatpush1.msra.mxu0 %v4518
    %4606 = vmatprep.subr.mxu0 %v4522
    %4607 = vmatpush1.msra.mxu0 %v4521
    %4608 = vmatprep.subr.mxu0 %v4525
    %4609 = vmatpush1.msra.mxu0 %v4524
    %4610 = vmatprep.subr.mxu0 %v4528
    %4611 = vmatpush1.msra.mxu0 %v4527
    %4612 = vmatprep.subr.mxu0 0.0
    %4613 = vmatpush1.msra.mxu0 0.0
    %4614 = vmatprep.subr.mxu0 0.0
    %4615 = vmatpush1.msra.mxu0 0.0
    %4616 = vmatprep.subr.mxu0 0.0
    %4617 = vmatpush1.msra.mxu0 0.0
    %4618 = vmatprep.subr.mxu0 0.0
    %4619 = vmatpush1.msra.mxu0 0.0
    %4620 = vmatprep.subr.mxu0 0.0
    %4621 = vmatpush1.msra.mxu0 0.0
    %4622 = vmatprep.subr.mxu0 0.0
    %4623 = vmatpush1.msra.mxu0 0.0
    %4624 = vmatprep.subr.mxu0 0.0
    %4625 = vmatpush1.msra.mxu0 0.0
    %4626 = vmatprep.subr.mxu0 0.0
    %4627 = vmatpush1.msra.mxu0 0.0
    %4628 = vmatprep.subr.mxu0 0.0
    %4629 = vmatpush1.msra.mxu0 0.0
    %4630 = vmatprep.subr.mxu0 0.0
    %4631 = vmatpush1.msra.mxu0 0.0
    %4632 = vmatprep.subr.mxu0 0.0
    %4633 = vmatpush1.msra.mxu0 0.0
    %4634 = vmatprep.subr.mxu0 0.0
    %4635 = vmatpush1.msra.mxu0 0.0
    %4636 = vmatprep.subr.mxu0 0.0
    %4637 = vmatpush1.msra.mxu0 0.0
    %4638 = vmatprep.subr.mxu0 0.0
    %4639 = vmatpush1.msra.mxu0 0.0
    %4640 = vmatprep.subr.mxu0 0.0
    %4641 = vmatpush1.msra.mxu0 0.0
    %4642 = vmatprep.subr.mxu0 0.0
    %4643 = vmatpush1.msra.mxu0 0.0
    %4644 = vmatprep.mubr.f32.mxu0 0.0
    %4645 = vmatmul.mubr.f32.gmra.mrb[0].mxu0 0.0
    %v4646 = vpop.f32.mrb[0].mxu0
    %v4647 = vadd.f32 0.0, %v4646
    %v4648 = vpop.f32.mrb[0].mxu0
    %v4649 = vadd.f32 0.0, %v4648
    %4650 = vdwg.mxu0
    %4651 = vmatprep.subr.mxu0 0.0
    %4652 = vmatpush1.msra.mxu0 %v4484
    %4653 = vmatprep.subr.mxu0 0.0
    %4654 = vmatpush1.msra.mxu0 %v4487
    %4655 = vmatprep.subr.mxu0 0.0
    %4656 = vmatpush1.msra.mxu0 %v4490
    %4657 = vmatprep.subr.mxu0 0.0
    %4658 = vmatpush1.msra.mxu0 %v4493
    %4659 = vmatprep.subr.mxu0 0.0
    %4660 = vmatpush1.msra.mxu0 %v4496
    %4661 = vmatprep.subr.mxu0 0.0
    %4662 = vmatpush1.msra.mxu0 %v4499
    %4663 = vmatprep.subr.mxu0 0.0
    %4664 = vmatpush1.msra.mxu0 %v4502
    %4665 = vmatprep.subr.mxu0 0.0
    %4666 = vmatpush1.msra.mxu0 %v4505
    %4667 = vmatprep.subr.mxu0 0.0
    %4668 = vmatpush1.msra.mxu0 %v4508
    %4669 = vmatprep.subr.mxu0 0.0
    %4670 = vmatpush1.msra.mxu0 %v4511
    %4671 = vmatprep.subr.mxu0 0.0
    %4672 = vmatpush1.msra.mxu0 %v4514
    %4673 = vmatprep.subr.mxu0 0.0
    %4674 = vmatpush1.msra.mxu0 %v4517
    %4675 = vmatprep.subr.mxu0 0.0
    %4676 = vmatpush1.msra.mxu0 %v4520
    %4677 = vmatprep.subr.mxu0 0.0
    %4678 = vmatpush1.msra.mxu0 %v4523
    %4679 = vmatprep.subr.mxu0 0.0
    %4680 = vmatpush1.msra.mxu0 %v4526
    %4681 = vmatprep.subr.mxu0 0.0
    %4682 = vmatpush1.msra.mxu0 %v4529
    %4683 = vmatprep.subr.mxu0 0.0
    %4684 = vmatpush1.msra.mxu0 0.0
    %4685 = vmatprep.subr.mxu0 0.0
    %4686 = vmatpush1.msra.mxu0 0.0
    %4687 = vmatprep.subr.mxu0 0.0
    %4688 = vmatpush1.msra.mxu0 0.0
    %4689 = vmatprep.subr.mxu0 0.0
    %4690 = vmatpush1.msra.mxu0 0.0
    %4691 = vmatprep.subr.mxu0 0.0
    %4692 = vmatpush1.msra.mxu0 0.0
    %4693 = vmatprep.subr.mxu0 0.0
    %4694 = vmatpush1.msra.mxu0 0.0
    %4695 = vmatprep.subr.mxu0 0.0
    %4696 = vmatpush1.msra.mxu0 0.0
    %4697 = vmatprep.subr.mxu0 0.0
    %4698 = vmatpush1.msra.mxu0 0.0
    %4699 = vmatprep.subr.mxu0 0.0
    %4700 = vmatpush1.msra.mxu0 0.0
    %4701 = vmatprep.subr.mxu0 0.0
    %4702 = vmatpush1.msra.mxu0 0.0
    %4703 = vmatprep.subr.mxu0 0.0
    %4704 = vmatpush1.msra.mxu0 0.0
    %4705 = vmatprep.subr.mxu0 0.0
    %4706 = vmatpush1.msra.mxu0 0.0
    %4707 = vmatprep.subr.mxu0 0.0
    %4708 = vmatpush1.msra.mxu0 0.0
    %4709 = vmatprep.subr.mxu0 0.0
    %4710 = vmatpush1.msra.mxu0 0.0
    %4711 = vmatprep.subr.mxu0 0.0
    %4712 = vmatpush1.msra.mxu0 0.0
    %4713 = vmatprep.subr.mxu0 0.0
    %4714 = vmatpush1.msra.mxu0 0.0
    %4715 = vmatprep.mubr.f32.mxu0 0.0
    %4716 = vmatmul.mubr.f32.gmra.mrb[0].mxu0 0.0
    %v4717 = vpop.f32.mrb[0].mxu0
    %v4718 = vadd.f32 0.0, %v4717
    %v4719 = vpop.f32.mrb[0].mxu0
    %4720 = vdwg.mxu0
    %4721 = vmatprep.subr.mxu0 %v4531
    %4722 = vmatpush1.msra.mxu0 %v4530
    %4723 = vmatprep.subr.mxu0 %v4534
    %4724 = vmatpush1.msra.mxu0 %v4533
    %4725 = vmatprep.subr.mxu0 %v4537
    %4726 = vmatpush1.msra.mxu0 %v4536
    %4727 = vmatprep.subr.mxu0 %v4540
    %4728 = vmatpush1.msra.mxu0 %v4539
    %4729 = vmatprep.subr.mxu0 %v4543
    %4730 = vmatpush1.msra.mxu0 %v4542
    %4731 = vmatprep.subr.mxu0 %v4546
    %4732 = vmatpush1.msra.mxu0 %v4545
    %4733 = vmatprep.subr.mxu0 %v4549
    %4734 = vmatpush1.msra.mxu0 %v4548
    %4735 = vmatprep.subr.mxu0 %v4552
    %4736 = vmatpush1.msra.mxu0 %v4551
    %4737 = vmatprep.subr.mxu0 %v4555
    %4738 = vmatpush1.msra.mxu0 %v4554
    %4739 = vmatprep.subr.mxu0 %v4558
    %4740 = vmatpush1.msra.mxu0 %v4557
    %4741 = vmatprep.subr.mxu0 %v4561
    %4742 = vmatpush1.msra.mxu0 %v4560
    %4743 = vmatprep.subr.mxu0 %v4564
    %4744 = vmatpush1.msra.mxu0 %v4563
    %4745 = vmatprep.subr.mxu0 %v4567
    %4746 = vmatpush1.msra.mxu0 %v4566
    %4747 = vmatprep.subr.mxu0 %v4570
    %4748 = vmatpush1.msra.mxu0 %v4569
    %4749 = vmatprep.subr.mxu0 %v4573
    %4750 = vmatpush1.msra.mxu0 %v4572
    %4751 = vmatprep.subr.mxu0 %v4576
    %4752 = vmatpush1.msra.mxu0 %v4575
    %4753 = vmatprep.subr.mxu0 0.0
    %4754 = vmatpush1.msra.mxu0 0.0
    %4755 = vmatprep.subr.mxu0 0.0
    %4756 = vmatpush1.msra.mxu0 0.0
    %4757 = vmatprep.subr.mxu0 0.0
    %4758 = vmatpush1.msra.mxu0 0.0
    %4759 = vmatprep.subr.mxu0 0.0
    %4760 = vmatpush1.msra.mxu0 0.0
    %4761 = vmatprep.subr.mxu0 0.0
    %4762 = vmatpush1.msra.mxu0 0.0
    %4763 = vmatprep.subr.mxu0 0.0
    %4764 = vmatpush1.msra.mxu0 0.0
    %4765 = vmatprep.subr.mxu0 0.0
    %4766 = vmatpush1.msra.mxu0 0.0
    %4767 = vmatprep.subr.mxu0 0.0
    %4768 = vmatpush1.msra.mxu0 0.0
    %4769 = vmatprep.subr.mxu0 0.0
    %4770 = vmatpush1.msra.mxu0 0.0
    %4771 = vmatprep.subr.mxu0 0.0
    %4772 = vmatpush1.msra.mxu0 0.0
    %4773 = vmatprep.subr.mxu0 0.0
    %4774 = vmatpush1.msra.mxu0 0.0
    %4775 = vmatprep.subr.mxu0 0.0
    %4776 = vmatpush1.msra.mxu0 0.0
    %4777 = vmatprep.subr.mxu0 0.0
    %4778 = vmatpush1.msra.mxu0 0.0
    %4779 = vmatprep.subr.mxu0 0.0
    %4780 = vmatpush1.msra.mxu0 0.0
    %4781 = vmatprep.subr.mxu0 0.0
    %4782 = vmatpush1.msra.mxu0 0.0
    %4783 = vmatprep.subr.mxu0 0.0
    %4784 = vmatpush1.msra.mxu0 0.0
    %4785 = vmatprep.mubr.f32.mxu0 0.0
    %4786 = vmatmul.mubr.f32.gmra.mrb[0].mxu0 0.0
    %v4787 = vpop.f32.mrb[0].mxu0
    %v4788 = vadd.f32 0.0, %v4787
    %v4789 = vpop.f32.mrb[0].mxu0
    %v4790 = vadd.f32 0.0, %v4789
    %4791 = vdwg.mxu0
    %4792 = vmatprep.subr.mxu0 0.0
    %4793 = vmatpush1.msra.mxu0 %v4532
    %4794 = vmatprep.subr.mxu0 0.0
    %4795 = vmatpush1.msra.mxu0 %v4535
    %4796 = vmatprep.subr.mxu0 0.0
    %4797 = vmatpush1.msra.mxu0 %v4538
    %4798 = vmatprep.subr.mxu0 0.0
    %4799 = vmatpush1.msra.mxu0 %v4541
    %4800 = vmatprep.subr.mxu0 0.0
    %4801 = vmatpush1.msra.mxu0 %v4544
    %4802 = vmatprep.subr.mxu0 0.0
    %4803 = vmatpush1.msra.mxu0 %v4547
    %4804 = vmatprep.subr.mxu0 0.0
    %4805 = vmatpush1.msra.mxu0 %v4550
    %4806 = vmatprep.subr.mxu0 0.0
    %4807 = vmatpush1.msra.mxu0 %v4553
    %4808 = vmatprep.subr.mxu0 0.0
    %4809 = vmatpush1.msra.mxu0 %v4556
    %4810 = vmatprep.subr.mxu0 0.0
    %4811 = vmatpush1.msra.mxu0 %v4559
    %4812 = vmatprep.subr.mxu0 0.0
    %4813 = vmatpush1.msra.mxu0 %v4562
    %4814 = vmatprep.subr.mxu0 0.0
    %4815 = vmatpush1.msra.mxu0 %v4565
    %4816 = vmatprep.subr.mxu0 0.0
    %4817 = vmatpush1.msra.mxu0 %v4568
    %4818 = vmatprep.subr.mxu0 0.0
    %4819 = vmatpush1.msra.mxu0 %v4571
    %4820 = vmatprep.subr.mxu0 0.0
    %4821 = vmatpush1.msra.mxu0 %v4574
    %4822 = vmatprep.subr.mxu0 0.0
    %4823 = vmatpush1.msra.mxu0 %v4577
    %4824 = vmatprep.subr.mxu0 0.0
    %4825 = vmatpush1.msra.mxu0 0.0
    %4826 = vmatprep.subr.mxu0 0.0
    %4827 = vmatpush1.msra.mxu0 0.0
    %4828 = vmatprep.subr.mxu0 0.0
    %4829 = vmatpush1.msra.mxu0 0.0
    %4830 = vmatprep.subr.mxu0 0.0
    %4831 = vmatpush1.msra.mxu0 0.0
    %4832 = vmatprep.subr.mxu0 0.0
    %4833 = vmatpush1.msra.mxu0 0.0
    %4834 = vmatprep.subr.mxu0 0.0
    %4835 = vmatpush1.msra.mxu0 0.0
    %4836 = vmatprep.subr.mxu0 0.0
    %4837 = vmatpush1.msra.mxu0 0.0
    %4838 = vmatprep.subr.mxu0 0.0
    %4839 = vmatpush1.msra.mxu0 0.0
    %4840 = vmatprep.subr.mxu0 0.0
    %4841 = vmatpush1.msra.mxu0 0.0
    %4842 = vmatprep.subr.mxu0 0.0
    %4843 = vmatpush1.msra.mxu0 0.0
    %4844 = vmatprep.subr.mxu0 0.0
    %4845 = vmatpush1.msra.mxu0 0.0
    %4846 = vmatprep.subr.mxu0 0.0
    %4847 = vmatpush1.msra.mxu0 0.0
    %4848 = vmatprep.subr.mxu0 0.0
    %4849 = vmatpush1.msra.mxu0 0.0
    %4850 = vmatprep.subr.mxu0 0.0
    %4851 = vmatpush1.msra.mxu0 0.0
    %4852 = vmatprep.subr.mxu0 0.0
    %4853 = vmatpush1.msra.mxu0 0.0
    %4854 = vmatprep.subr.mxu0 0.0
    %4855 = vmatpush1.msra.mxu0 0.0
    %4856 = vmatprep.mubr.f32.mxu0 0.0
    %4857 = vmatmul.mubr.f32.gmra.mrb[0].mxu0 0.0
    %v4858 = vpop.f32.mrb[0].mxu0
    %v4859 = vadd.f32 0.0, %v4858
    %v4860 = vpop.f32.mrb[0].mxu0
    %4861 = vdwg.mxu0
    %v4862 = vld [vmem:[#allocation2] sm:$0xff]
    %v4863 = vld [vmem:[#allocation2 + $0x8] sm:$0xff]
    %v4864 = vld [vmem:[#allocation2 + $0x10] sm:$0xff]
    %v4865 = vadd.f32 %v4862, %v4647
    %v4866 = vxor.u32 %v4865, 2147483648
    %v4867 = vmul.f32 %v4866, 1.442695
    %v4868 = vpow.pop %v4867
    %v4869 = vadd.f32 %v4868, 1.0
    %v4870 = vrcp.pop %v4869
    %v4871 = vmul.f32 1.0, %v4870
    %v4872 = vadd.f32 %v4863, %v4649
    %v4873 = vxor.u32 %v4872, 2147483648
    %v4874 = vmul.f32 %v4873, 1.442695
    %v4875 = vpow.pop %v4874
    %v4876 = vadd.f32 %v4875, 1.0
    %v4877 = vrcp.pop %v4876
    %v4878 = vmul.f32 1.0, %v4877
    %v4880 = vlaneseq
    %v4881 = vshrl.u32 %v4880, 7
    %v4882 = vsub.s32 0, %v4881
    %v4883 = vrot.slane %v4578, %v4882
    %v4885 = vadd.f32 %v4718, %v4883
    %v4886 = vmul.f32 %v4871, %v4885
    %v4887 = vadd.f32 %v4864, %v4886
    %v4888 = vtanh.pop %v4887
    %v4889 = vsub.f32 1.0, %v4878
    %v4890 = vmul.f32 %v4889, %v4888
    %v4891 = vmul.f32 %v4878, 0.0
    %v4892 = vadd.f32 %v4890, %v4891
    %v4893 = vld [vmem:[%s1069] sm:$0xff]
    %v4894 = vld [vmem:[%s1069 + $0x8] sm:$0xff]
    %v4895 = vld [vmem:[%s1069 + $0x10] sm:$0xff]
    %v4896 = vadd.f32 %v4893, %v4788
    %v4897 = vxor.u32 %v4896, 2147483648
    %v4898 = vmul.f32 %v4897, 1.442695
    %v4899 = vpow.pop %v4898
    %v4900 = vadd.f32 %v4899, 1.0
    %v4901 = vrcp.pop %v4900
    %v4902 = vmul.f32 1.0, %v4901
    %v4903 = vadd.f32 %v4894, %v4790
    %v4904 = vxor.u32 %v4903, 2147483648
    %v4905 = vmul.f32 %v4904, 1.442695
    %v4906 = vpow.pop %v4905
    %v4907 = vadd.f32 %v4906, 1.0
    %v4908 = vrcp.pop %v4907
    %v4909 = vmul.f32 1.0, %v4908
    %v4911 = vlaneseq
    %v4912 = vshrl.u32 %v4911, 7
    %v4913 = vsub.s32 0, %v4912
    %v4914 = vrot.slane %v4579, %v4913
    %v4916 = vadd.f32 %v4859, %v4914
    %v4917 = vmul.f32 %v4902, %v4916
    %v4918 = vadd.f32 %v4895, %v4917
    %v4919 = vtanh.pop %v4918
    %v4920 = vsub.f32 1.0, %v4909
    %v4921 = vmul.f32 %v4920, %v4919
    %v4922 = vmul.f32 %v4909, 0.0
    %v4923 = vadd.f32 %v4921, %v4922
    %4924 = vst [vmem:[%s15] sm:$0xff] %v4892
    %s4925 = scalar_lea.vmem %s16, 56
    %4926 = vst [vmem:[%s4925] sm:$0xff] %v4923
    %4927 = vmatprep.subr.mxu0 %v4483
    %4928 = vmatpush1.msra.mxu0 %v4482
    %4929 = vmatprep.subr.mxu0 %v4486
    %4930 = vmatpush1.msra.mxu0 %v4485
    %4931 = vmatprep.subr.mxu0 %v4489
    %4932 = vmatpush1.msra.mxu0 %v4488
    %4933 = vmatprep.subr.mxu0 %v4492
    %4934 = vmatpush1.msra.mxu0 %v4491
    %4935 = vmatprep.subr.mxu0 %v4495
    %4936 = vmatpush1.msra.mxu0 %v4494
    %4937 = vmatprep.subr.mxu0 %v4498
    %4938 = vmatpush1.msra.mxu0 %v4497
    %4939 = vmatprep.subr.mxu0 %v4501
    %4940 = vmatpush1.msra.mxu0 %v4500
    %4941 = vmatprep.subr.mxu0 %v4504
    %4942 = vmatpush1.msra.mxu0 %v4503
    %4943 = vmatprep.subr.mxu0 %v4507
    %4944 = vmatpush1.msra.mxu0 %v4506
    %4945 = vmatprep.subr.mxu0 %v4510
    %4946 = vmatpush1.msra.mxu0 %v4509
    %4947 = vmatprep.subr.mxu0 %v4513
    %4948 = vmatpush1.msra.mxu0 %v4512
    %4949 = vmatprep.subr.mxu0 %v4516
    %4950 = vmatpush1.msra.mxu0 %v4515
    %4951 = vmatprep.subr.mxu0 %v4519
    %4952 = vmatpush1.msra.mxu0 %v4518
    %4953 = vmatprep.subr.mxu0 %v4522
    %4954 = vmatpush1.msra.mxu0 %v4521
    %4955 = vmatprep.subr.mxu0 %v4525
    %4956 = vmatpush1.msra.mxu0 %v4524
    %4957 = vmatprep.subr.mxu0 %v4528
    %4958 = vmatpush1.msra.mxu0 %v4527
    %4959 = vmatprep.subr.mxu0 0.0
    %4960 = vmatpush1.msra.mxu0 0.0
    %4961 = vmatprep.subr.mxu0 0.0
    %4962 = vmatpush1.msra.mxu0 0.0
    %4963 = vmatprep.subr.mxu0 0.0
    %4964 = vmatpush1.msra.mxu0 0.0
    %4965 = vmatprep.subr.mxu0 0.0
    %4966 = vmatpush1.msra.mxu0 0.0
    %4967 = vmatprep.subr.mxu0 0.0
    %4968 = vmatpush1.msra.mxu0 0.0
    %4969 = vmatprep.subr.mxu0 0.0
    %4970 = vmatpush1.msra.mxu0 0.0
    %4971 = vmatprep.subr.mxu0 0.0
    %4972 = vmatpush1.msra.mxu0 0.0
    %4973 = vmatprep.subr.mxu0 0.0
    %4974 = vmatpush1.msra.mxu0 0.0
    %4975 = vmatprep.subr.mxu0 0.0
    %4976 = vmatpush1.msra.mxu0 0.0
    %4977 = vmatprep.subr.mxu0 0.0
    %4978 = vmatpush1.msra.mxu0 0.0
    %4979 = vmatprep.subr.mxu0 0.0
    %4980 = vmatpush1.msra.mxu0 0.0
    %4981 = vmatprep.subr.mxu0 0.0
    %4982 = vmatpush1.msra.mxu0 0.0
    %4983 = vmatprep.subr.mxu0 0.0
    %4984 = vmatpush1.msra.mxu0 0.0
    %4985 = vmatprep.subr.mxu0 0.0
    %4986 = vmatpush1.msra.mxu0 0.0
    %4987 = vmatprep.subr.mxu0 0.0
    %4988 = vmatpush1.msra.mxu0 0.0
    %4989 = vmatprep.subr.mxu0 0.0
    %4990 = vmatpush1.msra.mxu0 0.0
    %4991 = vmatprep.mubr.f32.mxu0 0.0
    %4992 = vmatmul.mubr.f32.gmra.mrb[0].mxu0 %v4892
    %v4993 = vpop.f32.mrb[0].mxu0
    %v4994 = vadd.f32 0.0, %v4993
    %v4995 = vpop.f32.mrb[0].mxu0
    %v4996 = vadd.f32 0.0, %v4995
    %4997 = vdwg.mxu0
    %4998 = vmatprep.subr.mxu0 0.0
    %4999 = vmatpush1.msra.mxu0 %v4484
    %5000 = vmatprep.subr.mxu0 0.0
    %5001 = vmatpush1.msra.mxu0 %v4487
    %5002 = vmatprep.subr.mxu0 0.0
    %5003 = vmatpush1.msra.mxu0 %v4490
    %5004 = vmatprep.subr.mxu0 0.0
    %5005 = vmatpush1.msra.mxu0 %v4493
    %5006 = vmatprep.subr.mxu0 0.0
    %5007 = vmatpush1.msra.mxu0 %v4496
    %5008 = vmatprep.subr.mxu0 0.0
    %5009 = vmatpush1.msra.mxu0 %v4499
    %5010 = vmatprep.subr.mxu0 0.0
    %5011 = vmatpush1.msra.mxu0 %v4502
    %5012 = vmatprep.subr.mxu0 0.0
    %5013 = vmatpush1.msra.mxu0 %v4505
    %5014 = vmatprep.subr.mxu0 0.0
    %5015 = vmatpush1.msra.mxu0 %v4508
    %5016 = vmatprep.subr.mxu0 0.0
    %5017 = vmatpush1.msra.mxu0 %v4511
    %5018 = vmatprep.subr.mxu0 0.0
    %5019 = vmatpush1.msra.mxu0 %v4514
    %5020 = vmatprep.subr.mxu0 0.0
    %5021 = vmatpush1.msra.mxu0 %v4517
    %5022 = vmatprep.subr.mxu0 0.0
    %5023 = vmatpush1.msra.mxu0 %v4520
    %5024 = vmatprep.subr.mxu0 0.0
    %5025 = vmatpush1.msra.mxu0 %v4523
    %5026 = vmatprep.subr.mxu0 0.0
    %5027 = vmatpush1.msra.mxu0 %v4526
    %5028 = vmatprep.subr.mxu0 0.0
    %5029 = vmatpush1.msra.mxu0 %v4529
    %5030 = vmatprep.subr.mxu0 0.0
    %5031 = vmatpush1.msra.mxu0 0.0
    %5032 = vmatprep.subr.mxu0 0.0
    %5033 = vmatpush1.msra.mxu0 0.0
    %5034 = vmatprep.subr.mxu0 0.0
    %5035 = vmatpush1.msra.mxu0 0.0
    %5036 = vmatprep.subr.mxu0 0.0
    %5037 = vmatpush1.msra.mxu0 0.0
    %5038 = vmatprep.subr.mxu0 0.0
    %5039 = vmatpush1.msra.mxu0 0.0
    %5040 = vmatprep.subr.mxu0 0.0
    %5041 = vmatpush1.msra.mxu0 0.0
    %5042 = vmatprep.subr.mxu0 0.0
    %5043 = vmatpush1.msra.mxu0 0.0
    %5044 = vmatprep.subr.mxu0 0.0
    %5045 = vmatpush1.msra.mxu0 0.0
    %5046 = vmatprep.subr.mxu0 0.0
    %5047 = vmatpush1.msra.mxu0 0.0
    %5048 = vmatprep.subr.mxu0 0.0
    %5049 = vmatpush1.msra.mxu0 0.0
    %5050 = vmatprep.subr.mxu0 0.0
    %5051 = vmatpush1.msra.mxu0 0.0
    %5052 = vmatprep.subr.mxu0 0.0
    %5053 = vmatpush1.msra.mxu0 0.0
    %5054 = vmatprep.subr.mxu0 0.0
    %5055 = vmatpush1.msra.mxu0 0.0
    %5056 = vmatprep.subr.mxu0 0.0
    %5057 = vmatpush1.msra.mxu0 0.0
    %5058 = vmatprep.subr.mxu0 0.0
    %5059 = vmatpush1.msra.mxu0 0.0
    %5060 = vmatprep.subr.mxu0 0.0
    %5061 = vmatpush1.msra.mxu0 0.0
    %5062 = vmatprep.mubr.f32.mxu0 0.0
    %5063 = vmatmul.mubr.f32.gmra.mrb[0].mxu0 %v4892
    %v5064 = vpop.f32.mrb[0].mxu0
    %v5065 = vadd.f32 0.0, %v5064
    %v5066 = vpop.f32.mrb[0].mxu0
    %5067 = vdwg.mxu0
    %5068 = vmatprep.subr.mxu0 %v4531
    %5069 = vmatpush1.msra.mxu0 %v4530
    %5070 = vmatprep.subr.mxu0 %v4534
    %5071 = vmatpush1.msra.mxu0 %v4533
    %5072 = vmatprep.subr.mxu0 %v4537
    %5073 = vmatpush1.msra.mxu0 %v4536
    %5074 = vmatprep.subr.mxu0 %v4540
    %5075 = vmatpush1.msra.mxu0 %v4539
    %5076 = vmatprep.subr.mxu0 %v4543
    %5077 = vmatpush1.msra.mxu0 %v4542
    %5078 = vmatprep.subr.mxu0 %v4546
    %5079 = vmatpush1.msra.mxu0 %v4545
    %5080 = vmatprep.subr.mxu0 %v4549
    %5081 = vmatpush1.msra.mxu0 %v4548
    %5082 = vmatprep.subr.mxu0 %v4552
    %5083 = vmatpush1.msra.mxu0 %v4551
    %5084 = vmatprep.subr.mxu0 %v4555
    %5085 = vmatpush1.msra.mxu0 %v4554
    %5086 = vmatprep.subr.mxu0 %v4558
    %5087 = vmatpush1.msra.mxu0 %v4557
    %5088 = vmatprep.subr.mxu0 %v4561
    %5089 = vmatpush1.msra.mxu0 %v4560
    %5090 = vmatprep.subr.mxu0 %v4564
    %5091 = vmatpush1.msra.mxu0 %v4563
    %5092 = vmatprep.subr.mxu0 %v4567
    %5093 = vmatpush1.msra.mxu0 %v4566
    %5094 = vmatprep.subr.mxu0 %v4570
    %5095 = vmatpush1.msra.mxu0 %v4569
    %5096 = vmatprep.subr.mxu0 %v4573
    %5097 = vmatpush1.msra.mxu0 %v4572
    %5098 = vmatprep.subr.mxu0 %v4576
    %5099 = vmatpush1.msra.mxu0 %v4575
    %5100 = vmatprep.subr.mxu0 0.0
    %5101 = vmatpush1.msra.mxu0 0.0
    %5102 = vmatprep.subr.mxu0 0.0
    %5103 = vmatpush1.msra.mxu0 0.0
    %5104 = vmatprep.subr.mxu0 0.0
    %5105 = vmatpush1.msra.mxu0 0.0
    %5106 = vmatprep.subr.mxu0 0.0
    %5107 = vmatpush1.msra.mxu0 0.0
    %5108 = vmatprep.subr.mxu0 0.0
    %5109 = vmatpush1.msra.mxu0 0.0
    %5110 = vmatprep.subr.mxu0 0.0
    %5111 = vmatpush1.msra.mxu0 0.0
    %5112 = vmatprep.subr.mxu0 0.0
    %5113 = vmatpush1.msra.mxu0 0.0
    %5114 = vmatprep.subr.mxu0 0.0
    %5115 = vmatpush1.msra.mxu0 0.0
    %5116 = vmatprep.subr.mxu0 0.0
    %5117 = vmatpush1.msra.mxu0 0.0
    %5118 = vmatprep.subr.mxu0 0.0
    %5119 = vmatpush1.msra.mxu0 0.0
    %5120 = vmatprep.subr.mxu0 0.0
    %5121 = vmatpush1.msra.mxu0 0.0
    %5122 = vmatprep.subr.mxu0 0.0
    %5123 = vmatpush1.msra.mxu0 0.0
    %5124 = vmatprep.subr.mxu0 0.0
    %5125 = vmatpush1.msra.mxu0 0.0
    %5126 = vmatprep.subr.mxu0 0.0
    %5127 = vmatpush1.msra.mxu0 0.0
    %5128 = vmatprep.subr.mxu0 0.0
    %5129 = vmatpush1.msra.mxu0 0.0
    %5130 = vmatprep.subr.mxu0 0.0
    %5131 = vmatpush1.msra.mxu0 0.0
    %5132 = vmatprep.mubr.f32.mxu0 0.0
    %5133 = vmatmul.mubr.f32.gmra.mrb[0].mxu0 %v4923
    %v5134 = vpop.f32.mrb[0].mxu0
    %v5135 = vadd.f32 0.0, %v5134
    %v5136 = vpop.f32.mrb[0].mxu0
    %v5137 = vadd.f32 0.0, %v5136
    %5138 = vdwg.mxu0
    %5139 = vmatprep.subr.mxu0 0.0
    %5140 = vmatpush1.msra.mxu0 %v4532
    %5141 = vmatprep.subr.mxu0 0.0
    %5142 = vmatpush1.msra.mxu0 %v4535
    %5143 = vmatprep.subr.mxu0 0.0
    %5144 = vmatpush1.msra.mxu0 %v4538
    %5145 = vmatprep.subr.mxu0 0.0
    %5146 = vmatpush1.msra.mxu0 %v4541
    %5147 = vmatprep.subr.mxu0 0.0
    %5148 = vmatpush1.msra.mxu0 %v4544
    %5149 = vmatprep.subr.mxu0 0.0
    %5150 = vmatpush1.msra.mxu0 %v4547
    %5151 = vmatprep.subr.mxu0 0.0
    %5152 = vmatpush1.msra.mxu0 %v4550
    %5153 = vmatprep.subr.mxu0 0.0
    %5154 = vmatpush1.msra.mxu0 %v4553
    %5155 = vmatprep.subr.mxu0 0.0
    %5156 = vmatpush1.msra.mxu0 %v4556
    %5157 = vmatprep.subr.mxu0 0.0
    %5158 = vmatpush1.msra.mxu0 %v4559
    %5159 = vmatprep.subr.mxu0 0.0
    %5160 = vmatpush1.msra.mxu0 %v4562
    %5161 = vmatprep.subr.mxu0 0.0
    %5162 = vmatpush1.msra.mxu0 %v4565
    %5163 = vmatprep.subr.mxu0 0.0
    %5164 = vmatpush1.msra.mxu0 %v4568
    %5165 = vmatprep.subr.mxu0 0.0
    %5166 = vmatpush1.msra.mxu0 %v4571
    %5167 = vmatprep.subr.mxu0 0.0
    %5168 = vmatpush1.msra.mxu0 %v4574
    %5169 = vmatprep.subr.mxu0 0.0
    %5170 = vmatpush1.msra.mxu0 %v4577
    %5171 = vmatprep.subr.mxu0 0.0
    %5172 = vmatpush1.msra.mxu0 0.0
    %5173 = vmatprep.subr.mxu0 0.0
    %5174 = vmatpush1.msra.mxu0 0.0
    %5175 = vmatprep.subr.mxu0 0.0
    %5176 = vmatpush1.msra.mxu0 0.0
    %5177 = vmatprep.subr.mxu0 0.0
    %5178 = vmatpush1.msra.mxu0 0.0
    %5179 = vmatprep.subr.mxu0 0.0
    %5180 = vmatpush1.msra.mxu0 0.0
    %5181 = vmatprep.subr.mxu0 0.0
    %5182 = vmatpush1.msra.mxu0 0.0
    %5183 = vmatprep.subr.mxu0 0.0
    %5184 = vmatpush1.msra.mxu0 0.0
    %5185 = vmatprep.subr.mxu0 0.0
    %5186 = vmatpush1.msra.mxu0 0.0
    %5187 = vmatprep.subr.mxu0 0.0
    %5188 = vmatpush1.msra.mxu0 0.0
    %5189 = vmatprep.subr.mxu0 0.0
    %5190 = vmatpush1.msra.mxu0 0.0
    %5191 = vmatprep.subr.mxu0 0.0
    %5192 = vmatpush1.msra.mxu0 0.0
    %5193 = vmatprep.subr.mxu0 0.0
    %5194 = vmatpush1.msra.mxu0 0.0
    %5195 = vmatprep.subr.mxu0 0.0
    %5196 = vmatpush1.msra.mxu0 0.0
    %5197 = vmatprep.subr.mxu0 0.0
    %5198 = vmatpush1.msra.mxu0 0.0
    %5199 = vmatprep.subr.mxu0 0.0
    %5200 = vmatpush1.msra.mxu0 0.0
    %5201 = vmatprep.subr.mxu0 0.0
    %5202 = vmatpush1.msra.mxu0 0.0
    %5203 = vmatprep.mubr.f32.mxu0 0.0
    %5204 = vmatmul.mubr.f32.gmra.mrb[0].mxu0 %v4923
    %v5205 = vpop.f32.mrb[0].mxu0
    %v5206 = vadd.f32 0.0, %v5205
    %v5207 = vpop.f32.mrb[0].mxu0
    %5208 = vdwg.mxu0
    %v5209 = vld [vmem:[%s1386] sm:$0xff]
    %v5210 = vld [vmem:[%s1386 + $0x8] sm:$0xff]
    %v5211 = vld [vmem:[%s1386 + $0x10] sm:$0xff]
    %v5212 = vadd.f32 %v5209, %v4994
    %v5213 = vxor.u32 %v5212, 2147483648
    %v5214 = vmul.f32 %v5213, 1.442695
    %v5215 = vpow.pop %v5214
    %v5216 = vadd.f32 %v5215, 1.0
    %v5217 = vrcp.pop %v5216
    %v5218 = vmul.f32 1.0, %v5217
    %v5219 = vadd.f32 %v5210, %v4996
    %v5220 = vxor.u32 %v5219, 2147483648
    %v5221 = vmul.f32 %v5220, 1.442695
    %v5222 = vpow.pop %v5221
    %v5223 = vadd.f32 %v5222, 1.0
    %v5224 = vrcp.pop %v5223
    %v5225 = vmul.f32 1.0, %v5224
    %v5226 = vadd.f32 %v5065, %v4883
    %v5227 = vmul.f32 %v5218, %v5226
    %v5228 = vadd.f32 %v5211, %v5227
    %v5229 = vtanh.pop %v5228
    %v5230 = vsub.f32 1.0, %v5225
    %v5231 = vmul.f32 %v5230, %v5229
    %v5232 = vmul.f32 %v5225, %v4892
    %v5233 = vadd.f32 %v5231, %v5232
    %v5234 = vld [vmem:[%s1412] sm:$0xff]
    %v5235 = vld [vmem:[%s1412 + $0x8] sm:$0xff]
    %v5236 = vld [vmem:[%s1412 + $0x10] sm:$0xff]
    %v5237 = vadd.f32 %v5234, %v5135
    %v5238 = vxor.u32 %v5237, 2147483648
    %v5239 = vmul.f32 %v5238, 1.442695
    %v5240 = vpow.pop %v5239
    %v5241 = vadd.f32 %v5240, 1.0
    %v5242 = vrcp.pop %v5241
    %v5243 = vmul.f32 1.0, %v5242
    %v5244 = vadd.f32 %v5235, %v5137
    %v5245 = vxor.u32 %v5244, 2147483648
    %v5246 = vmul.f32 %v5245, 1.442695
    %v5247 = vpow.pop %v5246
    %v5248 = vadd.f32 %v5247, 1.0
    %v5249 = vrcp.pop %v5248
    %v5250 = vmul.f32 1.0, %v5249
    %v5251 = vadd.f32 %v5206, %v4914
    %v5252 = vmul.f32 %v5243, %v5251
    %v5253 = vadd.f32 %v5236, %v5252
    %v5254 = vtanh.pop %v5253
    %v5255 = vsub.f32 1.0, %v5250
    %v5256 = vmul.f32 %v5255, %v5254
    %v5257 = vmul.f32 %v5250, %v4923
    %v5258 = vadd.f32 %v5256, %v5257
    %s5259 = scalar_lea.vmem %s15, 8
    %5260 = vst [vmem:[%s5259] sm:$0xff] %v5233
    %s5261 = scalar_lea.vmem %s16, 48
    %5262 = vst [vmem:[%s5261] sm:$0xff] %v5258
    %5263 = vmatprep.subr.mxu0 %v4483
    %5264 = vmatpush1.msra.mxu0 %v4482
    %5265 = vmatprep.subr.mxu0 %v4486
    %5266 = vmatpush1.msra.mxu0 %v4485
    %5267 = vmatprep.subr.mxu0 %v4489
    %5268 = vmatpush1.msra.mxu0 %v4488
    %5269 = vmatprep.subr.mxu0 %v4492
    %5270 = vmatpush1.msra.mxu0 %v4491
    %5271 = vmatprep.subr.mxu0 %v4495
    %5272 = vmatpush1.msra.mxu0 %v4494
    %5273 = vmatprep.subr.mxu0 %v4498
    %5274 = vmatpush1.msra.mxu0 %v4497
    %5275 = vmatprep.subr.mxu0 %v4501
    %5276 = vmatpush1.msra.mxu0 %v4500
    %5277 = vmatprep.subr.mxu0 %v4504
    %5278 = vmatpush1.msra.mxu0 %v4503
    %5279 = vmatprep.subr.mxu0 %v4507
    %5280 = vmatpush1.msra.mxu0 %v4506
    %5281 = vmatprep.subr.mxu0 %v4510
    %5282 = vmatpush1.msra.mxu0 %v4509
    %5283 = vmatprep.subr.mxu0 %v4513
    %5284 = vmatpush1.msra.mxu0 %v4512
    %5285 = vmatprep.subr.mxu0 %v4516
    %5286 = vmatpush1.msra.mxu0 %v4515
    %5287 = vmatprep.subr.mxu0 %v4519
    %5288 = vmatpush1.msra.mxu0 %v4518
    %5289 = vmatprep.subr.mxu0 %v4522
    %5290 = vmatpush1.msra.mxu0 %v4521
    %5291 = vmatprep.subr.mxu0 %v4525
    %5292 = vmatpush1.msra.mxu0 %v4524
    %5293 = vmatprep.subr.mxu0 %v4528
    %5294 = vmatpush1.msra.mxu0 %v4527
    %5295 = vmatprep.subr.mxu0 0.0
    %5296 = vmatpush1.msra.mxu0 0.0
    %5297 = vmatprep.subr.mxu0 0.0
    %5298 = vmatpush1.msra.mxu0 0.0
    %5299 = vmatprep.subr.mxu0 0.0
    %5300 = vmatpush1.msra.mxu0 0.0
    %5301 = vmatprep.subr.mxu0 0.0
    %5302 = vmatpush1.msra.mxu0 0.0
    %5303 = vmatprep.subr.mxu0 0.0
    %5304 = vmatpush1.msra.mxu0 0.0
    %5305 = vmatprep.subr.mxu0 0.0
    %5306 = vmatpush1.msra.mxu0 0.0
    %5307 = vmatprep.subr.mxu0 0.0
    %5308 = vmatpush1.msra.mxu0 0.0
    %5309 = vmatprep.subr.mxu0 0.0
    %5310 = vmatpush1.msra.mxu0 0.0
    %5311 = vmatprep.subr.mxu0 0.0
    %5312 = vmatpush1.msra.mxu0 0.0
    %5313 = vmatprep.subr.mxu0 0.0
    %5314 = vmatpush1.msra.mxu0 0.0
    %5315 = vmatprep.subr.mxu0 0.0
    %5316 = vmatpush1.msra.mxu0 0.0
    %5317 = vmatprep.subr.mxu0 0.0
    %5318 = vmatpush1.msra.mxu0 0.0
    %5319 = vmatprep.subr.mxu0 0.0
    %5320 = vmatpush1.msra.mxu0 0.0
    %5321 = vmatprep.subr.mxu0 0.0
    %5322 = vmatpush1.msra.mxu0 0.0
    %5323 = vmatprep.subr.mxu0 0.0
    %5324 = vmatpush1.msra.mxu0 0.0
    %5325 = vmatprep.subr.mxu0 0.0
    %5326 = vmatpush1.msra.mxu0 0.0
    %5327 = vmatprep.mubr.f32.mxu0 0.0
    %5328 = vmatmul.mubr.f32.gmra.mrb[0].mxu0 %v5233
    %v5329 = vpop.f32.mrb[0].mxu0
    %v5330 = vadd.f32 0.0, %v5329
    %v5331 = vpop.f32.mrb[0].mxu0
    %v5332 = vadd.f32 0.0, %v5331
    %5333 = vdwg.mxu0
    %5334 = vmatprep.subr.mxu0 0.0
    %5335 = vmatpush1.msra.mxu0 %v4484
    %5336 = vmatprep.subr.mxu0 0.0
    %5337 = vmatpush1.msra.mxu0 %v4487
    %5338 = vmatprep.subr.mxu0 0.0
    %5339 = vmatpush1.msra.mxu0 %v4490
    %5340 = vmatprep.subr.mxu0 0.0
    %5341 = vmatpush1.msra.mxu0 %v4493
    %5342 = vmatprep.subr.mxu0 0.0
    %5343 = vmatpush1.msra.mxu0 %v4496
    %5344 = vmatprep.subr.mxu0 0.0
    %5345 = vmatpush1.msra.mxu0 %v4499
    %5346 = vmatprep.subr.mxu0 0.0
    %5347 = vmatpush1.msra.mxu0 %v4502
    %5348 = vmatprep.subr.mxu0 0.0
    %5349 = vmatpush1.msra.mxu0 %v4505
    %5350 = vmatprep.subr.mxu0 0.0
    %5351 = vmatpush1.msra.mxu0 %v4508
    %5352 = vmatprep.subr.mxu0 0.0
    %5353 = vmatpush1.msra.mxu0 %v4511
    %5354 = vmatprep.subr.mxu0 0.0
    %5355 = vmatpush1.msra.mxu0 %v4514
    %5356 = vmatprep.subr.mxu0 0.0
    %5357 = vmatpush1.msra.mxu0 %v4517
    %5358 = vmatprep.subr.mxu0 0.0
    %5359 = vmatpush1.msra.mxu0 %v4520
    %5360 = vmatprep.subr.mxu0 0.0
    %5361 = vmatpush1.msra.mxu0 %v4523
    %5362 = vmatprep.subr.mxu0 0.0
    %5363 = vmatpush1.msra.mxu0 %v4526
    %5364 = vmatprep.subr.mxu0 0.0
    %5365 = vmatpush1.msra.mxu0 %v4529
    %5366 = vmatprep.subr.mxu0 0.0
    %5367 = vmatpush1.msra.mxu0 0.0
    %5368 = vmatprep.subr.mxu0 0.0
    %5369 = vmatpush1.msra.mxu0 0.0
    %5370 = vmatprep.subr.mxu0 0.0
    %5371 = vmatpush1.msra.mxu0 0.0
    %5372 = vmatprep.subr.mxu0 0.0
    %5373 = vmatpush1.msra.mxu0 0.0
    %5374 = vmatprep.subr.mxu0 0.0
    %5375 = vmatpush1.msra.mxu0 0.0
    %5376 = vmatprep.subr.mxu0 0.0
    %5377 = vmatpush1.msra.mxu0 0.0
    %5378 = vmatprep.subr.mxu0 0.0
    %5379 = vmatpush1.msra.mxu0 0.0
    %5380 = vmatprep.subr.mxu0 0.0
    %5381 = vmatpush1.msra.mxu0 0.0
    %5382 = vmatprep.subr.mxu0 0.0
    %5383 = vmatpush1.msra.mxu0 0.0
    %5384 = vmatprep.subr.mxu0 0.0
    %5385 = vmatpush1.msra.mxu0 0.0
    %5386 = vmatprep.subr.mxu0 0.0
    %5387 = vmatpush1.msra.mxu0 0.0
    %5388 = vmatprep.subr.mxu0 0.0
    %5389 = vmatpush1.msra.mxu0 0.0
    %5390 = vmatprep.subr.mxu0 0.0
    %5391 = vmatpush1.msra.mxu0 0.0
    %5392 = vmatprep.subr.mxu0 0.0
    %5393 = vmatpush1.msra.mxu0 0.0
    %5394 = vmatprep.subr.mxu0 0.0
    %5395 = vmatpush1.msra.mxu0 0.0
    %5396 = vmatprep.subr.mxu0 0.0
    %5397 = vmatpush1.msra.mxu0 0.0
    %5398 = vmatprep.mubr.f32.mxu0 0.0
    %5399 = vmatmul.mubr.f32.gmra.mrb[0].mxu0 %v5233
    %v5400 = vpop.f32.mrb[0].mxu0
    %v5401 = vadd.f32 0.0, %v5400
    %v5402 = vpop.f32.mrb[0].mxu0
    %5403 = vdwg.mxu0
    %5404 = vmatprep.subr.mxu0 %v4531
    %5405 = vmatpush1.msra.mxu0 %v4530
    %5406 = vmatprep.subr.mxu0 %v4534
    %5407 = vmatpush1.msra.mxu0 %v4533
    %5408 = vmatprep.subr.mxu0 %v4537
    %5409 = vmatpush1.msra.mxu0 %v4536
    %5410 = vmatprep.subr.mxu0 %v4540
    %5411 = vmatpush1.msra.mxu0 %v4539
    %5412 = vmatprep.subr.mxu0 %v4543
    %5413 = vmatpush1.msra.mxu0 %v4542
    %5414 = vmatprep.subr.mxu0 %v4546
    %5415 = vmatpush1.msra.mxu0 %v4545
    %5416 = vmatprep.subr.mxu0 %v4549
    %5417 = vmatpush1.msra.mxu0 %v4548
    %5418 = vmatprep.subr.mxu0 %v4552
    %5419 = vmatpush1.msra.mxu0 %v4551
    %5420 = vmatprep.subr.mxu0 %v4555
    %5421 = vmatpush1.msra.mxu0 %v4554
    %5422 = vmatprep.subr.mxu0 %v4558
    %5423 = vmatpush1.msra.mxu0 %v4557
    %5424 = vmatprep.subr.mxu0 %v4561
    %5425 = vmatpush1.msra.mxu0 %v4560
    %5426 = vmatprep.subr.mxu0 %v4564
    %5427 = vmatpush1.msra.mxu0 %v4563
    %5428 = vmatprep.subr.mxu0 %v4567
    %5429 = vmatpush1.msra.mxu0 %v4566
    %5430 = vmatprep.subr.mxu0 %v4570
    %5431 = vmatpush1.msra.mxu0 %v4569
    %5432 = vmatprep.subr.mxu0 %v4573
    %5433 = vmatpush1.msra.mxu0 %v4572
    %5434 = vmatprep.subr.mxu0 %v4576
    %5435 = vmatpush1.msra.mxu0 %v4575
    %5436 = vmatprep.subr.mxu0 0.0
    %5437 = vmatpush1.msra.mxu0 0.0
    %5438 = vmatprep.subr.mxu0 0.0
    %5439 = vmatpush1.msra.mxu0 0.0
    %5440 = vmatprep.subr.mxu0 0.0
    %5441 = vmatpush1.msra.mxu0 0.0
    %5442 = vmatprep.subr.mxu0 0.0
    %5443 = vmatpush1.msra.mxu0 0.0
    %5444 = vmatprep.subr.mxu0 0.0
    %5445 = vmatpush1.msra.mxu0 0.0
    %5446 = vmatprep.subr.mxu0 0.0
    %5447 = vmatpush1.msra.mxu0 0.0
    %5448 = vmatprep.subr.mxu0 0.0
    %5449 = vmatpush1.msra.mxu0 0.0
    %5450 = vmatprep.subr.mxu0 0.0
    %5451 = vmatpush1.msra.mxu0 0.0
    %5452 = vmatprep.subr.mxu0 0.0
    %5453 = vmatpush1.msra.mxu0 0.0
    %5454 = vmatprep.subr.mxu0 0.0
    %5455 = vmatpush1.msra.mxu0 0.0
    %5456 = vmatprep.subr.mxu0 0.0
    %5457 = vmatpush1.msra.mxu0 0.0
    %5458 = vmatprep.subr.mxu0 0.0
    %5459 = vmatpush1.msra.mxu0 0.0
    %5460 = vmatprep.subr.mxu0 0.0
    %5461 = vmatpush1.msra.mxu0 0.0
    %5462 = vmatprep.subr.mxu0 0.0
    %5463 = vmatpush1.msra.mxu0 0.0
    %5464 = vmatprep.subr.mxu0 0.0
    %5465 = vmatpush1.msra.mxu0 0.0
    %5466 = vmatprep.subr.mxu0 0.0
    %5467 = vmatpush1.msra.mxu0 0.0
    %5468 = vmatprep.mubr.f32.mxu0 0.0
    %5469 = vmatmul.mubr.f32.gmra.mrb[0].mxu0 %v5258
    %v5470 = vpop.f32.mrb[0].mxu0
    %v5471 = vadd.f32 0.0, %v5470
    %v5472 = vpop.f32.mrb[0].mxu0
    %v5473 = vadd.f32 0.0, %v5472
    %5474 = vdwg.mxu0
    %5475 = vmatprep.subr.mxu0 0.0
    %5476 = vmatpush1.msra.mxu0 %v4532
    %5477 = vmatprep.subr.mxu0 0.0
    %5478 = vmatpush1.msra.mxu0 %v4535
    %5479 = vmatprep.subr.mxu0 0.0
    %5480 = vmatpush1.msra.mxu0 %v4538
    %5481 = vmatprep.subr.mxu0 0.0
    %5482 = vmatpush1.msra.mxu0 %v4541
    %5483 = vmatprep.subr.mxu0 0.0
    %5484 = vmatpush1.msra.mxu0 %v4544
    %5485 = vmatprep.subr.mxu0 0.0
    %5486 = vmatpush1.msra.mxu0 %v4547
    %5487 = vmatprep.subr.mxu0 0.0
    %5488 = vmatpush1.msra.mxu0 %v4550
    %5489 = vmatprep.subr.mxu0 0.0
    %5490 = vmatpush1.msra.mxu0 %v4553
    %5491 = vmatprep.subr.mxu0 0.0
    %5492 = vmatpush1.msra.mxu0 %v4556
    %5493 = vmatprep.subr.mxu0 0.0
    %5494 = vmatpush1.msra.mxu0 %v4559
    %5495 = vmatprep.subr.mxu0 0.0
    %5496 = vmatpush1.msra.mxu0 %v4562
    %5497 = vmatprep.subr.mxu0 0.0
    %5498 = vmatpush1.msra.mxu0 %v4565
    %5499 = vmatprep.subr.mxu0 0.0
    %5500 = vmatpush1.msra.mxu0 %v4568
    %5501 = vmatprep.subr.mxu0 0.0
    %5502 = vmatpush1.msra.mxu0 %v4571
    %5503 = vmatprep.subr.mxu0 0.0
    %5504 = vmatpush1.msra.mxu0 %v4574
    %5505 = vmatprep.subr.mxu0 0.0
    %5506 = vmatpush1.msra.mxu0 %v4577
    %5507 = vmatprep.subr.mxu0 0.0
    %5508 = vmatpush1.msra.mxu0 0.0
    %5509 = vmatprep.subr.mxu0 0.0
    %5510 = vmatpush1.msra.mxu0 0.0
    %5511 = vmatprep.subr.mxu0 0.0
    %5512 = vmatpush1.msra.mxu0 0.0
    %5513 = vmatprep.subr.mxu0 0.0
    %5514 = vmatpush1.msra.mxu0 0.0
    %5515 = vmatprep.subr.mxu0 0.0
    %5516 = vmatpush1.msra.mxu0 0.0
    %5517 = vmatprep.subr.mxu0 0.0
    %5518 = vmatpush1.msra.mxu0 0.0
    %5519 = vmatprep.subr.mxu0 0.0
    %5520 = vmatpush1.msra.mxu0 0.0
    %5521 = vmatprep.subr.mxu0 0.0
    %5522 = vmatpush1.msra.mxu0 0.0
    %5523 = vmatprep.subr.mxu0 0.0
    %5524 = vmatpush1.msra.mxu0 0.0
    %5525 = vmatprep.subr.mxu0 0.0
    %5526 = vmatpush1.msra.mxu0 0.0
    %5527 = vmatprep.subr.mxu0 0.0
    %5528 = vmatpush1.msra.mxu0 0.0
    %5529 = vmatprep.subr.mxu0 0.0
    %5530 = vmatpush1.msra.mxu0 0.0
    %5531 = vmatprep.subr.mxu0 0.0
    %5532 = vmatpush1.msra.mxu0 0.0
    %5533 = vmatprep.subr.mxu0 0.0
    %5534 = vmatpush1.msra.mxu0 0.0
    %5535 = vmatprep.subr.mxu0 0.0
    %5536 = vmatpush1.msra.mxu0 0.0
    %5537 = vmatprep.subr.mxu0 0.0
    %5538 = vmatpush1.msra.mxu0 0.0
    %5539 = vmatprep.mubr.f32.mxu0 0.0
    %5540 = vmatmul.mubr.f32.gmra.mrb[0].mxu0 %v5258
    %v5541 = vpop.f32.mrb[0].mxu0
    %v5542 = vadd.f32 0.0, %v5541
    %v5543 = vpop.f32.mrb[0].mxu0
    %5544 = vdwg.mxu0
    %v5545 = vld [vmem:[%s1724] sm:$0xff]
    %v5546 = vld [vmem:[%s1724 + $0x8] sm:$0xff]
    %v5547 = vld [vmem:[%s1724 + $0x10] sm:$0xff]
    %v5548 = vadd.f32 %v5545, %v5330
    %v5549 = vxor.u32 %v5548, 2147483648
    %v5550 = vmul.f32 %v5549, 1.442695
    %v5551 = vpow.pop %v5550
    %v5552 = vadd.f32 %v5551, 1.0
    %v5553 = vrcp.pop %v5552
    %v5554 = vmul.f32 1.0, %v5553
    %v5555 = vadd.f32 %v5546, %v5332
    %v5556 = vxor.u32 %v5555, 2147483648
    %v5557 = vmul.f32 %v5556, 1.442695
    %v5558 = vpow.pop %v5557
    %v5559 = vadd.f32 %v5558, 1.0
    %v5560 = vrcp.pop %v5559
    %v5561 = vmul.f32 1.0, %v5560
    %v5562 = vadd.f32 %v5401, %v4883
    %v5563 = vmul.f32 %v5554, %v5562
    %v5564 = vadd.f32 %v5547, %v5563
    %v5565 = vtanh.pop %v5564
    %v5566 = vsub.f32 1.0, %v5561
    %v5567 = vmul.f32 %v5566, %v5565
    %v5568 = vmul.f32 %v5561, %v5233
    %v5569 = vadd.f32 %v5567, %v5568
    %v5570 = vld [vmem:[%s1750] sm:$0xff]
    %v5571 = vld [vmem:[%s1750 + $0x8] sm:$0xff]
    %v5572 = vld [vmem:[%s1750 + $0x10] sm:$0xff]
    %v5573 = vadd.f32 %v5570, %v5471
    %v5574 = vxor.u32 %v5573, 2147483648
    %v5575 = vmul.f32 %v5574, 1.442695
    %v5576 = vpow.pop %v5575
    %v5577 = vadd.f32 %v5576, 1.0
    %v5578 = vrcp.pop %v5577
    %v5579 = vmul.f32 1.0, %v5578
    %v5580 = vadd.f32 %v5571, %v5473
    %v5581 = vxor.u32 %v5580, 2147483648
    %v5582 = vmul.f32 %v5581, 1.442695
    %v5583 = vpow.pop %v5582
    %v5584 = vadd.f32 %v5583, 1.0
    %v5585 = vrcp.pop %v5584
    %v5586 = vmul.f32 1.0, %v5585
    %v5587 = vadd.f32 %v5542, %v4914
    %v5588 = vmul.f32 %v5579, %v5587
    %v5589 = vadd.f32 %v5572, %v5588
    %v5590 = vtanh.pop %v5589
    %v5591 = vsub.f32 1.0, %v5586
    %v5592 = vmul.f32 %v5591, %v5590
    %v5593 = vmul.f32 %v5586, %v5258
    %v5594 = vadd.f32 %v5592, %v5593
    %s5595 = scalar_lea.vmem %s15, 16
    %5596 = vst [vmem:[%s5595] sm:$0xff] %v5569
    %s5597 = scalar_lea.vmem %s16, 40
    %5598 = vst [vmem:[%s5597] sm:$0xff] %v5594
    %5599 = vmatprep.subr.mxu0 %v4483
    %5600 = vmatpush1.msra.mxu0 %v4482
    %5601 = vmatprep.subr.mxu0 %v4486
    %5602 = vmatpush1.msra.mxu0 %v4485
    %5603 = vmatprep.subr.mxu0 %v4489
    %5604 = vmatpush1.msra.mxu0 %v4488
    %5605 = vmatprep.subr.mxu0 %v4492
    %5606 = vmatpush1.msra.mxu0 %v4491
    %5607 = vmatprep.subr.mxu0 %v4495
    %5608 = vmatpush1.msra.mxu0 %v4494
    %5609 = vmatprep.subr.mxu0 %v4498
    %5610 = vmatpush1.msra.mxu0 %v4497
    %5611 = vmatprep.subr.mxu0 %v4501
    %5612 = vmatpush1.msra.mxu0 %v4500
    %5613 = vmatprep.subr.mxu0 %v4504
    %5614 = vmatpush1.msra.mxu0 %v4503
    %5615 = vmatprep.subr.mxu0 %v4507
    %5616 = vmatpush1.msra.mxu0 %v4506
    %5617 = vmatprep.subr.mxu0 %v4510
    %5618 = vmatpush1.msra.mxu0 %v4509
    %5619 = vmatprep.subr.mxu0 %v4513
    %5620 = vmatpush1.msra.mxu0 %v4512
    %5621 = vmatprep.subr.mxu0 %v4516
    %5622 = vmatpush1.msra.mxu0 %v4515
    %5623 = vmatprep.subr.mxu0 %v4519
    %5624 = vmatpush1.msra.mxu0 %v4518
    %5625 = vmatprep.subr.mxu0 %v4522
    %5626 = vmatpush1.msra.mxu0 %v4521
    %5627 = vmatprep.subr.mxu0 %v4525
    %5628 = vmatpush1.msra.mxu0 %v4524
    %5629 = vmatprep.subr.mxu0 %v4528
    %5630 = vmatpush1.msra.mxu0 %v4527
    %5631 = vmatprep.subr.mxu0 0.0
    %5632 = vmatpush1.msra.mxu0 0.0
    %5633 = vmatprep.subr.mxu0 0.0
    %5634 = vmatpush1.msra.mxu0 0.0
    %5635 = vmatprep.subr.mxu0 0.0
    %5636 = vmatpush1.msra.mxu0 0.0
    %5637 = vmatprep.subr.mxu0 0.0
    %5638 = vmatpush1.msra.mxu0 0.0
    %5639 = vmatprep.subr.mxu0 0.0
    %5640 = vmatpush1.msra.mxu0 0.0
    %5641 = vmatprep.subr.mxu0 0.0
    %5642 = vmatpush1.msra.mxu0 0.0
    %5643 = vmatprep.subr.mxu0 0.0
    %5644 = vmatpush1.msra.mxu0 0.0
    %5645 = vmatprep.subr.mxu0 0.0
    %5646 = vmatpush1.msra.mxu0 0.0
    %5647 = vmatprep.subr.mxu0 0.0
    %5648 = vmatpush1.msra.mxu0 0.0
    %5649 = vmatprep.subr.mxu0 0.0
    %5650 = vmatpush1.msra.mxu0 0.0
    %5651 = vmatprep.subr.mxu0 0.0
    %5652 = vmatpush1.msra.mxu0 0.0
    %5653 = vmatprep.subr.mxu0 0.0
    %5654 = vmatpush1.msra.mxu0 0.0
    %5655 = vmatprep.subr.mxu0 0.0
    %5656 = vmatpush1.msra.mxu0 0.0
    %5657 = vmatprep.subr.mxu0 0.0
    %5658 = vmatpush1.msra.mxu0 0.0
    %5659 = vmatprep.subr.mxu0 0.0
    %5660 = vmatpush1.msra.mxu0 0.0
    %5661 = vmatprep.subr.mxu0 0.0
    %5662 = vmatpush1.msra.mxu0 0.0
    %5663 = vmatprep.mubr.f32.mxu0 0.0
    %5664 = vmatmul.mubr.f32.gmra.mrb[0].mxu0 %v5569
    %v5665 = vpop.f32.mrb[0].mxu0
    %v5666 = vadd.f32 0.0, %v5665
    %v5667 = vpop.f32.mrb[0].mxu0
    %v5668 = vadd.f32 0.0, %v5667
    %5669 = vdwg.mxu0
    %5670 = vmatprep.subr.mxu0 0.0
    %5671 = vmatpush1.msra.mxu0 %v4484
    %5672 = vmatprep.subr.mxu0 0.0
    %5673 = vmatpush1.msra.mxu0 %v4487
    %5674 = vmatprep.subr.mxu0 0.0
    %5675 = vmatpush1.msra.mxu0 %v4490
    %5676 = vmatprep.subr.mxu0 0.0
    %5677 = vmatpush1.msra.mxu0 %v4493
    %5678 = vmatprep.subr.mxu0 0.0
    %5679 = vmatpush1.msra.mxu0 %v4496
    %5680 = vmatprep.subr.mxu0 0.0
    %5681 = vmatpush1.msra.mxu0 %v4499
    %5682 = vmatprep.subr.mxu0 0.0
    %5683 = vmatpush1.msra.mxu0 %v4502
    %5684 = vmatprep.subr.mxu0 0.0
    %5685 = vmatpush1.msra.mxu0 %v4505
    %5686 = vmatprep.subr.mxu0 0.0
    %5687 = vmatpush1.msra.mxu0 %v4508
    %5688 = vmatprep.subr.mxu0 0.0
    %5689 = vmatpush1.msra.mxu0 %v4511
    %5690 = vmatprep.subr.mxu0 0.0
    %5691 = vmatpush1.msra.mxu0 %v4514
    %5692 = vmatprep.subr.mxu0 0.0
    %5693 = vmatpush1.msra.mxu0 %v4517
    %5694 = vmatprep.subr.mxu0 0.0
    %5695 = vmatpush1.msra.mxu0 %v4520
    %5696 = vmatprep.subr.mxu0 0.0
    %5697 = vmatpush1.msra.mxu0 %v4523
    %5698 = vmatprep.subr.mxu0 0.0
    %5699 = vmatpush1.msra.mxu0 %v4526
    %5700 = vmatprep.subr.mxu0 0.0
    %5701 = vmatpush1.msra.mxu0 %v4529
    %5702 = vmatprep.subr.mxu0 0.0
    %5703 = vmatpush1.msra.mxu0 0.0
    %5704 = vmatprep.subr.mxu0 0.0
    %5705 = vmatpush1.msra.mxu0 0.0
    %5706 = vmatprep.subr.mxu0 0.0
    %5707 = vmatpush1.msra.mxu0 0.0
    %5708 = vmatprep.subr.mxu0 0.0
    %5709 = vmatpush1.msra.mxu0 0.0
    %5710 = vmatprep.subr.mxu0 0.0
    %5711 = vmatpush1.msra.mxu0 0.0
    %5712 = vmatprep.subr.mxu0 0.0
    %5713 = vmatpush1.msra.mxu0 0.0
    %5714 = vmatprep.subr.mxu0 0.0
    %5715 = vmatpush1.msra.mxu0 0.0
    %5716 = vmatprep.subr.mxu0 0.0
    %5717 = vmatpush1.msra.mxu0 0.0
    %5718 = vmatprep.subr.mxu0 0.0
    %5719 = vmatpush1.msra.mxu0 0.0
    %5720 = vmatprep.subr.mxu0 0.0
    %5721 = vmatpush1.msra.mxu0 0.0
    %5722 = vmatprep.subr.mxu0 0.0
    %5723 = vmatpush1.msra.mxu0 0.0
    %5724 = vmatprep.subr.mxu0 0.0
    %5725 = vmatpush1.msra.mxu0 0.0
    %5726 = vmatprep.subr.mxu0 0.0
    %5727 = vmatpush1.msra.mxu0 0.0
    %5728 = vmatprep.subr.mxu0 0.0
    %5729 = vmatpush1.msra.mxu0 0.0
    %5730 = vmatprep.subr.mxu0 0.0
    %5731 = vmatpush1.msra.mxu0 0.0
    %5732 = vmatprep.subr.mxu0 0.0
    %5733 = vmatpush1.msra.mxu0 0.0
    %5734 = vmatprep.mubr.f32.mxu0 0.0
    %5735 = vmatmul.mubr.f32.gmra.mrb[0].mxu0 %v5569
    %v5736 = vpop.f32.mrb[0].mxu0
    %v5737 = vadd.f32 0.0, %v5736
    %v5738 = vpop.f32.mrb[0].mxu0
    %5739 = vdwg.mxu0
    %5740 = vmatprep.subr.mxu0 %v4531
    %5741 = vmatpush1.msra.mxu0 %v4530
    %5742 = vmatprep.subr.mxu0 %v4534
    %5743 = vmatpush1.msra.mxu0 %v4533
    %5744 = vmatprep.subr.mxu0 %v4537
    %5745 = vmatpush1.msra.mxu0 %v4536
    %5746 = vmatprep.subr.mxu0 %v4540
    %5747 = vmatpush1.msra.mxu0 %v4539
    %5748 = vmatprep.subr.mxu0 %v4543
    %5749 = vmatpush1.msra.mxu0 %v4542
    %5750 = vmatprep.subr.mxu0 %v4546
    %5751 = vmatpush1.msra.mxu0 %v4545
    %5752 = vmatprep.subr.mxu0 %v4549
    %5753 = vmatpush1.msra.mxu0 %v4548
    %5754 = vmatprep.subr.mxu0 %v4552
    %5755 = vmatpush1.msra.mxu0 %v4551
    %5756 = vmatprep.subr.mxu0 %v4555
    %5757 = vmatpush1.msra.mxu0 %v4554
    %5758 = vmatprep.subr.mxu0 %v4558
    %5759 = vmatpush1.msra.mxu0 %v4557
    %5760 = vmatprep.subr.mxu0 %v4561
    %5761 = vmatpush1.msra.mxu0 %v4560
    %5762 = vmatprep.subr.mxu0 %v4564
    %5763 = vmatpush1.msra.mxu0 %v4563
    %5764 = vmatprep.subr.mxu0 %v4567
    %5765 = vmatpush1.msra.mxu0 %v4566
    %5766 = vmatprep.subr.mxu0 %v4570
    %5767 = vmatpush1.msra.mxu0 %v4569
    %5768 = vmatprep.subr.mxu0 %v4573
    %5769 = vmatpush1.msra.mxu0 %v4572
    %5770 = vmatprep.subr.mxu0 %v4576
    %5771 = vmatpush1.msra.mxu0 %v4575
    %5772 = vmatprep.subr.mxu0 0.0
    %5773 = vmatpush1.msra.mxu0 0.0
    %5774 = vmatprep.subr.mxu0 0.0
    %5775 = vmatpush1.msra.mxu0 0.0
    %5776 = vmatprep.subr.mxu0 0.0
    %5777 = vmatpush1.msra.mxu0 0.0
    %5778 = vmatprep.subr.mxu0 0.0
    %5779 = vmatpush1.msra.mxu0 0.0
    %5780 = vmatprep.subr.mxu0 0.0
    %5781 = vmatpush1.msra.mxu0 0.0
    %5782 = vmatprep.subr.mxu0 0.0
    %5783 = vmatpush1.msra.mxu0 0.0
    %5784 = vmatprep.subr.mxu0 0.0
    %5785 = vmatpush1.msra.mxu0 0.0
    %5786 = vmatprep.subr.mxu0 0.0
    %5787 = vmatpush1.msra.mxu0 0.0
    %5788 = vmatprep.subr.mxu0 0.0
    %5789 = vmatpush1.msra.mxu0 0.0
    %5790 = vmatprep.subr.mxu0 0.0
    %5791 = vmatpush1.msra.mxu0 0.0
    %5792 = vmatprep.subr.mxu0 0.0
    %5793 = vmatpush1.msra.mxu0 0.0
    %5794 = vmatprep.subr.mxu0 0.0
    %5795 = vmatpush1.msra.mxu0 0.0
    %5796 = vmatprep.subr.mxu0 0.0
    %5797 = vmatpush1.msra.mxu0 0.0
    %5798 = vmatprep.subr.mxu0 0.0
    %5799 = vmatpush1.msra.mxu0 0.0
    %5800 = vmatprep.subr.mxu0 0.0
    %5801 = vmatpush1.msra.mxu0 0.0
    %5802 = vmatprep.subr.mxu0 0.0
    %5803 = vmatpush1.msra.mxu0 0.0
    %5804 = vmatprep.mubr.f32.mxu0 0.0
    %5805 = vmatmul.mubr.f32.gmra.mrb[0].mxu0 %v5594
    %v5806 = vpop.f32.mrb[0].mxu0
    %v5807 = vadd.f32 0.0, %v5806
    %v5808 = vpop.f32.mrb[0].mxu0
    %v5809 = vadd.f32 0.0, %v5808
    %5810 = vdwg.mxu0
    %5811 = vmatprep.subr.mxu0 0.0
    %5812 = vmatpush1.msra.mxu0 %v4532
    %5813 = vmatprep.subr.mxu0 0.0
    %5814 = vmatpush1.msra.mxu0 %v4535
    %5815 = vmatprep.subr.mxu0 0.0
    %5816 = vmatpush1.msra.mxu0 %v4538
    %5817 = vmatprep.subr.mxu0 0.0
    %5818 = vmatpush1.msra.mxu0 %v4541
    %5819 = vmatprep.subr.mxu0 0.0
    %5820 = vmatpush1.msra.mxu0 %v4544
    %5821 = vmatprep.subr.mxu0 0.0
    %5822 = vmatpush1.msra.mxu0 %v4547
    %5823 = vmatprep.subr.mxu0 0.0
    %5824 = vmatpush1.msra.mxu0 %v4550
    %5825 = vmatprep.subr.mxu0 0.0
    %5826 = vmatpush1.msra.mxu0 %v4553
    %5827 = vmatprep.subr.mxu0 0.0
    %5828 = vmatpush1.msra.mxu0 %v4556
    %5829 = vmatprep.subr.mxu0 0.0
    %5830 = vmatpush1.msra.mxu0 %v4559
    %5831 = vmatprep.subr.mxu0 0.0
    %5832 = vmatpush1.msra.mxu0 %v4562
    %5833 = vmatprep.subr.mxu0 0.0
    %5834 = vmatpush1.msra.mxu0 %v4565
    %5835 = vmatprep.subr.mxu0 0.0
    %5836 = vmatpush1.msra.mxu0 %v4568
    %5837 = vmatprep.subr.mxu0 0.0
    %5838 = vmatpush1.msra.mxu0 %v4571
    %5839 = vmatprep.subr.mxu0 0.0
    %5840 = vmatpush1.msra.mxu0 %v4574
    %5841 = vmatprep.subr.mxu0 0.0
    %5842 = vmatpush1.msra.mxu0 %v4577
    %5843 = vmatprep.subr.mxu0 0.0
    %5844 = vmatpush1.msra.mxu0 0.0
    %5845 = vmatprep.subr.mxu0 0.0
    %5846 = vmatpush1.msra.mxu0 0.0
    %5847 = vmatprep.subr.mxu0 0.0
    %5848 = vmatpush1.msra.mxu0 0.0
    %5849 = vmatprep.subr.mxu0 0.0
    %5850 = vmatpush1.msra.mxu0 0.0
    %5851 = vmatprep.subr.mxu0 0.0
    %5852 = vmatpush1.msra.mxu0 0.0
    %5853 = vmatprep.subr.mxu0 0.0
    %5854 = vmatpush1.msra.mxu0 0.0
    %5855 = vmatprep.subr.mxu0 0.0
    %5856 = vmatpush1.msra.mxu0 0.0
    %5857 = vmatprep.subr.mxu0 0.0
    %5858 = vmatpush1.msra.mxu0 0.0
    %5859 = vmatprep.subr.mxu0 0.0
    %5860 = vmatpush1.msra.mxu0 0.0
    %5861 = vmatprep.subr.mxu0 0.0
    %5862 = vmatpush1.msra.mxu0 0.0
    %5863 = vmatprep.subr.mxu0 0.0
    %5864 = vmatpush1.msra.mxu0 0.0
    %5865 = vmatprep.subr.mxu0 0.0
    %5866 = vmatpush1.msra.mxu0 0.0
    %5867 = vmatprep.subr.mxu0 0.0
    %5868 = vmatpush1.msra.mxu0 0.0
    %5869 = vmatprep.subr.mxu0 0.0
    %5870 = vmatpush1.msra.mxu0 0.0
    %5871 = vmatprep.subr.mxu0 0.0
    %5872 = vmatpush1.msra.mxu0 0.0
    %5873 = vmatprep.subr.mxu0 0.0
    %5874 = vmatpush1.msra.mxu0 0.0
    %5875 = vmatprep.mubr.f32.mxu0 0.0
    %5876 = vmatmul.mubr.f32.gmra.mrb[0].mxu0 %v5594
    %v5877 = vpop.f32.mrb[0].mxu0
    %v5878 = vadd.f32 0.0, %v5877
    %v5879 = vpop.f32.mrb[0].mxu0
    %5880 = vdwg.mxu0
    %v5881 = vld [vmem:[%s2062] sm:$0xff]
    %v5882 = vld [vmem:[%s2062 + $0x8] sm:$0xff]
    %v5883 = vld [vmem:[%s2062 + $0x10] sm:$0xff]
    %v5884 = vadd.f32 %v5881, %v5666
    %v5885 = vxor.u32 %v5884, 2147483648
    %v5886 = vmul.f32 %v5885, 1.442695
    %v5887 = vpow.pop %v5886
    %v5888 = vadd.f32 %v5887, 1.0
    %v5889 = vrcp.pop %v5888
    %v5890 = vmul.f32 1.0, %v5889
    %v5891 = vadd.f32 %v5882, %v5668
    %v5892 = vxor.u32 %v5891, 2147483648
    %v5893 = vmul.f32 %v5892, 1.442695
    %v5894 = vpow.pop %v5893
    %v5895 = vadd.f32 %v5894, 1.0
    %v5896 = vrcp.pop %v5895
    %v5897 = vmul.f32 1.0, %v5896
    %v5898 = vadd.f32 %v5737, %v4883
    %v5899 = vmul.f32 %v5890, %v5898
    %v5900 = vadd.f32 %v5883, %v5899
    %v5901 = vtanh.pop %v5900
    %v5902 = vsub.f32 1.0, %v5897
    %v5903 = vmul.f32 %v5902, %v5901
    %v5904 = vmul.f32 %v5897, %v5569
    %v5905 = vadd.f32 %v5903, %v5904
    %v5906 = vld [vmem:[%s2088] sm:$0xff]
    %v5907 = vld [vmem:[%s2088 + $0x8] sm:$0xff]
    %v5908 = vld [vmem:[%s2088 + $0x10] sm:$0xff]
    %v5909 = vadd.f32 %v5906, %v5807
    %v5910 = vxor.u32 %v5909, 2147483648
    %v5911 = vmul.f32 %v5910, 1.442695
    %v5912 = vpow.pop %v5911
    %v5913 = vadd.f32 %v5912, 1.0
    %v5914 = vrcp.pop %v5913
    %v5915 = vmul.f32 1.0, %v5914
    %v5916 = vadd.f32 %v5907, %v5809
    %v5917 = vxor.u32 %v5916, 2147483648
    %v5918 = vmul.f32 %v5917, 1.442695
    %v5919 = vpow.pop %v5918
    %v5920 = vadd.f32 %v5919, 1.0
    %v5921 = vrcp.pop %v5920
    %v5922 = vmul.f32 1.0, %v5921
    %v5923 = vadd.f32 %v5878, %v4914
    %v5924 = vmul.f32 %v5915, %v5923
    %v5925 = vadd.f32 %v5908, %v5924
    %v5926 = vtanh.pop %v5925
    %v5927 = vsub.f32 1.0, %v5922
    %v5928 = vmul.f32 %v5927, %v5926
    %v5929 = vmul.f32 %v5922, %v5594
    %v5930 = vadd.f32 %v5928, %v5929
    %s5931 = scalar_lea.vmem %s15, 24
    %5932 = vst [vmem:[%s5931] sm:$0xff] %v5905
    %s5933 = scalar_lea.vmem %s16, 32
    %5934 = vst [vmem:[%s5933] sm:$0xff] %v5930
    %5935 = vmatprep.subr.mxu0 %v4483
    %5936 = vmatpush1.msra.mxu0 %v4482
    %5937 = vmatprep.subr.mxu0 %v4486
    %5938 = vmatpush1.msra.mxu0 %v4485
    %5939 = vmatprep.subr.mxu0 %v4489
    %5940 = vmatpush1.msra.mxu0 %v4488
    %5941 = vmatprep.subr.mxu0 %v4492
    %5942 = vmatpush1.msra.mxu0 %v4491
    %5943 = vmatprep.subr.mxu0 %v4495
    %5944 = vmatpush1.msra.mxu0 %v4494
    %5945 = vmatprep.subr.mxu0 %v4498
    %5946 = vmatpush1.msra.mxu0 %v4497
    %5947 = vmatprep.subr.mxu0 %v4501
    %5948 = vmatpush1.msra.mxu0 %v4500
    %5949 = vmatprep.subr.mxu0 %v4504
    %5950 = vmatpush1.msra.mxu0 %v4503
    %5951 = vmatprep.subr.mxu0 %v4507
    %5952 = vmatpush1.msra.mxu0 %v4506
    %5953 = vmatprep.subr.mxu0 %v4510
    %5954 = vmatpush1.msra.mxu0 %v4509
    %5955 = vmatprep.subr.mxu0 %v4513
    %5956 = vmatpush1.msra.mxu0 %v4512
    %5957 = vmatprep.subr.mxu0 %v4516
    %5958 = vmatpush1.msra.mxu0 %v4515
    %5959 = vmatprep.subr.mxu0 %v4519
    %5960 = vmatpush1.msra.mxu0 %v4518
    %5961 = vmatprep.subr.mxu0 %v4522
    %5962 = vmatpush1.msra.mxu0 %v4521
    %5963 = vmatprep.subr.mxu0 %v4525
    %5964 = vmatpush1.msra.mxu0 %v4524
    %5965 = vmatprep.subr.mxu0 %v4528
    %5966 = vmatpush1.msra.mxu0 %v4527
    %5967 = vmatprep.subr.mxu0 0.0
    %5968 = vmatpush1.msra.mxu0 0.0
    %5969 = vmatprep.subr.mxu0 0.0
    %5970 = vmatpush1.msra.mxu0 0.0
    %5971 = vmatprep.subr.mxu0 0.0
    %5972 = vmatpush1.msra.mxu0 0.0
    %5973 = vmatprep.subr.mxu0 0.0
    %5974 = vmatpush1.msra.mxu0 0.0
    %5975 = vmatprep.subr.mxu0 0.0
    %5976 = vmatpush1.msra.mxu0 0.0
    %5977 = vmatprep.subr.mxu0 0.0
    %5978 = vmatpush1.msra.mxu0 0.0
    %5979 = vmatprep.subr.mxu0 0.0
    %5980 = vmatpush1.msra.mxu0 0.0
    %5981 = vmatprep.subr.mxu0 0.0
    %5982 = vmatpush1.msra.mxu0 0.0
    %5983 = vmatprep.subr.mxu0 0.0
    %5984 = vmatpush1.msra.mxu0 0.0
    %5985 = vmatprep.subr.mxu0 0.0
    %5986 = vmatpush1.msra.mxu0 0.0
    %5987 = vmatprep.subr.mxu0 0.0
    %5988 = vmatpush1.msra.mxu0 0.0
    %5989 = vmatprep.subr.mxu0 0.0
    %5990 = vmatpush1.msra.mxu0 0.0
    %5991 = vmatprep.subr.mxu0 0.0
    %5992 = vmatpush1.msra.mxu0 0.0
    %5993 = vmatprep.subr.mxu0 0.0
    %5994 = vmatpush1.msra.mxu0 0.0
    %5995 = vmatprep.subr.mxu0 0.0
    %5996 = vmatpush1.msra.mxu0 0.0
    %5997 = vmatprep.subr.mxu0 0.0
    %5998 = vmatpush1.msra.mxu0 0.0
    %5999 = vmatprep.mubr.f32.mxu0 0.0
    %6000 = vmatmul.mubr.f32.gmra.mrb[0].mxu0 %v5905
    %v6001 = vpop.f32.mrb[0].mxu0
    %v6002 = vadd.f32 0.0, %v6001
    %v6003 = vpop.f32.mrb[0].mxu0
    %v6004 = vadd.f32 0.0, %v6003
    %6005 = vdwg.mxu0
    %6006 = vmatprep.subr.mxu0 0.0
    %6007 = vmatpush1.msra.mxu0 %v4484
    %6008 = vmatprep.subr.mxu0 0.0
    %6009 = vmatpush1.msra.mxu0 %v4487
    %6010 = vmatprep.subr.mxu0 0.0
    %6011 = vmatpush1.msra.mxu0 %v4490
    %6012 = vmatprep.subr.mxu0 0.0
    %6013 = vmatpush1.msra.mxu0 %v4493
    %6014 = vmatprep.subr.mxu0 0.0
    %6015 = vmatpush1.msra.mxu0 %v4496
    %6016 = vmatprep.subr.mxu0 0.0
    %6017 = vmatpush1.msra.mxu0 %v4499
    %6018 = vmatprep.subr.mxu0 0.0
    %6019 = vmatpush1.msra.mxu0 %v4502
    %6020 = vmatprep.subr.mxu0 0.0
    %6021 = vmatpush1.msra.mxu0 %v4505
    %6022 = vmatprep.subr.mxu0 0.0
    %6023 = vmatpush1.msra.mxu0 %v4508
    %6024 = vmatprep.subr.mxu0 0.0
    %6025 = vmatpush1.msra.mxu0 %v4511
    %6026 = vmatprep.subr.mxu0 0.0
    %6027 = vmatpush1.msra.mxu0 %v4514
    %6028 = vmatprep.subr.mxu0 0.0
    %6029 = vmatpush1.msra.mxu0 %v4517
    %6030 = vmatprep.subr.mxu0 0.0
    %6031 = vmatpush1.msra.mxu0 %v4520
    %6032 = vmatprep.subr.mxu0 0.0
    %6033 = vmatpush1.msra.mxu0 %v4523
    %6034 = vmatprep.subr.mxu0 0.0
    %6035 = vmatpush1.msra.mxu0 %v4526
    %6036 = vmatprep.subr.mxu0 0.0
    %6037 = vmatpush1.msra.mxu0 %v4529
    %6038 = vmatprep.subr.mxu0 0.0
    %6039 = vmatpush1.msra.mxu0 0.0
    %6040 = vmatprep.subr.mxu0 0.0
    %6041 = vmatpush1.msra.mxu0 0.0
    %6042 = vmatprep.subr.mxu0 0.0
    %6043 = vmatpush1.msra.mxu0 0.0
    %6044 = vmatprep.subr.mxu0 0.0
    %6045 = vmatpush1.msra.mxu0 0.0
    %6046 = vmatprep.subr.mxu0 0.0
    %6047 = vmatpush1.msra.mxu0 0.0
    %6048 = vmatprep.subr.mxu0 0.0
    %6049 = vmatpush1.msra.mxu0 0.0
    %6050 = vmatprep.subr.mxu0 0.0
    %6051 = vmatpush1.msra.mxu0 0.0
    %6052 = vmatprep.subr.mxu0 0.0
    %6053 = vmatpush1.msra.mxu0 0.0
    %6054 = vmatprep.subr.mxu0 0.0
    %6055 = vmatpush1.msra.mxu0 0.0
    %6056 = vmatprep.subr.mxu0 0.0
    %6057 = vmatpush1.msra.mxu0 0.0
    %6058 = vmatprep.subr.mxu0 0.0
    %6059 = vmatpush1.msra.mxu0 0.0
    %6060 = vmatprep.subr.mxu0 0.0
    %6061 = vmatpush1.msra.mxu0 0.0
    %6062 = vmatprep.subr.mxu0 0.0
    %6063 = vmatpush1.msra.mxu0 0.0
    %6064 = vmatprep.subr.mxu0 0.0
    %6065 = vmatpush1.msra.mxu0 0.0
    %6066 = vmatprep.subr.mxu0 0.0
    %6067 = vmatpush1.msra.mxu0 0.0
    %6068 = vmatprep.subr.mxu0 0.0
    %6069 = vmatpush1.msra.mxu0 0.0
    %6070 = vmatprep.mubr.f32.mxu0 0.0
    %6071 = vmatmul.mubr.f32.gmra.mrb[0].mxu0 %v5905
    %v6072 = vpop.f32.mrb[0].mxu0
    %v6073 = vadd.f32 0.0, %v6072
    %v6074 = vpop.f32.mrb[0].mxu0
    %6075 = vdwg.mxu0
    %6076 = vmatprep.subr.mxu0 %v4531
    %6077 = vmatpush1.msra.mxu0 %v4530
    %6078 = vmatprep.subr.mxu0 %v4534
    %6079 = vmatpush1.msra.mxu0 %v4533
    %6080 = vmatprep.subr.mxu0 %v4537
    %6081 = vmatpush1.msra.mxu0 %v4536
    %6082 = vmatprep.subr.mxu0 %v4540
    %6083 = vmatpush1.msra.mxu0 %v4539
    %6084 = vmatprep.subr.mxu0 %v4543
    %6085 = vmatpush1.msra.mxu0 %v4542
    %6086 = vmatprep.subr.mxu0 %v4546
    %6087 = vmatpush1.msra.mxu0 %v4545
    %6088 = vmatprep.subr.mxu0 %v4549
    %6089 = vmatpush1.msra.mxu0 %v4548
    %6090 = vmatprep.subr.mxu0 %v4552
    %6091 = vmatpush1.msra.mxu0 %v4551
    %6092 = vmatprep.subr.mxu0 %v4555
    %6093 = vmatpush1.msra.mxu0 %v4554
    %6094 = vmatprep.subr.mxu0 %v4558
    %6095 = vmatpush1.msra.mxu0 %v4557
    %6096 = vmatprep.subr.mxu0 %v4561
    %6097 = vmatpush1.msra.mxu0 %v4560
    %6098 = vmatprep.subr.mxu0 %v4564
    %6099 = vmatpush1.msra.mxu0 %v4563
    %6100 = vmatprep.subr.mxu0 %v4567
    %6101 = vmatpush1.msra.mxu0 %v4566
    %6102 = vmatprep.subr.mxu0 %v4570
    %6103 = vmatpush1.msra.mxu0 %v4569
    %6104 = vmatprep.subr.mxu0 %v4573
    %6105 = vmatpush1.msra.mxu0 %v4572
    %6106 = vmatprep.subr.mxu0 %v4576
    %6107 = vmatpush1.msra.mxu0 %v4575
    %6108 = vmatprep.subr.mxu0 0.0
    %6109 = vmatpush1.msra.mxu0 0.0
    %6110 = vmatprep.subr.mxu0 0.0
    %6111 = vmatpush1.msra.mxu0 0.0
    %6112 = vmatprep.subr.mxu0 0.0
    %6113 = vmatpush1.msra.mxu0 0.0
    %6114 = vmatprep.subr.mxu0 0.0
    %6115 = vmatpush1.msra.mxu0 0.0
    %6116 = vmatprep.subr.mxu0 0.0
    %6117 = vmatpush1.msra.mxu0 0.0
    %6118 = vmatprep.subr.mxu0 0.0
    %6119 = vmatpush1.msra.mxu0 0.0
    %6120 = vmatprep.subr.mxu0 0.0
    %6121 = vmatpush1.msra.mxu0 0.0
    %6122 = vmatprep.subr.mxu0 0.0
    %6123 = vmatpush1.msra.mxu0 0.0
    %6124 = vmatprep.subr.mxu0 0.0
    %6125 = vmatpush1.msra.mxu0 0.0
    %6126 = vmatprep.subr.mxu0 0.0
    %6127 = vmatpush1.msra.mxu0 0.0
    %6128 = vmatprep.subr.mxu0 0.0
    %6129 = vmatpush1.msra.mxu0 0.0
    %6130 = vmatprep.subr.mxu0 0.0
    %6131 = vmatpush1.msra.mxu0 0.0
    %6132 = vmatprep.subr.mxu0 0.0
    %6133 = vmatpush1.msra.mxu0 0.0
    %6134 = vmatprep.subr.mxu0 0.0
    %6135 = vmatpush1.msra.mxu0 0.0
    %6136 = vmatprep.subr.mxu0 0.0
    %6137 = vmatpush1.msra.mxu0 0.0
    %6138 = vmatprep.subr.mxu0 0.0
    %6139 = vmatpush1.msra.mxu0 0.0
    %6140 = vmatprep.mubr.f32.mxu0 0.0
    %6141 = vmatmul.mubr.f32.gmra.mrb[0].mxu0 %v5930
    %v6142 = vpop.f32.mrb[0].mxu0
    %v6143 = vadd.f32 0.0, %v6142
    %v6144 = vpop.f32.mrb[0].mxu0
    %v6145 = vadd.f32 0.0, %v6144
    %6146 = vdwg.mxu0
    %6147 = vmatprep.subr.mxu0 0.0
    %6148 = vmatpush1.msra.mxu0 %v4532
    %6149 = vmatprep.subr.mxu0 0.0
    %6150 = vmatpush1.msra.mxu0 %v4535
    %6151 = vmatprep.subr.mxu0 0.0
    %6152 = vmatpush1.msra.mxu0 %v4538
    %6153 = vmatprep.subr.mxu0 0.0
    %6154 = vmatpush1.msra.mxu0 %v4541
    %6155 = vmatprep.subr.mxu0 0.0
    %6156 = vmatpush1.msra.mxu0 %v4544
    %6157 = vmatprep.subr.mxu0 0.0
    %6158 = vmatpush1.msra.mxu0 %v4547
    %6159 = vmatprep.subr.mxu0 0.0
    %6160 = vmatpush1.msra.mxu0 %v4550
    %6161 = vmatprep.subr.mxu0 0.0
    %6162 = vmatpush1.msra.mxu0 %v4553
    %6163 = vmatprep.subr.mxu0 0.0
    %6164 = vmatpush1.msra.mxu0 %v4556
    %6165 = vmatprep.subr.mxu0 0.0
    %6166 = vmatpush1.msra.mxu0 %v4559
    %6167 = vmatprep.subr.mxu0 0.0
    %6168 = vmatpush1.msra.mxu0 %v4562
    %6169 = vmatprep.subr.mxu0 0.0
    %6170 = vmatpush1.msra.mxu0 %v4565
    %6171 = vmatprep.subr.mxu0 0.0
    %6172 = vmatpush1.msra.mxu0 %v4568
    %6173 = vmatprep.subr.mxu0 0.0
    %6174 = vmatpush1.msra.mxu0 %v4571
    %6175 = vmatprep.subr.mxu0 0.0
    %6176 = vmatpush1.msra.mxu0 %v4574
    %6177 = vmatprep.subr.mxu0 0.0
    %6178 = vmatpush1.msra.mxu0 %v4577
    %6179 = vmatprep.subr.mxu0 0.0
    %6180 = vmatpush1.msra.mxu0 0.0
    %6181 = vmatprep.subr.mxu0 0.0
    %6182 = vmatpush1.msra.mxu0 0.0
    %6183 = vmatprep.subr.mxu0 0.0
    %6184 = vmatpush1.msra.mxu0 0.0
    %6185 = vmatprep.subr.mxu0 0.0
    %6186 = vmatpush1.msra.mxu0 0.0
    %6187 = vmatprep.subr.mxu0 0.0
    %6188 = vmatpush1.msra.mxu0 0.0
    %6189 = vmatprep.subr.mxu0 0.0
    %6190 = vmatpush1.msra.mxu0 0.0
    %6191 = vmatprep.subr.mxu0 0.0
    %6192 = vmatpush1.msra.mxu0 0.0
    %6193 = vmatprep.subr.mxu0 0.0
    %6194 = vmatpush1.msra.mxu0 0.0
    %6195 = vmatprep.subr.mxu0 0.0
    %6196 = vmatpush1.msra.mxu0 0.0
    %6197 = vmatprep.subr.mxu0 0.0
    %6198 = vmatpush1.msra.mxu0 0.0
    %6199 = vmatprep.subr.mxu0 0.0
    %6200 = vmatpush1.msra.mxu0 0.0
    %6201 = vmatprep.subr.mxu0 0.0
    %6202 = vmatpush1.msra.mxu0 0.0
    %6203 = vmatprep.subr.mxu0 0.0
    %6204 = vmatpush1.msra.mxu0 0.0
    %6205 = vmatprep.subr.mxu0 0.0
    %6206 = vmatpush1.msra.mxu0 0.0
    %6207 = vmatprep.subr.mxu0 0.0
    %6208 = vmatpush1.msra.mxu0 0.0
    %6209 = vmatprep.subr.mxu0 0.0
    %6210 = vmatpush1.msra.mxu0 0.0
    %6211 = vmatprep.mubr.f32.mxu0 0.0
    %6212 = vmatmul.mubr.f32.gmra.mrb[0].mxu0 %v5930
    %v6213 = vpop.f32.mrb[0].mxu0
    %v6214 = vadd.f32 0.0, %v6213
    %v6215 = vpop.f32.mrb[0].mxu0
    %6216 = vdwg.mxu0
    %v6217 = vld [vmem:[%s2400] sm:$0xff]
    %v6218 = vld [vmem:[%s2400 + $0x8] sm:$0xff]
    %v6219 = vld [vmem:[%s2400 + $0x10] sm:$0xff]
    %v6220 = vadd.f32 %v6217, %v6002
    %v6221 = vxor.u32 %v6220, 2147483648
    %v6222 = vmul.f32 %v6221, 1.442695
    %v6223 = vpow.pop %v6222
    %v6224 = vadd.f32 %v6223, 1.0
    %v6225 = vrcp.pop %v6224
    %v6226 = vmul.f32 1.0, %v6225
    %v6227 = vadd.f32 %v6218, %v6004
    %v6228 = vxor.u32 %v6227, 2147483648
    %v6229 = vmul.f32 %v6228, 1.442695
    %v6230 = vpow.pop %v6229
    %v6231 = vadd.f32 %v6230, 1.0
    %v6232 = vrcp.pop %v6231
    %v6233 = vmul.f32 1.0, %v6232
    %v6234 = vadd.f32 %v6073, %v4883
    %v6235 = vmul.f32 %v6226, %v6234
    %v6236 = vadd.f32 %v6219, %v6235
    %v6237 = vtanh.pop %v6236
    %v6238 = vsub.f32 1.0, %v6233
    %v6239 = vmul.f32 %v6238, %v6237
    %v6240 = vmul.f32 %v6233, %v5905
    %v6241 = vadd.f32 %v6239, %v6240
    %v6242 = vld [vmem:[%s2426] sm:$0xff]
    %v6243 = vld [vmem:[%s2426 + $0x8] sm:$0xff]
    %v6244 = vld [vmem:[%s2426 + $0x10] sm:$0xff]
    %v6245 = vadd.f32 %v6242, %v6143
    %v6246 = vxor.u32 %v6245, 2147483648
    %v6247 = vmul.f32 %v6246, 1.442695
    %v6248 = vpow.pop %v6247
    %v6249 = vadd.f32 %v6248, 1.0
    %v6250 = vrcp.pop %v6249
    %v6251 = vmul.f32 1.0, %v6250
    %v6252 = vadd.f32 %v6243, %v6145
    %v6253 = vxor.u32 %v6252, 2147483648
    %v6254 = vmul.f32 %v6253, 1.442695
    %v6255 = vpow.pop %v6254
    %v6256 = vadd.f32 %v6255, 1.0
    %v6257 = vrcp.pop %v6256
    %v6258 = vmul.f32 1.0, %v6257
    %v6259 = vadd.f32 %v6214, %v4914
    %v6260 = vmul.f32 %v6251, %v6259
    %v6261 = vadd.f32 %v6244, %v6260
    %v6262 = vtanh.pop %v6261
    %v6263 = vsub.f32 1.0, %v6258
    %v6264 = vmul.f32 %v6263, %v6262
    %v6265 = vmul.f32 %v6258, %v5930
    %v6266 = vadd.f32 %v6264, %v6265
    %s6267 = scalar_lea.vmem %s15, 32
    %6268 = vst [vmem:[%s6267] sm:$0xff] %v6241
    %s6269 = scalar_lea.vmem %s16, 24
    %6270 = vst [vmem:[%s6269] sm:$0xff] %v6266
    %6271 = vmatprep.subr.mxu0 %v4483
    %6272 = vmatpush1.msra.mxu0 %v4482
    %6273 = vmatprep.subr.mxu0 %v4486
    %6274 = vmatpush1.msra.mxu0 %v4485
    %6275 = vmatprep.subr.mxu0 %v4489
    %6276 = vmatpush1.msra.mxu0 %v4488
    %6277 = vmatprep.subr.mxu0 %v4492
    %6278 = vmatpush1.msra.mxu0 %v4491
    %6279 = vmatprep.subr.mxu0 %v4495
    %6280 = vmatpush1.msra.mxu0 %v4494
    %6281 = vmatprep.subr.mxu0 %v4498
    %6282 = vmatpush1.msra.mxu0 %v4497
    %6283 = vmatprep.subr.mxu0 %v4501
    %6284 = vmatpush1.msra.mxu0 %v4500
    %6285 = vmatprep.subr.mxu0 %v4504
    %6286 = vmatpush1.msra.mxu0 %v4503
    %6287 = vmatprep.subr.mxu0 %v4507
    %6288 = vmatpush1.msra.mxu0 %v4506
    %6289 = vmatprep.subr.mxu0 %v4510
    %6290 = vmatpush1.msra.mxu0 %v4509
    %6291 = vmatprep.subr.mxu0 %v4513
    %6292 = vmatpush1.msra.mxu0 %v4512
    %6293 = vmatprep.subr.mxu0 %v4516
    %6294 = vmatpush1.msra.mxu0 %v4515
    %6295 = vmatprep.subr.mxu0 %v4519
    %6296 = vmatpush1.msra.mxu0 %v4518
    %6297 = vmatprep.subr.mxu0 %v4522
    %6298 = vmatpush1.msra.mxu0 %v4521
    %6299 = vmatprep.subr.mxu0 %v4525
    %6300 = vmatpush1.msra.mxu0 %v4524
    %6301 = vmatprep.subr.mxu0 %v4528
    %6302 = vmatpush1.msra.mxu0 %v4527
    %6303 = vmatprep.subr.mxu0 0.0
    %6304 = vmatpush1.msra.mxu0 0.0
    %6305 = vmatprep.subr.mxu0 0.0
    %6306 = vmatpush1.msra.mxu0 0.0
    %6307 = vmatprep.subr.mxu0 0.0
    %6308 = vmatpush1.msra.mxu0 0.0
    %6309 = vmatprep.subr.mxu0 0.0
    %6310 = vmatpush1.msra.mxu0 0.0
    %6311 = vmatprep.subr.mxu0 0.0
    %6312 = vmatpush1.msra.mxu0 0.0
    %6313 = vmatprep.subr.mxu0 0.0
    %6314 = vmatpush1.msra.mxu0 0.0
    %6315 = vmatprep.subr.mxu0 0.0
    %6316 = vmatpush1.msra.mxu0 0.0
    %6317 = vmatprep.subr.mxu0 0.0
    %6318 = vmatpush1.msra.mxu0 0.0
    %6319 = vmatprep.subr.mxu0 0.0
    %6320 = vmatpush1.msra.mxu0 0.0
    %6321 = vmatprep.subr.mxu0 0.0
    %6322 = vmatpush1.msra.mxu0 0.0
    %6323 = vmatprep.subr.mxu0 0.0
    %6324 = vmatpush1.msra.mxu0 0.0
    %6325 = vmatprep.subr.mxu0 0.0
    %6326 = vmatpush1.msra.mxu0 0.0
    %6327 = vmatprep.subr.mxu0 0.0
    %6328 = vmatpush1.msra.mxu0 0.0
    %6329 = vmatprep.subr.mxu0 0.0
    %6330 = vmatpush1.msra.mxu0 0.0
    %6331 = vmatprep.subr.mxu0 0.0
    %6332 = vmatpush1.msra.mxu0 0.0
    %6333 = vmatprep.subr.mxu0 0.0
    %6334 = vmatpush1.msra.mxu0 0.0
    %6335 = vmatprep.mubr.f32.mxu0 0.0
    %6336 = vmatmul.mubr.f32.gmra.mrb[0].mxu0 %v6241
    %v6337 = vpop.f32.mrb[0].mxu0
    %v6338 = vadd.f32 0.0, %v6337
    %v6339 = vpop.f32.mrb[0].mxu0
    %v6340 = vadd.f32 0.0, %v6339
    %6341 = vdwg.mxu0
    %6342 = vmatprep.subr.mxu0 0.0
    %6343 = vmatpush1.msra.mxu0 %v4484
    %6344 = vmatprep.subr.mxu0 0.0
    %6345 = vmatpush1.msra.mxu0 %v4487
    %6346 = vmatprep.subr.mxu0 0.0
    %6347 = vmatpush1.msra.mxu0 %v4490
    %6348 = vmatprep.subr.mxu0 0.0
    %6349 = vmatpush1.msra.mxu0 %v4493
    %6350 = vmatprep.subr.mxu0 0.0
    %6351 = vmatpush1.msra.mxu0 %v4496
    %6352 = vmatprep.subr.mxu0 0.0
    %6353 = vmatpush1.msra.mxu0 %v4499
    %6354 = vmatprep.subr.mxu0 0.0
    %6355 = vmatpush1.msra.mxu0 %v4502
    %6356 = vmatprep.subr.mxu0 0.0
    %6357 = vmatpush1.msra.mxu0 %v4505
    %6358 = vmatprep.subr.mxu0 0.0
    %6359 = vmatpush1.msra.mxu0 %v4508
    %6360 = vmatprep.subr.mxu0 0.0
    %6361 = vmatpush1.msra.mxu0 %v4511
    %6362 = vmatprep.subr.mxu0 0.0
    %6363 = vmatpush1.msra.mxu0 %v4514
    %6364 = vmatprep.subr.mxu0 0.0
    %6365 = vmatpush1.msra.mxu0 %v4517
    %6366 = vmatprep.subr.mxu0 0.0
    %6367 = vmatpush1.msra.mxu0 %v4520
    %6368 = vmatprep.subr.mxu0 0.0
    %6369 = vmatpush1.msra.mxu0 %v4523
    %6370 = vmatprep.subr.mxu0 0.0
    %6371 = vmatpush1.msra.mxu0 %v4526
    %6372 = vmatprep.subr.mxu0 0.0
    %6373 = vmatpush1.msra.mxu0 %v4529
    %6374 = vmatprep.subr.mxu0 0.0
    %6375 = vmatpush1.msra.mxu0 0.0
    %6376 = vmatprep.subr.mxu0 0.0
    %6377 = vmatpush1.msra.mxu0 0.0
    %6378 = vmatprep.subr.mxu0 0.0
    %6379 = vmatpush1.msra.mxu0 0.0
    %6380 = vmatprep.subr.mxu0 0.0
    %6381 = vmatpush1.msra.mxu0 0.0
    %6382 = vmatprep.subr.mxu0 0.0
    %6383 = vmatpush1.msra.mxu0 0.0
    %6384 = vmatprep.subr.mxu0 0.0
    %6385 = vmatpush1.msra.mxu0 0.0
    %6386 = vmatprep.subr.mxu0 0.0
    %6387 = vmatpush1.msra.mxu0 0.0
    %6388 = vmatprep.subr.mxu0 0.0
    %6389 = vmatpush1.msra.mxu0 0.0
    %6390 = vmatprep.subr.mxu0 0.0
    %6391 = vmatpush1.msra.mxu0 0.0
    %6392 = vmatprep.subr.mxu0 0.0
    %6393 = vmatpush1.msra.mxu0 0.0
    %6394 = vmatprep.subr.mxu0 0.0
    %6395 = vmatpush1.msra.mxu0 0.0
    %6396 = vmatprep.subr.mxu0 0.0
    %6397 = vmatpush1.msra.mxu0 0.0
    %6398 = vmatprep.subr.mxu0 0.0
    %6399 = vmatpush1.msra.mxu0 0.0
    %6400 = vmatprep.subr.mxu0 0.0
    %6401 = vmatpush1.msra.mxu0 0.0
    %6402 = vmatprep.subr.mxu0 0.0
    %6403 = vmatpush1.msra.mxu0 0.0
    %6404 = vmatprep.subr.mxu0 0.0
    %6405 = vmatpush1.msra.mxu0 0.0
    %6406 = vmatprep.mubr.f32.mxu0 0.0
    %6407 = vmatmul.mubr.f32.gmra.mrb[0].mxu0 %v6241
    %v6408 = vpop.f32.mrb[0].mxu0
    %v6409 = vadd.f32 0.0, %v6408
    %v6410 = vpop.f32.mrb[0].mxu0
    %6411 = vdwg.mxu0
    %6412 = vmatprep.subr.mxu0 %v4531
    %6413 = vmatpush1.msra.mxu0 %v4530
    %6414 = vmatprep.subr.mxu0 %v4534
    %6415 = vmatpush1.msra.mxu0 %v4533
    %6416 = vmatprep.subr.mxu0 %v4537
    %6417 = vmatpush1.msra.mxu0 %v4536
    %6418 = vmatprep.subr.mxu0 %v4540
    %6419 = vmatpush1.msra.mxu0 %v4539
    %6420 = vmatprep.subr.mxu0 %v4543
    %6421 = vmatpush1.msra.mxu0 %v4542
    %6422 = vmatprep.subr.mxu0 %v4546
    %6423 = vmatpush1.msra.mxu0 %v4545
    %6424 = vmatprep.subr.mxu0 %v4549
    %6425 = vmatpush1.msra.mxu0 %v4548
    %6426 = vmatprep.subr.mxu0 %v4552
    %6427 = vmatpush1.msra.mxu0 %v4551
    %6428 = vmatprep.subr.mxu0 %v4555
    %6429 = vmatpush1.msra.mxu0 %v4554
    %6430 = vmatprep.subr.mxu0 %v4558
    %6431 = vmatpush1.msra.mxu0 %v4557
    %6432 = vmatprep.subr.mxu0 %v4561
    %6433 = vmatpush1.msra.mxu0 %v4560
    %6434 = vmatprep.subr.mxu0 %v4564
    %6435 = vmatpush1.msra.mxu0 %v4563
    %6436 = vmatprep.subr.mxu0 %v4567
    %6437 = vmatpush1.msra.mxu0 %v4566
    %6438 = vmatprep.subr.mxu0 %v4570
    %6439 = vmatpush1.msra.mxu0 %v4569
    %6440 = vmatprep.subr.mxu0 %v4573
    %6441 = vmatpush1.msra.mxu0 %v4572
    %6442 = vmatprep.subr.mxu0 %v4576
    %6443 = vmatpush1.msra.mxu0 %v4575
    %6444 = vmatprep.subr.mxu0 0.0
    %6445 = vmatpush1.msra.mxu0 0.0
    %6446 = vmatprep.subr.mxu0 0.0
    %6447 = vmatpush1.msra.mxu0 0.0
    %6448 = vmatprep.subr.mxu0 0.0
    %6449 = vmatpush1.msra.mxu0 0.0
    %6450 = vmatprep.subr.mxu0 0.0
    %6451 = vmatpush1.msra.mxu0 0.0
    %6452 = vmatprep.subr.mxu0 0.0
    %6453 = vmatpush1.msra.mxu0 0.0
    %6454 = vmatprep.subr.mxu0 0.0
    %6455 = vmatpush1.msra.mxu0 0.0
    %6456 = vmatprep.subr.mxu0 0.0
    %6457 = vmatpush1.msra.mxu0 0.0
    %6458 = vmatprep.subr.mxu0 0.0
    %6459 = vmatpush1.msra.mxu0 0.0
    %6460 = vmatprep.subr.mxu0 0.0
    %6461 = vmatpush1.msra.mxu0 0.0
    %6462 = vmatprep.subr.mxu0 0.0
    %6463 = vmatpush1.msra.mxu0 0.0
    %6464 = vmatprep.subr.mxu0 0.0
    %6465 = vmatpush1.msra.mxu0 0.0
    %6466 = vmatprep.subr.mxu0 0.0
    %6467 = vmatpush1.msra.mxu0 0.0
    %6468 = vmatprep.subr.mxu0 0.0
    %6469 = vmatpush1.msra.mxu0 0.0
    %6470 = vmatprep.subr.mxu0 0.0
    %6471 = vmatpush1.msra.mxu0 0.0
    %6472 = vmatprep.subr.mxu0 0.0
    %6473 = vmatpush1.msra.mxu0 0.0
    %6474 = vmatprep.subr.mxu0 0.0
    %6475 = vmatpush1.msra.mxu0 0.0
    %6476 = vmatprep.mubr.f32.mxu0 0.0
    %6477 = vmatmul.mubr.f32.gmra.mrb[0].mxu0 %v6266
    %v6478 = vpop.f32.mrb[0].mxu0
    %v6479 = vadd.f32 0.0, %v6478
    %v6480 = vpop.f32.mrb[0].mxu0
    %v6481 = vadd.f32 0.0, %v6480
    %6482 = vdwg.mxu0
    %6483 = vmatprep.subr.mxu0 0.0
    %6484 = vmatpush1.msra.mxu0 %v4532
    %6485 = vmatprep.subr.mxu0 0.0
    %6486 = vmatpush1.msra.mxu0 %v4535
    %6487 = vmatprep.subr.mxu0 0.0
    %6488 = vmatpush1.msra.mxu0 %v4538
    %6489 = vmatprep.subr.mxu0 0.0
    %6490 = vmatpush1.msra.mxu0 %v4541
    %6491 = vmatprep.subr.mxu0 0.0
    %6492 = vmatpush1.msra.mxu0 %v4544
    %6493 = vmatprep.subr.mxu0 0.0
    %6494 = vmatpush1.msra.mxu0 %v4547
    %6495 = vmatprep.subr.mxu0 0.0
    %6496 = vmatpush1.msra.mxu0 %v4550
    %6497 = vmatprep.subr.mxu0 0.0
    %6498 = vmatpush1.msra.mxu0 %v4553
    %6499 = vmatprep.subr.mxu0 0.0
    %6500 = vmatpush1.msra.mxu0 %v4556
    %6501 = vmatprep.subr.mxu0 0.0
    %6502 = vmatpush1.msra.mxu0 %v4559
    %6503 = vmatprep.subr.mxu0 0.0
    %6504 = vmatpush1.msra.mxu0 %v4562
    %6505 = vmatprep.subr.mxu0 0.0
    %6506 = vmatpush1.msra.mxu0 %v4565
    %6507 = vmatprep.subr.mxu0 0.0
    %6508 = vmatpush1.msra.mxu0 %v4568
    %6509 = vmatprep.subr.mxu0 0.0
    %6510 = vmatpush1.msra.mxu0 %v4571
    %6511 = vmatprep.subr.mxu0 0.0
    %6512 = vmatpush1.msra.mxu0 %v4574
    %6513 = vmatprep.subr.mxu0 0.0
    %6514 = vmatpush1.msra.mxu0 %v4577
    %6515 = vmatprep.subr.mxu0 0.0
    %6516 = vmatpush1.msra.mxu0 0.0
    %6517 = vmatprep.subr.mxu0 0.0
    %6518 = vmatpush1.msra.mxu0 0.0
    %6519 = vmatprep.subr.mxu0 0.0
    %6520 = vmatpush1.msra.mxu0 0.0
    %6521 = vmatprep.subr.mxu0 0.0
    %6522 = vmatpush1.msra.mxu0 0.0
    %6523 = vmatprep.subr.mxu0 0.0
    %6524 = vmatpush1.msra.mxu0 0.0
    %6525 = vmatprep.subr.mxu0 0.0
    %6526 = vmatpush1.msra.mxu0 0.0
    %6527 = vmatprep.subr.mxu0 0.0
    %6528 = vmatpush1.msra.mxu0 0.0
    %6529 = vmatprep.subr.mxu0 0.0
    %6530 = vmatpush1.msra.mxu0 0.0
    %6531 = vmatprep.subr.mxu0 0.0
    %6532 = vmatpush1.msra.mxu0 0.0
    %6533 = vmatprep.subr.mxu0 0.0
    %6534 = vmatpush1.msra.mxu0 0.0
    %6535 = vmatprep.subr.mxu0 0.0
    %6536 = vmatpush1.msra.mxu0 0.0
    %6537 = vmatprep.subr.mxu0 0.0
    %6538 = vmatpush1.msra.mxu0 0.0
    %6539 = vmatprep.subr.mxu0 0.0
    %6540 = vmatpush1.msra.mxu0 0.0
    %6541 = vmatprep.subr.mxu0 0.0
    %6542 = vmatpush1.msra.mxu0 0.0
    %6543 = vmatprep.subr.mxu0 0.0
    %6544 = vmatpush1.msra.mxu0 0.0
    %6545 = vmatprep.subr.mxu0 0.0
    %6546 = vmatpush1.msra.mxu0 0.0
    %6547 = vmatprep.mubr.f32.mxu0 0.0
    %6548 = vmatmul.mubr.f32.gmra.mrb[0].mxu0 %v6266
    %v6549 = vpop.f32.mrb[0].mxu0
    %v6550 = vadd.f32 0.0, %v6549
    %v6551 = vpop.f32.mrb[0].mxu0
    %6552 = vdwg.mxu0
    %v6553 = vld [vmem:[%s2738] sm:$0xff]
    %v6554 = vld [vmem:[%s2738 + $0x8] sm:$0xff]
    %v6555 = vld [vmem:[%s2738 + $0x10] sm:$0xff]
    %v6556 = vadd.f32 %v6553, %v6338
    %v6557 = vxor.u32 %v6556, 2147483648
    %v6558 = vmul.f32 %v6557, 1.442695
    %v6559 = vpow.pop %v6558
    %v6560 = vadd.f32 %v6559, 1.0
    %v6561 = vrcp.pop %v6560
    %v6562 = vmul.f32 1.0, %v6561
    %v6563 = vadd.f32 %v6554, %v6340
    %v6564 = vxor.u32 %v6563, 2147483648
    %v6565 = vmul.f32 %v6564, 1.442695
    %v6566 = vpow.pop %v6565
    %v6567 = vadd.f32 %v6566, 1.0
    %v6568 = vrcp.pop %v6567
    %v6569 = vmul.f32 1.0, %v6568
    %v6570 = vadd.f32 %v6409, %v4883
    %v6571 = vmul.f32 %v6562, %v6570
    %v6572 = vadd.f32 %v6555, %v6571
    %v6573 = vtanh.pop %v6572
    %v6574 = vsub.f32 1.0, %v6569
    %v6575 = vmul.f32 %v6574, %v6573
    %v6576 = vmul.f32 %v6569, %v6241
    %v6577 = vadd.f32 %v6575, %v6576
    %v6578 = vld [vmem:[%s2764] sm:$0xff]
    %v6579 = vld [vmem:[%s2764 + $0x8] sm:$0xff]
    %v6580 = vld [vmem:[%s2764 + $0x10] sm:$0xff]
    %v6581 = vadd.f32 %v6578, %v6479
    %v6582 = vxor.u32 %v6581, 2147483648
    %v6583 = vmul.f32 %v6582, 1.442695
    %v6584 = vpow.pop %v6583
    %v6585 = vadd.f32 %v6584, 1.0
    %v6586 = vrcp.pop %v6585
    %v6587 = vmul.f32 1.0, %v6586
    %v6588 = vadd.f32 %v6579, %v6481
    %v6589 = vxor.u32 %v6588, 2147483648
    %v6590 = vmul.f32 %v6589, 1.442695
    %v6591 = vpow.pop %v6590
    %v6592 = vadd.f32 %v6591, 1.0
    %v6593 = vrcp.pop %v6592
    %v6594 = vmul.f32 1.0, %v6593
    %v6595 = vadd.f32 %v6550, %v4914
    %v6596 = vmul.f32 %v6587, %v6595
    %v6597 = vadd.f32 %v6580, %v6596
    %v6598 = vtanh.pop %v6597
    %v6599 = vsub.f32 1.0, %v6594
    %v6600 = vmul.f32 %v6599, %v6598
    %v6601 = vmul.f32 %v6594, %v6266
    %v6602 = vadd.f32 %v6600, %v6601
    %s6603 = scalar_lea.vmem %s15, 40
    %6604 = vst [vmem:[%s6603] sm:$0xff] %v6577
    %s6605 = scalar_lea.vmem %s16, 16
    %6606 = vst [vmem:[%s6605] sm:$0xff] %v6602
    %6607 = vmatprep.subr.mxu0 %v4483
    %6608 = vmatpush1.msra.mxu0 %v4482
    %6609 = vmatprep.subr.mxu0 %v4486
    %6610 = vmatpush1.msra.mxu0 %v4485
    %6611 = vmatprep.subr.mxu0 %v4489
    %6612 = vmatpush1.msra.mxu0 %v4488
    %6613 = vmatprep.subr.mxu0 %v4492
    %6614 = vmatpush1.msra.mxu0 %v4491
    %6615 = vmatprep.subr.mxu0 %v4495
    %6616 = vmatpush1.msra.mxu0 %v4494
    %6617 = vmatprep.subr.mxu0 %v4498
    %6618 = vmatpush1.msra.mxu0 %v4497
    %6619 = vmatprep.subr.mxu0 %v4501
    %6620 = vmatpush1.msra.mxu0 %v4500
    %6621 = vmatprep.subr.mxu0 %v4504
    %6622 = vmatpush1.msra.mxu0 %v4503
    %6623 = vmatprep.subr.mxu0 %v4507
    %6624 = vmatpush1.msra.mxu0 %v4506
    %6625 = vmatprep.subr.mxu0 %v4510
    %6626 = vmatpush1.msra.mxu0 %v4509
    %6627 = vmatprep.subr.mxu0 %v4513
    %6628 = vmatpush1.msra.mxu0 %v4512
    %6629 = vmatprep.subr.mxu0 %v4516
    %6630 = vmatpush1.msra.mxu0 %v4515
    %6631 = vmatprep.subr.mxu0 %v4519
    %6632 = vmatpush1.msra.mxu0 %v4518
    %6633 = vmatprep.subr.mxu0 %v4522
    %6634 = vmatpush1.msra.mxu0 %v4521
    %6635 = vmatprep.subr.mxu0 %v4525
    %6636 = vmatpush1.msra.mxu0 %v4524
    %6637 = vmatprep.subr.mxu0 %v4528
    %6638 = vmatpush1.msra.mxu0 %v4527
    %6639 = vmatprep.subr.mxu0 0.0
    %6640 = vmatpush1.msra.mxu0 0.0
    %6641 = vmatprep.subr.mxu0 0.0
    %6642 = vmatpush1.msra.mxu0 0.0
    %6643 = vmatprep.subr.mxu0 0.0
    %6644 = vmatpush1.msra.mxu0 0.0
    %6645 = vmatprep.subr.mxu0 0.0
    %6646 = vmatpush1.msra.mxu0 0.0
    %6647 = vmatprep.subr.mxu0 0.0
    %6648 = vmatpush1.msra.mxu0 0.0
    %6649 = vmatprep.subr.mxu0 0.0
    %6650 = vmatpush1.msra.mxu0 0.0
    %6651 = vmatprep.subr.mxu0 0.0
    %6652 = vmatpush1.msra.mxu0 0.0
    %6653 = vmatprep.subr.mxu0 0.0
    %6654 = vmatpush1.msra.mxu0 0.0
    %6655 = vmatprep.subr.mxu0 0.0
    %6656 = vmatpush1.msra.mxu0 0.0
    %6657 = vmatprep.subr.mxu0 0.0
    %6658 = vmatpush1.msra.mxu0 0.0
    %6659 = vmatprep.subr.mxu0 0.0
    %6660 = vmatpush1.msra.mxu0 0.0
    %6661 = vmatprep.subr.mxu0 0.0
    %6662 = vmatpush1.msra.mxu0 0.0
    %6663 = vmatprep.subr.mxu0 0.0
    %6664 = vmatpush1.msra.mxu0 0.0
    %6665 = vmatprep.subr.mxu0 0.0
    %6666 = vmatpush1.msra.mxu0 0.0
    %6667 = vmatprep.subr.mxu0 0.0
    %6668 = vmatpush1.msra.mxu0 0.0
    %6669 = vmatprep.subr.mxu0 0.0
    %6670 = vmatpush1.msra.mxu0 0.0
    %6671 = vmatprep.mubr.f32.mxu0 0.0
    %6672 = vmatmul.mubr.f32.gmra.mrb[0].mxu0 %v6577
    %v6673 = vpop.f32.mrb[0].mxu0
    %v6674 = vadd.f32 0.0, %v6673
    %v6675 = vpop.f32.mrb[0].mxu0
    %v6676 = vadd.f32 0.0, %v6675
    %6677 = vdwg.mxu0
    %6678 = vmatprep.subr.mxu0 0.0
    %6679 = vmatpush1.msra.mxu0 %v4484
    %6680 = vmatprep.subr.mxu0 0.0
    %6681 = vmatpush1.msra.mxu0 %v4487
    %6682 = vmatprep.subr.mxu0 0.0
    %6683 = vmatpush1.msra.mxu0 %v4490
    %6684 = vmatprep.subr.mxu0 0.0
    %6685 = vmatpush1.msra.mxu0 %v4493
    %6686 = vmatprep.subr.mxu0 0.0
    %6687 = vmatpush1.msra.mxu0 %v4496
    %6688 = vmatprep.subr.mxu0 0.0
    %6689 = vmatpush1.msra.mxu0 %v4499
    %6690 = vmatprep.subr.mxu0 0.0
    %6691 = vmatpush1.msra.mxu0 %v4502
    %6692 = vmatprep.subr.mxu0 0.0
    %6693 = vmatpush1.msra.mxu0 %v4505
    %6694 = vmatprep.subr.mxu0 0.0
    %6695 = vmatpush1.msra.mxu0 %v4508
    %6696 = vmatprep.subr.mxu0 0.0
    %6697 = vmatpush1.msra.mxu0 %v4511
    %6698 = vmatprep.subr.mxu0 0.0
    %6699 = vmatpush1.msra.mxu0 %v4514
    %6700 = vmatprep.subr.mxu0 0.0
    %6701 = vmatpush1.msra.mxu0 %v4517
    %6702 = vmatprep.subr.mxu0 0.0
    %6703 = vmatpush1.msra.mxu0 %v4520
    %6704 = vmatprep.subr.mxu0 0.0
    %6705 = vmatpush1.msra.mxu0 %v4523
    %6706 = vmatprep.subr.mxu0 0.0
    %6707 = vmatpush1.msra.mxu0 %v4526
    %6708 = vmatprep.subr.mxu0 0.0
    %6709 = vmatpush1.msra.mxu0 %v4529
    %6710 = vmatprep.subr.mxu0 0.0
    %6711 = vmatpush1.msra.mxu0 0.0
    %6712 = vmatprep.subr.mxu0 0.0
    %6713 = vmatpush1.msra.mxu0 0.0
    %6714 = vmatprep.subr.mxu0 0.0
    %6715 = vmatpush1.msra.mxu0 0.0
    %6716 = vmatprep.subr.mxu0 0.0
    %6717 = vmatpush1.msra.mxu0 0.0
    %6718 = vmatprep.subr.mxu0 0.0
    %6719 = vmatpush1.msra.mxu0 0.0
    %6720 = vmatprep.subr.mxu0 0.0
    %6721 = vmatpush1.msra.mxu0 0.0
    %6722 = vmatprep.subr.mxu0 0.0
    %6723 = vmatpush1.msra.mxu0 0.0
    %6724 = vmatprep.subr.mxu0 0.0
    %6725 = vmatpush1.msra.mxu0 0.0
    %6726 = vmatprep.subr.mxu0 0.0
    %6727 = vmatpush1.msra.mxu0 0.0
    %6728 = vmatprep.subr.mxu0 0.0
    %6729 = vmatpush1.msra.mxu0 0.0
    %6730 = vmatprep.subr.mxu0 0.0
    %6731 = vmatpush1.msra.mxu0 0.0
    %6732 = vmatprep.subr.mxu0 0.0
    %6733 = vmatpush1.msra.mxu0 0.0
    %6734 = vmatprep.subr.mxu0 0.0
    %6735 = vmatpush1.msra.mxu0 0.0
    %6736 = vmatprep.subr.mxu0 0.0
    %6737 = vmatpush1.msra.mxu0 0.0
    %6738 = vmatprep.subr.mxu0 0.0
    %6739 = vmatpush1.msra.mxu0 0.0
    %6740 = vmatprep.subr.mxu0 0.0
    %6741 = vmatpush1.msra.mxu0 0.0
    %6742 = vmatprep.mubr.f32.mxu0 0.0
    %6743 = vmatmul.mubr.f32.gmra.mrb[0].mxu0 %v6577
    %v6744 = vpop.f32.mrb[0].mxu0
    %v6745 = vadd.f32 0.0, %v6744
    %v6746 = vpop.f32.mrb[0].mxu0
    %6747 = vdwg.mxu0
    %6748 = vmatprep.subr.mxu0 %v4531
    %6749 = vmatpush1.msra.mxu0 %v4530
    %6750 = vmatprep.subr.mxu0 %v4534
    %6751 = vmatpush1.msra.mxu0 %v4533
    %6752 = vmatprep.subr.mxu0 %v4537
    %6753 = vmatpush1.msra.mxu0 %v4536
    %6754 = vmatprep.subr.mxu0 %v4540
    %6755 = vmatpush1.msra.mxu0 %v4539
    %6756 = vmatprep.subr.mxu0 %v4543
    %6757 = vmatpush1.msra.mxu0 %v4542
    %6758 = vmatprep.subr.mxu0 %v4546
    %6759 = vmatpush1.msra.mxu0 %v4545
    %6760 = vmatprep.subr.mxu0 %v4549
    %6761 = vmatpush1.msra.mxu0 %v4548
    %6762 = vmatprep.subr.mxu0 %v4552
    %6763 = vmatpush1.msra.mxu0 %v4551
    %6764 = vmatprep.subr.mxu0 %v4555
    %6765 = vmatpush1.msra.mxu0 %v4554
    %6766 = vmatprep.subr.mxu0 %v4558
    %6767 = vmatpush1.msra.mxu0 %v4557
    %6768 = vmatprep.subr.mxu0 %v4561
    %6769 = vmatpush1.msra.mxu0 %v4560
    %6770 = vmatprep.subr.mxu0 %v4564
    %6771 = vmatpush1.msra.mxu0 %v4563
    %6772 = vmatprep.subr.mxu0 %v4567
    %6773 = vmatpush1.msra.mxu0 %v4566
    %6774 = vmatprep.subr.mxu0 %v4570
    %6775 = vmatpush1.msra.mxu0 %v4569
    %6776 = vmatprep.subr.mxu0 %v4573
    %6777 = vmatpush1.msra.mxu0 %v4572
    %6778 = vmatprep.subr.mxu0 %v4576
    %6779 = vmatpush1.msra.mxu0 %v4575
    %6780 = vmatprep.subr.mxu0 0.0
    %6781 = vmatpush1.msra.mxu0 0.0
    %6782 = vmatprep.subr.mxu0 0.0
    %6783 = vmatpush1.msra.mxu0 0.0
    %6784 = vmatprep.subr.mxu0 0.0
    %6785 = vmatpush1.msra.mxu0 0.0
    %6786 = vmatprep.subr.mxu0 0.0
    %6787 = vmatpush1.msra.mxu0 0.0
    %6788 = vmatprep.subr.mxu0 0.0
    %6789 = vmatpush1.msra.mxu0 0.0
    %6790 = vmatprep.subr.mxu0 0.0
    %6791 = vmatpush1.msra.mxu0 0.0
    %6792 = vmatprep.subr.mxu0 0.0
    %6793 = vmatpush1.msra.mxu0 0.0
    %6794 = vmatprep.subr.mxu0 0.0
    %6795 = vmatpush1.msra.mxu0 0.0
    %6796 = vmatprep.subr.mxu0 0.0
    %6797 = vmatpush1.msra.mxu0 0.0
    %6798 = vmatprep.subr.mxu0 0.0
    %6799 = vmatpush1.msra.mxu0 0.0
    %6800 = vmatprep.subr.mxu0 0.0
    %6801 = vmatpush1.msra.mxu0 0.0
    %6802 = vmatprep.subr.mxu0 0.0
    %6803 = vmatpush1.msra.mxu0 0.0
    %6804 = vmatprep.subr.mxu0 0.0
    %6805 = vmatpush1.msra.mxu0 0.0
    %6806 = vmatprep.subr.mxu0 0.0
    %6807 = vmatpush1.msra.mxu0 0.0
    %6808 = vmatprep.subr.mxu0 0.0
    %6809 = vmatpush1.msra.mxu0 0.0
    %6810 = vmatprep.subr.mxu0 0.0
    %6811 = vmatpush1.msra.mxu0 0.0
    %6812 = vmatprep.mubr.f32.mxu0 0.0
    %6813 = vmatmul.mubr.f32.gmra.mrb[0].mxu0 %v6602
    %v6814 = vpop.f32.mrb[0].mxu0
    %v6815 = vadd.f32 0.0, %v6814
    %v6816 = vpop.f32.mrb[0].mxu0
    %v6817 = vadd.f32 0.0, %v6816
    %6818 = vdwg.mxu0
    %6819 = vmatprep.subr.mxu0 0.0
    %6820 = vmatpush1.msra.mxu0 %v4532
    %6821 = vmatprep.subr.mxu0 0.0
    %6822 = vmatpush1.msra.mxu0 %v4535
    %6823 = vmatprep.subr.mxu0 0.0
    %6824 = vmatpush1.msra.mxu0 %v4538
    %6825 = vmatprep.subr.mxu0 0.0
    %6826 = vmatpush1.msra.mxu0 %v4541
    %6827 = vmatprep.subr.mxu0 0.0
    %6828 = vmatpush1.msra.mxu0 %v4544
    %6829 = vmatprep.subr.mxu0 0.0
    %6830 = vmatpush1.msra.mxu0 %v4547
    %6831 = vmatprep.subr.mxu0 0.0
    %6832 = vmatpush1.msra.mxu0 %v4550
    %6833 = vmatprep.subr.mxu0 0.0
    %6834 = vmatpush1.msra.mxu0 %v4553
    %6835 = vmatprep.subr.mxu0 0.0
    %6836 = vmatpush1.msra.mxu0 %v4556
    %6837 = vmatprep.subr.mxu0 0.0
    %6838 = vmatpush1.msra.mxu0 %v4559
    %6839 = vmatprep.subr.mxu0 0.0
    %6840 = vmatpush1.msra.mxu0 %v4562
    %6841 = vmatprep.subr.mxu0 0.0
    %6842 = vmatpush1.msra.mxu0 %v4565
    %6843 = vmatprep.subr.mxu0 0.0
    %6844 = vmatpush1.msra.mxu0 %v4568
    %6845 = vmatprep.subr.mxu0 0.0
    %6846 = vmatpush1.msra.mxu0 %v4571
    %6847 = vmatprep.subr.mxu0 0.0
    %6848 = vmatpush1.msra.mxu0 %v4574
    %6849 = vmatprep.subr.mxu0 0.0
    %6850 = vmatpush1.msra.mxu0 %v4577
    %6851 = vmatprep.subr.mxu0 0.0
    %6852 = vmatpush1.msra.mxu0 0.0
    %6853 = vmatprep.subr.mxu0 0.0
    %6854 = vmatpush1.msra.mxu0 0.0
    %6855 = vmatprep.subr.mxu0 0.0
    %6856 = vmatpush1.msra.mxu0 0.0
    %6857 = vmatprep.subr.mxu0 0.0
    %6858 = vmatpush1.msra.mxu0 0.0
    %6859 = vmatprep.subr.mxu0 0.0
    %6860 = vmatpush1.msra.mxu0 0.0
    %6861 = vmatprep.subr.mxu0 0.0
    %6862 = vmatpush1.msra.mxu0 0.0
    %6863 = vmatprep.subr.mxu0 0.0
    %6864 = vmatpush1.msra.mxu0 0.0
    %6865 = vmatprep.subr.mxu0 0.0
    %6866 = vmatpush1.msra.mxu0 0.0
    %6867 = vmatprep.subr.mxu0 0.0
    %6868 = vmatpush1.msra.mxu0 0.0
    %6869 = vmatprep.subr.mxu0 0.0
    %6870 = vmatpush1.msra.mxu0 0.0
    %6871 = vmatprep.subr.mxu0 0.0
    %6872 = vmatpush1.msra.mxu0 0.0
    %6873 = vmatprep.subr.mxu0 0.0
    %6874 = vmatpush1.msra.mxu0 0.0
    %6875 = vmatprep.subr.mxu0 0.0
    %6876 = vmatpush1.msra.mxu0 0.0
    %6877 = vmatprep.subr.mxu0 0.0
    %6878 = vmatpush1.msra.mxu0 0.0
    %6879 = vmatprep.subr.mxu0 0.0
    %6880 = vmatpush1.msra.mxu0 0.0
    %6881 = vmatprep.subr.mxu0 0.0
    %6882 = vmatpush1.msra.mxu0 0.0
    %6883 = vmatprep.mubr.f32.mxu0 0.0
    %6884 = vmatmul.mubr.f32.gmra.mrb[0].mxu0 %v6602
    %v6885 = vpop.f32.mrb[0].mxu0
    %v6886 = vadd.f32 0.0, %v6885
    %v6887 = vpop.f32.mrb[0].mxu0
    %6888 = vdwg.mxu0
    %v6889 = vld [vmem:[%s3076] sm:$0xff]
    %v6890 = vld [vmem:[%s3076 + $0x8] sm:$0xff]
    %v6891 = vld [vmem:[%s3076 + $0x10] sm:$0xff]
    %v6892 = vadd.f32 %v6889, %v6674
    %v6893 = vxor.u32 %v6892, 2147483648
    %v6894 = vmul.f32 %v6893, 1.442695
    %v6895 = vpow.pop %v6894
    %v6896 = vadd.f32 %v6895, 1.0
    %v6897 = vrcp.pop %v6896
    %v6898 = vmul.f32 1.0, %v6897
    %v6899 = vadd.f32 %v6890, %v6676
    %v6900 = vxor.u32 %v6899, 2147483648
    %v6901 = vmul.f32 %v6900, 1.442695
    %v6902 = vpow.pop %v6901
    %v6903 = vadd.f32 %v6902, 1.0
    %v6904 = vrcp.pop %v6903
    %v6905 = vmul.f32 1.0, %v6904
    %v6906 = vadd.f32 %v6745, %v4883
    %v6907 = vmul.f32 %v6898, %v6906
    %v6908 = vadd.f32 %v6891, %v6907
    %v6909 = vtanh.pop %v6908
    %v6910 = vsub.f32 1.0, %v6905
    %v6911 = vmul.f32 %v6910, %v6909
    %v6912 = vmul.f32 %v6905, %v6577
    %v6913 = vadd.f32 %v6911, %v6912
    %v6914 = vld [vmem:[%s3102] sm:$0xff]
    %v6915 = vld [vmem:[%s3102 + $0x8] sm:$0xff]
    %v6916 = vld [vmem:[%s3102 + $0x10] sm:$0xff]
    %v6917 = vadd.f32 %v6914, %v6815
    %v6918 = vxor.u32 %v6917, 2147483648
    %v6919 = vmul.f32 %v6918, 1.442695
    %v6920 = vpow.pop %v6919
    %v6921 = vadd.f32 %v6920, 1.0
    %v6922 = vrcp.pop %v6921
    %v6923 = vmul.f32 1.0, %v6922
    %v6924 = vadd.f32 %v6915, %v6817
    %v6925 = vxor.u32 %v6924, 2147483648
    %v6926 = vmul.f32 %v6925, 1.442695
    %v6927 = vpow.pop %v6926
    %v6928 = vadd.f32 %v6927, 1.0
    %v6929 = vrcp.pop %v6928
    %v6930 = vmul.f32 1.0, %v6929
    %v6931 = vadd.f32 %v6886, %v4914
    %v6932 = vmul.f32 %v6923, %v6931
    %v6933 = vadd.f32 %v6916, %v6932
    %v6934 = vtanh.pop %v6933
    %v6935 = vsub.f32 1.0, %v6930
    %v6936 = vmul.f32 %v6935, %v6934
    %v6937 = vmul.f32 %v6930, %v6602
    %v6938 = vadd.f32 %v6936, %v6937
    %s6939 = scalar_lea.vmem %s15, 48
    %6940 = vst [vmem:[%s6939] sm:$0xff] %v6913
    %s6941 = scalar_lea.vmem %s16, 8
    %6942 = vst [vmem:[%s6941] sm:$0xff] %v6938
    %6943 = vmatprep.subr.mxu0 %v4483
    %6944 = vmatpush1.msra.mxu0 %v4482
    %6945 = vmatprep.subr.mxu0 %v4486
    %6946 = vmatpush1.msra.mxu0 %v4485
    %6947 = vmatprep.subr.mxu0 %v4489
    %6948 = vmatpush1.msra.mxu0 %v4488
    %6949 = vmatprep.subr.mxu0 %v4492
    %6950 = vmatpush1.msra.mxu0 %v4491
    %6951 = vmatprep.subr.mxu0 %v4495
    %6952 = vmatpush1.msra.mxu0 %v4494
    %6953 = vmatprep.subr.mxu0 %v4498
    %6954 = vmatpush1.msra.mxu0 %v4497
    %6955 = vmatprep.subr.mxu0 %v4501
    %6956 = vmatpush1.msra.mxu0 %v4500
    %6957 = vmatprep.subr.mxu0 %v4504
    %6958 = vmatpush1.msra.mxu0 %v4503
    %6959 = vmatprep.subr.mxu0 %v4507
    %6960 = vmatpush1.msra.mxu0 %v4506
    %6961 = vmatprep.subr.mxu0 %v4510
    %6962 = vmatpush1.msra.mxu0 %v4509
    %6963 = vmatprep.subr.mxu0 %v4513
    %6964 = vmatpush1.msra.mxu0 %v4512
    %6965 = vmatprep.subr.mxu0 %v4516
    %6966 = vmatpush1.msra.mxu0 %v4515
    %6967 = vmatprep.subr.mxu0 %v4519
    %6968 = vmatpush1.msra.mxu0 %v4518
    %6969 = vmatprep.subr.mxu0 %v4522
    %6970 = vmatpush1.msra.mxu0 %v4521
    %6971 = vmatprep.subr.mxu0 %v4525
    %6972 = vmatpush1.msra.mxu0 %v4524
    %6973 = vmatprep.subr.mxu0 %v4528
    %6974 = vmatpush1.msra.mxu0 %v4527
    %6975 = vmatprep.subr.mxu0 0.0
    %6976 = vmatpush1.msra.mxu0 0.0
    %6977 = vmatprep.subr.mxu0 0.0
    %6978 = vmatpush1.msra.mxu0 0.0
    %6979 = vmatprep.subr.mxu0 0.0
    %6980 = vmatpush1.msra.mxu0 0.0
    %6981 = vmatprep.subr.mxu0 0.0
    %6982 = vmatpush1.msra.mxu0 0.0
    %6983 = vmatprep.subr.mxu0 0.0
    %6984 = vmatpush1.msra.mxu0 0.0
    %6985 = vmatprep.subr.mxu0 0.0
    %6986 = vmatpush1.msra.mxu0 0.0
    %6987 = vmatprep.subr.mxu0 0.0
    %6988 = vmatpush1.msra.mxu0 0.0
    %6989 = vmatprep.subr.mxu0 0.0
    %6990 = vmatpush1.msra.mxu0 0.0
    %6991 = vmatprep.subr.mxu0 0.0
    %6992 = vmatpush1.msra.mxu0 0.0
    %6993 = vmatprep.subr.mxu0 0.0
    %6994 = vmatpush1.msra.mxu0 0.0
    %6995 = vmatprep.subr.mxu0 0.0
    %6996 = vmatpush1.msra.mxu0 0.0
    %6997 = vmatprep.subr.mxu0 0.0
    %6998 = vmatpush1.msra.mxu0 0.0
    %6999 = vmatprep.subr.mxu0 0.0
    %7000 = vmatpush1.msra.mxu0 0.0
    %7001 = vmatprep.subr.mxu0 0.0
    %7002 = vmatpush1.msra.mxu0 0.0
    %7003 = vmatprep.subr.mxu0 0.0
    %7004 = vmatpush1.msra.mxu0 0.0
    %7005 = vmatprep.subr.mxu0 0.0
    %7006 = vmatpush1.msra.mxu0 0.0
    %7007 = vmatprep.mubr.f32.mxu0 0.0
    %7008 = vmatmul.mubr.f32.gmra.mrb[0].mxu0 %v6913
    %v7009 = vpop.f32.mrb[0].mxu0
    %v7010 = vadd.f32 0.0, %v7009
    %v7011 = vpop.f32.mrb[0].mxu0
    %v7012 = vadd.f32 0.0, %v7011
    %7013 = vdwg.mxu0
    %7014 = vmatprep.subr.mxu0 0.0
    %7015 = vmatpush1.msra.mxu0 %v4484
    %7016 = vmatprep.subr.mxu0 0.0
    %7017 = vmatpush1.msra.mxu0 %v4487
    %7018 = vmatprep.subr.mxu0 0.0
    %7019 = vmatpush1.msra.mxu0 %v4490
    %7020 = vmatprep.subr.mxu0 0.0
    %7021 = vmatpush1.msra.mxu0 %v4493
    %7022 = vmatprep.subr.mxu0 0.0
    %7023 = vmatpush1.msra.mxu0 %v4496
    %7024 = vmatprep.subr.mxu0 0.0
    %7025 = vmatpush1.msra.mxu0 %v4499
    %7026 = vmatprep.subr.mxu0 0.0
    %7027 = vmatpush1.msra.mxu0 %v4502
    %7028 = vmatprep.subr.mxu0 0.0
    %7029 = vmatpush1.msra.mxu0 %v4505
    %7030 = vmatprep.subr.mxu0 0.0
    %7031 = vmatpush1.msra.mxu0 %v4508
    %7032 = vmatprep.subr.mxu0 0.0
    %7033 = vmatpush1.msra.mxu0 %v4511
    %7034 = vmatprep.subr.mxu0 0.0
    %7035 = vmatpush1.msra.mxu0 %v4514
    %7036 = vmatprep.subr.mxu0 0.0
    %7037 = vmatpush1.msra.mxu0 %v4517
    %7038 = vmatprep.subr.mxu0 0.0
    %7039 = vmatpush1.msra.mxu0 %v4520
    %7040 = vmatprep.subr.mxu0 0.0
    %7041 = vmatpush1.msra.mxu0 %v4523
    %7042 = vmatprep.subr.mxu0 0.0
    %7043 = vmatpush1.msra.mxu0 %v4526
    %7044 = vmatprep.subr.mxu0 0.0
    %7045 = vmatpush1.msra.mxu0 %v4529
    %7046 = vmatprep.subr.mxu0 0.0
    %7047 = vmatpush1.msra.mxu0 0.0
    %7048 = vmatprep.subr.mxu0 0.0
    %7049 = vmatpush1.msra.mxu0 0.0
    %7050 = vmatprep.subr.mxu0 0.0
    %7051 = vmatpush1.msra.mxu0 0.0
    %7052 = vmatprep.subr.mxu0 0.0
    %7053 = vmatpush1.msra.mxu0 0.0
    %7054 = vmatprep.subr.mxu0 0.0
    %7055 = vmatpush1.msra.mxu0 0.0
    %7056 = vmatprep.subr.mxu0 0.0
    %7057 = vmatpush1.msra.mxu0 0.0
    %7058 = vmatprep.subr.mxu0 0.0
    %7059 = vmatpush1.msra.mxu0 0.0
    %7060 = vmatprep.subr.mxu0 0.0
    %7061 = vmatpush1.msra.mxu0 0.0
    %7062 = vmatprep.subr.mxu0 0.0
    %7063 = vmatpush1.msra.mxu0 0.0
    %7064 = vmatprep.subr.mxu0 0.0
    %7065 = vmatpush1.msra.mxu0 0.0
    %7066 = vmatprep.subr.mxu0 0.0
    %7067 = vmatpush1.msra.mxu0 0.0
    %7068 = vmatprep.subr.mxu0 0.0
    %7069 = vmatpush1.msra.mxu0 0.0
    %7070 = vmatprep.subr.mxu0 0.0
    %7071 = vmatpush1.msra.mxu0 0.0
    %7072 = vmatprep.subr.mxu0 0.0
    %7073 = vmatpush1.msra.mxu0 0.0
    %7074 = vmatprep.subr.mxu0 0.0
    %7075 = vmatpush1.msra.mxu0 0.0
    %7076 = vmatprep.subr.mxu0 0.0
    %7077 = vmatpush1.msra.mxu0 0.0
    %7078 = vmatprep.mubr.f32.mxu0 0.0
    %7079 = vmatmul.mubr.f32.gmra.mrb[0].mxu0 %v6913
    %v7080 = vpop.f32.mrb[0].mxu0
    %v7081 = vadd.f32 0.0, %v7080
    %v7082 = vpop.f32.mrb[0].mxu0
    %7083 = vdwg.mxu0
    %7084 = vmatprep.subr.mxu0 %v4531
    %7085 = vmatpush1.msra.mxu0 %v4530
    %7086 = vmatprep.subr.mxu0 %v4534
    %7087 = vmatpush1.msra.mxu0 %v4533
    %7088 = vmatprep.subr.mxu0 %v4537
    %7089 = vmatpush1.msra.mxu0 %v4536
    %7090 = vmatprep.subr.mxu0 %v4540
    %7091 = vmatpush1.msra.mxu0 %v4539
    %7092 = vmatprep.subr.mxu0 %v4543
    %7093 = vmatpush1.msra.mxu0 %v4542
    %7094 = vmatprep.subr.mxu0 %v4546
    %7095 = vmatpush1.msra.mxu0 %v4545
    %7096 = vmatprep.subr.mxu0 %v4549
    %7097 = vmatpush1.msra.mxu0 %v4548
    %7098 = vmatprep.subr.mxu0 %v4552
    %7099 = vmatpush1.msra.mxu0 %v4551
    %7100 = vmatprep.subr.mxu0 %v4555
    %7101 = vmatpush1.msra.mxu0 %v4554
    %7102 = vmatprep.subr.mxu0 %v4558
    %7103 = vmatpush1.msra.mxu0 %v4557
    %7104 = vmatprep.subr.mxu0 %v4561
    %7105 = vmatpush1.msra.mxu0 %v4560
    %7106 = vmatprep.subr.mxu0 %v4564
    %7107 = vmatpush1.msra.mxu0 %v4563
    %7108 = vmatprep.subr.mxu0 %v4567
    %7109 = vmatpush1.msra.mxu0 %v4566
    %7110 = vmatprep.subr.mxu0 %v4570
    %7111 = vmatpush1.msra.mxu0 %v4569
    %7112 = vmatprep.subr.mxu0 %v4573
    %7113 = vmatpush1.msra.mxu0 %v4572
    %7114 = vmatprep.subr.mxu0 %v4576
    %7115 = vmatpush1.msra.mxu0 %v4575
    %7116 = vmatprep.subr.mxu0 0.0
    %7117 = vmatpush1.msra.mxu0 0.0
    %7118 = vmatprep.subr.mxu0 0.0
    %7119 = vmatpush1.msra.mxu0 0.0
    %7120 = vmatprep.subr.mxu0 0.0
    %7121 = vmatpush1.msra.mxu0 0.0
    %7122 = vmatprep.subr.mxu0 0.0
    %7123 = vmatpush1.msra.mxu0 0.0
    %7124 = vmatprep.subr.mxu0 0.0
    %7125 = vmatpush1.msra.mxu0 0.0
    %7126 = vmatprep.subr.mxu0 0.0
    %7127 = vmatpush1.msra.mxu0 0.0
    %7128 = vmatprep.subr.mxu0 0.0
    %7129 = vmatpush1.msra.mxu0 0.0
    %7130 = vmatprep.subr.mxu0 0.0
    %7131 = vmatpush1.msra.mxu0 0.0
    %7132 = vmatprep.subr.mxu0 0.0
    %7133 = vmatpush1.msra.mxu0 0.0
    %7134 = vmatprep.subr.mxu0 0.0
    %7135 = vmatpush1.msra.mxu0 0.0
    %7136 = vmatprep.subr.mxu0 0.0
    %7137 = vmatpush1.msra.mxu0 0.0
    %7138 = vmatprep.subr.mxu0 0.0
    %7139 = vmatpush1.msra.mxu0 0.0
    %7140 = vmatprep.subr.mxu0 0.0
    %7141 = vmatpush1.msra.mxu0 0.0
    %7142 = vmatprep.subr.mxu0 0.0
    %7143 = vmatpush1.msra.mxu0 0.0
    %7144 = vmatprep.subr.mxu0 0.0
    %7145 = vmatpush1.msra.mxu0 0.0
    %7146 = vmatprep.subr.mxu0 0.0
    %7147 = vmatpush1.msra.mxu0 0.0
    %7148 = vmatprep.mubr.f32.mxu0 0.0
    %7149 = vmatmul.mubr.f32.gmra.mrb[0].mxu0 %v6938
    %v7150 = vpop.f32.mrb[0].mxu0
    %v7151 = vadd.f32 0.0, %v7150
    %v7152 = vpop.f32.mrb[0].mxu0
    %v7153 = vadd.f32 0.0, %v7152
    %7154 = vdwg.mxu0
    %7155 = vmatprep.subr.mxu0 0.0
    %7156 = vmatpush1.msra.mxu0 %v4532
    %7157 = vmatprep.subr.mxu0 0.0
    %7158 = vmatpush1.msra.mxu0 %v4535
    %7159 = vmatprep.subr.mxu0 0.0
    %7160 = vmatpush1.msra.mxu0 %v4538
    %7161 = vmatprep.subr.mxu0 0.0
    %7162 = vmatpush1.msra.mxu0 %v4541
    %7163 = vmatprep.subr.mxu0 0.0
    %7164 = vmatpush1.msra.mxu0 %v4544
    %7165 = vmatprep.subr.mxu0 0.0
    %7166 = vmatpush1.msra.mxu0 %v4547
    %7167 = vmatprep.subr.mxu0 0.0
    %7168 = vmatpush1.msra.mxu0 %v4550
    %7169 = vmatprep.subr.mxu0 0.0
    %7170 = vmatpush1.msra.mxu0 %v4553
    %7171 = vmatprep.subr.mxu0 0.0
    %7172 = vmatpush1.msra.mxu0 %v4556
    %7173 = vmatprep.subr.mxu0 0.0
    %7174 = vmatpush1.msra.mxu0 %v4559
    %7175 = vmatprep.subr.mxu0 0.0
    %7176 = vmatpush1.msra.mxu0 %v4562
    %7177 = vmatprep.subr.mxu0 0.0
    %7178 = vmatpush1.msra.mxu0 %v4565
    %7179 = vmatprep.subr.mxu0 0.0
    %7180 = vmatpush1.msra.mxu0 %v4568
    %7181 = vmatprep.subr.mxu0 0.0
    %7182 = vmatpush1.msra.mxu0 %v4571
    %7183 = vmatprep.subr.mxu0 0.0
    %7184 = vmatpush1.msra.mxu0 %v4574
    %7185 = vmatprep.subr.mxu0 0.0
    %7186 = vmatpush1.msra.mxu0 %v4577
    %7187 = vmatprep.subr.mxu0 0.0
    %7188 = vmatpush1.msra.mxu0 0.0
    %7189 = vmatprep.subr.mxu0 0.0
    %7190 = vmatpush1.msra.mxu0 0.0
    %7191 = vmatprep.subr.mxu0 0.0
    %7192 = vmatpush1.msra.mxu0 0.0
    %7193 = vmatprep.subr.mxu0 0.0
    %7194 = vmatpush1.msra.mxu0 0.0
    %7195 = vmatprep.subr.mxu0 0.0
    %7196 = vmatpush1.msra.mxu0 0.0
    %7197 = vmatprep.subr.mxu0 0.0
    %7198 = vmatpush1.msra.mxu0 0.0
    %7199 = vmatprep.subr.mxu0 0.0
    %7200 = vmatpush1.msra.mxu0 0.0
    %7201 = vmatprep.subr.mxu0 0.0
    %7202 = vmatpush1.msra.mxu0 0.0
    %7203 = vmatprep.subr.mxu0 0.0
    %7204 = vmatpush1.msra.mxu0 0.0
    %7205 = vmatprep.subr.mxu0 0.0
    %7206 = vmatpush1.msra.mxu0 0.0
    %7207 = vmatprep.subr.mxu0 0.0
    %7208 = vmatpush1.msra.mxu0 0.0
    %7209 = vmatprep.subr.mxu0 0.0
    %7210 = vmatpush1.msra.mxu0 0.0
    %7211 = vmatprep.subr.mxu0 0.0
    %7212 = vmatpush1.msra.mxu0 0.0
    %7213 = vmatprep.subr.mxu0 0.0
    %7214 = vmatpush1.msra.mxu0 0.0
    %7215 = vmatprep.subr.mxu0 0.0
    %7216 = vmatpush1.msra.mxu0 0.0
    %7217 = vmatprep.subr.mxu0 0.0
    %7218 = vmatpush1.msra.mxu0 0.0
    %7219 = vmatprep.mubr.f32.mxu0 0.0
    %7220 = vmatmul.mubr.f32.gmra.mrb[0].mxu0 %v6938
    %v7221 = vpop.f32.mrb[0].mxu0
    %v7222 = vadd.f32 0.0, %v7221
    %v7223 = vpop.f32.mrb[0].mxu0
    %7224 = vdwg.mxu0
    %v7225 = vld [vmem:[%s3414] sm:$0xff]
    %v7226 = vld [vmem:[%s3414 + $0x8] sm:$0xff]
    %v7227 = vld [vmem:[%s3414 + $0x10] sm:$0xff]
    %v7228 = vadd.f32 %v7225, %v7010
    %v7229 = vxor.u32 %v7228, 2147483648
    %v7230 = vmul.f32 %v7229, 1.442695
    %v7231 = vpow.pop %v7230
    %v7232 = vadd.f32 %v7231, 1.0
    %v7233 = vrcp.pop %v7232
    %v7234 = vmul.f32 1.0, %v7233
    %v7235 = vadd.f32 %v7226, %v7012
    %v7236 = vxor.u32 %v7235, 2147483648
    %v7237 = vmul.f32 %v7236, 1.442695
    %v7238 = vpow.pop %v7237
    %v7239 = vadd.f32 %v7238, 1.0
    %v7240 = vrcp.pop %v7239
    %v7241 = vmul.f32 1.0, %v7240
    %v7242 = vadd.f32 %v7081, %v4883
    %v7243 = vmul.f32 %v7234, %v7242
    %v7244 = vadd.f32 %v7227, %v7243
    %v7245 = vtanh.pop %v7244
    %v7246 = vsub.f32 1.0, %v7241
    %v7247 = vmul.f32 %v7246, %v7245
    %v7248 = vmul.f32 %v7241, %v6913
    %v7249 = vadd.f32 %v7247, %v7248
    %v7250 = vld [vmem:[#allocation3] sm:$0xff]
    %v7251 = vld [vmem:[#allocation3 + $0x8] sm:$0xff]
    %v7252 = vld [vmem:[#allocation3 + $0x10] sm:$0xff]
    %v7253 = vadd.f32 %v7250, %v7151
    %v7254 = vxor.u32 %v7253, 2147483648
    %v7255 = vmul.f32 %v7254, 1.442695
    %v7256 = vpow.pop %v7255
    %v7257 = vadd.f32 %v7256, 1.0
    %v7258 = vrcp.pop %v7257
    %v7259 = vmul.f32 1.0, %v7258
    %v7260 = vadd.f32 %v7251, %v7153
    %v7261 = vxor.u32 %v7260, 2147483648
    %v7262 = vmul.f32 %v7261, 1.442695
    %v7263 = vpow.pop %v7262
    %v7264 = vadd.f32 %v7263, 1.0
    %v7265 = vrcp.pop %v7264
    %v7266 = vmul.f32 1.0, %v7265
    %v7267 = vadd.f32 %v7222, %v4914
    %v7268 = vmul.f32 %v7259, %v7267
    %v7269 = vadd.f32 %v7252, %v7268
    %v7270 = vtanh.pop %v7269
    %v7271 = vsub.f32 1.0, %v7266
    %v7272 = vmul.f32 %v7271, %v7270
    %v7273 = vmul.f32 %v7266, %v6938
    %v7274 = vadd.f32 %v7272, %v7273
    %s7275 = scalar_lea.vmem %s15, 56
    %7276 = vst [vmem:[%s7275] sm:$0xff] %v7249
    %7277 = vst [vmem:[%s16] sm:$0xff] %v7274
    %v7278 = vld [vmem:[%s13] sm:$0xff]
    %v7279 = vld [vmem:[%s13 + $0x8] sm:$0xff]
    %v7280 = vld [vmem:[%s13 + $0x10] sm:$0xff]
    %v7281 = vld [vmem:[%s13 + $0x18] sm:$0xff]
    %v7282 = vld [vmem:[%s13 + $0x20] sm:$0xff]
    %v7283 = vld [vmem:[%s13 + $0x28] sm:$0xff]
    %v7284 = vld [vmem:[%s13 + $0x30] sm:$0xff]
    %v7285 = vld [vmem:[%s13 + $0x38] sm:$0xff]
    %v7286 = vld [vmem:[%s13 + $0x40] sm:$0xff]
    %v7287 = vld [vmem:[%s13 + $0x48] sm:$0xff]
    %v7288 = vld [vmem:[%s13 + $0x50] sm:$0xff]
    %v7289 = vld [vmem:[%s13 + $0x58] sm:$0xff]
    %v7290 = vld [vmem:[%s13 + $0x60] sm:$0xff]
    %v7291 = vld [vmem:[%s13 + $0x68] sm:$0xff]
    %v7292 = vld [vmem:[%s13 + $0x70] sm:$0xff]
    %v7293 = vld [vmem:[%s13 + $0x78] sm:$0xff]
    %v7294 = vld [vmem:[%s13 + $0x80] sm:$0xff]
    %v7295 = vld [vmem:[%s13 + $0x88] sm:$0xff]
    %v7296 = vld [vmem:[%s13 + $0x90] sm:$0xff]
    %v7297 = vld [vmem:[%s13 + $0x98] sm:$0xff]
    %v7298 = vld [vmem:[%s13 + $0xa0] sm:$0xff]
    %v7299 = vld [vmem:[%s13 + $0xa8] sm:$0xff]
    %v7300 = vld [vmem:[%s13 + $0xb0] sm:$0xff]
    %v7301 = vld [vmem:[%s13 + $0xb8] sm:$0xff]
    %v7302 = vld [vmem:[%s13 + $0xc0] sm:$0xff]
    %v7303 = vld [vmem:[%s13 + $0xc8] sm:$0xff]
    %v7304 = vld [vmem:[%s13 + $0xd0] sm:$0xff]
    %v7305 = vld [vmem:[%s13 + $0xd8] sm:$0xff]
    %v7306 = vld [vmem:[%s13 + $0xe0] sm:$0xff]
    %v7307 = vld [vmem:[%s13 + $0xe8] sm:$0xff]
    %v7308 = vld [vmem:[%s13 + $0xf0] sm:$0xff]
    %v7309 = vld [vmem:[%s13 + $0xf8] sm:$0xff]
    %v7310 = vld [vmem:[%s14] sm:$0x1]
    %v7312 = vlaneseq
    %v7313 = vshrl.u32 %v7312, 7
    %v7314 = vsub.s32 0, %v7313
    %v7315 = vrot.slane %v7310, %v7314
    %7317 = vmatprep.subr.mxu0 0.0
    %7318 = vmatpush1.msra.mxu0 %v7278
    %7319 = vmatprep.subr.mxu0 0.0
    %7320 = vmatpush1.msra.mxu0 %v7279
    %7321 = vmatprep.subr.mxu0 0.0
    %7322 = vmatpush1.msra.mxu0 %v7280
    %7323 = vmatprep.subr.mxu0 0.0
    %7324 = vmatpush1.msra.mxu0 %v7281
    %7325 = vmatprep.subr.mxu0 0.0
    %7326 = vmatpush1.msra.mxu0 %v7282
    %7327 = vmatprep.subr.mxu0 0.0
    %7328 = vmatpush1.msra.mxu0 %v7283
    %7329 = vmatprep.subr.mxu0 0.0
    %7330 = vmatpush1.msra.mxu0 %v7284
    %7331 = vmatprep.subr.mxu0 0.0
    %7332 = vmatpush1.msra.mxu0 %v7285
    %7333 = vmatprep.subr.mxu0 0.0
    %7334 = vmatpush1.msra.mxu0 %v7286
    %7335 = vmatprep.subr.mxu0 0.0
    %7336 = vmatpush1.msra.mxu0 %v7287
    %7337 = vmatprep.subr.mxu0 0.0
    %7338 = vmatpush1.msra.mxu0 %v7288
    %7339 = vmatprep.subr.mxu0 0.0
    %7340 = vmatpush1.msra.mxu0 %v7289
    %7341 = vmatprep.subr.mxu0 0.0
    %7342 = vmatpush1.msra.mxu0 %v7290
    %7343 = vmatprep.subr.mxu0 0.0
    %7344 = vmatpush1.msra.mxu0 %v7291
    %7345 = vmatprep.subr.mxu0 0.0
    %7346 = vmatpush1.msra.mxu0 %v7292
    %7347 = vmatprep.subr.mxu0 0.0
    %7348 = vmatpush1.msra.mxu0 %v7293
    %7349 = vmatprep.subr.mxu0 0.0
    %7350 = vmatpush1.msra.mxu0 %v7294
    %7351 = vmatprep.subr.mxu0 0.0
    %7352 = vmatpush1.msra.mxu0 %v7295
    %7353 = vmatprep.subr.mxu0 0.0
    %7354 = vmatpush1.msra.mxu0 %v7296
    %7355 = vmatprep.subr.mxu0 0.0
    %7356 = vmatpush1.msra.mxu0 %v7297
    %7357 = vmatprep.subr.mxu0 0.0
    %7358 = vmatpush1.msra.mxu0 %v7298
    %7359 = vmatprep.subr.mxu0 0.0
    %7360 = vmatpush1.msra.mxu0 %v7299
    %7361 = vmatprep.subr.mxu0 0.0
    %7362 = vmatpush1.msra.mxu0 %v7300
    %7363 = vmatprep.subr.mxu0 0.0
    %7364 = vmatpush1.msra.mxu0 %v7301
    %7365 = vmatprep.subr.mxu0 0.0
    %7366 = vmatpush1.msra.mxu0 %v7302
    %7367 = vmatprep.subr.mxu0 0.0
    %7368 = vmatpush1.msra.mxu0 %v7303
    %7369 = vmatprep.subr.mxu0 0.0
    %7370 = vmatpush1.msra.mxu0 %v7304
    %7371 = vmatprep.subr.mxu0 0.0
    %7372 = vmatpush1.msra.mxu0 %v7305
    %7373 = vmatprep.subr.mxu0 0.0
    %7374 = vmatpush1.msra.mxu0 %v7306
    %7375 = vmatprep.subr.mxu0 0.0
    %7376 = vmatpush1.msra.mxu0 %v7307
    %7377 = vmatprep.subr.mxu0 0.0
    %7378 = vmatpush1.msra.mxu0 %v7308
    %7379 = vmatprep.subr.mxu0 0.0
    %7380 = vmatpush1.msra.mxu0 %v7309
    %7381 = vmatprep.mubr.f32.mxu0 %v7274
    %7382 = vmatmul.mubr.f32.gmra.mrb[0].mxu0 %v7249
    %v7383 = vpop.f32.mrb[0].mxu0
    %v7384 = vadd.f32 %v7315, %v7383
    %v7385 = vpop.f32.mrb[0].mxu0
    %7386 = vdwg.mxu0
    %v7387 = vtanh.pop %v7384
    %7388 = vst [vmem:[%s17] sm:$0xff] %v7387
    // Predicated region
    $region86: #{encoder_forward.1} parent=1 // pred_check
      _
    $region87: #{encoder_forward.1} parent=1 // pred_check_branch
      %7390 = sbr.rel (0) target = $region89
    $region88: #{encoder_forward.1} parent=1 // pred_region
      _
    $region89: #{encoder_forward.1} parent=1 // pred_fallthru
      _
    // Predicated region
    $region90: #{encoder_forward.1} parent=1 // pred_check
      _
    $region91: #{encoder_forward.1} parent=1 // pred_check_branch
      %7392 = sbr.rel (0) target = $region93
    $region92: #{encoder_forward.1} parent=1 // pred_region
      _
    $region93: #{encoder_forward.1} parent=1 // pred_fallthru
      _
    // Predicated region
    $region94: #{encoder_forward.1} parent=1 // pred_check
      _
    $region95: #{encoder_forward.1} parent=1 // pred_check_branch
      %7394 = sbr.rel (0) target = $region97
    $region96: #{encoder_forward.1} parent=1 // pred_region
      _
    $region97: #{encoder_forward.1} parent=1 // pred_fallthru
      _
    // Predicated region
    $region98: #{encoder_forward.1} parent=1 // pred_check
      _
    $region99: #{encoder_forward.1} parent=1 // pred_check_branch
      %7396 = sbr.rel (0) target = $region101
    $region100: #{encoder_forward.1} parent=1 // pred_region
      _
    $region101: #{encoder_forward.1} parent=1 // pred_fallthru
      _
    // Predicated region
    $region102: #{encoder_forward.1} parent=1 // pred_check
      _
    $region103: #{encoder_forward.1} parent=1 // pred_check_branch
      %7398 = sbr.rel (0) target = $region105
    $region104: #{encoder_forward.1} parent=1 // pred_region
      _
    $region105: #{encoder_forward.1} parent=1 // pred_fallthru
      _
    // Predicated region
    $region106: #{encoder_forward.1} parent=1 // pred_check
      _
    $region107: #{encoder_forward.1} parent=1 // pred_check_branch
      %7400 = sbr.rel (0) target = $region109
    $region108: #{encoder_forward.1} parent=1 // pred_region
      _
    $region109: #{encoder_forward.1} parent=1 // pred_fallthru
      _
    %7401 = vsyncpa [#allocation7], 1
    %7402 = vsyncpa [#allocation9], 1
    %7403 = vsyncpa [#allocation12], 1
    %7404 = vsyncpa [#allocation15], 1

</llo_original>
